<compile_context>
chip_gen: v6e
topology: v6e:2x2x1
jax: 0.10.0
libtpu: 0.0.40
codegen_flags: <defaults>
</compile_context>

<pallas_src>
import functools

import jax
import jax.numpy as jnp
from jax.experimental import pallas as pl
from jax.experimental.pallas import tpu as pltpu

PAD = 2  # spatial halo; big enough for both the pad=1/dil=1 and pad=2/dil=2 convs


def _round_up(v, m):
    return ((v + m - 1) // m) * m


def _num_tensorcores():
    """Best-effort TensorCores-per-chip query (2 on v7x, 1 on v5e/v6e); safe fallback = 1."""
    try:
        n = getattr(jax.devices()[0], "num_cores", None)
        return max(int(n), 1) if n else 1
    except Exception:
        return 1


def _resblock_cdc_kernel(x_ref, w1_ref, b1_ref, w2_ref, b2_ref, w3_ref, b3_ref,
                         m_ref, o_ref, plane_ref, *, cp, wp, n, marg):
    """One group of lane-concatenated images per grid step.

    x_ref  : (cp, n)              zero-padded planes, flattened + lane-padded (lane-dense)
    w*_ref : (9*cp, cp)           per-tap weights stacked along sublanes (row = t*cp + co)
    b*_ref : (cp, 1)              stage bias
    m_ref  : (1, n)               interior mask (1 inside the un-padded image, else 0)
    o_ref  : (cp, n)              output planes (caller dtype)
    plane_ref : (cp, marg+n+marg) VMEM staging plane with zero lane margins
    """
    # Re-zero only the two lane-margin strips each step (interior is always overwritten).
    # Keeps halo emulation exact and is megacore-safe (each core zeroes its own scratch).
    zeros_m = jnp.zeros((cp, marg), jnp.float32)
    plane_ref[:, :marg] = zeros_m
    plane_ref[:, marg + n:] = zeros_m

    x_plane = x_ref[...]                              # already f32, lane-dense read
    plane_ref[:, marg:marg + n] = x_plane             # aligned, unmasked store
    mask = jnp.broadcast_to(m_ref[...], (cp, n))      # hoisted once, reused by both stages

    def conv_stage(w_ref, b_ref, dilation, pad):
        # 9 shifted dots accumulated in vregs (no im2col scratch round-trip):
        #   out[co, p] = b[co] + sum_t sum_ci W_t[co, ci] * plane[ci, p + shift(t)]
        acc = None
        for kh in range(3):
            for kw in range(3):
                t = kh * 3 + kw
                s = (kh * dilation - pad) * wp + (kw * dilation - pad)
                part = jnp.dot(w_ref[t * cp:(t + 1) * cp, :],
                               plane_ref[:, marg + s:marg + s + n],
                               preferred_element_type=jnp.float32)
                acc = part if acc is None else acc + part
        return acc + b_ref[...]

    # 'C': 3x3 pad=1 dil=1  (mask re-zeroes halo + lane tail -> emulates zero padding next stage)
    y = conv_stage(w1_ref, b1_ref, dilation=1, pad=1) * mask
    plane_ref[:, marg:marg + n] = y
    # 'D': 3x3 pad=2 dil=2
    y = conv_stage(w2_ref, b2_ref, dilation=2, pad=2) * mask
    plane_ref[:, marg:marg + n] = y
    # 'C': 3x3 pad=1 dil=1  (halo/tail garbage is sliced off by the wrapper)
    y = conv_stage(w3_ref, b3_ref, dilation=1, pad=1)

    # residual add + fully lane-dense output store in the caller's dtype
    o_ref[...] = (x_plane + y).astype(o_ref.dtype)


def resblock_cdc(x, w1, b1, w2, b2, w3, b3):
    """x: (B, C, H, W) NCHW; w*: (C, C, 3, 3) OIHW (PyTorch layout); b*: (C,)."""
    B, C, H, W = x.shape
    Hp, Wp = H + 2 * PAD, W + 2 * PAD
    N = Hp * Wp
    NP = _round_up(N, 128)                  # lane-padded per-image plane width
    CP = _round_up(max(C, 8), 8)            # sublane-aligned channel count
    MARG = _round_up(2 * Wp + PAD, 128)     # lane margin covering the largest tap shift
    f32 = jnp.float32

    # batch grouping: >=2 parallel grid slices when the chip has 2 TCs (v7x);
    # fully lane-folded single grid step on 1-TC chips (v5e/v6e).
    S = max(1, min(B, _num_tensorcores()))
    G = -(-B // S)                          # images per grid step
    Bp = S * G                              # padded batch
    NL = G * NP                             # lane extent of one grid step

    def prep_w(w, b):
        # (Co, Ci, kh, kw) OIHW -> [t=kh*3+kw, co, ci] -> (9*CP, CP) with row = t*CP + co
        wt = jnp.transpose(w.astype(f32), (2, 3, 0, 1)).reshape(9, C, C)
        ws = jnp.zeros((9, CP, CP), f32).at[:, :C, :C].set(wt).reshape(9 * CP, CP)
        bc = jnp.zeros((CP, 1), f32).at[:C, 0].set(b.astype(f32))
        return ws, bc

    wp1, bp1 = prep_w(w1, b1)
    wp2, bp2 = prep_w(w2, b2)
    wp3, bp3 = prep_w(w3, b3)

    # zero-padded, channel-padded, flattened + lane-padded input planes -> (S, CP, NL)
    xp = jnp.zeros((Bp, CP, Hp, Wp), f32)
    xp = xp.at[:B, :C, PAD:PAD + H, PAD:PAD + W].set(x.astype(f32)).reshape(Bp, CP, N)
    xp = jnp.pad(xp, ((0, 0), (0, 0), (0, NP - N)))
    xp = xp.reshape(S, G, CP, NP).transpose(0, 2, 1, 3).reshape(S, CP, NL)

    # interior mask (1 inside the image, 0 on the halo and on the lane-padding tail), tiled per group
    m1 = jnp.pad(jnp.pad(jnp.ones((H, W), f32), PAD).reshape(1, N), ((0, 0), (0, NP - N)))
    mask = jnp.tile(m1, (1, G))

    kernel = functools.partial(_resblock_cdc_kernel, cp=CP, wp=Wp, n=NL, marg=MARG)

    full = lambda shape: pl.BlockSpec(shape, lambda s, _sh=shape: (0,) * len(_sh))
    per_step = pl.BlockSpec((None, CP, NL), lambda s: (s, 0, 0))

    out = pl.pallas_call(
        kernel,
        out_shape=jax.ShapeDtypeStruct((S, CP, NL), x.dtype),
        grid_spec=pltpu.PrefetchScalarGridSpec(
            num_scalar_prefetch=0,
            grid=(S,),
            in_specs=[per_step,
                      full((9 * CP, CP)), full((CP, 1)),
                      full((9 * CP, CP)), full((CP, 1)),
                      full((9 * CP, CP)), full((CP, 1)),
                      full((1, NL))],
            out_specs=per_step,
            scratch_shapes=[pltpu.VMEM((CP, MARG + NL + MARG), f32)],
        ),
        compiler_params=pltpu.CompilerParams(
            dimension_semantics=("parallel",)),
    )(xp, wp1, bp1, wp2, bp2, wp3, bp3, mask)

    # (S, CP, NL) -> (B, C, H, W): ungroup, drop channel pad, lane tail and spatial halo
    out = out.reshape(S, CP, G, NP).transpose(0, 2, 1, 3).reshape(Bp, CP, NP)
    out = out[:B, :C, :N].reshape(B, C, Hp, Wp)[:, :, PAD:PAD + H, PAD:PAD + W]
    return out


def _conv_ref(x, w, b, dilation, padding):
    out = jax.lax.conv_general_dilated(
        x, w, window_strides=(1, 1),
        padding=[(padding, padding), (padding, padding)],
        rhs_dilation=(dilation, dilation),
        dimension_numbers=('NCHW', 'OIHW', 'NCHW'))
    return out + b[None, :, None, None]


if __name__ == "__main__":
    key = jax.random.PRNGKey(0)
    B, C, H, W = 2, 4, 16, 16
    ks = jax.random.split(key, 7)

    # deterministic synthetic parameters (shapes from Conv2d(C, C, 3, bias=True), PyTorch OIHW)
    x = jax.random.normal(ks[0], (B, C, H, W), jnp.float32)
    w1 = jax.random.normal(ks[1], (C, C, 3, 3), jnp.float32) * 0.1
    b1 = jax.random.normal(ks[2], (C,), jnp.float32) * 0.1
    w2 = jax.random.normal(ks[3], (C, C, 3, 3), jnp.float32) * 0.1
    b2 = jax.random.normal(ks[4], (C,), jnp.float32) * 0.1
    w3 = jax.random.normal(ks[5], (C, C, 3, 3), jnp.float32) * 0.1
    b3 = jax.random.normal(ks[6], (C,), jnp.float32) * 0.1

    out = resblock_cdc(x, w1, b1, w2, b2, w3, b3)
    jax.block_until_ready(out)

    # pure-JAX reference (same math as the PyTorch 'CDC' residual block)
    y1 = _conv_ref(x, w1, b1, 1, 1)
    y2 = _conv_ref(y1, w2, b2, 2, 2)
    y3 = _conv_ref(y2, w3, b3, 1, 1)
    ref = x + y3
    assert jnp.allclose(out, ref, atol=1e-4, rtol=1e-4), "mismatch vs reference"

    print("KERNEL_OK")
</pallas_src>

<mosaic_0001>
module attributes {stable_mosaic.version = 11 : i64} {
  func.func @_resblock_cdc_kernel(%arg0: i32, %arg1: memref<1x8x1024xf32, #tpu.memory_space<vmem>>, %arg2: memref<72x8xf32, #tpu.memory_space<vmem>>, %arg3: memref<8x1xf32, #tpu.memory_space<vmem>>, %arg4: memref<72x8xf32, #tpu.memory_space<vmem>>, %arg5: memref<8x1xf32, #tpu.memory_space<vmem>>, %arg6: memref<72x8xf32, #tpu.memory_space<vmem>>, %arg7: memref<8x1xf32, #tpu.memory_space<vmem>>, %arg8: memref<1x1024xf32, #tpu.memory_space<vmem>>, %arg9: memref<1x8x1024xf32, #tpu.memory_space<vmem>>, %arg10: memref<8x1280xf32, #tpu.memory_space<vmem>>) attributes {dimension_semantics = [#tpu.dimension_semantics<parallel>], iteration_bounds = array<i64: 1>, scalar_prefetch = 0 : i64, scratch_operands = 1 : i64, tpu.core_type = #tpu.core_type<tc>, window_params = [{transform_indices = @transform_0, window_bounds = array<i64: 1, 8, 1024>}, {pipeline_mode = #tpu.pipeline_mode<synchronous>, transform_indices = @transform_1, window_bounds = array<i64: 72, 8>}, {pipeline_mode = #tpu.pipeline_mode<synchronous>, transform_indices = @transform_2, window_bounds = array<i64: 8, 1>}, {pipeline_mode = #tpu.pipeline_mode<synchronous>, transform_indices = @transform_3, window_bounds = array<i64: 72, 8>}, {pipeline_mode = #tpu.pipeline_mode<synchronous>, transform_indices = @transform_4, window_bounds = array<i64: 8, 1>}, {pipeline_mode = #tpu.pipeline_mode<synchronous>, transform_indices = @transform_5, window_bounds = array<i64: 72, 8>}, {pipeline_mode = #tpu.pipeline_mode<synchronous>, transform_indices = @transform_6, window_bounds = array<i64: 8, 1>}, {pipeline_mode = #tpu.pipeline_mode<synchronous>, transform_indices = @transform_7, window_bounds = array<i64: 1, 1024>}, {transform_indices = @transform_8, window_bounds = array<i64: 1, 8, 1024>}]} {
    %cst = arith.constant 0.000000e+00 : f32
    %0 = vector.broadcast %cst : f32 to vector<8x128xf32>
    %c0 = arith.constant 0 : index
    %c0_0 = arith.constant 0 : index
    %1 = vector.load %arg10[%c0, %c0_0] : memref<8x1280xf32, #tpu.memory_space<vmem>>, vector<8x128xf32>
    tpu.vector_store %arg10[%c0, %c0_0], %0 {strides = array<i32>} : memref<8x1280xf32, #tpu.memory_space<vmem>>, vector<8x128xf32>,
    %c0_1 = arith.constant 0 : index
    %c1152 = arith.constant 1152 : index
    %2 = vector.load %arg10[%c0_1, %c1152] : memref<8x1280xf32, #tpu.memory_space<vmem>>, vector<8x128xf32>
    tpu.vector_store %arg10[%c0_1, %c1152], %0 {strides = array<i32>} : memref<8x1280xf32, #tpu.memory_space<vmem>>, vector<8x128xf32>,
    %c0_2 = arith.constant 0 : index
    %c0_3 = arith.constant 0 : index
    %c0_4 = arith.constant 0 : index
    %3 = vector.load %arg1[%c0_2, %c0_3, %c0_4] : memref<1x8x1024xf32, #tpu.memory_space<vmem>>, vector<1x8x1024xf32>
    %4 = vector.shape_cast %3 : vector<1x8x1024xf32> to vector<8x1024xf32>
    %c0_5 = arith.constant 0 : index
    %c128 = arith.constant 128 : index
    %5 = vector.load %arg10[%c0_5, %c128] : memref<8x1280xf32, #tpu.memory_space<vmem>>, vector<8x1024xf32>
    tpu.vector_store %arg10[%c0_5, %c128], %4 {strides = array<i32>} : memref<8x1280xf32, #tpu.memory_space<vmem>>, vector<8x1024xf32>,
    %c0_6 = arith.constant 0 : index
    %c0_7 = arith.constant 0 : index
    %6 = vector.load %arg8[%c0_6, %c0_7] : memref<1x1024xf32, #tpu.memory_space<vmem>>, vector<1x1024xf32>
    %7 = vector.shape_cast %6 : vector<1x1024xf32> to vector<1x1024xf32>
    %8 = vector.broadcast %7 : vector<1x1024xf32> to vector<8x1024xf32>
    %c0_8 = arith.constant 0 : index
    %c0_9 = arith.constant 0 : index
    %9 = vector.load %arg2[%c0_8, %c0_9] : memref<72x8xf32, #tpu.memory_space<vmem>>, vector<8x8xf32>
    %c0_10 = arith.constant 0 : index
    %c107 = arith.constant 107 : index
    %10 = vector.load %arg10[%c0_10, %c107] : memref<8x1280xf32, #tpu.memory_space<vmem>>, vector<8x1024xf32>
    %cst_11 = arith.constant dense<0.000000e+00> : vector<8x1024xf32>
    %11 = tpu.matmul %9, %10, %cst_11 {dimension_numbers = #tpu.dot_dimension_numbers<[1], [0], [0], [1], [0, 0, 1, 1], [], []>} : vector<8x8xf32>, vector<8x1024xf32>, vector<8x1024xf32> -> vector<8x1024xf32>
    %c8 = arith.constant 8 : index
    %c0_12 = arith.constant 0 : index
    %12 = vector.load %arg2[%c8, %c0_12] : memref<72x8xf32, #tpu.memory_space<vmem>>, vector<8x8xf32>
    %c0_13 = arith.constant 0 : index
    %c108 = arith.constant 108 : index
    %13 = vector.load %arg10[%c0_13, %c108] : memref<8x1280xf32, #tpu.memory_space<vmem>>, vector<8x1024xf32>
    %cst_14 = arith.constant dense<0.000000e+00> : vector<8x1024xf32>
    %14 = tpu.matmul %12, %13, %cst_14 {dimension_numbers = #tpu.dot_dimension_numbers<[1], [0], [0], [1], [0, 0, 1, 1], [], []>} : vector<8x8xf32>, vector<8x1024xf32>, vector<8x1024xf32> -> vector<8x1024xf32>
    %15 = arith.addf %11, %14 : vector<8x1024xf32>
    %c16 = arith.constant 16 : index
    %c0_15 = arith.constant 0 : index
    %16 = vector.load %arg2[%c16, %c0_15] : memref<72x8xf32, #tpu.memory_space<vmem>>, vector<8x8xf32>
    %c0_16 = arith.constant 0 : index
    %c109 = arith.constant 109 : index
    %17 = vector.load %arg10[%c0_16, %c109] : memref<8x1280xf32, #tpu.memory_space<vmem>>, vector<8x1024xf32>
    %cst_17 = arith.constant dense<0.000000e+00> : vector<8x1024xf32>
    %18 = tpu.matmul %16, %17, %cst_17 {dimension_numbers = #tpu.dot_dimension_numbers<[1], [0], [0], [1], [0, 0, 1, 1], [], []>} : vector<8x8xf32>, vector<8x1024xf32>, vector<8x1024xf32> -> vector<8x1024xf32>
    %19 = arith.addf %15, %18 : vector<8x1024xf32>
    %c24 = arith.constant 24 : index
    %c0_18 = arith.constant 0 : index
    %20 = vector.load %arg2[%c24, %c0_18] : memref<72x8xf32, #tpu.memory_space<vmem>>, vector<8x8xf32>
    %c0_19 = arith.constant 0 : index
    %c127 = arith.constant 127 : index
    %21 = vector.load %arg10[%c0_19, %c127] : memref<8x1280xf32, #tpu.memory_space<vmem>>, vector<8x1024xf32>
    %cst_20 = arith.constant dense<0.000000e+00> : vector<8x1024xf32>
    %22 = tpu.matmul %20, %21, %cst_20 {dimension_numbers = #tpu.dot_dimension_numbers<[1], [0], [0], [1], [0, 0, 1, 1], [], []>} : vector<8x8xf32>, vector<8x1024xf32>, vector<8x1024xf32> -> vector<8x1024xf32>
    %23 = arith.addf %19, %22 : vector<8x1024xf32>
    %c32 = arith.constant 32 : index
    %c0_21 = arith.constant 0 : index
    %24 = vector.load %arg2[%c32, %c0_21] : memref<72x8xf32, #tpu.memory_space<vmem>>, vector<8x8xf32>
    %c0_22 = arith.constant 0 : index
    %c128_23 = arith.constant 128 : index
    %25 = vector.load %arg10[%c0_22, %c128_23] : memref<8x1280xf32, #tpu.memory_space<vmem>>, vector<8x1024xf32>
    %cst_24 = arith.constant dense<0.000000e+00> : vector<8x1024xf32>
    %26 = tpu.matmul %24, %25, %cst_24 {dimension_numbers = #tpu.dot_dimension_numbers<[1], [0], [0], [1], [0, 0, 1, 1], [], []>} : vector<8x8xf32>, vector<8x1024xf32>, vector<8x1024xf32> -> vector<8x1024xf32>
    %27 = arith.addf %23, %26 : vector<8x1024xf32>
    %c40 = arith.constant 40 : index
    %c0_25 = arith.constant 0 : index
    %28 = vector.load %arg2[%c40, %c0_25] : memref<72x8xf32, #tpu.memory_space<vmem>>, vector<8x8xf32>
    %c0_26 = arith.constant 0 : index
    %c129 = arith.constant 129 : index
    %29 = vector.load %arg10[%c0_26, %c129] : memref<8x1280xf32, #tpu.memory_space<vmem>>, vector<8x1024xf32>
    %cst_27 = arith.constant dense<0.000000e+00> : vector<8x1024xf32>
    %30 = tpu.matmul %28, %29, %cst_27 {dimension_numbers = #tpu.dot_dimension_numbers<[1], [0], [0], [1], [0, 0, 1, 1], [], []>} : vector<8x8xf32>, vector<8x1024xf32>, vector<8x1024xf32> -> vector<8x1024xf32>
    %31 = arith.addf %27, %30 : vector<8x1024xf32>
    %c48 = arith.constant 48 : index
    %c0_28 = arith.constant 0 : index
    %32 = vector.load %arg2[%c48, %c0_28] : memref<72x8xf32, #tpu.memory_space<vmem>>, vector<8x8xf32>
    %c0_29 = arith.constant 0 : index
    %c147 = arith.constant 147 : index
    %33 = vector.load %arg10[%c0_29, %c147] : memref<8x1280xf32, #tpu.memory_space<vmem>>, vector<8x1024xf32>
    %cst_30 = arith.constant dense<0.000000e+00> : vector<8x1024xf32>
    %34 = tpu.matmul %32, %33, %cst_30 {dimension_numbers = #tpu.dot_dimension_numbers<[1], [0], [0], [1], [0, 0, 1, 1], [], []>} : vector<8x8xf32>, vector<8x1024xf32>, vector<8x1024xf32> -> vector<8x1024xf32>
    %35 = arith.addf %31, %34 : vector<8x1024xf32>
    %c56 = arith.constant 56 : index
    %c0_31 = arith.constant 0 : index
    %36 = vector.load %arg2[%c56, %c0_31] : memref<72x8xf32, #tpu.memory_space<vmem>>, vector<8x8xf32>
    %c0_32 = arith.constant 0 : index
    %c148 = arith.constant 148 : index
    %37 = vector.load %arg10[%c0_32, %c148] : memref<8x1280xf32, #tpu.memory_space<vmem>>, vector<8x1024xf32>
    %cst_33 = arith.constant dense<0.000000e+00> : vector<8x1024xf32>
    %38 = tpu.matmul %36, %37, %cst_33 {dimension_numbers = #tpu.dot_dimension_numbers<[1], [0], [0], [1], [0, 0, 1, 1], [], []>} : vector<8x8xf32>, vector<8x1024xf32>, vector<8x1024xf32> -> vector<8x1024xf32>
    %39 = arith.addf %35, %38 : vector<8x1024xf32>
    %c64 = arith.constant 64 : index
    %c0_34 = arith.constant 0 : index
    %40 = vector.load %arg2[%c64, %c0_34] : memref<72x8xf32, #tpu.memory_space<vmem>>, vector<8x8xf32>
    %c0_35 = arith.constant 0 : index
    %c149 = arith.constant 149 : index
    %41 = vector.load %arg10[%c0_35, %c149] : memref<8x1280xf32, #tpu.memory_space<vmem>>, vector<8x1024xf32>
    %cst_36 = arith.constant dense<0.000000e+00> : vector<8x1024xf32>
    %42 = tpu.matmul %40, %41, %cst_36 {dimension_numbers = #tpu.dot_dimension_numbers<[1], [0], [0], [1], [0, 0, 1, 1], [], []>} : vector<8x8xf32>, vector<8x1024xf32>, vector<8x1024xf32> -> vector<8x1024xf32>
    %43 = arith.addf %39, %42 : vector<8x1024xf32>
    %c0_37 = arith.constant 0 : index
    %c0_38 = arith.constant 0 : index
    %44 = vector.load %arg3[%c0_37, %c0_38] : memref<8x1xf32, #tpu.memory_space<vmem>>, vector<8x1xf32>
    %45 = vector.broadcast %44 : vector<8x1xf32> to vector<8x1024xf32>
    %46 = arith.addf %43, %45 : vector<8x1024xf32>
    %47 = arith.mulf %46, %8 : vector<8x1024xf32>
    %c0_39 = arith.constant 0 : index
    %c128_40 = arith.constant 128 : index
    %48 = vector.load %arg10[%c0_39, %c128_40] : memref<8x1280xf32, #tpu.memory_space<vmem>>, vector<8x1024xf32>
    tpu.vector_store %arg10[%c0_39, %c128_40], %47 {strides = array<i32>} : memref<8x1280xf32, #tpu.memory_space<vmem>>, vector<8x1024xf32>,
    %c0_41 = arith.constant 0 : index
    %c0_42 = arith.constant 0 : index
    %49 = vector.load %arg4[%c0_41, %c0_42] : memref<72x8xf32, #tpu.memory_space<vmem>>, vector<8x8xf32>
    %c0_43 = arith.constant 0 : index
    %c86 = arith.constant 86 : index
    %50 = vector.load %arg10[%c0_43, %c86] : memref<8x1280xf32, #tpu.memory_space<vmem>>, vector<8x1024xf32>
    %cst_44 = arith.constant dense<0.000000e+00> : vector<8x1024xf32>
    %51 = tpu.matmul %49, %50, %cst_44 {dimension_numbers = #tpu.dot_dimension_numbers<[1], [0], [0], [1], [0, 0, 1, 1], [], []>} : vector<8x8xf32>, vector<8x1024xf32>, vector<8x1024xf32> -> vector<8x1024xf32>
    %c8_45 = arith.constant 8 : index
    %c0_46 = arith.constant 0 : index
    %52 = vector.load %arg4[%c8_45, %c0_46] : memref<72x8xf32, #tpu.memory_space<vmem>>, vector<8x8xf32>
    %c0_47 = arith.constant 0 : index
    %c88 = arith.constant 88 : index
    %53 = vector.load %arg10[%c0_47, %c88] : memref<8x1280xf32, #tpu.memory_space<vmem>>, vector<8x1024xf32>
    %cst_48 = arith.constant dense<0.000000e+00> : vector<8x1024xf32>
    %54 = tpu.matmul %52, %53, %cst_48 {dimension_numbers = #tpu.dot_dimension_numbers<[1], [0], [0], [1], [0, 0, 1, 1], [], []>} : vector<8x8xf32>, vector<8x1024xf32>, vector<8x1024xf32> -> vector<8x1024xf32>
    %55 = arith.addf %51, %54 : vector<8x1024xf32>
    %c16_49 = arith.constant 16 : index
    %c0_50 = arith.constant 0 : index
    %56 = vector.load %arg4[%c16_49, %c0_50] : memref<72x8xf32, #tpu.memory_space<vmem>>, vector<8x8xf32>
    %c0_51 = arith.constant 0 : index
    %c90 = arith.constant 90 : index
    %57 = vector.load %arg10[%c0_51, %c90] : memref<8x1280xf32, #tpu.memory_space<vmem>>, vector<8x1024xf32>
    %cst_52 = arith.constant dense<0.000000e+00> : vector<8x1024xf32>
    %58 = tpu.matmul %56, %57, %cst_52 {dimension_numbers = #tpu.dot_dimension_numbers<[1], [0], [0], [1], [0, 0, 1, 1], [], []>} : vector<8x8xf32>, vector<8x1024xf32>, vector<8x1024xf32> -> vector<8x1024xf32>
    %59 = arith.addf %55, %58 : vector<8x1024xf32>
    %c24_53 = arith.constant 24 : index
    %c0_54 = arith.constant 0 : index
    %60 = vector.load %arg4[%c24_53, %c0_54] : memref<72x8xf32, #tpu.memory_space<vmem>>, vector<8x8xf32>
    %c0_55 = arith.constant 0 : index
    %c126 = arith.constant 126 : index
    %61 = vector.load %arg10[%c0_55, %c126] : memref<8x1280xf32, #tpu.memory_space<vmem>>, vector<8x1024xf32>
    %cst_56 = arith.constant dense<0.000000e+00> : vector<8x1024xf32>
    %62 = tpu.matmul %60, %61, %cst_56 {dimension_numbers = #tpu.dot_dimension_numbers<[1], [0], [0], [1], [0, 0, 1, 1], [], []>} : vector<8x8xf32>, vector<8x1024xf32>, vector<8x1024xf32> -> vector<8x1024xf32>
    %63 = arith.addf %59, %62 : vector<8x1024xf32>
    %c32_57 = arith.constant 32 : index
    %c0_58 = arith.constant 0 : index
    %64 = vector.load %arg4[%c32_57, %c0_58] : memref<72x8xf32, #tpu.memory_space<vmem>>, vector<8x8xf32>
    %c0_59 = arith.constant 0 : index
    %c128_60 = arith.constant 128 : index
    %65 = vector.load %arg10[%c0_59, %c128_60] : memref<8x1280xf32, #tpu.memory_space<vmem>>, vector<8x1024xf32>
    %cst_61 = arith.constant dense<0.000000e+00> : vector<8x1024xf32>
    %66 = tpu.matmul %64, %65, %cst_61 {dimension_numbers = #tpu.dot_dimension_numbers<[1], [0], [0], [1], [0, 0, 1, 1], [], []>} : vector<8x8xf32>, vector<8x1024xf32>, vector<8x1024xf32> -> vector<8x1024xf32>
    %67 = arith.addf %63, %66 : vector<8x1024xf32>
    %c40_62 = arith.constant 40 : index
    %c0_63 = arith.constant 0 : index
    %68 = vector.load %arg4[%c40_62, %c0_63] : memref<72x8xf32, #tpu.memory_space<vmem>>, vector<8x8xf32>
    %c0_64 = arith.constant 0 : index
    %c130 = arith.constant 130 : index
    %69 = vector.load %arg10[%c0_64, %c130] : memref<8x1280xf32, #tpu.memory_space<vmem>>, vector<8x1024xf32>
    %cst_65 = arith.constant dense<0.000000e+00> : vector<8x1024xf32>
    %70 = tpu.matmul %68, %69, %cst_65 {dimension_numbers = #tpu.dot_dimension_numbers<[1], [0], [0], [1], [0, 0, 1, 1], [], []>} : vector<8x8xf32>, vector<8x1024xf32>, vector<8x1024xf32> -> vector<8x1024xf32>
    %71 = arith.addf %67, %70 : vector<8x1024xf32>
    %c48_66 = arith.constant 48 : index
    %c0_67 = arith.constant 0 : index
    %72 = vector.load %arg4[%c48_66, %c0_67] : memref<72x8xf32, #tpu.memory_space<vmem>>, vector<8x8xf32>
    %c0_68 = arith.constant 0 : index
    %c166 = arith.constant 166 : index
    %73 = vector.load %arg10[%c0_68, %c166] : memref<8x1280xf32, #tpu.memory_space<vmem>>, vector<8x1024xf32>
    %cst_69 = arith.constant dense<0.000000e+00> : vector<8x1024xf32>
    %74 = tpu.matmul %72, %73, %cst_69 {dimension_numbers = #tpu.dot_dimension_numbers<[1], [0], [0], [1], [0, 0, 1, 1], [], []>} : vector<8x8xf32>, vector<8x1024xf32>, vector<8x1024xf32> -> vector<8x1024xf32>
    %75 = arith.addf %71, %74 : vector<8x1024xf32>
    %c56_70 = arith.constant 56 : index
    %c0_71 = arith.constant 0 : index
    %76 = vector.load %arg4[%c56_70, %c0_71] : memref<72x8xf32, #tpu.memory_space<vmem>>, vector<8x8xf32>
    %c0_72 = arith.constant 0 : index
    %c168 = arith.constant 168 : index
    %77 = vector.load %arg10[%c0_72, %c168] : memref<8x1280xf32, #tpu.memory_space<vmem>>, vector<8x1024xf32>
    %cst_73 = arith.constant dense<0.000000e+00> : vector<8x1024xf32>
    %78 = tpu.matmul %76, %77, %cst_73 {dimension_numbers = #tpu.dot_dimension_numbers<[1], [0], [0], [1], [0, 0, 1, 1], [], []>} : vector<8x8xf32>, vector<8x1024xf32>, vector<8x1024xf32> -> vector<8x1024xf32>
    %79 = arith.addf %75, %78 : vector<8x1024xf32>
    %c64_74 = arith.constant 64 : index
    %c0_75 = arith.constant 0 : index
    %80 = vector.load %arg4[%c64_74, %c0_75] : memref<72x8xf32, #tpu.memory_space<vmem>>, vector<8x8xf32>
    %c0_76 = arith.constant 0 : index
    %c170 = arith.constant 170 : index
    %81 = vector.load %arg10[%c0_76, %c170] : memref<8x1280xf32, #tpu.memory_space<vmem>>, vector<8x1024xf32>
    %cst_77 = arith.constant dense<0.000000e+00> : vector<8x1024xf32>
    %82 = tpu.matmul %80, %81, %cst_77 {dimension_numbers = #tpu.dot_dimension_numbers<[1], [0], [0], [1], [0, 0, 1, 1], [], []>} : vector<8x8xf32>, vector<8x1024xf32>, vector<8x1024xf32> -> vector<8x1024xf32>
    %83 = arith.addf %79, %82 : vector<8x1024xf32>
    %c0_78 = arith.constant 0 : index
    %c0_79 = arith.constant 0 : index
    %84 = vector.load %arg5[%c0_78, %c0_79] : memref<8x1xf32, #tpu.memory_space<vmem>>, vector<8x1xf32>
    %85 = vector.broadcast %84 : vector<8x1xf32> to vector<8x1024xf32>
    %86 = arith.addf %83, %85 : vector<8x1024xf32>
    %87 = arith.mulf %86, %8 : vector<8x1024xf32>
    %c0_80 = arith.constant 0 : index
    %c128_81 = arith.constant 128 : index
    %88 = vector.load %arg10[%c0_80, %c128_81] : memref<8x1280xf32, #tpu.memory_space<vmem>>, vector<8x1024xf32>
    tpu.vector_store %arg10[%c0_80, %c128_81], %87 {strides = array<i32>} : memref<8x1280xf32, #tpu.memory_space<vmem>>, vector<8x1024xf32>,
    %c0_82 = arith.constant 0 : index
    %c0_83 = arith.constant 0 : index
    %89 = vector.load %arg6[%c0_82, %c0_83] : memref<72x8xf32, #tpu.memory_space<vmem>>, vector<8x8xf32>
    %c0_84 = arith.constant 0 : index
    %c107_85 = arith.constant 107 : index
    %90 = vector.load %arg10[%c0_84, %c107_85] : memref<8x1280xf32, #tpu.memory_space<vmem>>, vector<8x1024xf32>
    %cst_86 = arith.constant dense<0.000000e+00> : vector<8x1024xf32>
    %91 = tpu.matmul %89, %90, %cst_86 {dimension_numbers = #tpu.dot_dimension_numbers<[1], [0], [0], [1], [0, 0, 1, 1], [], []>} : vector<8x8xf32>, vector<8x1024xf32>, vector<8x1024xf32> -> vector<8x1024xf32>
    %c8_87 = arith.constant 8 : index
    %c0_88 = arith.constant 0 : index
    %92 = vector.load %arg6[%c8_87, %c0_88] : memref<72x8xf32, #tpu.memory_space<vmem>>, vector<8x8xf32>
    %c0_89 = arith.constant 0 : index
    %c108_90 = arith.constant 108 : index
    %93 = vector.load %arg10[%c0_89, %c108_90] : memref<8x1280xf32, #tpu.memory_space<vmem>>, vector<8x1024xf32>
    %cst_91 = arith.constant dense<0.000000e+00> : vector<8x1024xf32>
    %94 = tpu.matmul %92, %93, %cst_91 {dimension_numbers = #tpu.dot_dimension_numbers<[1], [0], [0], [1], [0, 0, 1, 1], [], []>} : vector<8x8xf32>, vector<8x1024xf32>, vector<8x1024xf32> -> vector<8x1024xf32>
    %95 = arith.addf %91, %94 : vector<8x1024xf32>
    %c16_92 = arith.constant 16 : index
    %c0_93 = arith.constant 0 : index
    %96 = vector.load %arg6[%c16_92, %c0_93] : memref<72x8xf32, #tpu.memory_space<vmem>>, vector<8x8xf32>
    %c0_94 = arith.constant 0 : index
    %c109_95 = arith.constant 109 : index
    %97 = vector.load %arg10[%c0_94, %c109_95] : memref<8x1280xf32, #tpu.memory_space<vmem>>, vector<8x1024xf32>
    %cst_96 = arith.constant dense<0.000000e+00> : vector<8x1024xf32>
    %98 = tpu.matmul %96, %97, %cst_96 {dimension_numbers = #tpu.dot_dimension_numbers<[1], [0], [0], [1], [0, 0, 1, 1], [], []>} : vector<8x8xf32>, vector<8x1024xf32>, vector<8x1024xf32> -> vector<8x1024xf32>
    %99 = arith.addf %95, %98 : vector<8x1024xf32>
    %c24_97 = arith.constant 24 : index
    %c0_98 = arith.constant 0 : index
    %100 = vector.load %arg6[%c24_97, %c0_98] : memref<72x8xf32, #tpu.memory_space<vmem>>, vector<8x8xf32>
    %c0_99 = arith.constant 0 : index
    %c127_100 = arith.constant 127 : index
    %101 = vector.load %arg10[%c0_99, %c127_100] : memref<8x1280xf32, #tpu.memory_space<vmem>>, vector<8x1024xf32>
    %cst_101 = arith.constant dense<0.000000e+00> : vector<8x1024xf32>
    %102 = tpu.matmul %100, %101, %cst_101 {dimension_numbers = #tpu.dot_dimension_numbers<[1], [0], [0], [1], [0, 0, 1, 1], [], []>} : vector<8x8xf32>, vector<8x1024xf32>, vector<8x1024xf32> -> vector<8x1024xf32>
    %103 = arith.addf %99, %102 : vector<8x1024xf32>
    %c32_102 = arith.constant 32 : index
    %c0_103 = arith.constant 0 : index
    %104 = vector.load %arg6[%c32_102, %c0_103] : memref<72x8xf32, #tpu.memory_space<vmem>>, vector<8x8xf32>
    %c0_104 = arith.constant 0 : index
    %c128_105 = arith.constant 128 : index
    %105 = vector.load %arg10[%c0_104, %c128_105] : memref<8x1280xf32, #tpu.memory_space<vmem>>, vector<8x1024xf32>
    %cst_106 = arith.constant dense<0.000000e+00> : vector<8x1024xf32>
    %106 = tpu.matmul %104, %105, %cst_106 {dimension_numbers = #tpu.dot_dimension_numbers<[1], [0], [0], [1], [0, 0, 1, 1], [], []>} : vector<8x8xf32>, vector<8x1024xf32>, vector<8x1024xf32> -> vector<8x1024xf32>
    %107 = arith.addf %103, %106 : vector<8x1024xf32>
    %c40_107 = arith.constant 40 : index
    %c0_108 = arith.constant 0 : index
    %108 = vector.load %arg6[%c40_107, %c0_108] : memref<72x8xf32, #tpu.memory_space<vmem>>, vector<8x8xf32>
    %c0_109 = arith.constant 0 : index
    %c129_110 = arith.constant 129 : index
    %109 = vector.load %arg10[%c0_109, %c129_110] : memref<8x1280xf32, #tpu.memory_space<vmem>>, vector<8x1024xf32>
    %cst_111 = arith.constant dense<0.000000e+00> : vector<8x1024xf32>
    %110 = tpu.matmul %108, %109, %cst_111 {dimension_numbers = #tpu.dot_dimension_numbers<[1], [0], [0], [1], [0, 0, 1, 1], [], []>} : vector<8x8xf32>, vector<8x1024xf32>, vector<8x1024xf32> -> vector<8x1024xf32>
    %111 = arith.addf %107, %110 : vector<8x1024xf32>
    %c48_112 = arith.constant 48 : index
    %c0_113 = arith.constant 0 : index
    %112 = vector.load %arg6[%c48_112, %c0_113] : memref<72x8xf32, #tpu.memory_space<vmem>>, vector<8x8xf32>
    %c0_114 = arith.constant 0 : index
    %c147_115 = arith.constant 147 : index
    %113 = vector.load %arg10[%c0_114, %c147_115] : memref<8x1280xf32, #tpu.memory_space<vmem>>, vector<8x1024xf32>
    %cst_116 = arith.constant dense<0.000000e+00> : vector<8x1024xf32>
    %114 = tpu.matmul %112, %113, %cst_116 {dimension_numbers = #tpu.dot_dimension_numbers<[1], [0], [0], [1], [0, 0, 1, 1], [], []>} : vector<8x8xf32>, vector<8x1024xf32>, vector<8x1024xf32> -> vector<8x1024xf32>
    %115 = arith.addf %111, %114 : vector<8x1024xf32>
    %c56_117 = arith.constant 56 : index
    %c0_118 = arith.constant 0 : index
    %116 = vector.load %arg6[%c56_117, %c0_118] : memref<72x8xf32, #tpu.memory_space<vmem>>, vector<8x8xf32>
    %c0_119 = arith.constant 0 : index
    %c148_120 = arith.constant 148 : index
    %117 = vector.load %arg10[%c0_119, %c148_120] : memref<8x1280xf32, #tpu.memory_space<vmem>>, vector<8x1024xf32>
    %cst_121 = arith.constant dense<0.000000e+00> : vector<8x1024xf32>
    %118 = tpu.matmul %116, %117, %cst_121 {dimension_numbers = #tpu.dot_dimension_numbers<[1], [0], [0], [1], [0, 0, 1, 1], [], []>} : vector<8x8xf32>, vector<8x1024xf32>, vector<8x1024xf32> -> vector<8x1024xf32>
    %119 = arith.addf %115, %118 : vector<8x1024xf32>
    %c64_122 = arith.constant 64 : index
    %c0_123 = arith.constant 0 : index
    %120 = vector.load %arg6[%c64_122, %c0_123] : memref<72x8xf32, #tpu.memory_space<vmem>>, vector<8x8xf32>
    %c0_124 = arith.constant 0 : index
    %c149_125 = arith.constant 149 : index
    %121 = vector.load %arg10[%c0_124, %c149_125] : memref<8x1280xf32, #tpu.memory_space<vmem>>, vector<8x1024xf32>
    %cst_126 = arith.constant dense<0.000000e+00> : vector<8x1024xf32>
    %122 = tpu.matmul %120, %121, %cst_126 {dimension_numbers = #tpu.dot_dimension_numbers<[1], [0], [0], [1], [0, 0, 1, 1], [], []>} : vector<8x8xf32>, vector<8x1024xf32>, vector<8x1024xf32> -> vector<8x1024xf32>
    %123 = arith.addf %119, %122 : vector<8x1024xf32>
    %c0_127 = arith.constant 0 : index
    %c0_128 = arith.constant 0 : index
    %124 = vector.load %arg7[%c0_127, %c0_128] : memref<8x1xf32, #tpu.memory_space<vmem>>, vector<8x1xf32>
    %125 = vector.broadcast %124 : vector<8x1xf32> to vector<8x1024xf32>
    %126 = arith.addf %123, %125 : vector<8x1024xf32>
    %127 = arith.addf %4, %126 : vector<8x1024xf32>
    %c0_129 = arith.constant 0 : index
    %c0_130 = arith.constant 0 : index
    %c0_131 = arith.constant 0 : index
    %128 = vector.load %arg9[%c0_129, %c0_130, %c0_131] : memref<1x8x1024xf32, #tpu.memory_space<vmem>>, vector<1x8x1024xf32>
    %129 = vector.shape_cast %128 : vector<1x8x1024xf32> to vector<8x1024xf32>
    %130 = vector.shape_cast %127 : vector<8x1024xf32> to vector<1x8x1024xf32>
    tpu.vector_store %arg9[%c0_129, %c0_130, %c0_131], %130 {strides = array<i32>} : memref<1x8x1024xf32, #tpu.memory_space<vmem>>, vector<1x8x1024xf32>,
    return
  }
  func.func @transform_0(%arg0: i32) -> (i32, i32, i32) {
    %c0_i32 = arith.constant 0 : i32
    %c0_i32_0 = arith.constant 0 : i32
    %c0_i32_1 = arith.constant 0 : i32
    return %arg0, %c0_i32, %c0_i32_0 : i32, i32, i32
  }
  func.func @transform_1(%arg0: i32) -> (i32, i32) {
    %c0_i32 = arith.constant 0 : i32
    %c0_i32_0 = arith.constant 0 : i32
    %c0_i32_1 = arith.constant 0 : i32
    return %c0_i32, %c0_i32_0 : i32, i32
  }
  func.func @transform_2(%arg0: i32) -> (i32, i32) {
    %c0_i32 = arith.constant 0 : i32
    %c0_i32_0 = arith.constant 0 : i32
    %c0_i32_1 = arith.constant 0 : i32
    return %c0_i32, %c0_i32_0 : i32, i32
  }
  func.func @transform_3(%arg0: i32) -> (i32, i32) {
    %c0_i32 = arith.constant 0 : i32
    %c0_i32_0 = arith.constant 0 : i32
    %c0_i32_1 = arith.constant 0 : i32
    return %c0_i32, %c0_i32_0 : i32, i32
  }
  func.func @transform_4(%arg0: i32) -> (i32, i32) {
    %c0_i32 = arith.constant 0 : i32
    %c0_i32_0 = arith.constant 0 : i32
    %c0_i32_1 = arith.constant 0 : i32
    return %c0_i32, %c0_i32_0 : i32, i32
  }
  func.func @transform_5(%arg0: i32) -> (i32, i32) {
    %c0_i32 = arith.constant 0 : i32
    %c0_i32_0 = arith.constant 0 : i32
    %c0_i32_1 = arith.constant 0 : i32
    return %c0_i32, %c0_i32_0 : i32, i32
  }
  func.func @transform_6(%arg0: i32) -> (i32, i32) {
    %c0_i32 = arith.constant 0 : i32
    %c0_i32_0 = arith.constant 0 : i32
    %c0_i32_1 = arith.constant 0 : i32
    return %c0_i32, %c0_i32_0 : i32, i32
  }
  func.func @transform_7(%arg0: i32) -> (i32, i32) {
    %c0_i32 = arith.constant 0 : i32
    %c0_i32_0 = arith.constant 0 : i32
    %c0_i32_1 = arith.constant 0 : i32
    return %c0_i32, %c0_i32_0 : i32, i32
  }
  func.func @transform_8(%arg0: i32) -> (i32, i32, i32) {
    %c0_i32 = arith.constant 0 : i32
    %c0_i32_0 = arith.constant 0 : i32
    %c0_i32_1 = arith.constant 0 : i32
    return %arg0, %c0_i32, %c0_i32_0 : i32, i32, i32
  }
}

</mosaic_0001>

<llo_original>
// kernel: tpu_custom_call.1
$region0: #{tpu_custom_call.1}
  #allocation0 [shape = 'u32[]', space=smem, size = 0x4, offset = 0x4, fixed_abs, tag = 'smem constant byte address 0x4 - core index']
  #allocation1 [shape = 'u32[144,128]{1,0:T(1,128)}', space=vmem, size = 0x12000, scoped, tag = 'internal scratch']
  #allocation2 [shape = 'f32[8,1280]{1,0:T(8,128)}', space=vmem, size = 0xa000, scoped, tag = 'scratch operand']
  %s0 = inlined_call_operand.vmem [shape: f32[1,8,1024], index: 0, kind: input, shape index: {}]
  %s1 = inlined_call_operand.vmem [shape: f32[72,8], index: 1, kind: input, shape index: {}]
  %s2 = inlined_call_operand.vmem [shape: f32[8,1], index: 2, kind: input, shape index: {}]
  %s3 = inlined_call_operand.vmem [shape: f32[72,8], index: 3, kind: input, shape index: {}]
  %s4 = inlined_call_operand.vmem [shape: f32[8,1], index: 4, kind: input, shape index: {}]
  %s5 = inlined_call_operand.vmem [shape: f32[72,8], index: 5, kind: input, shape index: {}]
  %s6 = inlined_call_operand.vmem [shape: f32[8,1], index: 6, kind: input, shape index: {}]
  %s7 = inlined_call_operand.vmem [shape: f32[1,1024], index: 7, kind: input, shape index: {}]
  %s8 = inlined_call_operand.hbm [shape: f32[1,8,1024], index: 8, kind: output, shape index: {}]
  %s9 = sld [smem:[#allocation0]]
  $region42: #{tpu_custom_call.1} parent=0
    _
  %s11 = ssub.s32 1, %s9
  %s12 = scalar_select 0, %s11, %s9
  $region1: #{tpu_custom_call.1} parent=0
    #allocation3 [shape = 'u8[32768]{0}', space=vmem, size = 0x8000, scoped, tag = 'output window, operand 0, single buffered']
    #allocation4 [shape = 's32[1]{0}', space=sflag, size = 0x4, scoped, tag = 'scoped memory for tpu_custom_call.1']
    %13 = vsyncpa [#allocation4], 0
    // Predicated region
    $region2: #{tpu_custom_call.1} parent=1 // pred_check
      _
    $region3: #{tpu_custom_call.1} parent=1 // pred_check_branch
      %15 = sbr.rel (0) target = $region5
    $region4: #{tpu_custom_call.1} parent=1 // pred_region
      _
    $region5: #{tpu_custom_call.1} parent=1 // pred_fallthru
      _
    // Predicated region
    $region6: #{tpu_custom_call.1} parent=1 // pred_check
      _
    $region7: #{tpu_custom_call.1} parent=1 // pred_check_branch
      %17 = sbr.rel (0) target = $region9
    $region8: #{tpu_custom_call.1} parent=1 // pred_region
      _
    $region9: #{tpu_custom_call.1} parent=1 // pred_fallthru
      _
    // Predicated region
    $region10: #{tpu_custom_call.1} parent=1 // pred_check
      _
    $region11: #{tpu_custom_call.1} parent=1 // pred_check_branch
      %19 = sbr.rel (0) target = $region13
    $region12: #{tpu_custom_call.1} parent=1 // pred_region
      _
    $region13: #{tpu_custom_call.1} parent=1 // pred_fallthru
      _
    // Predicated region
    $region14: #{tpu_custom_call.1} parent=1 // pred_check
      _
    $region15: #{tpu_custom_call.1} parent=1 // pred_check_branch
      %21 = sbr.rel (0) target = $region17
    $region16: #{tpu_custom_call.1} parent=1 // pred_region
      _
    $region17: #{tpu_custom_call.1} parent=1 // pred_fallthru
      _
    // Predicated region
    $region18: #{tpu_custom_call.1} parent=1 // pred_check
      _
    $region19: #{tpu_custom_call.1} parent=1 // pred_check_branch
      %23 = sbr.rel (0) target = $region21
    $region20: #{tpu_custom_call.1} parent=1 // pred_region
      _
    $region21: #{tpu_custom_call.1} parent=1 // pred_fallthru
      _
    // Predicated region
    $region22: #{tpu_custom_call.1} parent=1 // pred_check
      _
    $region23: #{tpu_custom_call.1} parent=1 // pred_check_branch
      %25 = sbr.rel (0) target = $region25
    $region24: #{tpu_custom_call.1} parent=1 // pred_region
      _
    $region25: #{tpu_custom_call.1} parent=1 // pred_fallthru
      _
    // Predicated region
    $region26: #{tpu_custom_call.1} parent=1 // pred_check
      _
    $region27: #{tpu_custom_call.1} parent=1 // pred_check_branch
      %27 = sbr.rel (0) target = $region29
    $region28: #{tpu_custom_call.1} parent=1 // pred_region
      _
    $region29: #{tpu_custom_call.1} parent=1 // pred_fallthru
      _
    // Predicated region
    $region30: #{tpu_custom_call.1} parent=1 // pred_check
      _
    $region31: #{tpu_custom_call.1} parent=1 // pred_check_branch
      %29 = sbr.rel (0) target = $region33
    $region32: #{tpu_custom_call.1} parent=1 // pred_region
      _
    $region33: #{tpu_custom_call.1} parent=1 // pred_fallthru
      _
    %30 = vst [vmem:[#allocation2] sm:$0xff] 0.0
    %31 = vst [vmem:[#allocation2 + $0x48] sm:$0xff] 0.0
    %v32 = vld [vmem:[%s0] sm:$0xff]
    %v33 = vld [vmem:[%s0 + $0x8] sm:$0xff]
    %v34 = vld [vmem:[%s0 + $0x10] sm:$0xff]
    %v35 = vld [vmem:[%s0 + $0x18] sm:$0xff]
    %v36 = vld [vmem:[%s0 + $0x20] sm:$0xff]
    %v37 = vld [vmem:[%s0 + $0x28] sm:$0xff]
    %v38 = vld [vmem:[%s0 + $0x30] sm:$0xff]
    %v39 = vld [vmem:[%s0 + $0x38] sm:$0xff]
    %40 = vst [vmem:[#allocation2 + $0x8] sm:$0xff] %v32
    %41 = vst [vmem:[#allocation2 + $0x10] sm:$0xff] %v33
    %42 = vst [vmem:[#allocation2 + $0x18] sm:$0xff] %v34
    %43 = vst [vmem:[#allocation2 + $0x20] sm:$0xff] %v35
    %44 = vst [vmem:[#allocation2 + $0x28] sm:$0xff] %v36
    %45 = vst [vmem:[#allocation2 + $0x30] sm:$0xff] %v37
    %46 = vst [vmem:[#allocation2 + $0x38] sm:$0xff] %v38
    %47 = vst [vmem:[#allocation2 + $0x40] sm:$0xff] %v39
    %v48 = vld [vmem:[%s7] sm:$0xff]
    %v50 = vlaneseq
    %v51 = vshrl.u32 %v50, 7
    %v52 = vsub.s32 0, %v51
    %v53 = vrot.slane %v48, %v52
    %v54 = vlaneseq
    %v55 = vshrl.u32 %v54, 7
    %v56 = vsub.s32 1, %v55
    %v57 = vrot.slane %v48, %v56
    %v58 = vlaneseq
    %v59 = vshrl.u32 %v58, 7
    %v60 = vsub.s32 2, %v59
    %v61 = vrot.slane %v48, %v60
    %v62 = vlaneseq
    %v63 = vshrl.u32 %v62, 7
    %v64 = vsub.s32 3, %v63
    %v65 = vrot.slane %v48, %v64
    %v66 = vlaneseq
    %v67 = vshrl.u32 %v66, 7
    %v68 = vsub.s32 4, %v67
    %v69 = vrot.slane %v48, %v68
    %v70 = vlaneseq
    %v71 = vshrl.u32 %v70, 7
    %v72 = vsub.s32 5, %v71
    %v73 = vrot.slane %v48, %v72
    %v74 = vlaneseq
    %v75 = vshrl.u32 %v74, 7
    %v76 = vsub.s32 6, %v75
    %v77 = vrot.slane %v48, %v76
    %v78 = vlaneseq
    %v79 = vshrl.u32 %v78, 7
    %v80 = vsub.s32 7, %v79
    %v81 = vrot.slane %v48, %v80
    %v90 = vld [vmem:[%s1] sm:$0xff]
    %v91 = vld [vmem:[#allocation2] sm:$0xff]
    %v92 = vld [vmem:[#allocation2 + $0x8] sm:$0xff]
    %v93 = vld [vmem:[#allocation2 + $0x10] sm:$0xff]
    %v94 = vld [vmem:[#allocation2 + $0x18] sm:$0xff]
    %v95 = vld [vmem:[#allocation2 + $0x20] sm:$0xff]
    %v96 = vld [vmem:[#allocation2 + $0x28] sm:$0xff]
    %v97 = vld [vmem:[#allocation2 + $0x30] sm:$0xff]
    %v98 = vld [vmem:[#allocation2 + $0x38] sm:$0xff]
    %v99 = vld [vmem:[#allocation2 + $0x40] sm:$0xff]
    %v100 = vld [vmem:[%s1 + $0x8] sm:$0xff]
    %110 = vrot.lane.b32.xlu0 %v91, 20
    %v111 = vpop.permute.xlu0 %110
    %112 = vrot.lane.b32.xlu0 %v92, 20
    %v113 = vpop.permute.xlu0 %112
    %114 = vrot.lane.b32.xlu0 %v93, 20
    %v115 = vpop.permute.xlu0 %114
    %116 = vrot.lane.b32.xlu0 %v94, 20
    %v117 = vpop.permute.xlu0 %116
    %118 = vrot.lane.b32.xlu0 %v95, 20
    %v119 = vpop.permute.xlu0 %118
    %120 = vrot.lane.b32.xlu0 %v96, 20
    %v121 = vpop.permute.xlu0 %120
    %122 = vrot.lane.b32.xlu0 %v97, 20
    %v123 = vpop.permute.xlu0 %122
    %124 = vrot.lane.b32.xlu0 %v98, 20
    %v125 = vpop.permute.xlu0 %124
    %126 = vrot.lane.b32.xlu0 %v99, 20
    %v127 = vpop.permute.xlu0 %126
    %vm128 = vcmask 162816
    %v129 = vsel %vm128, %v111, %v113
    %v130 = vsel %vm128, %v113, %v115
    %v131 = vsel %vm128, %v115, %v117
    %v132 = vsel %vm128, %v117, %v119
    %v133 = vsel %vm128, %v119, %v121
    %v134 = vsel %vm128, %v121, %v123
    %v135 = vsel %vm128, %v123, %v125
    %v136 = vsel %vm128, %v125, %v127
    %vm145 = vcmask 64512
    %v147 = vsel %vm145, %v100, 0
    %149 = vmatprep.subr.mxu0 0.0
    %150 = vmatpush1.msra.mxu0 0.0
    %151 = vmatprep.subr.mxu0 0.0
    %152 = vmatpush1.msra.mxu0 0.0
    %153 = vmatprep.subr.mxu0 0.0
    %154 = vmatpush1.msra.mxu0 0.0
    %155 = vmatprep.subr.mxu0 0.0
    %156 = vmatpush1.msra.mxu0 0.0
    %157 = vmatprep.subr.mxu0 0.0
    %158 = vmatpush1.msra.mxu0 0.0
    %159 = vmatprep.subr.mxu0 0.0
    %160 = vmatpush1.msra.mxu0 0.0
    %161 = vmatprep.subr.mxu0 0.0
    %162 = vmatpush1.msra.mxu0 0.0
    %163 = vmatprep.subr.mxu0 0.0
    %164 = vmatpush1.msra.mxu0 0.0
    %165 = vmatprep.subr.mxu0 0.0
    %166 = vmatpush1.msra.mxu0 0.0
    %167 = vmatprep.subr.mxu0 0.0
    %168 = vmatpush1.msra.mxu0 0.0
    %169 = vmatprep.subr.mxu0 0.0
    %170 = vmatpush1.msra.mxu0 0.0
    %171 = vmatprep.subr.mxu0 0.0
    %172 = vmatpush1.msra.mxu0 0.0
    %173 = vmatprep.subr.mxu0 0.0
    %174 = vmatpush1.msra.mxu0 0.0
    %175 = vmatprep.subr.mxu0 0.0
    %176 = vmatpush1.msra.mxu0 0.0
    %177 = vmatprep.subr.mxu0 0.0
    %178 = vmatpush1.msra.mxu0 0.0
    %179 = vmatprep.subr.mxu0 %v130
    %180 = vmatpush1.msra.mxu0 %v129
    %181 = vmatprep.subr.mxu0 0.0
    %182 = vmatpush2.msra.mxu0 0.0
    %183 = vmatprep.subr.mxu0 0.0
    %184 = vmatpush2.msra.mxu0 0.0
    %185 = vmatprep.subr.mxu0 0.0
    %186 = vmatpush2.msra.mxu0 0.0
    %187 = vmatprep.subr.mxu0 0.0
    %188 = vmatpush2.msra.mxu0 0.0
    %189 = vmatprep.subr.mxu0 0.0
    %190 = vmatpush2.msra.mxu0 0.0
    %191 = vmatprep.subr.mxu0 0.0
    %192 = vmatpush2.msra.mxu0 0.0
    %193 = vmatprep.subr.mxu0 0.0
    %194 = vmatpush2.msra.mxu0 0.0
    %195 = vmatprep.subr.mxu0 0.0
    %196 = vmatpush2.msra.mxu0 0.0
    %197 = vmatprep.subr.mxu0 0.0
    %198 = vmatpush2.msra.mxu0 0.0
    %199 = vmatprep.subr.mxu0 0.0
    %200 = vmatpush2.msra.mxu0 0.0
    %201 = vmatprep.subr.mxu0 0.0
    %202 = vmatpush2.msra.mxu0 0.0
    %203 = vmatprep.subr.mxu0 0.0
    %204 = vmatpush2.msra.mxu0 0.0
    %205 = vmatprep.subr.mxu0 0.0
    %206 = vmatpush2.msra.mxu0 0.0
    %207 = vmatprep.subr.mxu0 0.0
    %208 = vmatpush2.msra.mxu0 0.0
    %209 = vmatprep.subr.mxu0 0.0
    %210 = vmatpush2.msra.mxu0 0.0
    %211 = vmatprep.subr.mxu0 0.0
    %212 = vmatpush2.msra.mxu0 0.0
    %213 = vmatprep.mubr.f32.mxu0 0.0
    %214 = vmatmul.mubr.f32.gmra.mxu0 %v147
    %v215 = vpop.f32.mrf.mxu0
    %v216 = vadd.f32 0.0, %v215
    %v217 = vpop.f32.mrf.mxu0
    %v218 = vadd.f32 0.0, %v217
    %219 = vdwg.mxu0
    %220 = vmatprep.subr.mxu0 0.0
    %221 = vmatpush1.msra.mxu0 0.0
    %222 = vmatprep.subr.mxu0 0.0
    %223 = vmatpush1.msra.mxu0 0.0
    %224 = vmatprep.subr.mxu0 0.0
    %225 = vmatpush1.msra.mxu0 0.0
    %226 = vmatprep.subr.mxu0 0.0
    %227 = vmatpush1.msra.mxu0 0.0
    %228 = vmatprep.subr.mxu0 0.0
    %229 = vmatpush1.msra.mxu0 0.0
    %230 = vmatprep.subr.mxu0 0.0
    %231 = vmatpush1.msra.mxu0 0.0
    %232 = vmatprep.subr.mxu0 0.0
    %233 = vmatpush1.msra.mxu0 0.0
    %234 = vmatprep.subr.mxu0 0.0
    %235 = vmatpush1.msra.mxu0 0.0
    %236 = vmatprep.subr.mxu0 0.0
    %237 = vmatpush1.msra.mxu0 0.0
    %238 = vmatprep.subr.mxu0 0.0
    %239 = vmatpush1.msra.mxu0 0.0
    %240 = vmatprep.subr.mxu0 0.0
    %241 = vmatpush1.msra.mxu0 0.0
    %242 = vmatprep.subr.mxu0 0.0
    %243 = vmatpush1.msra.mxu0 0.0
    %244 = vmatprep.subr.mxu0 0.0
    %245 = vmatpush1.msra.mxu0 0.0
    %246 = vmatprep.subr.mxu0 0.0
    %247 = vmatpush1.msra.mxu0 0.0
    %248 = vmatprep.subr.mxu0 0.0
    %249 = vmatpush1.msra.mxu0 0.0
    %250 = vmatprep.subr.mxu0 %v132
    %251 = vmatpush1.msra.mxu0 %v131
    %252 = vmatprep.subr.mxu0 0.0
    %253 = vmatpush2.msra.mxu0 0.0
    %254 = vmatprep.subr.mxu0 0.0
    %255 = vmatpush2.msra.mxu0 0.0
    %256 = vmatprep.subr.mxu0 0.0
    %257 = vmatpush2.msra.mxu0 0.0
    %258 = vmatprep.subr.mxu0 0.0
    %259 = vmatpush2.msra.mxu0 0.0
    %260 = vmatprep.subr.mxu0 0.0
    %261 = vmatpush2.msra.mxu0 0.0
    %262 = vmatprep.subr.mxu0 0.0
    %263 = vmatpush2.msra.mxu0 0.0
    %264 = vmatprep.subr.mxu0 0.0
    %265 = vmatpush2.msra.mxu0 0.0
    %266 = vmatprep.subr.mxu0 0.0
    %267 = vmatpush2.msra.mxu0 0.0
    %268 = vmatprep.subr.mxu0 0.0
    %269 = vmatpush2.msra.mxu0 0.0
    %270 = vmatprep.subr.mxu0 0.0
    %271 = vmatpush2.msra.mxu0 0.0
    %272 = vmatprep.subr.mxu0 0.0
    %273 = vmatpush2.msra.mxu0 0.0
    %274 = vmatprep.subr.mxu0 0.0
    %275 = vmatpush2.msra.mxu0 0.0
    %276 = vmatprep.subr.mxu0 0.0
    %277 = vmatpush2.msra.mxu0 0.0
    %278 = vmatprep.subr.mxu0 0.0
    %279 = vmatpush2.msra.mxu0 0.0
    %280 = vmatprep.subr.mxu0 0.0
    %281 = vmatpush2.msra.mxu0 0.0
    %282 = vmatprep.subr.mxu0 0.0
    %283 = vmatpush2.msra.mxu0 0.0
    %284 = vmatprep.mubr.f32.mxu0 0.0
    %285 = vmatmul.mubr.f32.gmra.mxu0 %v147
    %v286 = vpop.f32.mrf.mxu0
    %v287 = vadd.f32 0.0, %v286
    %v288 = vpop.f32.mrf.mxu0
    %v289 = vadd.f32 0.0, %v288
    %290 = vdwg.mxu0
    %291 = vmatprep.subr.mxu0 0.0
    %292 = vmatpush1.msra.mxu0 0.0
    %293 = vmatprep.subr.mxu0 0.0
    %294 = vmatpush1.msra.mxu0 0.0
    %295 = vmatprep.subr.mxu0 0.0
    %296 = vmatpush1.msra.mxu0 0.0
    %297 = vmatprep.subr.mxu0 0.0
    %298 = vmatpush1.msra.mxu0 0.0
    %299 = vmatprep.subr.mxu0 0.0
    %300 = vmatpush1.msra.mxu0 0.0
    %301 = vmatprep.subr.mxu0 0.0
    %302 = vmatpush1.msra.mxu0 0.0
    %303 = vmatprep.subr.mxu0 0.0
    %304 = vmatpush1.msra.mxu0 0.0
    %305 = vmatprep.subr.mxu0 0.0
    %306 = vmatpush1.msra.mxu0 0.0
    %307 = vmatprep.subr.mxu0 0.0
    %308 = vmatpush1.msra.mxu0 0.0
    %309 = vmatprep.subr.mxu0 0.0
    %310 = vmatpush1.msra.mxu0 0.0
    %311 = vmatprep.subr.mxu0 0.0
    %312 = vmatpush1.msra.mxu0 0.0
    %313 = vmatprep.subr.mxu0 0.0
    %314 = vmatpush1.msra.mxu0 0.0
    %315 = vmatprep.subr.mxu0 0.0
    %316 = vmatpush1.msra.mxu0 0.0
    %317 = vmatprep.subr.mxu0 0.0
    %318 = vmatpush1.msra.mxu0 0.0
    %319 = vmatprep.subr.mxu0 0.0
    %320 = vmatpush1.msra.mxu0 0.0
    %321 = vmatprep.subr.mxu0 %v134
    %322 = vmatpush1.msra.mxu0 %v133
    %323 = vmatprep.subr.mxu0 0.0
    %324 = vmatpush2.msra.mxu0 0.0
    %325 = vmatprep.subr.mxu0 0.0
    %326 = vmatpush2.msra.mxu0 0.0
    %327 = vmatprep.subr.mxu0 0.0
    %328 = vmatpush2.msra.mxu0 0.0
    %329 = vmatprep.subr.mxu0 0.0
    %330 = vmatpush2.msra.mxu0 0.0
    %331 = vmatprep.subr.mxu0 0.0
    %332 = vmatpush2.msra.mxu0 0.0
    %333 = vmatprep.subr.mxu0 0.0
    %334 = vmatpush2.msra.mxu0 0.0
    %335 = vmatprep.subr.mxu0 0.0
    %336 = vmatpush2.msra.mxu0 0.0
    %337 = vmatprep.subr.mxu0 0.0
    %338 = vmatpush2.msra.mxu0 0.0
    %339 = vmatprep.subr.mxu0 0.0
    %340 = vmatpush2.msra.mxu0 0.0
    %341 = vmatprep.subr.mxu0 0.0
    %342 = vmatpush2.msra.mxu0 0.0
    %343 = vmatprep.subr.mxu0 0.0
    %344 = vmatpush2.msra.mxu0 0.0
    %345 = vmatprep.subr.mxu0 0.0
    %346 = vmatpush2.msra.mxu0 0.0
    %347 = vmatprep.subr.mxu0 0.0
    %348 = vmatpush2.msra.mxu0 0.0
    %349 = vmatprep.subr.mxu0 0.0
    %350 = vmatpush2.msra.mxu0 0.0
    %351 = vmatprep.subr.mxu0 0.0
    %352 = vmatpush2.msra.mxu0 0.0
    %353 = vmatprep.subr.mxu0 0.0
    %354 = vmatpush2.msra.mxu0 0.0
    %355 = vmatprep.mubr.f32.mxu0 0.0
    %356 = vmatmul.mubr.f32.gmra.mxu0 %v147
    %v357 = vpop.f32.mrf.mxu0
    %v358 = vadd.f32 0.0, %v357
    %v359 = vpop.f32.mrf.mxu0
    %v360 = vadd.f32 0.0, %v359
    %361 = vdwg.mxu0
    %362 = vmatprep.subr.mxu0 0.0
    %363 = vmatpush1.msra.mxu0 0.0
    %364 = vmatprep.subr.mxu0 0.0
    %365 = vmatpush1.msra.mxu0 0.0
    %366 = vmatprep.subr.mxu0 0.0
    %367 = vmatpush1.msra.mxu0 0.0
    %368 = vmatprep.subr.mxu0 0.0
    %369 = vmatpush1.msra.mxu0 0.0
    %370 = vmatprep.subr.mxu0 0.0
    %371 = vmatpush1.msra.mxu0 0.0
    %372 = vmatprep.subr.mxu0 0.0
    %373 = vmatpush1.msra.mxu0 0.0
    %374 = vmatprep.subr.mxu0 0.0
    %375 = vmatpush1.msra.mxu0 0.0
    %376 = vmatprep.subr.mxu0 0.0
    %377 = vmatpush1.msra.mxu0 0.0
    %378 = vmatprep.subr.mxu0 0.0
    %379 = vmatpush1.msra.mxu0 0.0
    %380 = vmatprep.subr.mxu0 0.0
    %381 = vmatpush1.msra.mxu0 0.0
    %382 = vmatprep.subr.mxu0 0.0
    %383 = vmatpush1.msra.mxu0 0.0
    %384 = vmatprep.subr.mxu0 0.0
    %385 = vmatpush1.msra.mxu0 0.0
    %386 = vmatprep.subr.mxu0 0.0
    %387 = vmatpush1.msra.mxu0 0.0
    %388 = vmatprep.subr.mxu0 0.0
    %389 = vmatpush1.msra.mxu0 0.0
    %390 = vmatprep.subr.mxu0 0.0
    %391 = vmatpush1.msra.mxu0 0.0
    %392 = vmatprep.subr.mxu0 %v136
    %393 = vmatpush1.msra.mxu0 %v135
    %394 = vmatprep.subr.mxu0 0.0
    %395 = vmatpush2.msra.mxu0 0.0
    %396 = vmatprep.subr.mxu0 0.0
    %397 = vmatpush2.msra.mxu0 0.0
    %398 = vmatprep.subr.mxu0 0.0
    %399 = vmatpush2.msra.mxu0 0.0
    %400 = vmatprep.subr.mxu0 0.0
    %401 = vmatpush2.msra.mxu0 0.0
    %402 = vmatprep.subr.mxu0 0.0
    %403 = vmatpush2.msra.mxu0 0.0
    %404 = vmatprep.subr.mxu0 0.0
    %405 = vmatpush2.msra.mxu0 0.0
    %406 = vmatprep.subr.mxu0 0.0
    %407 = vmatpush2.msra.mxu0 0.0
    %408 = vmatprep.subr.mxu0 0.0
    %409 = vmatpush2.msra.mxu0 0.0
    %410 = vmatprep.subr.mxu0 0.0
    %411 = vmatpush2.msra.mxu0 0.0
    %412 = vmatprep.subr.mxu0 0.0
    %413 = vmatpush2.msra.mxu0 0.0
    %414 = vmatprep.subr.mxu0 0.0
    %415 = vmatpush2.msra.mxu0 0.0
    %416 = vmatprep.subr.mxu0 0.0
    %417 = vmatpush2.msra.mxu0 0.0
    %418 = vmatprep.subr.mxu0 0.0
    %419 = vmatpush2.msra.mxu0 0.0
    %420 = vmatprep.subr.mxu0 0.0
    %421 = vmatpush2.msra.mxu0 0.0
    %422 = vmatprep.subr.mxu0 0.0
    %423 = vmatpush2.msra.mxu0 0.0
    %424 = vmatprep.subr.mxu0 0.0
    %425 = vmatpush2.msra.mxu0 0.0
    %426 = vmatprep.mubr.f32.mxu0 0.0
    %427 = vmatmul.mubr.f32.gmra.mxu0 %v147
    %v428 = vpop.f32.mrf.mxu0
    %v429 = vadd.f32 0.0, %v428
    %v430 = vpop.f32.mrf.mxu0
    %v431 = vadd.f32 0.0, %v430
    %432 = vdwg.mxu0
    %433 = vrot.lane.b32.xlu0 %v91, 21
    %v434 = vpop.permute.xlu0 %433
    %435 = vrot.lane.b32.xlu0 %v92, 21
    %v436 = vpop.permute.xlu0 %435
    %437 = vrot.lane.b32.xlu0 %v93, 21
    %v438 = vpop.permute.xlu0 %437
    %439 = vrot.lane.b32.xlu0 %v94, 21
    %v440 = vpop.permute.xlu0 %439
    %441 = vrot.lane.b32.xlu0 %v95, 21
    %v442 = vpop.permute.xlu0 %441
    %443 = vrot.lane.b32.xlu0 %v96, 21
    %v444 = vpop.permute.xlu0 %443
    %445 = vrot.lane.b32.xlu0 %v97, 21
    %v446 = vpop.permute.xlu0 %445
    %447 = vrot.lane.b32.xlu0 %v98, 21
    %v448 = vpop.permute.xlu0 %447
    %449 = vrot.lane.b32.xlu0 %v99, 21
    %v450 = vpop.permute.xlu0 %449
    %vm451 = vcmask 171008
    %v452 = vsel %vm451, %v434, %v436
    %v453 = vsel %vm451, %v436, %v438
    %v454 = vsel %vm451, %v438, %v440
    %v455 = vsel %vm451, %v440, %v442
    %v456 = vsel %vm451, %v442, %v444
    %v457 = vsel %vm451, %v444, %v446
    %v458 = vsel %vm451, %v446, %v448
    %v459 = vsel %vm451, %v448, %v450
    %v469 = vsel %vm145, %v90, 0
    %471 = vmatprep.subr.mxu0 0.0
    %472 = vmatpush1.msra.mxu0 0.0
    %473 = vmatprep.subr.mxu0 0.0
    %474 = vmatpush1.msra.mxu0 0.0
    %475 = vmatprep.subr.mxu0 0.0
    %476 = vmatpush1.msra.mxu0 0.0
    %477 = vmatprep.subr.mxu0 0.0
    %478 = vmatpush1.msra.mxu0 0.0
    %479 = vmatprep.subr.mxu0 0.0
    %480 = vmatpush1.msra.mxu0 0.0
    %481 = vmatprep.subr.mxu0 0.0
    %482 = vmatpush1.msra.mxu0 0.0
    %483 = vmatprep.subr.mxu0 0.0
    %484 = vmatpush1.msra.mxu0 0.0
    %485 = vmatprep.subr.mxu0 0.0
    %486 = vmatpush1.msra.mxu0 0.0
    %487 = vmatprep.subr.mxu0 0.0
    %488 = vmatpush1.msra.mxu0 0.0
    %489 = vmatprep.subr.mxu0 0.0
    %490 = vmatpush1.msra.mxu0 0.0
    %491 = vmatprep.subr.mxu0 0.0
    %492 = vmatpush1.msra.mxu0 0.0
    %493 = vmatprep.subr.mxu0 0.0
    %494 = vmatpush1.msra.mxu0 0.0
    %495 = vmatprep.subr.mxu0 0.0
    %496 = vmatpush1.msra.mxu0 0.0
    %497 = vmatprep.subr.mxu0 0.0
    %498 = vmatpush1.msra.mxu0 0.0
    %499 = vmatprep.subr.mxu0 0.0
    %500 = vmatpush1.msra.mxu0 0.0
    %501 = vmatprep.subr.mxu0 %v453
    %502 = vmatpush1.msra.mxu0 %v452
    %503 = vmatprep.subr.mxu0 0.0
    %504 = vmatpush2.msra.mxu0 0.0
    %505 = vmatprep.subr.mxu0 0.0
    %506 = vmatpush2.msra.mxu0 0.0
    %507 = vmatprep.subr.mxu0 0.0
    %508 = vmatpush2.msra.mxu0 0.0
    %509 = vmatprep.subr.mxu0 0.0
    %510 = vmatpush2.msra.mxu0 0.0
    %511 = vmatprep.subr.mxu0 0.0
    %512 = vmatpush2.msra.mxu0 0.0
    %513 = vmatprep.subr.mxu0 0.0
    %514 = vmatpush2.msra.mxu0 0.0
    %515 = vmatprep.subr.mxu0 0.0
    %516 = vmatpush2.msra.mxu0 0.0
    %517 = vmatprep.subr.mxu0 0.0
    %518 = vmatpush2.msra.mxu0 0.0
    %519 = vmatprep.subr.mxu0 0.0
    %520 = vmatpush2.msra.mxu0 0.0
    %521 = vmatprep.subr.mxu0 0.0
    %522 = vmatpush2.msra.mxu0 0.0
    %523 = vmatprep.subr.mxu0 0.0
    %524 = vmatpush2.msra.mxu0 0.0
    %525 = vmatprep.subr.mxu0 0.0
    %526 = vmatpush2.msra.mxu0 0.0
    %527 = vmatprep.subr.mxu0 0.0
    %528 = vmatpush2.msra.mxu0 0.0
    %529 = vmatprep.subr.mxu0 0.0
    %530 = vmatpush2.msra.mxu0 0.0
    %531 = vmatprep.subr.mxu0 0.0
    %532 = vmatpush2.msra.mxu0 0.0
    %533 = vmatprep.subr.mxu0 0.0
    %534 = vmatpush2.msra.mxu0 0.0
    %535 = vmatprep.mubr.f32.mxu0 0.0
    %536 = vmatmul.mubr.f32.gmra.mxu0 %v469
    %v537 = vpop.f32.mrf.mxu0
    %v538 = vadd.f32 %v216, %v537
    %v539 = vpop.f32.mrf.mxu0
    %v540 = vadd.f32 %v218, %v539
    %541 = vdwg.mxu0
    %542 = vmatprep.subr.mxu0 0.0
    %543 = vmatpush1.msra.mxu0 0.0
    %544 = vmatprep.subr.mxu0 0.0
    %545 = vmatpush1.msra.mxu0 0.0
    %546 = vmatprep.subr.mxu0 0.0
    %547 = vmatpush1.msra.mxu0 0.0
    %548 = vmatprep.subr.mxu0 0.0
    %549 = vmatpush1.msra.mxu0 0.0
    %550 = vmatprep.subr.mxu0 0.0
    %551 = vmatpush1.msra.mxu0 0.0
    %552 = vmatprep.subr.mxu0 0.0
    %553 = vmatpush1.msra.mxu0 0.0
    %554 = vmatprep.subr.mxu0 0.0
    %555 = vmatpush1.msra.mxu0 0.0
    %556 = vmatprep.subr.mxu0 0.0
    %557 = vmatpush1.msra.mxu0 0.0
    %558 = vmatprep.subr.mxu0 0.0
    %559 = vmatpush1.msra.mxu0 0.0
    %560 = vmatprep.subr.mxu0 0.0
    %561 = vmatpush1.msra.mxu0 0.0
    %562 = vmatprep.subr.mxu0 0.0
    %563 = vmatpush1.msra.mxu0 0.0
    %564 = vmatprep.subr.mxu0 0.0
    %565 = vmatpush1.msra.mxu0 0.0
    %566 = vmatprep.subr.mxu0 0.0
    %567 = vmatpush1.msra.mxu0 0.0
    %568 = vmatprep.subr.mxu0 0.0
    %569 = vmatpush1.msra.mxu0 0.0
    %570 = vmatprep.subr.mxu0 0.0
    %571 = vmatpush1.msra.mxu0 0.0
    %572 = vmatprep.subr.mxu0 %v455
    %573 = vmatpush1.msra.mxu0 %v454
    %574 = vmatprep.subr.mxu0 0.0
    %575 = vmatpush2.msra.mxu0 0.0
    %576 = vmatprep.subr.mxu0 0.0
    %577 = vmatpush2.msra.mxu0 0.0
    %578 = vmatprep.subr.mxu0 0.0
    %579 = vmatpush2.msra.mxu0 0.0
    %580 = vmatprep.subr.mxu0 0.0
    %581 = vmatpush2.msra.mxu0 0.0
    %582 = vmatprep.subr.mxu0 0.0
    %583 = vmatpush2.msra.mxu0 0.0
    %584 = vmatprep.subr.mxu0 0.0
    %585 = vmatpush2.msra.mxu0 0.0
    %586 = vmatprep.subr.mxu0 0.0
    %587 = vmatpush2.msra.mxu0 0.0
    %588 = vmatprep.subr.mxu0 0.0
    %589 = vmatpush2.msra.mxu0 0.0
    %590 = vmatprep.subr.mxu0 0.0
    %591 = vmatpush2.msra.mxu0 0.0
    %592 = vmatprep.subr.mxu0 0.0
    %593 = vmatpush2.msra.mxu0 0.0
    %594 = vmatprep.subr.mxu0 0.0
    %595 = vmatpush2.msra.mxu0 0.0
    %596 = vmatprep.subr.mxu0 0.0
    %597 = vmatpush2.msra.mxu0 0.0
    %598 = vmatprep.subr.mxu0 0.0
    %599 = vmatpush2.msra.mxu0 0.0
    %600 = vmatprep.subr.mxu0 0.0
    %601 = vmatpush2.msra.mxu0 0.0
    %602 = vmatprep.subr.mxu0 0.0
    %603 = vmatpush2.msra.mxu0 0.0
    %604 = vmatprep.subr.mxu0 0.0
    %605 = vmatpush2.msra.mxu0 0.0
    %606 = vmatprep.mubr.f32.mxu0 0.0
    %607 = vmatmul.mubr.f32.gmra.mxu0 %v469
    %v608 = vpop.f32.mrf.mxu0
    %v609 = vadd.f32 %v287, %v608
    %v610 = vpop.f32.mrf.mxu0
    %v611 = vadd.f32 %v289, %v610
    %612 = vdwg.mxu0
    %613 = vmatprep.subr.mxu0 0.0
    %614 = vmatpush1.msra.mxu0 0.0
    %615 = vmatprep.subr.mxu0 0.0
    %616 = vmatpush1.msra.mxu0 0.0
    %617 = vmatprep.subr.mxu0 0.0
    %618 = vmatpush1.msra.mxu0 0.0
    %619 = vmatprep.subr.mxu0 0.0
    %620 = vmatpush1.msra.mxu0 0.0
    %621 = vmatprep.subr.mxu0 0.0
    %622 = vmatpush1.msra.mxu0 0.0
    %623 = vmatprep.subr.mxu0 0.0
    %624 = vmatpush1.msra.mxu0 0.0
    %625 = vmatprep.subr.mxu0 0.0
    %626 = vmatpush1.msra.mxu0 0.0
    %627 = vmatprep.subr.mxu0 0.0
    %628 = vmatpush1.msra.mxu0 0.0
    %629 = vmatprep.subr.mxu0 0.0
    %630 = vmatpush1.msra.mxu0 0.0
    %631 = vmatprep.subr.mxu0 0.0
    %632 = vmatpush1.msra.mxu0 0.0
    %633 = vmatprep.subr.mxu0 0.0
    %634 = vmatpush1.msra.mxu0 0.0
    %635 = vmatprep.subr.mxu0 0.0
    %636 = vmatpush1.msra.mxu0 0.0
    %637 = vmatprep.subr.mxu0 0.0
    %638 = vmatpush1.msra.mxu0 0.0
    %639 = vmatprep.subr.mxu0 0.0
    %640 = vmatpush1.msra.mxu0 0.0
    %641 = vmatprep.subr.mxu0 0.0
    %642 = vmatpush1.msra.mxu0 0.0
    %643 = vmatprep.subr.mxu0 %v457
    %644 = vmatpush1.msra.mxu0 %v456
    %645 = vmatprep.subr.mxu0 0.0
    %646 = vmatpush2.msra.mxu0 0.0
    %647 = vmatprep.subr.mxu0 0.0
    %648 = vmatpush2.msra.mxu0 0.0
    %649 = vmatprep.subr.mxu0 0.0
    %650 = vmatpush2.msra.mxu0 0.0
    %651 = vmatprep.subr.mxu0 0.0
    %652 = vmatpush2.msra.mxu0 0.0
    %653 = vmatprep.subr.mxu0 0.0
    %654 = vmatpush2.msra.mxu0 0.0
    %655 = vmatprep.subr.mxu0 0.0
    %656 = vmatpush2.msra.mxu0 0.0
    %657 = vmatprep.subr.mxu0 0.0
    %658 = vmatpush2.msra.mxu0 0.0
    %659 = vmatprep.subr.mxu0 0.0
    %660 = vmatpush2.msra.mxu0 0.0
    %661 = vmatprep.subr.mxu0 0.0
    %662 = vmatpush2.msra.mxu0 0.0
    %663 = vmatprep.subr.mxu0 0.0
    %664 = vmatpush2.msra.mxu0 0.0
    %665 = vmatprep.subr.mxu0 0.0
    %666 = vmatpush2.msra.mxu0 0.0
    %667 = vmatprep.subr.mxu0 0.0
    %668 = vmatpush2.msra.mxu0 0.0
    %669 = vmatprep.subr.mxu0 0.0
    %670 = vmatpush2.msra.mxu0 0.0
    %671 = vmatprep.subr.mxu0 0.0
    %672 = vmatpush2.msra.mxu0 0.0
    %673 = vmatprep.subr.mxu0 0.0
    %674 = vmatpush2.msra.mxu0 0.0
    %675 = vmatprep.subr.mxu0 0.0
    %676 = vmatpush2.msra.mxu0 0.0
    %677 = vmatprep.mubr.f32.mxu0 0.0
    %678 = vmatmul.mubr.f32.gmra.mxu0 %v469
    %v679 = vpop.f32.mrf.mxu0
    %v680 = vadd.f32 %v358, %v679
    %v681 = vpop.f32.mrf.mxu0
    %v682 = vadd.f32 %v360, %v681
    %683 = vdwg.mxu0
    %684 = vmatprep.subr.mxu0 0.0
    %685 = vmatpush1.msra.mxu0 0.0
    %686 = vmatprep.subr.mxu0 0.0
    %687 = vmatpush1.msra.mxu0 0.0
    %688 = vmatprep.subr.mxu0 0.0
    %689 = vmatpush1.msra.mxu0 0.0
    %690 = vmatprep.subr.mxu0 0.0
    %691 = vmatpush1.msra.mxu0 0.0
    %692 = vmatprep.subr.mxu0 0.0
    %693 = vmatpush1.msra.mxu0 0.0
    %694 = vmatprep.subr.mxu0 0.0
    %695 = vmatpush1.msra.mxu0 0.0
    %696 = vmatprep.subr.mxu0 0.0
    %697 = vmatpush1.msra.mxu0 0.0
    %698 = vmatprep.subr.mxu0 0.0
    %699 = vmatpush1.msra.mxu0 0.0
    %700 = vmatprep.subr.mxu0 0.0
    %701 = vmatpush1.msra.mxu0 0.0
    %702 = vmatprep.subr.mxu0 0.0
    %703 = vmatpush1.msra.mxu0 0.0
    %704 = vmatprep.subr.mxu0 0.0
    %705 = vmatpush1.msra.mxu0 0.0
    %706 = vmatprep.subr.mxu0 0.0
    %707 = vmatpush1.msra.mxu0 0.0
    %708 = vmatprep.subr.mxu0 0.0
    %709 = vmatpush1.msra.mxu0 0.0
    %710 = vmatprep.subr.mxu0 0.0
    %711 = vmatpush1.msra.mxu0 0.0
    %712 = vmatprep.subr.mxu0 0.0
    %713 = vmatpush1.msra.mxu0 0.0
    %714 = vmatprep.subr.mxu0 %v459
    %715 = vmatpush1.msra.mxu0 %v458
    %716 = vmatprep.subr.mxu0 0.0
    %717 = vmatpush2.msra.mxu0 0.0
    %718 = vmatprep.subr.mxu0 0.0
    %719 = vmatpush2.msra.mxu0 0.0
    %720 = vmatprep.subr.mxu0 0.0
    %721 = vmatpush2.msra.mxu0 0.0
    %722 = vmatprep.subr.mxu0 0.0
    %723 = vmatpush2.msra.mxu0 0.0
    %724 = vmatprep.subr.mxu0 0.0
    %725 = vmatpush2.msra.mxu0 0.0
    %726 = vmatprep.subr.mxu0 0.0
    %727 = vmatpush2.msra.mxu0 0.0
    %728 = vmatprep.subr.mxu0 0.0
    %729 = vmatpush2.msra.mxu0 0.0
    %730 = vmatprep.subr.mxu0 0.0
    %731 = vmatpush2.msra.mxu0 0.0
    %732 = vmatprep.subr.mxu0 0.0
    %733 = vmatpush2.msra.mxu0 0.0
    %734 = vmatprep.subr.mxu0 0.0
    %735 = vmatpush2.msra.mxu0 0.0
    %736 = vmatprep.subr.mxu0 0.0
    %737 = vmatpush2.msra.mxu0 0.0
    %738 = vmatprep.subr.mxu0 0.0
    %739 = vmatpush2.msra.mxu0 0.0
    %740 = vmatprep.subr.mxu0 0.0
    %741 = vmatpush2.msra.mxu0 0.0
    %742 = vmatprep.subr.mxu0 0.0
    %743 = vmatpush2.msra.mxu0 0.0
    %744 = vmatprep.subr.mxu0 0.0
    %745 = vmatpush2.msra.mxu0 0.0
    %746 = vmatprep.subr.mxu0 0.0
    %747 = vmatpush2.msra.mxu0 0.0
    %748 = vmatprep.mubr.f32.mxu0 0.0
    %749 = vmatmul.mubr.f32.gmra.mxu0 %v469
    %v750 = vpop.f32.mrf.mxu0
    %v751 = vadd.f32 %v429, %v750
    %v752 = vpop.f32.mrf.mxu0
    %v753 = vadd.f32 %v431, %v752
    %754 = vdwg.mxu0
    %v755 = vld [vmem:[%s1 + $0x10] sm:$0xff]
    %756 = vrot.lane.b32.xlu0 %v91, 19
    %v757 = vpop.permute.xlu0 %756
    %758 = vrot.lane.b32.xlu0 %v92, 19
    %v759 = vpop.permute.xlu0 %758
    %760 = vrot.lane.b32.xlu0 %v93, 19
    %v761 = vpop.permute.xlu0 %760
    %762 = vrot.lane.b32.xlu0 %v94, 19
    %v763 = vpop.permute.xlu0 %762
    %764 = vrot.lane.b32.xlu0 %v95, 19
    %v765 = vpop.permute.xlu0 %764
    %766 = vrot.lane.b32.xlu0 %v96, 19
    %v767 = vpop.permute.xlu0 %766
    %768 = vrot.lane.b32.xlu0 %v97, 19
    %v769 = vpop.permute.xlu0 %768
    %770 = vrot.lane.b32.xlu0 %v98, 19
    %v771 = vpop.permute.xlu0 %770
    %772 = vrot.lane.b32.xlu0 %v99, 19
    %v773 = vpop.permute.xlu0 %772
    %vm774 = vcmask 154624
    %v775 = vsel %vm774, %v757, %v759
    %v776 = vsel %vm774, %v759, %v761
    %v777 = vsel %vm774, %v761, %v763
    %v778 = vsel %vm774, %v763, %v765
    %v779 = vsel %vm774, %v765, %v767
    %v780 = vsel %vm774, %v767, %v769
    %v781 = vsel %vm774, %v769, %v771
    %v782 = vsel %vm774, %v771, %v773
    %v792 = vsel %vm145, %v755, 0
    %794 = vmatprep.subr.mxu0 0.0
    %795 = vmatpush1.msra.mxu0 0.0
    %796 = vmatprep.subr.mxu0 0.0
    %797 = vmatpush1.msra.mxu0 0.0
    %798 = vmatprep.subr.mxu0 0.0
    %799 = vmatpush1.msra.mxu0 0.0
    %800 = vmatprep.subr.mxu0 0.0
    %801 = vmatpush1.msra.mxu0 0.0
    %802 = vmatprep.subr.mxu0 0.0
    %803 = vmatpush1.msra.mxu0 0.0
    %804 = vmatprep.subr.mxu0 0.0
    %805 = vmatpush1.msra.mxu0 0.0
    %806 = vmatprep.subr.mxu0 0.0
    %807 = vmatpush1.msra.mxu0 0.0
    %808 = vmatprep.subr.mxu0 0.0
    %809 = vmatpush1.msra.mxu0 0.0
    %810 = vmatprep.subr.mxu0 0.0
    %811 = vmatpush1.msra.mxu0 0.0
    %812 = vmatprep.subr.mxu0 0.0
    %813 = vmatpush1.msra.mxu0 0.0
    %814 = vmatprep.subr.mxu0 0.0
    %815 = vmatpush1.msra.mxu0 0.0
    %816 = vmatprep.subr.mxu0 0.0
    %817 = vmatpush1.msra.mxu0 0.0
    %818 = vmatprep.subr.mxu0 0.0
    %819 = vmatpush1.msra.mxu0 0.0
    %820 = vmatprep.subr.mxu0 0.0
    %821 = vmatpush1.msra.mxu0 0.0
    %822 = vmatprep.subr.mxu0 0.0
    %823 = vmatpush1.msra.mxu0 0.0
    %824 = vmatprep.subr.mxu0 %v776
    %825 = vmatpush1.msra.mxu0 %v775
    %826 = vmatprep.subr.mxu0 0.0
    %827 = vmatpush2.msra.mxu0 0.0
    %828 = vmatprep.subr.mxu0 0.0
    %829 = vmatpush2.msra.mxu0 0.0
    %830 = vmatprep.subr.mxu0 0.0
    %831 = vmatpush2.msra.mxu0 0.0
    %832 = vmatprep.subr.mxu0 0.0
    %833 = vmatpush2.msra.mxu0 0.0
    %834 = vmatprep.subr.mxu0 0.0
    %835 = vmatpush2.msra.mxu0 0.0
    %836 = vmatprep.subr.mxu0 0.0
    %837 = vmatpush2.msra.mxu0 0.0
    %838 = vmatprep.subr.mxu0 0.0
    %839 = vmatpush2.msra.mxu0 0.0
    %840 = vmatprep.subr.mxu0 0.0
    %841 = vmatpush2.msra.mxu0 0.0
    %842 = vmatprep.subr.mxu0 0.0
    %843 = vmatpush2.msra.mxu0 0.0
    %844 = vmatprep.subr.mxu0 0.0
    %845 = vmatpush2.msra.mxu0 0.0
    %846 = vmatprep.subr.mxu0 0.0
    %847 = vmatpush2.msra.mxu0 0.0
    %848 = vmatprep.subr.mxu0 0.0
    %849 = vmatpush2.msra.mxu0 0.0
    %850 = vmatprep.subr.mxu0 0.0
    %851 = vmatpush2.msra.mxu0 0.0
    %852 = vmatprep.subr.mxu0 0.0
    %853 = vmatpush2.msra.mxu0 0.0
    %854 = vmatprep.subr.mxu0 0.0
    %855 = vmatpush2.msra.mxu0 0.0
    %856 = vmatprep.subr.mxu0 0.0
    %857 = vmatpush2.msra.mxu0 0.0
    %858 = vmatprep.mubr.f32.mxu0 0.0
    %859 = vmatmul.mubr.f32.gmra.mxu0 %v792
    %v860 = vpop.f32.mrf.mxu0
    %v861 = vadd.f32 0.0, %v860
    %v862 = vpop.f32.mrf.mxu0
    %v863 = vadd.f32 0.0, %v862
    %864 = vdwg.mxu0
    %865 = vmatprep.subr.mxu0 0.0
    %866 = vmatpush1.msra.mxu0 0.0
    %867 = vmatprep.subr.mxu0 0.0
    %868 = vmatpush1.msra.mxu0 0.0
    %869 = vmatprep.subr.mxu0 0.0
    %870 = vmatpush1.msra.mxu0 0.0
    %871 = vmatprep.subr.mxu0 0.0
    %872 = vmatpush1.msra.mxu0 0.0
    %873 = vmatprep.subr.mxu0 0.0
    %874 = vmatpush1.msra.mxu0 0.0
    %875 = vmatprep.subr.mxu0 0.0
    %876 = vmatpush1.msra.mxu0 0.0
    %877 = vmatprep.subr.mxu0 0.0
    %878 = vmatpush1.msra.mxu0 0.0
    %879 = vmatprep.subr.mxu0 0.0
    %880 = vmatpush1.msra.mxu0 0.0
    %881 = vmatprep.subr.mxu0 0.0
    %882 = vmatpush1.msra.mxu0 0.0
    %883 = vmatprep.subr.mxu0 0.0
    %884 = vmatpush1.msra.mxu0 0.0
    %885 = vmatprep.subr.mxu0 0.0
    %886 = vmatpush1.msra.mxu0 0.0
    %887 = vmatprep.subr.mxu0 0.0
    %888 = vmatpush1.msra.mxu0 0.0
    %889 = vmatprep.subr.mxu0 0.0
    %890 = vmatpush1.msra.mxu0 0.0
    %891 = vmatprep.subr.mxu0 0.0
    %892 = vmatpush1.msra.mxu0 0.0
    %893 = vmatprep.subr.mxu0 0.0
    %894 = vmatpush1.msra.mxu0 0.0
    %895 = vmatprep.subr.mxu0 %v778
    %896 = vmatpush1.msra.mxu0 %v777
    %897 = vmatprep.subr.mxu0 0.0
    %898 = vmatpush2.msra.mxu0 0.0
    %899 = vmatprep.subr.mxu0 0.0
    %900 = vmatpush2.msra.mxu0 0.0
    %901 = vmatprep.subr.mxu0 0.0
    %902 = vmatpush2.msra.mxu0 0.0
    %903 = vmatprep.subr.mxu0 0.0
    %904 = vmatpush2.msra.mxu0 0.0
    %905 = vmatprep.subr.mxu0 0.0
    %906 = vmatpush2.msra.mxu0 0.0
    %907 = vmatprep.subr.mxu0 0.0
    %908 = vmatpush2.msra.mxu0 0.0
    %909 = vmatprep.subr.mxu0 0.0
    %910 = vmatpush2.msra.mxu0 0.0
    %911 = vmatprep.subr.mxu0 0.0
    %912 = vmatpush2.msra.mxu0 0.0
    %913 = vmatprep.subr.mxu0 0.0
    %914 = vmatpush2.msra.mxu0 0.0
    %915 = vmatprep.subr.mxu0 0.0
    %916 = vmatpush2.msra.mxu0 0.0
    %917 = vmatprep.subr.mxu0 0.0
    %918 = vmatpush2.msra.mxu0 0.0
    %919 = vmatprep.subr.mxu0 0.0
    %920 = vmatpush2.msra.mxu0 0.0
    %921 = vmatprep.subr.mxu0 0.0
    %922 = vmatpush2.msra.mxu0 0.0
    %923 = vmatprep.subr.mxu0 0.0
    %924 = vmatpush2.msra.mxu0 0.0
    %925 = vmatprep.subr.mxu0 0.0
    %926 = vmatpush2.msra.mxu0 0.0
    %927 = vmatprep.subr.mxu0 0.0
    %928 = vmatpush2.msra.mxu0 0.0
    %929 = vmatprep.mubr.f32.mxu0 0.0
    %930 = vmatmul.mubr.f32.gmra.mxu0 %v792
    %v931 = vpop.f32.mrf.mxu0
    %v932 = vadd.f32 0.0, %v931
    %v933 = vpop.f32.mrf.mxu0
    %v934 = vadd.f32 0.0, %v933
    %935 = vdwg.mxu0
    %936 = vmatprep.subr.mxu0 0.0
    %937 = vmatpush1.msra.mxu0 0.0
    %938 = vmatprep.subr.mxu0 0.0
    %939 = vmatpush1.msra.mxu0 0.0
    %940 = vmatprep.subr.mxu0 0.0
    %941 = vmatpush1.msra.mxu0 0.0
    %942 = vmatprep.subr.mxu0 0.0
    %943 = vmatpush1.msra.mxu0 0.0
    %944 = vmatprep.subr.mxu0 0.0
    %945 = vmatpush1.msra.mxu0 0.0
    %946 = vmatprep.subr.mxu0 0.0
    %947 = vmatpush1.msra.mxu0 0.0
    %948 = vmatprep.subr.mxu0 0.0
    %949 = vmatpush1.msra.mxu0 0.0
    %950 = vmatprep.subr.mxu0 0.0
    %951 = vmatpush1.msra.mxu0 0.0
    %952 = vmatprep.subr.mxu0 0.0
    %953 = vmatpush1.msra.mxu0 0.0
    %954 = vmatprep.subr.mxu0 0.0
    %955 = vmatpush1.msra.mxu0 0.0
    %956 = vmatprep.subr.mxu0 0.0
    %957 = vmatpush1.msra.mxu0 0.0
    %958 = vmatprep.subr.mxu0 0.0
    %959 = vmatpush1.msra.mxu0 0.0
    %960 = vmatprep.subr.mxu0 0.0
    %961 = vmatpush1.msra.mxu0 0.0
    %962 = vmatprep.subr.mxu0 0.0
    %963 = vmatpush1.msra.mxu0 0.0
    %964 = vmatprep.subr.mxu0 0.0
    %965 = vmatpush1.msra.mxu0 0.0
    %966 = vmatprep.subr.mxu0 %v780
    %967 = vmatpush1.msra.mxu0 %v779
    %968 = vmatprep.subr.mxu0 0.0
    %969 = vmatpush2.msra.mxu0 0.0
    %970 = vmatprep.subr.mxu0 0.0
    %971 = vmatpush2.msra.mxu0 0.0
    %972 = vmatprep.subr.mxu0 0.0
    %973 = vmatpush2.msra.mxu0 0.0
    %974 = vmatprep.subr.mxu0 0.0
    %975 = vmatpush2.msra.mxu0 0.0
    %976 = vmatprep.subr.mxu0 0.0
    %977 = vmatpush2.msra.mxu0 0.0
    %978 = vmatprep.subr.mxu0 0.0
    %979 = vmatpush2.msra.mxu0 0.0
    %980 = vmatprep.subr.mxu0 0.0
    %981 = vmatpush2.msra.mxu0 0.0
    %982 = vmatprep.subr.mxu0 0.0
    %983 = vmatpush2.msra.mxu0 0.0
    %984 = vmatprep.subr.mxu0 0.0
    %985 = vmatpush2.msra.mxu0 0.0
    %986 = vmatprep.subr.mxu0 0.0
    %987 = vmatpush2.msra.mxu0 0.0
    %988 = vmatprep.subr.mxu0 0.0
    %989 = vmatpush2.msra.mxu0 0.0
    %990 = vmatprep.subr.mxu0 0.0
    %991 = vmatpush2.msra.mxu0 0.0
    %992 = vmatprep.subr.mxu0 0.0
    %993 = vmatpush2.msra.mxu0 0.0
    %994 = vmatprep.subr.mxu0 0.0
    %995 = vmatpush2.msra.mxu0 0.0
    %996 = vmatprep.subr.mxu0 0.0
    %997 = vmatpush2.msra.mxu0 0.0
    %998 = vmatprep.subr.mxu0 0.0
    %999 = vmatpush2.msra.mxu0 0.0
    %1000 = vmatprep.mubr.f32.mxu0 0.0
    %1001 = vmatmul.mubr.f32.gmra.mxu0 %v792
    %v1002 = vpop.f32.mrf.mxu0
    %v1003 = vadd.f32 0.0, %v1002
    %v1004 = vpop.f32.mrf.mxu0
    %v1005 = vadd.f32 0.0, %v1004
    %1006 = vdwg.mxu0
    %1007 = vmatprep.subr.mxu0 0.0
    %1008 = vmatpush1.msra.mxu0 0.0
    %1009 = vmatprep.subr.mxu0 0.0
    %1010 = vmatpush1.msra.mxu0 0.0
    %1011 = vmatprep.subr.mxu0 0.0
    %1012 = vmatpush1.msra.mxu0 0.0
    %1013 = vmatprep.subr.mxu0 0.0
    %1014 = vmatpush1.msra.mxu0 0.0
    %1015 = vmatprep.subr.mxu0 0.0
    %1016 = vmatpush1.msra.mxu0 0.0
    %1017 = vmatprep.subr.mxu0 0.0
    %1018 = vmatpush1.msra.mxu0 0.0
    %1019 = vmatprep.subr.mxu0 0.0
    %1020 = vmatpush1.msra.mxu0 0.0
    %1021 = vmatprep.subr.mxu0 0.0
    %1022 = vmatpush1.msra.mxu0 0.0
    %1023 = vmatprep.subr.mxu0 0.0
    %1024 = vmatpush1.msra.mxu0 0.0
    %1025 = vmatprep.subr.mxu0 0.0
    %1026 = vmatpush1.msra.mxu0 0.0
    %1027 = vmatprep.subr.mxu0 0.0
    %1028 = vmatpush1.msra.mxu0 0.0
    %1029 = vmatprep.subr.mxu0 0.0
    %1030 = vmatpush1.msra.mxu0 0.0
    %1031 = vmatprep.subr.mxu0 0.0
    %1032 = vmatpush1.msra.mxu0 0.0
    %1033 = vmatprep.subr.mxu0 0.0
    %1034 = vmatpush1.msra.mxu0 0.0
    %1035 = vmatprep.subr.mxu0 0.0
    %1036 = vmatpush1.msra.mxu0 0.0
    %1037 = vmatprep.subr.mxu0 %v782
    %1038 = vmatpush1.msra.mxu0 %v781
    %1039 = vmatprep.subr.mxu0 0.0
    %1040 = vmatpush2.msra.mxu0 0.0
    %1041 = vmatprep.subr.mxu0 0.0
    %1042 = vmatpush2.msra.mxu0 0.0
    %1043 = vmatprep.subr.mxu0 0.0
    %1044 = vmatpush2.msra.mxu0 0.0
    %1045 = vmatprep.subr.mxu0 0.0
    %1046 = vmatpush2.msra.mxu0 0.0
    %1047 = vmatprep.subr.mxu0 0.0
    %1048 = vmatpush2.msra.mxu0 0.0
    %1049 = vmatprep.subr.mxu0 0.0
    %1050 = vmatpush2.msra.mxu0 0.0
    %1051 = vmatprep.subr.mxu0 0.0
    %1052 = vmatpush2.msra.mxu0 0.0
    %1053 = vmatprep.subr.mxu0 0.0
    %1054 = vmatpush2.msra.mxu0 0.0
    %1055 = vmatprep.subr.mxu0 0.0
    %1056 = vmatpush2.msra.mxu0 0.0
    %1057 = vmatprep.subr.mxu0 0.0
    %1058 = vmatpush2.msra.mxu0 0.0
    %1059 = vmatprep.subr.mxu0 0.0
    %1060 = vmatpush2.msra.mxu0 0.0
    %1061 = vmatprep.subr.mxu0 0.0
    %1062 = vmatpush2.msra.mxu0 0.0
    %1063 = vmatprep.subr.mxu0 0.0
    %1064 = vmatpush2.msra.mxu0 0.0
    %1065 = vmatprep.subr.mxu0 0.0
    %1066 = vmatpush2.msra.mxu0 0.0
    %1067 = vmatprep.subr.mxu0 0.0
    %1068 = vmatpush2.msra.mxu0 0.0
    %1069 = vmatprep.subr.mxu0 0.0
    %1070 = vmatpush2.msra.mxu0 0.0
    %1071 = vmatprep.mubr.f32.mxu0 0.0
    %1072 = vmatmul.mubr.f32.gmra.mxu0 %v792
    %v1073 = vpop.f32.mrf.mxu0
    %v1074 = vadd.f32 0.0, %v1073
    %v1075 = vpop.f32.mrf.mxu0
    %v1076 = vadd.f32 0.0, %v1075
    %1077 = vdwg.mxu0
    %v1078 = vadd.f32 %v538, %v861
    %v1079 = vadd.f32 %v540, %v863
    %v1080 = vadd.f32 %v609, %v932
    %v1081 = vadd.f32 %v611, %v934
    %v1082 = vadd.f32 %v680, %v1003
    %v1083 = vadd.f32 %v682, %v1005
    %v1084 = vadd.f32 %v751, %v1074
    %v1085 = vadd.f32 %v753, %v1076
    %v1086 = vld [vmem:[%s1 + $0x18] sm:$0xff]
    %1087 = vrot.lane.b32.xlu0 %v91, 1
    %v1088 = vpop.permute.xlu0 %1087
    %1089 = vrot.lane.b32.xlu0 %v92, 1
    %v1090 = vpop.permute.xlu0 %1089
    %1091 = vrot.lane.b32.xlu0 %v93, 1
    %v1092 = vpop.permute.xlu0 %1091
    %1093 = vrot.lane.b32.xlu0 %v94, 1
    %v1094 = vpop.permute.xlu0 %1093
    %1095 = vrot.lane.b32.xlu0 %v95, 1
    %v1096 = vpop.permute.xlu0 %1095
    %1097 = vrot.lane.b32.xlu0 %v96, 1
    %v1098 = vpop.permute.xlu0 %1097
    %1099 = vrot.lane.b32.xlu0 %v97, 1
    %v1100 = vpop.permute.xlu0 %1099
    %1101 = vrot.lane.b32.xlu0 %v98, 1
    %v1102 = vpop.permute.xlu0 %1101
    %1103 = vrot.lane.b32.xlu0 %v99, 1
    %v1104 = vpop.permute.xlu0 %1103
    %vm1105 = vcmask 7168
    %v1106 = vsel %vm1105, %v1088, %v1090
    %v1107 = vsel %vm1105, %v1090, %v1092
    %v1108 = vsel %vm1105, %v1092, %v1094
    %v1109 = vsel %vm1105, %v1094, %v1096
    %v1110 = vsel %vm1105, %v1096, %v1098
    %v1111 = vsel %vm1105, %v1098, %v1100
    %v1112 = vsel %vm1105, %v1100, %v1102
    %v1113 = vsel %vm1105, %v1102, %v1104
    %v1123 = vsel %vm145, %v1086, 0
    %1125 = vmatprep.subr.mxu0 0.0
    %1126 = vmatpush1.msra.mxu0 0.0
    %1127 = vmatprep.subr.mxu0 0.0
    %1128 = vmatpush1.msra.mxu0 0.0
    %1129 = vmatprep.subr.mxu0 0.0
    %1130 = vmatpush1.msra.mxu0 0.0
    %1131 = vmatprep.subr.mxu0 0.0
    %1132 = vmatpush1.msra.mxu0 0.0
    %1133 = vmatprep.subr.mxu0 0.0
    %1134 = vmatpush1.msra.mxu0 0.0
    %1135 = vmatprep.subr.mxu0 0.0
    %1136 = vmatpush1.msra.mxu0 0.0
    %1137 = vmatprep.subr.mxu0 0.0
    %1138 = vmatpush1.msra.mxu0 0.0
    %1139 = vmatprep.subr.mxu0 0.0
    %1140 = vmatpush1.msra.mxu0 0.0
    %1141 = vmatprep.subr.mxu0 0.0
    %1142 = vmatpush1.msra.mxu0 0.0
    %1143 = vmatprep.subr.mxu0 0.0
    %1144 = vmatpush1.msra.mxu0 0.0
    %1145 = vmatprep.subr.mxu0 0.0
    %1146 = vmatpush1.msra.mxu0 0.0
    %1147 = vmatprep.subr.mxu0 0.0
    %1148 = vmatpush1.msra.mxu0 0.0
    %1149 = vmatprep.subr.mxu0 0.0
    %1150 = vmatpush1.msra.mxu0 0.0
    %1151 = vmatprep.subr.mxu0 0.0
    %1152 = vmatpush1.msra.mxu0 0.0
    %1153 = vmatprep.subr.mxu0 0.0
    %1154 = vmatpush1.msra.mxu0 0.0
    %1155 = vmatprep.subr.mxu0 %v1107
    %1156 = vmatpush1.msra.mxu0 %v1106
    %1157 = vmatprep.subr.mxu0 0.0
    %1158 = vmatpush2.msra.mxu0 0.0
    %1159 = vmatprep.subr.mxu0 0.0
    %1160 = vmatpush2.msra.mxu0 0.0
    %1161 = vmatprep.subr.mxu0 0.0
    %1162 = vmatpush2.msra.mxu0 0.0
    %1163 = vmatprep.subr.mxu0 0.0
    %1164 = vmatpush2.msra.mxu0 0.0
    %1165 = vmatprep.subr.mxu0 0.0
    %1166 = vmatpush2.msra.mxu0 0.0
    %1167 = vmatprep.subr.mxu0 0.0
    %1168 = vmatpush2.msra.mxu0 0.0
    %1169 = vmatprep.subr.mxu0 0.0
    %1170 = vmatpush2.msra.mxu0 0.0
    %1171 = vmatprep.subr.mxu0 0.0
    %1172 = vmatpush2.msra.mxu0 0.0
    %1173 = vmatprep.subr.mxu0 0.0
    %1174 = vmatpush2.msra.mxu0 0.0
    %1175 = vmatprep.subr.mxu0 0.0
    %1176 = vmatpush2.msra.mxu0 0.0
    %1177 = vmatprep.subr.mxu0 0.0
    %1178 = vmatpush2.msra.mxu0 0.0
    %1179 = vmatprep.subr.mxu0 0.0
    %1180 = vmatpush2.msra.mxu0 0.0
    %1181 = vmatprep.subr.mxu0 0.0
    %1182 = vmatpush2.msra.mxu0 0.0
    %1183 = vmatprep.subr.mxu0 0.0
    %1184 = vmatpush2.msra.mxu0 0.0
    %1185 = vmatprep.subr.mxu0 0.0
    %1186 = vmatpush2.msra.mxu0 0.0
    %1187 = vmatprep.subr.mxu0 0.0
    %1188 = vmatpush2.msra.mxu0 0.0
    %1189 = vmatprep.mubr.f32.mxu0 0.0
    %1190 = vmatmul.mubr.f32.gmra.mxu0 %v1123
    %v1191 = vpop.f32.mrf.mxu0
    %v1192 = vadd.f32 0.0, %v1191
    %v1193 = vpop.f32.mrf.mxu0
    %v1194 = vadd.f32 0.0, %v1193
    %1195 = vdwg.mxu0
    %1196 = vmatprep.subr.mxu0 0.0
    %1197 = vmatpush1.msra.mxu0 0.0
    %1198 = vmatprep.subr.mxu0 0.0
    %1199 = vmatpush1.msra.mxu0 0.0
    %1200 = vmatprep.subr.mxu0 0.0
    %1201 = vmatpush1.msra.mxu0 0.0
    %1202 = vmatprep.subr.mxu0 0.0
    %1203 = vmatpush1.msra.mxu0 0.0
    %1204 = vmatprep.subr.mxu0 0.0
    %1205 = vmatpush1.msra.mxu0 0.0
    %1206 = vmatprep.subr.mxu0 0.0
    %1207 = vmatpush1.msra.mxu0 0.0
    %1208 = vmatprep.subr.mxu0 0.0
    %1209 = vmatpush1.msra.mxu0 0.0
    %1210 = vmatprep.subr.mxu0 0.0
    %1211 = vmatpush1.msra.mxu0 0.0
    %1212 = vmatprep.subr.mxu0 0.0
    %1213 = vmatpush1.msra.mxu0 0.0
    %1214 = vmatprep.subr.mxu0 0.0
    %1215 = vmatpush1.msra.mxu0 0.0
    %1216 = vmatprep.subr.mxu0 0.0
    %1217 = vmatpush1.msra.mxu0 0.0
    %1218 = vmatprep.subr.mxu0 0.0
    %1219 = vmatpush1.msra.mxu0 0.0
    %1220 = vmatprep.subr.mxu0 0.0
    %1221 = vmatpush1.msra.mxu0 0.0
    %1222 = vmatprep.subr.mxu0 0.0
    %1223 = vmatpush1.msra.mxu0 0.0
    %1224 = vmatprep.subr.mxu0 0.0
    %1225 = vmatpush1.msra.mxu0 0.0
    %1226 = vmatprep.subr.mxu0 %v1109
    %1227 = vmatpush1.msra.mxu0 %v1108
    %1228 = vmatprep.subr.mxu0 0.0
    %1229 = vmatpush2.msra.mxu0 0.0
    %1230 = vmatprep.subr.mxu0 0.0
    %1231 = vmatpush2.msra.mxu0 0.0
    %1232 = vmatprep.subr.mxu0 0.0
    %1233 = vmatpush2.msra.mxu0 0.0
    %1234 = vmatprep.subr.mxu0 0.0
    %1235 = vmatpush2.msra.mxu0 0.0
    %1236 = vmatprep.subr.mxu0 0.0
    %1237 = vmatpush2.msra.mxu0 0.0
    %1238 = vmatprep.subr.mxu0 0.0
    %1239 = vmatpush2.msra.mxu0 0.0
    %1240 = vmatprep.subr.mxu0 0.0
    %1241 = vmatpush2.msra.mxu0 0.0
    %1242 = vmatprep.subr.mxu0 0.0
    %1243 = vmatpush2.msra.mxu0 0.0
    %1244 = vmatprep.subr.mxu0 0.0
    %1245 = vmatpush2.msra.mxu0 0.0
    %1246 = vmatprep.subr.mxu0 0.0
    %1247 = vmatpush2.msra.mxu0 0.0
    %1248 = vmatprep.subr.mxu0 0.0
    %1249 = vmatpush2.msra.mxu0 0.0
    %1250 = vmatprep.subr.mxu0 0.0
    %1251 = vmatpush2.msra.mxu0 0.0
    %1252 = vmatprep.subr.mxu0 0.0
    %1253 = vmatpush2.msra.mxu0 0.0
    %1254 = vmatprep.subr.mxu0 0.0
    %1255 = vmatpush2.msra.mxu0 0.0
    %1256 = vmatprep.subr.mxu0 0.0
    %1257 = vmatpush2.msra.mxu0 0.0
    %1258 = vmatprep.subr.mxu0 0.0
    %1259 = vmatpush2.msra.mxu0 0.0
    %1260 = vmatprep.mubr.f32.mxu0 0.0
    %1261 = vmatmul.mubr.f32.gmra.mxu0 %v1123
    %v1262 = vpop.f32.mrf.mxu0
    %v1263 = vadd.f32 0.0, %v1262
    %v1264 = vpop.f32.mrf.mxu0
    %v1265 = vadd.f32 0.0, %v1264
    %1266 = vdwg.mxu0
    %1267 = vmatprep.subr.mxu0 0.0
    %1268 = vmatpush1.msra.mxu0 0.0
    %1269 = vmatprep.subr.mxu0 0.0
    %1270 = vmatpush1.msra.mxu0 0.0
    %1271 = vmatprep.subr.mxu0 0.0
    %1272 = vmatpush1.msra.mxu0 0.0
    %1273 = vmatprep.subr.mxu0 0.0
    %1274 = vmatpush1.msra.mxu0 0.0
    %1275 = vmatprep.subr.mxu0 0.0
    %1276 = vmatpush1.msra.mxu0 0.0
    %1277 = vmatprep.subr.mxu0 0.0
    %1278 = vmatpush1.msra.mxu0 0.0
    %1279 = vmatprep.subr.mxu0 0.0
    %1280 = vmatpush1.msra.mxu0 0.0
    %1281 = vmatprep.subr.mxu0 0.0
    %1282 = vmatpush1.msra.mxu0 0.0
    %1283 = vmatprep.subr.mxu0 0.0
    %1284 = vmatpush1.msra.mxu0 0.0
    %1285 = vmatprep.subr.mxu0 0.0
    %1286 = vmatpush1.msra.mxu0 0.0
    %1287 = vmatprep.subr.mxu0 0.0
    %1288 = vmatpush1.msra.mxu0 0.0
    %1289 = vmatprep.subr.mxu0 0.0
    %1290 = vmatpush1.msra.mxu0 0.0
    %1291 = vmatprep.subr.mxu0 0.0
    %1292 = vmatpush1.msra.mxu0 0.0
    %1293 = vmatprep.subr.mxu0 0.0
    %1294 = vmatpush1.msra.mxu0 0.0
    %1295 = vmatprep.subr.mxu0 0.0
    %1296 = vmatpush1.msra.mxu0 0.0
    %1297 = vmatprep.subr.mxu0 %v1111
    %1298 = vmatpush1.msra.mxu0 %v1110
    %1299 = vmatprep.subr.mxu0 0.0
    %1300 = vmatpush2.msra.mxu0 0.0
    %1301 = vmatprep.subr.mxu0 0.0
    %1302 = vmatpush2.msra.mxu0 0.0
    %1303 = vmatprep.subr.mxu0 0.0
    %1304 = vmatpush2.msra.mxu0 0.0
    %1305 = vmatprep.subr.mxu0 0.0
    %1306 = vmatpush2.msra.mxu0 0.0
    %1307 = vmatprep.subr.mxu0 0.0
    %1308 = vmatpush2.msra.mxu0 0.0
    %1309 = vmatprep.subr.mxu0 0.0
    %1310 = vmatpush2.msra.mxu0 0.0
    %1311 = vmatprep.subr.mxu0 0.0
    %1312 = vmatpush2.msra.mxu0 0.0
    %1313 = vmatprep.subr.mxu0 0.0
    %1314 = vmatpush2.msra.mxu0 0.0
    %1315 = vmatprep.subr.mxu0 0.0
    %1316 = vmatpush2.msra.mxu0 0.0
    %1317 = vmatprep.subr.mxu0 0.0
    %1318 = vmatpush2.msra.mxu0 0.0
    %1319 = vmatprep.subr.mxu0 0.0
    %1320 = vmatpush2.msra.mxu0 0.0
    %1321 = vmatprep.subr.mxu0 0.0
    %1322 = vmatpush2.msra.mxu0 0.0
    %1323 = vmatprep.subr.mxu0 0.0
    %1324 = vmatpush2.msra.mxu0 0.0
    %1325 = vmatprep.subr.mxu0 0.0
    %1326 = vmatpush2.msra.mxu0 0.0
    %1327 = vmatprep.subr.mxu0 0.0
    %1328 = vmatpush2.msra.mxu0 0.0
    %1329 = vmatprep.subr.mxu0 0.0
    %1330 = vmatpush2.msra.mxu0 0.0
    %1331 = vmatprep.mubr.f32.mxu0 0.0
    %1332 = vmatmul.mubr.f32.gmra.mxu0 %v1123
    %v1333 = vpop.f32.mrf.mxu0
    %v1334 = vadd.f32 0.0, %v1333
    %v1335 = vpop.f32.mrf.mxu0
    %v1336 = vadd.f32 0.0, %v1335
    %1337 = vdwg.mxu0
    %1338 = vmatprep.subr.mxu0 0.0
    %1339 = vmatpush1.msra.mxu0 0.0
    %1340 = vmatprep.subr.mxu0 0.0
    %1341 = vmatpush1.msra.mxu0 0.0
    %1342 = vmatprep.subr.mxu0 0.0
    %1343 = vmatpush1.msra.mxu0 0.0
    %1344 = vmatprep.subr.mxu0 0.0
    %1345 = vmatpush1.msra.mxu0 0.0
    %1346 = vmatprep.subr.mxu0 0.0
    %1347 = vmatpush1.msra.mxu0 0.0
    %1348 = vmatprep.subr.mxu0 0.0
    %1349 = vmatpush1.msra.mxu0 0.0
    %1350 = vmatprep.subr.mxu0 0.0
    %1351 = vmatpush1.msra.mxu0 0.0
    %1352 = vmatprep.subr.mxu0 0.0
    %1353 = vmatpush1.msra.mxu0 0.0
    %1354 = vmatprep.subr.mxu0 0.0
    %1355 = vmatpush1.msra.mxu0 0.0
    %1356 = vmatprep.subr.mxu0 0.0
    %1357 = vmatpush1.msra.mxu0 0.0
    %1358 = vmatprep.subr.mxu0 0.0
    %1359 = vmatpush1.msra.mxu0 0.0
    %1360 = vmatprep.subr.mxu0 0.0
    %1361 = vmatpush1.msra.mxu0 0.0
    %1362 = vmatprep.subr.mxu0 0.0
    %1363 = vmatpush1.msra.mxu0 0.0
    %1364 = vmatprep.subr.mxu0 0.0
    %1365 = vmatpush1.msra.mxu0 0.0
    %1366 = vmatprep.subr.mxu0 0.0
    %1367 = vmatpush1.msra.mxu0 0.0
    %1368 = vmatprep.subr.mxu0 %v1113
    %1369 = vmatpush1.msra.mxu0 %v1112
    %1370 = vmatprep.subr.mxu0 0.0
    %1371 = vmatpush2.msra.mxu0 0.0
    %1372 = vmatprep.subr.mxu0 0.0
    %1373 = vmatpush2.msra.mxu0 0.0
    %1374 = vmatprep.subr.mxu0 0.0
    %1375 = vmatpush2.msra.mxu0 0.0
    %1376 = vmatprep.subr.mxu0 0.0
    %1377 = vmatpush2.msra.mxu0 0.0
    %1378 = vmatprep.subr.mxu0 0.0
    %1379 = vmatpush2.msra.mxu0 0.0
    %1380 = vmatprep.subr.mxu0 0.0
    %1381 = vmatpush2.msra.mxu0 0.0
    %1382 = vmatprep.subr.mxu0 0.0
    %1383 = vmatpush2.msra.mxu0 0.0
    %1384 = vmatprep.subr.mxu0 0.0
    %1385 = vmatpush2.msra.mxu0 0.0
    %1386 = vmatprep.subr.mxu0 0.0
    %1387 = vmatpush2.msra.mxu0 0.0
    %1388 = vmatprep.subr.mxu0 0.0
    %1389 = vmatpush2.msra.mxu0 0.0
    %1390 = vmatprep.subr.mxu0 0.0
    %1391 = vmatpush2.msra.mxu0 0.0
    %1392 = vmatprep.subr.mxu0 0.0
    %1393 = vmatpush2.msra.mxu0 0.0
    %1394 = vmatprep.subr.mxu0 0.0
    %1395 = vmatpush2.msra.mxu0 0.0
    %1396 = vmatprep.subr.mxu0 0.0
    %1397 = vmatpush2.msra.mxu0 0.0
    %1398 = vmatprep.subr.mxu0 0.0
    %1399 = vmatpush2.msra.mxu0 0.0
    %1400 = vmatprep.subr.mxu0 0.0
    %1401 = vmatpush2.msra.mxu0 0.0
    %1402 = vmatprep.mubr.f32.mxu0 0.0
    %1403 = vmatmul.mubr.f32.gmra.mxu0 %v1123
    %v1404 = vpop.f32.mrf.mxu0
    %v1405 = vadd.f32 0.0, %v1404
    %v1406 = vpop.f32.mrf.mxu0
    %v1407 = vadd.f32 0.0, %v1406
    %1408 = vdwg.mxu0
    %v1409 = vadd.f32 %v1078, %v1192
    %v1410 = vadd.f32 %v1079, %v1194
    %v1411 = vadd.f32 %v1080, %v1263
    %v1412 = vadd.f32 %v1081, %v1265
    %v1413 = vadd.f32 %v1082, %v1334
    %v1414 = vadd.f32 %v1083, %v1336
    %v1415 = vadd.f32 %v1084, %v1405
    %v1416 = vadd.f32 %v1085, %v1407
    %v1417 = vld [vmem:[%s1 + $0x20] sm:$0xff]
    %v1419 = vsel %vm145, %v1417, 0
    %1421 = vmatprep.subr.mxu0 0.0
    %1422 = vmatpush1.msra.mxu0 0.0
    %1423 = vmatprep.subr.mxu0 0.0
    %1424 = vmatpush1.msra.mxu0 0.0
    %1425 = vmatprep.subr.mxu0 0.0
    %1426 = vmatpush1.msra.mxu0 0.0
    %1427 = vmatprep.subr.mxu0 0.0
    %1428 = vmatpush1.msra.mxu0 0.0
    %1429 = vmatprep.subr.mxu0 0.0
    %1430 = vmatpush1.msra.mxu0 0.0
    %1431 = vmatprep.subr.mxu0 0.0
    %1432 = vmatpush1.msra.mxu0 0.0
    %1433 = vmatprep.subr.mxu0 0.0
    %1434 = vmatpush1.msra.mxu0 0.0
    %1435 = vmatprep.subr.mxu0 0.0
    %1436 = vmatpush1.msra.mxu0 0.0
    %1437 = vmatprep.subr.mxu0 0.0
    %1438 = vmatpush1.msra.mxu0 0.0
    %1439 = vmatprep.subr.mxu0 0.0
    %1440 = vmatpush1.msra.mxu0 0.0
    %1441 = vmatprep.subr.mxu0 0.0
    %1442 = vmatpush1.msra.mxu0 0.0
    %1443 = vmatprep.subr.mxu0 0.0
    %1444 = vmatpush1.msra.mxu0 0.0
    %1445 = vmatprep.subr.mxu0 0.0
    %1446 = vmatpush1.msra.mxu0 0.0
    %1447 = vmatprep.subr.mxu0 0.0
    %1448 = vmatpush1.msra.mxu0 0.0
    %1449 = vmatprep.subr.mxu0 0.0
    %1450 = vmatpush1.msra.mxu0 0.0
    %1451 = vmatprep.subr.mxu0 %v93
    %1452 = vmatpush1.msra.mxu0 %v92
    %1453 = vmatprep.subr.mxu0 0.0
    %1454 = vmatpush2.msra.mxu0 0.0
    %1455 = vmatprep.subr.mxu0 0.0
    %1456 = vmatpush2.msra.mxu0 0.0
    %1457 = vmatprep.subr.mxu0 0.0
    %1458 = vmatpush2.msra.mxu0 0.0
    %1459 = vmatprep.subr.mxu0 0.0
    %1460 = vmatpush2.msra.mxu0 0.0
    %1461 = vmatprep.subr.mxu0 0.0
    %1462 = vmatpush2.msra.mxu0 0.0
    %1463 = vmatprep.subr.mxu0 0.0
    %1464 = vmatpush2.msra.mxu0 0.0
    %1465 = vmatprep.subr.mxu0 0.0
    %1466 = vmatpush2.msra.mxu0 0.0
    %1467 = vmatprep.subr.mxu0 0.0
    %1468 = vmatpush2.msra.mxu0 0.0
    %1469 = vmatprep.subr.mxu0 0.0
    %1470 = vmatpush2.msra.mxu0 0.0
    %1471 = vmatprep.subr.mxu0 0.0
    %1472 = vmatpush2.msra.mxu0 0.0
    %1473 = vmatprep.subr.mxu0 0.0
    %1474 = vmatpush2.msra.mxu0 0.0
    %1475 = vmatprep.subr.mxu0 0.0
    %1476 = vmatpush2.msra.mxu0 0.0
    %1477 = vmatprep.subr.mxu0 0.0
    %1478 = vmatpush2.msra.mxu0 0.0
    %1479 = vmatprep.subr.mxu0 0.0
    %1480 = vmatpush2.msra.mxu0 0.0
    %1481 = vmatprep.subr.mxu0 0.0
    %1482 = vmatpush2.msra.mxu0 0.0
    %1483 = vmatprep.subr.mxu0 0.0
    %1484 = vmatpush2.msra.mxu0 0.0
    %1485 = vmatprep.mubr.f32.mxu0 0.0
    %1486 = vmatmul.mubr.f32.gmra.mxu0 %v1419
    %v1487 = vpop.f32.mrf.mxu0
    %v1488 = vadd.f32 0.0, %v1487
    %v1489 = vpop.f32.mrf.mxu0
    %v1490 = vadd.f32 0.0, %v1489
    %1491 = vdwg.mxu0
    %1492 = vmatprep.subr.mxu0 0.0
    %1493 = vmatpush1.msra.mxu0 0.0
    %1494 = vmatprep.subr.mxu0 0.0
    %1495 = vmatpush1.msra.mxu0 0.0
    %1496 = vmatprep.subr.mxu0 0.0
    %1497 = vmatpush1.msra.mxu0 0.0
    %1498 = vmatprep.subr.mxu0 0.0
    %1499 = vmatpush1.msra.mxu0 0.0
    %1500 = vmatprep.subr.mxu0 0.0
    %1501 = vmatpush1.msra.mxu0 0.0
    %1502 = vmatprep.subr.mxu0 0.0
    %1503 = vmatpush1.msra.mxu0 0.0
    %1504 = vmatprep.subr.mxu0 0.0
    %1505 = vmatpush1.msra.mxu0 0.0
    %1506 = vmatprep.subr.mxu0 0.0
    %1507 = vmatpush1.msra.mxu0 0.0
    %1508 = vmatprep.subr.mxu0 0.0
    %1509 = vmatpush1.msra.mxu0 0.0
    %1510 = vmatprep.subr.mxu0 0.0
    %1511 = vmatpush1.msra.mxu0 0.0
    %1512 = vmatprep.subr.mxu0 0.0
    %1513 = vmatpush1.msra.mxu0 0.0
    %1514 = vmatprep.subr.mxu0 0.0
    %1515 = vmatpush1.msra.mxu0 0.0
    %1516 = vmatprep.subr.mxu0 0.0
    %1517 = vmatpush1.msra.mxu0 0.0
    %1518 = vmatprep.subr.mxu0 0.0
    %1519 = vmatpush1.msra.mxu0 0.0
    %1520 = vmatprep.subr.mxu0 0.0
    %1521 = vmatpush1.msra.mxu0 0.0
    %1522 = vmatprep.subr.mxu0 %v95
    %1523 = vmatpush1.msra.mxu0 %v94
    %1524 = vmatprep.subr.mxu0 0.0
    %1525 = vmatpush2.msra.mxu0 0.0
    %1526 = vmatprep.subr.mxu0 0.0
    %1527 = vmatpush2.msra.mxu0 0.0
    %1528 = vmatprep.subr.mxu0 0.0
    %1529 = vmatpush2.msra.mxu0 0.0
    %1530 = vmatprep.subr.mxu0 0.0
    %1531 = vmatpush2.msra.mxu0 0.0
    %1532 = vmatprep.subr.mxu0 0.0
    %1533 = vmatpush2.msra.mxu0 0.0
    %1534 = vmatprep.subr.mxu0 0.0
    %1535 = vmatpush2.msra.mxu0 0.0
    %1536 = vmatprep.subr.mxu0 0.0
    %1537 = vmatpush2.msra.mxu0 0.0
    %1538 = vmatprep.subr.mxu0 0.0
    %1539 = vmatpush2.msra.mxu0 0.0
    %1540 = vmatprep.subr.mxu0 0.0
    %1541 = vmatpush2.msra.mxu0 0.0
    %1542 = vmatprep.subr.mxu0 0.0
    %1543 = vmatpush2.msra.mxu0 0.0
    %1544 = vmatprep.subr.mxu0 0.0
    %1545 = vmatpush2.msra.mxu0 0.0
    %1546 = vmatprep.subr.mxu0 0.0
    %1547 = vmatpush2.msra.mxu0 0.0
    %1548 = vmatprep.subr.mxu0 0.0
    %1549 = vmatpush2.msra.mxu0 0.0
    %1550 = vmatprep.subr.mxu0 0.0
    %1551 = vmatpush2.msra.mxu0 0.0
    %1552 = vmatprep.subr.mxu0 0.0
    %1553 = vmatpush2.msra.mxu0 0.0
    %1554 = vmatprep.subr.mxu0 0.0
    %1555 = vmatpush2.msra.mxu0 0.0
    %1556 = vmatprep.mubr.f32.mxu0 0.0
    %1557 = vmatmul.mubr.f32.gmra.mxu0 %v1419
    %v1558 = vpop.f32.mrf.mxu0
    %v1559 = vadd.f32 0.0, %v1558
    %v1560 = vpop.f32.mrf.mxu0
    %v1561 = vadd.f32 0.0, %v1560
    %1562 = vdwg.mxu0
    %1563 = vmatprep.subr.mxu0 0.0
    %1564 = vmatpush1.msra.mxu0 0.0
    %1565 = vmatprep.subr.mxu0 0.0
    %1566 = vmatpush1.msra.mxu0 0.0
    %1567 = vmatprep.subr.mxu0 0.0
    %1568 = vmatpush1.msra.mxu0 0.0
    %1569 = vmatprep.subr.mxu0 0.0
    %1570 = vmatpush1.msra.mxu0 0.0
    %1571 = vmatprep.subr.mxu0 0.0
    %1572 = vmatpush1.msra.mxu0 0.0
    %1573 = vmatprep.subr.mxu0 0.0
    %1574 = vmatpush1.msra.mxu0 0.0
    %1575 = vmatprep.subr.mxu0 0.0
    %1576 = vmatpush1.msra.mxu0 0.0
    %1577 = vmatprep.subr.mxu0 0.0
    %1578 = vmatpush1.msra.mxu0 0.0
    %1579 = vmatprep.subr.mxu0 0.0
    %1580 = vmatpush1.msra.mxu0 0.0
    %1581 = vmatprep.subr.mxu0 0.0
    %1582 = vmatpush1.msra.mxu0 0.0
    %1583 = vmatprep.subr.mxu0 0.0
    %1584 = vmatpush1.msra.mxu0 0.0
    %1585 = vmatprep.subr.mxu0 0.0
    %1586 = vmatpush1.msra.mxu0 0.0
    %1587 = vmatprep.subr.mxu0 0.0
    %1588 = vmatpush1.msra.mxu0 0.0
    %1589 = vmatprep.subr.mxu0 0.0
    %1590 = vmatpush1.msra.mxu0 0.0
    %1591 = vmatprep.subr.mxu0 0.0
    %1592 = vmatpush1.msra.mxu0 0.0
    %1593 = vmatprep.subr.mxu0 %v97
    %1594 = vmatpush1.msra.mxu0 %v96
    %1595 = vmatprep.subr.mxu0 0.0
    %1596 = vmatpush2.msra.mxu0 0.0
    %1597 = vmatprep.subr.mxu0 0.0
    %1598 = vmatpush2.msra.mxu0 0.0
    %1599 = vmatprep.subr.mxu0 0.0
    %1600 = vmatpush2.msra.mxu0 0.0
    %1601 = vmatprep.subr.mxu0 0.0
    %1602 = vmatpush2.msra.mxu0 0.0
    %1603 = vmatprep.subr.mxu0 0.0
    %1604 = vmatpush2.msra.mxu0 0.0
    %1605 = vmatprep.subr.mxu0 0.0
    %1606 = vmatpush2.msra.mxu0 0.0
    %1607 = vmatprep.subr.mxu0 0.0
    %1608 = vmatpush2.msra.mxu0 0.0
    %1609 = vmatprep.subr.mxu0 0.0
    %1610 = vmatpush2.msra.mxu0 0.0
    %1611 = vmatprep.subr.mxu0 0.0
    %1612 = vmatpush2.msra.mxu0 0.0
    %1613 = vmatprep.subr.mxu0 0.0
    %1614 = vmatpush2.msra.mxu0 0.0
    %1615 = vmatprep.subr.mxu0 0.0
    %1616 = vmatpush2.msra.mxu0 0.0
    %1617 = vmatprep.subr.mxu0 0.0
    %1618 = vmatpush2.msra.mxu0 0.0
    %1619 = vmatprep.subr.mxu0 0.0
    %1620 = vmatpush2.msra.mxu0 0.0
    %1621 = vmatprep.subr.mxu0 0.0
    %1622 = vmatpush2.msra.mxu0 0.0
    %1623 = vmatprep.subr.mxu0 0.0
    %1624 = vmatpush2.msra.mxu0 0.0
    %1625 = vmatprep.subr.mxu0 0.0
    %1626 = vmatpush2.msra.mxu0 0.0
    %1627 = vmatprep.mubr.f32.mxu0 0.0
    %1628 = vmatmul.mubr.f32.gmra.mxu0 %v1419
    %v1629 = vpop.f32.mrf.mxu0
    %v1630 = vadd.f32 0.0, %v1629
    %v1631 = vpop.f32.mrf.mxu0
    %v1632 = vadd.f32 0.0, %v1631
    %1633 = vdwg.mxu0
    %1634 = vmatprep.subr.mxu0 0.0
    %1635 = vmatpush1.msra.mxu0 0.0
    %1636 = vmatprep.subr.mxu0 0.0
    %1637 = vmatpush1.msra.mxu0 0.0
    %1638 = vmatprep.subr.mxu0 0.0
    %1639 = vmatpush1.msra.mxu0 0.0
    %1640 = vmatprep.subr.mxu0 0.0
    %1641 = vmatpush1.msra.mxu0 0.0
    %1642 = vmatprep.subr.mxu0 0.0
    %1643 = vmatpush1.msra.mxu0 0.0
    %1644 = vmatprep.subr.mxu0 0.0
    %1645 = vmatpush1.msra.mxu0 0.0
    %1646 = vmatprep.subr.mxu0 0.0
    %1647 = vmatpush1.msra.mxu0 0.0
    %1648 = vmatprep.subr.mxu0 0.0
    %1649 = vmatpush1.msra.mxu0 0.0
    %1650 = vmatprep.subr.mxu0 0.0
    %1651 = vmatpush1.msra.mxu0 0.0
    %1652 = vmatprep.subr.mxu0 0.0
    %1653 = vmatpush1.msra.mxu0 0.0
    %1654 = vmatprep.subr.mxu0 0.0
    %1655 = vmatpush1.msra.mxu0 0.0
    %1656 = vmatprep.subr.mxu0 0.0
    %1657 = vmatpush1.msra.mxu0 0.0
    %1658 = vmatprep.subr.mxu0 0.0
    %1659 = vmatpush1.msra.mxu0 0.0
    %1660 = vmatprep.subr.mxu0 0.0
    %1661 = vmatpush1.msra.mxu0 0.0
    %1662 = vmatprep.subr.mxu0 0.0
    %1663 = vmatpush1.msra.mxu0 0.0
    %1664 = vmatprep.subr.mxu0 %v99
    %1665 = vmatpush1.msra.mxu0 %v98
    %1666 = vmatprep.subr.mxu0 0.0
    %1667 = vmatpush2.msra.mxu0 0.0
    %1668 = vmatprep.subr.mxu0 0.0
    %1669 = vmatpush2.msra.mxu0 0.0
    %1670 = vmatprep.subr.mxu0 0.0
    %1671 = vmatpush2.msra.mxu0 0.0
    %1672 = vmatprep.subr.mxu0 0.0
    %1673 = vmatpush2.msra.mxu0 0.0
    %1674 = vmatprep.subr.mxu0 0.0
    %1675 = vmatpush2.msra.mxu0 0.0
    %1676 = vmatprep.subr.mxu0 0.0
    %1677 = vmatpush2.msra.mxu0 0.0
    %1678 = vmatprep.subr.mxu0 0.0
    %1679 = vmatpush2.msra.mxu0 0.0
    %1680 = vmatprep.subr.mxu0 0.0
    %1681 = vmatpush2.msra.mxu0 0.0
    %1682 = vmatprep.subr.mxu0 0.0
    %1683 = vmatpush2.msra.mxu0 0.0
    %1684 = vmatprep.subr.mxu0 0.0
    %1685 = vmatpush2.msra.mxu0 0.0
    %1686 = vmatprep.subr.mxu0 0.0
    %1687 = vmatpush2.msra.mxu0 0.0
    %1688 = vmatprep.subr.mxu0 0.0
    %1689 = vmatpush2.msra.mxu0 0.0
    %1690 = vmatprep.subr.mxu0 0.0
    %1691 = vmatpush2.msra.mxu0 0.0
    %1692 = vmatprep.subr.mxu0 0.0
    %1693 = vmatpush2.msra.mxu0 0.0
    %1694 = vmatprep.subr.mxu0 0.0
    %1695 = vmatpush2.msra.mxu0 0.0
    %1696 = vmatprep.subr.mxu0 0.0
    %1697 = vmatpush2.msra.mxu0 0.0
    %1698 = vmatprep.mubr.f32.mxu0 0.0
    %1699 = vmatmul.mubr.f32.gmra.mxu0 %v1419
    %v1700 = vpop.f32.mrf.mxu0
    %v1701 = vadd.f32 0.0, %v1700
    %v1702 = vpop.f32.mrf.mxu0
    %v1703 = vadd.f32 0.0, %v1702
    %1704 = vdwg.mxu0
    %v1705 = vadd.f32 %v1409, %v1488
    %v1706 = vadd.f32 %v1410, %v1490
    %v1707 = vadd.f32 %v1411, %v1559
    %v1708 = vadd.f32 %v1412, %v1561
    %v1709 = vadd.f32 %v1413, %v1630
    %v1710 = vadd.f32 %v1414, %v1632
    %v1711 = vadd.f32 %v1415, %v1701
    %v1712 = vadd.f32 %v1416, %v1703
    %v1713 = vld [vmem:[%s1 + $0x28] sm:$0xff]
    %v1714 = vld [vmem:[#allocation2 + $0x8] sm:$0xff]
    %v1715 = vld [vmem:[#allocation2 + $0x10] sm:$0xff]
    %v1716 = vld [vmem:[#allocation2 + $0x18] sm:$0xff]
    %v1717 = vld [vmem:[#allocation2 + $0x20] sm:$0xff]
    %v1718 = vld [vmem:[#allocation2 + $0x28] sm:$0xff]
    %v1719 = vld [vmem:[#allocation2 + $0x30] sm:$0xff]
    %v1720 = vld [vmem:[#allocation2 + $0x38] sm:$0xff]
    %v1721 = vld [vmem:[#allocation2 + $0x40] sm:$0xff]
    %v1722 = vld [vmem:[#allocation2 + $0x48] sm:$0xff]
    %1732 = vrot.lane.b32.xlu0 %v1714, 127
    %v1733 = vpop.permute.xlu0 %1732
    %1734 = vrot.lane.b32.xlu0 %v1715, 127
    %v1735 = vpop.permute.xlu0 %1734
    %1736 = vrot.lane.b32.xlu0 %v1716, 127
    %v1737 = vpop.permute.xlu0 %1736
    %1738 = vrot.lane.b32.xlu0 %v1717, 127
    %v1739 = vpop.permute.xlu0 %1738
    %1740 = vrot.lane.b32.xlu0 %v1718, 127
    %v1741 = vpop.permute.xlu0 %1740
    %1742 = vrot.lane.b32.xlu0 %v1719, 127
    %v1743 = vpop.permute.xlu0 %1742
    %1744 = vrot.lane.b32.xlu0 %v1720, 127
    %v1745 = vpop.permute.xlu0 %1744
    %1746 = vrot.lane.b32.xlu0 %v1721, 127
    %v1747 = vpop.permute.xlu0 %1746
    %1748 = vrot.lane.b32.xlu0 %v1722, 127
    %v1749 = vpop.permute.xlu0 %1748
    %vm1750 = vcmask 1039360
    %v1751 = vsel %vm1750, %v1733, %v1735
    %v1752 = vsel %vm1750, %v1735, %v1737
    %v1753 = vsel %vm1750, %v1737, %v1739
    %v1754 = vsel %vm1750, %v1739, %v1741
    %v1755 = vsel %vm1750, %v1741, %v1743
    %v1756 = vsel %vm1750, %v1743, %v1745
    %v1757 = vsel %vm1750, %v1745, %v1747
    %v1758 = vsel %vm1750, %v1747, %v1749
    %v1768 = vsel %vm145, %v1713, 0
    %1770 = vmatprep.subr.mxu0 0.0
    %1771 = vmatpush1.msra.mxu0 0.0
    %1772 = vmatprep.subr.mxu0 0.0
    %1773 = vmatpush1.msra.mxu0 0.0
    %1774 = vmatprep.subr.mxu0 0.0
    %1775 = vmatpush1.msra.mxu0 0.0
    %1776 = vmatprep.subr.mxu0 0.0
    %1777 = vmatpush1.msra.mxu0 0.0
    %1778 = vmatprep.subr.mxu0 0.0
    %1779 = vmatpush1.msra.mxu0 0.0
    %1780 = vmatprep.subr.mxu0 0.0
    %1781 = vmatpush1.msra.mxu0 0.0
    %1782 = vmatprep.subr.mxu0 0.0
    %1783 = vmatpush1.msra.mxu0 0.0
    %1784 = vmatprep.subr.mxu0 0.0
    %1785 = vmatpush1.msra.mxu0 0.0
    %1786 = vmatprep.subr.mxu0 0.0
    %1787 = vmatpush1.msra.mxu0 0.0
    %1788 = vmatprep.subr.mxu0 0.0
    %1789 = vmatpush1.msra.mxu0 0.0
    %1790 = vmatprep.subr.mxu0 0.0
    %1791 = vmatpush1.msra.mxu0 0.0
    %1792 = vmatprep.subr.mxu0 0.0
    %1793 = vmatpush1.msra.mxu0 0.0
    %1794 = vmatprep.subr.mxu0 0.0
    %1795 = vmatpush1.msra.mxu0 0.0
    %1796 = vmatprep.subr.mxu0 0.0
    %1797 = vmatpush1.msra.mxu0 0.0
    %1798 = vmatprep.subr.mxu0 0.0
    %1799 = vmatpush1.msra.mxu0 0.0
    %1800 = vmatprep.subr.mxu0 %v1752
    %1801 = vmatpush1.msra.mxu0 %v1751
    %1802 = vmatprep.subr.mxu0 0.0
    %1803 = vmatpush2.msra.mxu0 0.0
    %1804 = vmatprep.subr.mxu0 0.0
    %1805 = vmatpush2.msra.mxu0 0.0
    %1806 = vmatprep.subr.mxu0 0.0
    %1807 = vmatpush2.msra.mxu0 0.0
    %1808 = vmatprep.subr.mxu0 0.0
    %1809 = vmatpush2.msra.mxu0 0.0
    %1810 = vmatprep.subr.mxu0 0.0
    %1811 = vmatpush2.msra.mxu0 0.0
    %1812 = vmatprep.subr.mxu0 0.0
    %1813 = vmatpush2.msra.mxu0 0.0
    %1814 = vmatprep.subr.mxu0 0.0
    %1815 = vmatpush2.msra.mxu0 0.0
    %1816 = vmatprep.subr.mxu0 0.0
    %1817 = vmatpush2.msra.mxu0 0.0
    %1818 = vmatprep.subr.mxu0 0.0
    %1819 = vmatpush2.msra.mxu0 0.0
    %1820 = vmatprep.subr.mxu0 0.0
    %1821 = vmatpush2.msra.mxu0 0.0
    %1822 = vmatprep.subr.mxu0 0.0
    %1823 = vmatpush2.msra.mxu0 0.0
    %1824 = vmatprep.subr.mxu0 0.0
    %1825 = vmatpush2.msra.mxu0 0.0
    %1826 = vmatprep.subr.mxu0 0.0
    %1827 = vmatpush2.msra.mxu0 0.0
    %1828 = vmatprep.subr.mxu0 0.0
    %1829 = vmatpush2.msra.mxu0 0.0
    %1830 = vmatprep.subr.mxu0 0.0
    %1831 = vmatpush2.msra.mxu0 0.0
    %1832 = vmatprep.subr.mxu0 0.0
    %1833 = vmatpush2.msra.mxu0 0.0
    %1834 = vmatprep.mubr.f32.mxu0 0.0
    %1835 = vmatmul.mubr.f32.gmra.mxu0 %v1768
    %v1836 = vpop.f32.mrf.mxu0
    %v1837 = vadd.f32 0.0, %v1836
    %v1838 = vpop.f32.mrf.mxu0
    %v1839 = vadd.f32 0.0, %v1838
    %1840 = vdwg.mxu0
    %1841 = vmatprep.subr.mxu0 0.0
    %1842 = vmatpush1.msra.mxu0 0.0
    %1843 = vmatprep.subr.mxu0 0.0
    %1844 = vmatpush1.msra.mxu0 0.0
    %1845 = vmatprep.subr.mxu0 0.0
    %1846 = vmatpush1.msra.mxu0 0.0
    %1847 = vmatprep.subr.mxu0 0.0
    %1848 = vmatpush1.msra.mxu0 0.0
    %1849 = vmatprep.subr.mxu0 0.0
    %1850 = vmatpush1.msra.mxu0 0.0
    %1851 = vmatprep.subr.mxu0 0.0
    %1852 = vmatpush1.msra.mxu0 0.0
    %1853 = vmatprep.subr.mxu0 0.0
    %1854 = vmatpush1.msra.mxu0 0.0
    %1855 = vmatprep.subr.mxu0 0.0
    %1856 = vmatpush1.msra.mxu0 0.0
    %1857 = vmatprep.subr.mxu0 0.0
    %1858 = vmatpush1.msra.mxu0 0.0
    %1859 = vmatprep.subr.mxu0 0.0
    %1860 = vmatpush1.msra.mxu0 0.0
    %1861 = vmatprep.subr.mxu0 0.0
    %1862 = vmatpush1.msra.mxu0 0.0
    %1863 = vmatprep.subr.mxu0 0.0
    %1864 = vmatpush1.msra.mxu0 0.0
    %1865 = vmatprep.subr.mxu0 0.0
    %1866 = vmatpush1.msra.mxu0 0.0
    %1867 = vmatprep.subr.mxu0 0.0
    %1868 = vmatpush1.msra.mxu0 0.0
    %1869 = vmatprep.subr.mxu0 0.0
    %1870 = vmatpush1.msra.mxu0 0.0
    %1871 = vmatprep.subr.mxu0 %v1754
    %1872 = vmatpush1.msra.mxu0 %v1753
    %1873 = vmatprep.subr.mxu0 0.0
    %1874 = vmatpush2.msra.mxu0 0.0
    %1875 = vmatprep.subr.mxu0 0.0
    %1876 = vmatpush2.msra.mxu0 0.0
    %1877 = vmatprep.subr.mxu0 0.0
    %1878 = vmatpush2.msra.mxu0 0.0
    %1879 = vmatprep.subr.mxu0 0.0
    %1880 = vmatpush2.msra.mxu0 0.0
    %1881 = vmatprep.subr.mxu0 0.0
    %1882 = vmatpush2.msra.mxu0 0.0
    %1883 = vmatprep.subr.mxu0 0.0
    %1884 = vmatpush2.msra.mxu0 0.0
    %1885 = vmatprep.subr.mxu0 0.0
    %1886 = vmatpush2.msra.mxu0 0.0
    %1887 = vmatprep.subr.mxu0 0.0
    %1888 = vmatpush2.msra.mxu0 0.0
    %1889 = vmatprep.subr.mxu0 0.0
    %1890 = vmatpush2.msra.mxu0 0.0
    %1891 = vmatprep.subr.mxu0 0.0
    %1892 = vmatpush2.msra.mxu0 0.0
    %1893 = vmatprep.subr.mxu0 0.0
    %1894 = vmatpush2.msra.mxu0 0.0
    %1895 = vmatprep.subr.mxu0 0.0
    %1896 = vmatpush2.msra.mxu0 0.0
    %1897 = vmatprep.subr.mxu0 0.0
    %1898 = vmatpush2.msra.mxu0 0.0
    %1899 = vmatprep.subr.mxu0 0.0
    %1900 = vmatpush2.msra.mxu0 0.0
    %1901 = vmatprep.subr.mxu0 0.0
    %1902 = vmatpush2.msra.mxu0 0.0
    %1903 = vmatprep.subr.mxu0 0.0
    %1904 = vmatpush2.msra.mxu0 0.0
    %1905 = vmatprep.mubr.f32.mxu0 0.0
    %1906 = vmatmul.mubr.f32.gmra.mxu0 %v1768
    %v1907 = vpop.f32.mrf.mxu0
    %v1908 = vadd.f32 0.0, %v1907
    %v1909 = vpop.f32.mrf.mxu0
    %v1910 = vadd.f32 0.0, %v1909
    %1911 = vdwg.mxu0
    %1912 = vmatprep.subr.mxu0 0.0
    %1913 = vmatpush1.msra.mxu0 0.0
    %1914 = vmatprep.subr.mxu0 0.0
    %1915 = vmatpush1.msra.mxu0 0.0
    %1916 = vmatprep.subr.mxu0 0.0
    %1917 = vmatpush1.msra.mxu0 0.0
    %1918 = vmatprep.subr.mxu0 0.0
    %1919 = vmatpush1.msra.mxu0 0.0
    %1920 = vmatprep.subr.mxu0 0.0
    %1921 = vmatpush1.msra.mxu0 0.0
    %1922 = vmatprep.subr.mxu0 0.0
    %1923 = vmatpush1.msra.mxu0 0.0
    %1924 = vmatprep.subr.mxu0 0.0
    %1925 = vmatpush1.msra.mxu0 0.0
    %1926 = vmatprep.subr.mxu0 0.0
    %1927 = vmatpush1.msra.mxu0 0.0
    %1928 = vmatprep.subr.mxu0 0.0
    %1929 = vmatpush1.msra.mxu0 0.0
    %1930 = vmatprep.subr.mxu0 0.0
    %1931 = vmatpush1.msra.mxu0 0.0
    %1932 = vmatprep.subr.mxu0 0.0
    %1933 = vmatpush1.msra.mxu0 0.0
    %1934 = vmatprep.subr.mxu0 0.0
    %1935 = vmatpush1.msra.mxu0 0.0
    %1936 = vmatprep.subr.mxu0 0.0
    %1937 = vmatpush1.msra.mxu0 0.0
    %1938 = vmatprep.subr.mxu0 0.0
    %1939 = vmatpush1.msra.mxu0 0.0
    %1940 = vmatprep.subr.mxu0 0.0
    %1941 = vmatpush1.msra.mxu0 0.0
    %1942 = vmatprep.subr.mxu0 %v1756
    %1943 = vmatpush1.msra.mxu0 %v1755
    %1944 = vmatprep.subr.mxu0 0.0
    %1945 = vmatpush2.msra.mxu0 0.0
    %1946 = vmatprep.subr.mxu0 0.0
    %1947 = vmatpush2.msra.mxu0 0.0
    %1948 = vmatprep.subr.mxu0 0.0
    %1949 = vmatpush2.msra.mxu0 0.0
    %1950 = vmatprep.subr.mxu0 0.0
    %1951 = vmatpush2.msra.mxu0 0.0
    %1952 = vmatprep.subr.mxu0 0.0
    %1953 = vmatpush2.msra.mxu0 0.0
    %1954 = vmatprep.subr.mxu0 0.0
    %1955 = vmatpush2.msra.mxu0 0.0
    %1956 = vmatprep.subr.mxu0 0.0
    %1957 = vmatpush2.msra.mxu0 0.0
    %1958 = vmatprep.subr.mxu0 0.0
    %1959 = vmatpush2.msra.mxu0 0.0
    %1960 = vmatprep.subr.mxu0 0.0
    %1961 = vmatpush2.msra.mxu0 0.0
    %1962 = vmatprep.subr.mxu0 0.0
    %1963 = vmatpush2.msra.mxu0 0.0
    %1964 = vmatprep.subr.mxu0 0.0
    %1965 = vmatpush2.msra.mxu0 0.0
    %1966 = vmatprep.subr.mxu0 0.0
    %1967 = vmatpush2.msra.mxu0 0.0
    %1968 = vmatprep.subr.mxu0 0.0
    %1969 = vmatpush2.msra.mxu0 0.0
    %1970 = vmatprep.subr.mxu0 0.0
    %1971 = vmatpush2.msra.mxu0 0.0
    %1972 = vmatprep.subr.mxu0 0.0
    %1973 = vmatpush2.msra.mxu0 0.0
    %1974 = vmatprep.subr.mxu0 0.0
    %1975 = vmatpush2.msra.mxu0 0.0
    %1976 = vmatprep.mubr.f32.mxu0 0.0
    %1977 = vmatmul.mubr.f32.gmra.mxu0 %v1768
    %v1978 = vpop.f32.mrf.mxu0
    %v1979 = vadd.f32 0.0, %v1978
    %v1980 = vpop.f32.mrf.mxu0
    %v1981 = vadd.f32 0.0, %v1980
    %1982 = vdwg.mxu0
    %1983 = vmatprep.subr.mxu0 0.0
    %1984 = vmatpush1.msra.mxu0 0.0
    %1985 = vmatprep.subr.mxu0 0.0
    %1986 = vmatpush1.msra.mxu0 0.0
    %1987 = vmatprep.subr.mxu0 0.0
    %1988 = vmatpush1.msra.mxu0 0.0
    %1989 = vmatprep.subr.mxu0 0.0
    %1990 = vmatpush1.msra.mxu0 0.0
    %1991 = vmatprep.subr.mxu0 0.0
    %1992 = vmatpush1.msra.mxu0 0.0
    %1993 = vmatprep.subr.mxu0 0.0
    %1994 = vmatpush1.msra.mxu0 0.0
    %1995 = vmatprep.subr.mxu0 0.0
    %1996 = vmatpush1.msra.mxu0 0.0
    %1997 = vmatprep.subr.mxu0 0.0
    %1998 = vmatpush1.msra.mxu0 0.0
    %1999 = vmatprep.subr.mxu0 0.0
    %2000 = vmatpush1.msra.mxu0 0.0
    %2001 = vmatprep.subr.mxu0 0.0
    %2002 = vmatpush1.msra.mxu0 0.0
    %2003 = vmatprep.subr.mxu0 0.0
    %2004 = vmatpush1.msra.mxu0 0.0
    %2005 = vmatprep.subr.mxu0 0.0
    %2006 = vmatpush1.msra.mxu0 0.0
    %2007 = vmatprep.subr.mxu0 0.0
    %2008 = vmatpush1.msra.mxu0 0.0
    %2009 = vmatprep.subr.mxu0 0.0
    %2010 = vmatpush1.msra.mxu0 0.0
    %2011 = vmatprep.subr.mxu0 0.0
    %2012 = vmatpush1.msra.mxu0 0.0
    %2013 = vmatprep.subr.mxu0 %v1758
    %2014 = vmatpush1.msra.mxu0 %v1757
    %2015 = vmatprep.subr.mxu0 0.0
    %2016 = vmatpush2.msra.mxu0 0.0
    %2017 = vmatprep.subr.mxu0 0.0
    %2018 = vmatpush2.msra.mxu0 0.0
    %2019 = vmatprep.subr.mxu0 0.0
    %2020 = vmatpush2.msra.mxu0 0.0
    %2021 = vmatprep.subr.mxu0 0.0
    %2022 = vmatpush2.msra.mxu0 0.0
    %2023 = vmatprep.subr.mxu0 0.0
    %2024 = vmatpush2.msra.mxu0 0.0
    %2025 = vmatprep.subr.mxu0 0.0
    %2026 = vmatpush2.msra.mxu0 0.0
    %2027 = vmatprep.subr.mxu0 0.0
    %2028 = vmatpush2.msra.mxu0 0.0
    %2029 = vmatprep.subr.mxu0 0.0
    %2030 = vmatpush2.msra.mxu0 0.0
    %2031 = vmatprep.subr.mxu0 0.0
    %2032 = vmatpush2.msra.mxu0 0.0
    %2033 = vmatprep.subr.mxu0 0.0
    %2034 = vmatpush2.msra.mxu0 0.0
    %2035 = vmatprep.subr.mxu0 0.0
    %2036 = vmatpush2.msra.mxu0 0.0
    %2037 = vmatprep.subr.mxu0 0.0
    %2038 = vmatpush2.msra.mxu0 0.0
    %2039 = vmatprep.subr.mxu0 0.0
    %2040 = vmatpush2.msra.mxu0 0.0
    %2041 = vmatprep.subr.mxu0 0.0
    %2042 = vmatpush2.msra.mxu0 0.0
    %2043 = vmatprep.subr.mxu0 0.0
    %2044 = vmatpush2.msra.mxu0 0.0
    %2045 = vmatprep.subr.mxu0 0.0
    %2046 = vmatpush2.msra.mxu0 0.0
    %2047 = vmatprep.mubr.f32.mxu0 0.0
    %2048 = vmatmul.mubr.f32.gmra.mxu0 %v1768
    %v2049 = vpop.f32.mrf.mxu0
    %v2050 = vadd.f32 0.0, %v2049
    %v2051 = vpop.f32.mrf.mxu0
    %v2052 = vadd.f32 0.0, %v2051
    %2053 = vdwg.mxu0
    %v2054 = vadd.f32 %v1705, %v1837
    %v2055 = vadd.f32 %v1706, %v1839
    %v2056 = vadd.f32 %v1707, %v1908
    %v2057 = vadd.f32 %v1708, %v1910
    %v2058 = vadd.f32 %v1709, %v1979
    %v2059 = vadd.f32 %v1710, %v1981
    %v2060 = vadd.f32 %v1711, %v2050
    %v2061 = vadd.f32 %v1712, %v2052
    %v2062 = vld [vmem:[%s1 + $0x30] sm:$0xff]
    %2063 = vrot.lane.b32.xlu0 %v1714, 109
    %v2064 = vpop.permute.xlu0 %2063
    %2065 = vrot.lane.b32.xlu0 %v1715, 109
    %v2066 = vpop.permute.xlu0 %2065
    %2067 = vrot.lane.b32.xlu0 %v1716, 109
    %v2068 = vpop.permute.xlu0 %2067
    %2069 = vrot.lane.b32.xlu0 %v1717, 109
    %v2070 = vpop.permute.xlu0 %2069
    %2071 = vrot.lane.b32.xlu0 %v1718, 109
    %v2072 = vpop.permute.xlu0 %2071
    %2073 = vrot.lane.b32.xlu0 %v1719, 109
    %v2074 = vpop.permute.xlu0 %2073
    %2075 = vrot.lane.b32.xlu0 %v1720, 109
    %v2076 = vpop.permute.xlu0 %2075
    %2077 = vrot.lane.b32.xlu0 %v1721, 109
    %v2078 = vpop.permute.xlu0 %2077
    %2079 = vrot.lane.b32.xlu0 %v1722, 109
    %v2080 = vpop.permute.xlu0 %2079
    %vm2081 = vcmask 891904
    %v2082 = vsel %vm2081, %v2064, %v2066
    %v2083 = vsel %vm2081, %v2066, %v2068
    %v2084 = vsel %vm2081, %v2068, %v2070
    %v2085 = vsel %vm2081, %v2070, %v2072
    %v2086 = vsel %vm2081, %v2072, %v2074
    %v2087 = vsel %vm2081, %v2074, %v2076
    %v2088 = vsel %vm2081, %v2076, %v2078
    %v2089 = vsel %vm2081, %v2078, %v2080
    %v2099 = vsel %vm145, %v2062, 0
    %2101 = vmatprep.subr.mxu0 0.0
    %2102 = vmatpush1.msra.mxu0 0.0
    %2103 = vmatprep.subr.mxu0 0.0
    %2104 = vmatpush1.msra.mxu0 0.0
    %2105 = vmatprep.subr.mxu0 0.0
    %2106 = vmatpush1.msra.mxu0 0.0
    %2107 = vmatprep.subr.mxu0 0.0
    %2108 = vmatpush1.msra.mxu0 0.0
    %2109 = vmatprep.subr.mxu0 0.0
    %2110 = vmatpush1.msra.mxu0 0.0
    %2111 = vmatprep.subr.mxu0 0.0
    %2112 = vmatpush1.msra.mxu0 0.0
    %2113 = vmatprep.subr.mxu0 0.0
    %2114 = vmatpush1.msra.mxu0 0.0
    %2115 = vmatprep.subr.mxu0 0.0
    %2116 = vmatpush1.msra.mxu0 0.0
    %2117 = vmatprep.subr.mxu0 0.0
    %2118 = vmatpush1.msra.mxu0 0.0
    %2119 = vmatprep.subr.mxu0 0.0
    %2120 = vmatpush1.msra.mxu0 0.0
    %2121 = vmatprep.subr.mxu0 0.0
    %2122 = vmatpush1.msra.mxu0 0.0
    %2123 = vmatprep.subr.mxu0 0.0
    %2124 = vmatpush1.msra.mxu0 0.0
    %2125 = vmatprep.subr.mxu0 0.0
    %2126 = vmatpush1.msra.mxu0 0.0
    %2127 = vmatprep.subr.mxu0 0.0
    %2128 = vmatpush1.msra.mxu0 0.0
    %2129 = vmatprep.subr.mxu0 0.0
    %2130 = vmatpush1.msra.mxu0 0.0
    %2131 = vmatprep.subr.mxu0 %v2083
    %2132 = vmatpush1.msra.mxu0 %v2082
    %2133 = vmatprep.subr.mxu0 0.0
    %2134 = vmatpush2.msra.mxu0 0.0
    %2135 = vmatprep.subr.mxu0 0.0
    %2136 = vmatpush2.msra.mxu0 0.0
    %2137 = vmatprep.subr.mxu0 0.0
    %2138 = vmatpush2.msra.mxu0 0.0
    %2139 = vmatprep.subr.mxu0 0.0
    %2140 = vmatpush2.msra.mxu0 0.0
    %2141 = vmatprep.subr.mxu0 0.0
    %2142 = vmatpush2.msra.mxu0 0.0
    %2143 = vmatprep.subr.mxu0 0.0
    %2144 = vmatpush2.msra.mxu0 0.0
    %2145 = vmatprep.subr.mxu0 0.0
    %2146 = vmatpush2.msra.mxu0 0.0
    %2147 = vmatprep.subr.mxu0 0.0
    %2148 = vmatpush2.msra.mxu0 0.0
    %2149 = vmatprep.subr.mxu0 0.0
    %2150 = vmatpush2.msra.mxu0 0.0
    %2151 = vmatprep.subr.mxu0 0.0
    %2152 = vmatpush2.msra.mxu0 0.0
    %2153 = vmatprep.subr.mxu0 0.0
    %2154 = vmatpush2.msra.mxu0 0.0
    %2155 = vmatprep.subr.mxu0 0.0
    %2156 = vmatpush2.msra.mxu0 0.0
    %2157 = vmatprep.subr.mxu0 0.0
    %2158 = vmatpush2.msra.mxu0 0.0
    %2159 = vmatprep.subr.mxu0 0.0
    %2160 = vmatpush2.msra.mxu0 0.0
    %2161 = vmatprep.subr.mxu0 0.0
    %2162 = vmatpush2.msra.mxu0 0.0
    %2163 = vmatprep.subr.mxu0 0.0
    %2164 = vmatpush2.msra.mxu0 0.0
    %2165 = vmatprep.mubr.f32.mxu0 0.0
    %2166 = vmatmul.mubr.f32.gmra.mxu0 %v2099
    %v2167 = vpop.f32.mrf.mxu0
    %v2168 = vadd.f32 0.0, %v2167
    %v2169 = vpop.f32.mrf.mxu0
    %v2170 = vadd.f32 0.0, %v2169
    %2171 = vdwg.mxu0
    %2172 = vmatprep.subr.mxu0 0.0
    %2173 = vmatpush1.msra.mxu0 0.0
    %2174 = vmatprep.subr.mxu0 0.0
    %2175 = vmatpush1.msra.mxu0 0.0
    %2176 = vmatprep.subr.mxu0 0.0
    %2177 = vmatpush1.msra.mxu0 0.0
    %2178 = vmatprep.subr.mxu0 0.0
    %2179 = vmatpush1.msra.mxu0 0.0
    %2180 = vmatprep.subr.mxu0 0.0
    %2181 = vmatpush1.msra.mxu0 0.0
    %2182 = vmatprep.subr.mxu0 0.0
    %2183 = vmatpush1.msra.mxu0 0.0
    %2184 = vmatprep.subr.mxu0 0.0
    %2185 = vmatpush1.msra.mxu0 0.0
    %2186 = vmatprep.subr.mxu0 0.0
    %2187 = vmatpush1.msra.mxu0 0.0
    %2188 = vmatprep.subr.mxu0 0.0
    %2189 = vmatpush1.msra.mxu0 0.0
    %2190 = vmatprep.subr.mxu0 0.0
    %2191 = vmatpush1.msra.mxu0 0.0
    %2192 = vmatprep.subr.mxu0 0.0
    %2193 = vmatpush1.msra.mxu0 0.0
    %2194 = vmatprep.subr.mxu0 0.0
    %2195 = vmatpush1.msra.mxu0 0.0
    %2196 = vmatprep.subr.mxu0 0.0
    %2197 = vmatpush1.msra.mxu0 0.0
    %2198 = vmatprep.subr.mxu0 0.0
    %2199 = vmatpush1.msra.mxu0 0.0
    %2200 = vmatprep.subr.mxu0 0.0
    %2201 = vmatpush1.msra.mxu0 0.0
    %2202 = vmatprep.subr.mxu0 %v2085
    %2203 = vmatpush1.msra.mxu0 %v2084
    %2204 = vmatprep.subr.mxu0 0.0
    %2205 = vmatpush2.msra.mxu0 0.0
    %2206 = vmatprep.subr.mxu0 0.0
    %2207 = vmatpush2.msra.mxu0 0.0
    %2208 = vmatprep.subr.mxu0 0.0
    %2209 = vmatpush2.msra.mxu0 0.0
    %2210 = vmatprep.subr.mxu0 0.0
    %2211 = vmatpush2.msra.mxu0 0.0
    %2212 = vmatprep.subr.mxu0 0.0
    %2213 = vmatpush2.msra.mxu0 0.0
    %2214 = vmatprep.subr.mxu0 0.0
    %2215 = vmatpush2.msra.mxu0 0.0
    %2216 = vmatprep.subr.mxu0 0.0
    %2217 = vmatpush2.msra.mxu0 0.0
    %2218 = vmatprep.subr.mxu0 0.0
    %2219 = vmatpush2.msra.mxu0 0.0
    %2220 = vmatprep.subr.mxu0 0.0
    %2221 = vmatpush2.msra.mxu0 0.0
    %2222 = vmatprep.subr.mxu0 0.0
    %2223 = vmatpush2.msra.mxu0 0.0
    %2224 = vmatprep.subr.mxu0 0.0
    %2225 = vmatpush2.msra.mxu0 0.0
    %2226 = vmatprep.subr.mxu0 0.0
    %2227 = vmatpush2.msra.mxu0 0.0
    %2228 = vmatprep.subr.mxu0 0.0
    %2229 = vmatpush2.msra.mxu0 0.0
    %2230 = vmatprep.subr.mxu0 0.0
    %2231 = vmatpush2.msra.mxu0 0.0
    %2232 = vmatprep.subr.mxu0 0.0
    %2233 = vmatpush2.msra.mxu0 0.0
    %2234 = vmatprep.subr.mxu0 0.0
    %2235 = vmatpush2.msra.mxu0 0.0
    %2236 = vmatprep.mubr.f32.mxu0 0.0
    %2237 = vmatmul.mubr.f32.gmra.mxu0 %v2099
    %v2238 = vpop.f32.mrf.mxu0
    %v2239 = vadd.f32 0.0, %v2238
    %v2240 = vpop.f32.mrf.mxu0
    %v2241 = vadd.f32 0.0, %v2240
    %2242 = vdwg.mxu0
    %2243 = vmatprep.subr.mxu0 0.0
    %2244 = vmatpush1.msra.mxu0 0.0
    %2245 = vmatprep.subr.mxu0 0.0
    %2246 = vmatpush1.msra.mxu0 0.0
    %2247 = vmatprep.subr.mxu0 0.0
    %2248 = vmatpush1.msra.mxu0 0.0
    %2249 = vmatprep.subr.mxu0 0.0
    %2250 = vmatpush1.msra.mxu0 0.0
    %2251 = vmatprep.subr.mxu0 0.0
    %2252 = vmatpush1.msra.mxu0 0.0
    %2253 = vmatprep.subr.mxu0 0.0
    %2254 = vmatpush1.msra.mxu0 0.0
    %2255 = vmatprep.subr.mxu0 0.0
    %2256 = vmatpush1.msra.mxu0 0.0
    %2257 = vmatprep.subr.mxu0 0.0
    %2258 = vmatpush1.msra.mxu0 0.0
    %2259 = vmatprep.subr.mxu0 0.0
    %2260 = vmatpush1.msra.mxu0 0.0
    %2261 = vmatprep.subr.mxu0 0.0
    %2262 = vmatpush1.msra.mxu0 0.0
    %2263 = vmatprep.subr.mxu0 0.0
    %2264 = vmatpush1.msra.mxu0 0.0
    %2265 = vmatprep.subr.mxu0 0.0
    %2266 = vmatpush1.msra.mxu0 0.0
    %2267 = vmatprep.subr.mxu0 0.0
    %2268 = vmatpush1.msra.mxu0 0.0
    %2269 = vmatprep.subr.mxu0 0.0
    %2270 = vmatpush1.msra.mxu0 0.0
    %2271 = vmatprep.subr.mxu0 0.0
    %2272 = vmatpush1.msra.mxu0 0.0
    %2273 = vmatprep.subr.mxu0 %v2087
    %2274 = vmatpush1.msra.mxu0 %v2086
    %2275 = vmatprep.subr.mxu0 0.0
    %2276 = vmatpush2.msra.mxu0 0.0
    %2277 = vmatprep.subr.mxu0 0.0
    %2278 = vmatpush2.msra.mxu0 0.0
    %2279 = vmatprep.subr.mxu0 0.0
    %2280 = vmatpush2.msra.mxu0 0.0
    %2281 = vmatprep.subr.mxu0 0.0
    %2282 = vmatpush2.msra.mxu0 0.0
    %2283 = vmatprep.subr.mxu0 0.0
    %2284 = vmatpush2.msra.mxu0 0.0
    %2285 = vmatprep.subr.mxu0 0.0
    %2286 = vmatpush2.msra.mxu0 0.0
    %2287 = vmatprep.subr.mxu0 0.0
    %2288 = vmatpush2.msra.mxu0 0.0
    %2289 = vmatprep.subr.mxu0 0.0
    %2290 = vmatpush2.msra.mxu0 0.0
    %2291 = vmatprep.subr.mxu0 0.0
    %2292 = vmatpush2.msra.mxu0 0.0
    %2293 = vmatprep.subr.mxu0 0.0
    %2294 = vmatpush2.msra.mxu0 0.0
    %2295 = vmatprep.subr.mxu0 0.0
    %2296 = vmatpush2.msra.mxu0 0.0
    %2297 = vmatprep.subr.mxu0 0.0
    %2298 = vmatpush2.msra.mxu0 0.0
    %2299 = vmatprep.subr.mxu0 0.0
    %2300 = vmatpush2.msra.mxu0 0.0
    %2301 = vmatprep.subr.mxu0 0.0
    %2302 = vmatpush2.msra.mxu0 0.0
    %2303 = vmatprep.subr.mxu0 0.0
    %2304 = vmatpush2.msra.mxu0 0.0
    %2305 = vmatprep.subr.mxu0 0.0
    %2306 = vmatpush2.msra.mxu0 0.0
    %2307 = vmatprep.mubr.f32.mxu0 0.0
    %2308 = vmatmul.mubr.f32.gmra.mxu0 %v2099
    %v2309 = vpop.f32.mrf.mxu0
    %v2310 = vadd.f32 0.0, %v2309
    %v2311 = vpop.f32.mrf.mxu0
    %v2312 = vadd.f32 0.0, %v2311
    %2313 = vdwg.mxu0
    %2314 = vmatprep.subr.mxu0 0.0
    %2315 = vmatpush1.msra.mxu0 0.0
    %2316 = vmatprep.subr.mxu0 0.0
    %2317 = vmatpush1.msra.mxu0 0.0
    %2318 = vmatprep.subr.mxu0 0.0
    %2319 = vmatpush1.msra.mxu0 0.0
    %2320 = vmatprep.subr.mxu0 0.0
    %2321 = vmatpush1.msra.mxu0 0.0
    %2322 = vmatprep.subr.mxu0 0.0
    %2323 = vmatpush1.msra.mxu0 0.0
    %2324 = vmatprep.subr.mxu0 0.0
    %2325 = vmatpush1.msra.mxu0 0.0
    %2326 = vmatprep.subr.mxu0 0.0
    %2327 = vmatpush1.msra.mxu0 0.0
    %2328 = vmatprep.subr.mxu0 0.0
    %2329 = vmatpush1.msra.mxu0 0.0
    %2330 = vmatprep.subr.mxu0 0.0
    %2331 = vmatpush1.msra.mxu0 0.0
    %2332 = vmatprep.subr.mxu0 0.0
    %2333 = vmatpush1.msra.mxu0 0.0
    %2334 = vmatprep.subr.mxu0 0.0
    %2335 = vmatpush1.msra.mxu0 0.0
    %2336 = vmatprep.subr.mxu0 0.0
    %2337 = vmatpush1.msra.mxu0 0.0
    %2338 = vmatprep.subr.mxu0 0.0
    %2339 = vmatpush1.msra.mxu0 0.0
    %2340 = vmatprep.subr.mxu0 0.0
    %2341 = vmatpush1.msra.mxu0 0.0
    %2342 = vmatprep.subr.mxu0 0.0
    %2343 = vmatpush1.msra.mxu0 0.0
    %2344 = vmatprep.subr.mxu0 %v2089
    %2345 = vmatpush1.msra.mxu0 %v2088
    %2346 = vmatprep.subr.mxu0 0.0
    %2347 = vmatpush2.msra.mxu0 0.0
    %2348 = vmatprep.subr.mxu0 0.0
    %2349 = vmatpush2.msra.mxu0 0.0
    %2350 = vmatprep.subr.mxu0 0.0
    %2351 = vmatpush2.msra.mxu0 0.0
    %2352 = vmatprep.subr.mxu0 0.0
    %2353 = vmatpush2.msra.mxu0 0.0
    %2354 = vmatprep.subr.mxu0 0.0
    %2355 = vmatpush2.msra.mxu0 0.0
    %2356 = vmatprep.subr.mxu0 0.0
    %2357 = vmatpush2.msra.mxu0 0.0
    %2358 = vmatprep.subr.mxu0 0.0
    %2359 = vmatpush2.msra.mxu0 0.0
    %2360 = vmatprep.subr.mxu0 0.0
    %2361 = vmatpush2.msra.mxu0 0.0
    %2362 = vmatprep.subr.mxu0 0.0
    %2363 = vmatpush2.msra.mxu0 0.0
    %2364 = vmatprep.subr.mxu0 0.0
    %2365 = vmatpush2.msra.mxu0 0.0
    %2366 = vmatprep.subr.mxu0 0.0
    %2367 = vmatpush2.msra.mxu0 0.0
    %2368 = vmatprep.subr.mxu0 0.0
    %2369 = vmatpush2.msra.mxu0 0.0
    %2370 = vmatprep.subr.mxu0 0.0
    %2371 = vmatpush2.msra.mxu0 0.0
    %2372 = vmatprep.subr.mxu0 0.0
    %2373 = vmatpush2.msra.mxu0 0.0
    %2374 = vmatprep.subr.mxu0 0.0
    %2375 = vmatpush2.msra.mxu0 0.0
    %2376 = vmatprep.subr.mxu0 0.0
    %2377 = vmatpush2.msra.mxu0 0.0
    %2378 = vmatprep.mubr.f32.mxu0 0.0
    %2379 = vmatmul.mubr.f32.gmra.mxu0 %v2099
    %v2380 = vpop.f32.mrf.mxu0
    %v2381 = vadd.f32 0.0, %v2380
    %v2382 = vpop.f32.mrf.mxu0
    %v2383 = vadd.f32 0.0, %v2382
    %2384 = vdwg.mxu0
    %v2385 = vadd.f32 %v2054, %v2168
    %v2386 = vadd.f32 %v2055, %v2170
    %v2387 = vadd.f32 %v2056, %v2239
    %v2388 = vadd.f32 %v2057, %v2241
    %v2389 = vadd.f32 %v2058, %v2310
    %v2390 = vadd.f32 %v2059, %v2312
    %v2391 = vadd.f32 %v2060, %v2381
    %v2392 = vadd.f32 %v2061, %v2383
    %v2393 = vld [vmem:[%s1 + $0x38] sm:$0xff]
    %2394 = vrot.lane.b32.xlu0 %v1714, 108
    %v2395 = vpop.permute.xlu0 %2394
    %2396 = vrot.lane.b32.xlu0 %v1715, 108
    %v2397 = vpop.permute.xlu0 %2396
    %2398 = vrot.lane.b32.xlu0 %v1716, 108
    %v2399 = vpop.permute.xlu0 %2398
    %2400 = vrot.lane.b32.xlu0 %v1717, 108
    %v2401 = vpop.permute.xlu0 %2400
    %2402 = vrot.lane.b32.xlu0 %v1718, 108
    %v2403 = vpop.permute.xlu0 %2402
    %2404 = vrot.lane.b32.xlu0 %v1719, 108
    %v2405 = vpop.permute.xlu0 %2404
    %2406 = vrot.lane.b32.xlu0 %v1720, 108
    %v2407 = vpop.permute.xlu0 %2406
    %2408 = vrot.lane.b32.xlu0 %v1721, 108
    %v2409 = vpop.permute.xlu0 %2408
    %2410 = vrot.lane.b32.xlu0 %v1722, 108
    %v2411 = vpop.permute.xlu0 %2410
    %vm2412 = vcmask 883712
    %v2413 = vsel %vm2412, %v2395, %v2397
    %v2414 = vsel %vm2412, %v2397, %v2399
    %v2415 = vsel %vm2412, %v2399, %v2401
    %v2416 = vsel %vm2412, %v2401, %v2403
    %v2417 = vsel %vm2412, %v2403, %v2405
    %v2418 = vsel %vm2412, %v2405, %v2407
    %v2419 = vsel %vm2412, %v2407, %v2409
    %v2420 = vsel %vm2412, %v2409, %v2411
    %v2430 = vsel %vm145, %v2393, 0
    %2432 = vmatprep.subr.mxu0 0.0
    %2433 = vmatpush1.msra.mxu0 0.0
    %2434 = vmatprep.subr.mxu0 0.0
    %2435 = vmatpush1.msra.mxu0 0.0
    %2436 = vmatprep.subr.mxu0 0.0
    %2437 = vmatpush1.msra.mxu0 0.0
    %2438 = vmatprep.subr.mxu0 0.0
    %2439 = vmatpush1.msra.mxu0 0.0
    %2440 = vmatprep.subr.mxu0 0.0
    %2441 = vmatpush1.msra.mxu0 0.0
    %2442 = vmatprep.subr.mxu0 0.0
    %2443 = vmatpush1.msra.mxu0 0.0
    %2444 = vmatprep.subr.mxu0 0.0
    %2445 = vmatpush1.msra.mxu0 0.0
    %2446 = vmatprep.subr.mxu0 0.0
    %2447 = vmatpush1.msra.mxu0 0.0
    %2448 = vmatprep.subr.mxu0 0.0
    %2449 = vmatpush1.msra.mxu0 0.0
    %2450 = vmatprep.subr.mxu0 0.0
    %2451 = vmatpush1.msra.mxu0 0.0
    %2452 = vmatprep.subr.mxu0 0.0
    %2453 = vmatpush1.msra.mxu0 0.0
    %2454 = vmatprep.subr.mxu0 0.0
    %2455 = vmatpush1.msra.mxu0 0.0
    %2456 = vmatprep.subr.mxu0 0.0
    %2457 = vmatpush1.msra.mxu0 0.0
    %2458 = vmatprep.subr.mxu0 0.0
    %2459 = vmatpush1.msra.mxu0 0.0
    %2460 = vmatprep.subr.mxu0 0.0
    %2461 = vmatpush1.msra.mxu0 0.0
    %2462 = vmatprep.subr.mxu0 %v2414
    %2463 = vmatpush1.msra.mxu0 %v2413
    %2464 = vmatprep.subr.mxu0 0.0
    %2465 = vmatpush2.msra.mxu0 0.0
    %2466 = vmatprep.subr.mxu0 0.0
    %2467 = vmatpush2.msra.mxu0 0.0
    %2468 = vmatprep.subr.mxu0 0.0
    %2469 = vmatpush2.msra.mxu0 0.0
    %2470 = vmatprep.subr.mxu0 0.0
    %2471 = vmatpush2.msra.mxu0 0.0
    %2472 = vmatprep.subr.mxu0 0.0
    %2473 = vmatpush2.msra.mxu0 0.0
    %2474 = vmatprep.subr.mxu0 0.0
    %2475 = vmatpush2.msra.mxu0 0.0
    %2476 = vmatprep.subr.mxu0 0.0
    %2477 = vmatpush2.msra.mxu0 0.0
    %2478 = vmatprep.subr.mxu0 0.0
    %2479 = vmatpush2.msra.mxu0 0.0
    %2480 = vmatprep.subr.mxu0 0.0
    %2481 = vmatpush2.msra.mxu0 0.0
    %2482 = vmatprep.subr.mxu0 0.0
    %2483 = vmatpush2.msra.mxu0 0.0
    %2484 = vmatprep.subr.mxu0 0.0
    %2485 = vmatpush2.msra.mxu0 0.0
    %2486 = vmatprep.subr.mxu0 0.0
    %2487 = vmatpush2.msra.mxu0 0.0
    %2488 = vmatprep.subr.mxu0 0.0
    %2489 = vmatpush2.msra.mxu0 0.0
    %2490 = vmatprep.subr.mxu0 0.0
    %2491 = vmatpush2.msra.mxu0 0.0
    %2492 = vmatprep.subr.mxu0 0.0
    %2493 = vmatpush2.msra.mxu0 0.0
    %2494 = vmatprep.subr.mxu0 0.0
    %2495 = vmatpush2.msra.mxu0 0.0
    %2496 = vmatprep.mubr.f32.mxu0 0.0
    %2497 = vmatmul.mubr.f32.gmra.mxu0 %v2430
    %v2498 = vpop.f32.mrf.mxu0
    %v2499 = vadd.f32 0.0, %v2498
    %v2500 = vpop.f32.mrf.mxu0
    %v2501 = vadd.f32 0.0, %v2500
    %2502 = vdwg.mxu0
    %2503 = vmatprep.subr.mxu0 0.0
    %2504 = vmatpush1.msra.mxu0 0.0
    %2505 = vmatprep.subr.mxu0 0.0
    %2506 = vmatpush1.msra.mxu0 0.0
    %2507 = vmatprep.subr.mxu0 0.0
    %2508 = vmatpush1.msra.mxu0 0.0
    %2509 = vmatprep.subr.mxu0 0.0
    %2510 = vmatpush1.msra.mxu0 0.0
    %2511 = vmatprep.subr.mxu0 0.0
    %2512 = vmatpush1.msra.mxu0 0.0
    %2513 = vmatprep.subr.mxu0 0.0
    %2514 = vmatpush1.msra.mxu0 0.0
    %2515 = vmatprep.subr.mxu0 0.0
    %2516 = vmatpush1.msra.mxu0 0.0
    %2517 = vmatprep.subr.mxu0 0.0
    %2518 = vmatpush1.msra.mxu0 0.0
    %2519 = vmatprep.subr.mxu0 0.0
    %2520 = vmatpush1.msra.mxu0 0.0
    %2521 = vmatprep.subr.mxu0 0.0
    %2522 = vmatpush1.msra.mxu0 0.0
    %2523 = vmatprep.subr.mxu0 0.0
    %2524 = vmatpush1.msra.mxu0 0.0
    %2525 = vmatprep.subr.mxu0 0.0
    %2526 = vmatpush1.msra.mxu0 0.0
    %2527 = vmatprep.subr.mxu0 0.0
    %2528 = vmatpush1.msra.mxu0 0.0
    %2529 = vmatprep.subr.mxu0 0.0
    %2530 = vmatpush1.msra.mxu0 0.0
    %2531 = vmatprep.subr.mxu0 0.0
    %2532 = vmatpush1.msra.mxu0 0.0
    %2533 = vmatprep.subr.mxu0 %v2416
    %2534 = vmatpush1.msra.mxu0 %v2415
    %2535 = vmatprep.subr.mxu0 0.0
    %2536 = vmatpush2.msra.mxu0 0.0
    %2537 = vmatprep.subr.mxu0 0.0
    %2538 = vmatpush2.msra.mxu0 0.0
    %2539 = vmatprep.subr.mxu0 0.0
    %2540 = vmatpush2.msra.mxu0 0.0
    %2541 = vmatprep.subr.mxu0 0.0
    %2542 = vmatpush2.msra.mxu0 0.0
    %2543 = vmatprep.subr.mxu0 0.0
    %2544 = vmatpush2.msra.mxu0 0.0
    %2545 = vmatprep.subr.mxu0 0.0
    %2546 = vmatpush2.msra.mxu0 0.0
    %2547 = vmatprep.subr.mxu0 0.0
    %2548 = vmatpush2.msra.mxu0 0.0
    %2549 = vmatprep.subr.mxu0 0.0
    %2550 = vmatpush2.msra.mxu0 0.0
    %2551 = vmatprep.subr.mxu0 0.0
    %2552 = vmatpush2.msra.mxu0 0.0
    %2553 = vmatprep.subr.mxu0 0.0
    %2554 = vmatpush2.msra.mxu0 0.0
    %2555 = vmatprep.subr.mxu0 0.0
    %2556 = vmatpush2.msra.mxu0 0.0
    %2557 = vmatprep.subr.mxu0 0.0
    %2558 = vmatpush2.msra.mxu0 0.0
    %2559 = vmatprep.subr.mxu0 0.0
    %2560 = vmatpush2.msra.mxu0 0.0
    %2561 = vmatprep.subr.mxu0 0.0
    %2562 = vmatpush2.msra.mxu0 0.0
    %2563 = vmatprep.subr.mxu0 0.0
    %2564 = vmatpush2.msra.mxu0 0.0
    %2565 = vmatprep.subr.mxu0 0.0
    %2566 = vmatpush2.msra.mxu0 0.0
    %2567 = vmatprep.mubr.f32.mxu0 0.0
    %2568 = vmatmul.mubr.f32.gmra.mxu0 %v2430
    %v2569 = vpop.f32.mrf.mxu0
    %v2570 = vadd.f32 0.0, %v2569
    %v2571 = vpop.f32.mrf.mxu0
    %v2572 = vadd.f32 0.0, %v2571
    %2573 = vdwg.mxu0
    %2574 = vmatprep.subr.mxu0 0.0
    %2575 = vmatpush1.msra.mxu0 0.0
    %2576 = vmatprep.subr.mxu0 0.0
    %2577 = vmatpush1.msra.mxu0 0.0
    %2578 = vmatprep.subr.mxu0 0.0
    %2579 = vmatpush1.msra.mxu0 0.0
    %2580 = vmatprep.subr.mxu0 0.0
    %2581 = vmatpush1.msra.mxu0 0.0
    %2582 = vmatprep.subr.mxu0 0.0
    %2583 = vmatpush1.msra.mxu0 0.0
    %2584 = vmatprep.subr.mxu0 0.0
    %2585 = vmatpush1.msra.mxu0 0.0
    %2586 = vmatprep.subr.mxu0 0.0
    %2587 = vmatpush1.msra.mxu0 0.0
    %2588 = vmatprep.subr.mxu0 0.0
    %2589 = vmatpush1.msra.mxu0 0.0
    %2590 = vmatprep.subr.mxu0 0.0
    %2591 = vmatpush1.msra.mxu0 0.0
    %2592 = vmatprep.subr.mxu0 0.0
    %2593 = vmatpush1.msra.mxu0 0.0
    %2594 = vmatprep.subr.mxu0 0.0
    %2595 = vmatpush1.msra.mxu0 0.0
    %2596 = vmatprep.subr.mxu0 0.0
    %2597 = vmatpush1.msra.mxu0 0.0
    %2598 = vmatprep.subr.mxu0 0.0
    %2599 = vmatpush1.msra.mxu0 0.0
    %2600 = vmatprep.subr.mxu0 0.0
    %2601 = vmatpush1.msra.mxu0 0.0
    %2602 = vmatprep.subr.mxu0 0.0
    %2603 = vmatpush1.msra.mxu0 0.0
    %2604 = vmatprep.subr.mxu0 %v2418
    %2605 = vmatpush1.msra.mxu0 %v2417
    %2606 = vmatprep.subr.mxu0 0.0
    %2607 = vmatpush2.msra.mxu0 0.0
    %2608 = vmatprep.subr.mxu0 0.0
    %2609 = vmatpush2.msra.mxu0 0.0
    %2610 = vmatprep.subr.mxu0 0.0
    %2611 = vmatpush2.msra.mxu0 0.0
    %2612 = vmatprep.subr.mxu0 0.0
    %2613 = vmatpush2.msra.mxu0 0.0
    %2614 = vmatprep.subr.mxu0 0.0
    %2615 = vmatpush2.msra.mxu0 0.0
    %2616 = vmatprep.subr.mxu0 0.0
    %2617 = vmatpush2.msra.mxu0 0.0
    %2618 = vmatprep.subr.mxu0 0.0
    %2619 = vmatpush2.msra.mxu0 0.0
    %2620 = vmatprep.subr.mxu0 0.0
    %2621 = vmatpush2.msra.mxu0 0.0
    %2622 = vmatprep.subr.mxu0 0.0
    %2623 = vmatpush2.msra.mxu0 0.0
    %2624 = vmatprep.subr.mxu0 0.0
    %2625 = vmatpush2.msra.mxu0 0.0
    %2626 = vmatprep.subr.mxu0 0.0
    %2627 = vmatpush2.msra.mxu0 0.0
    %2628 = vmatprep.subr.mxu0 0.0
    %2629 = vmatpush2.msra.mxu0 0.0
    %2630 = vmatprep.subr.mxu0 0.0
    %2631 = vmatpush2.msra.mxu0 0.0
    %2632 = vmatprep.subr.mxu0 0.0
    %2633 = vmatpush2.msra.mxu0 0.0
    %2634 = vmatprep.subr.mxu0 0.0
    %2635 = vmatpush2.msra.mxu0 0.0
    %2636 = vmatprep.subr.mxu0 0.0
    %2637 = vmatpush2.msra.mxu0 0.0
    %2638 = vmatprep.mubr.f32.mxu0 0.0
    %2639 = vmatmul.mubr.f32.gmra.mxu0 %v2430
    %v2640 = vpop.f32.mrf.mxu0
    %v2641 = vadd.f32 0.0, %v2640
    %v2642 = vpop.f32.mrf.mxu0
    %v2643 = vadd.f32 0.0, %v2642
    %2644 = vdwg.mxu0
    %2645 = vmatprep.subr.mxu0 0.0
    %2646 = vmatpush1.msra.mxu0 0.0
    %2647 = vmatprep.subr.mxu0 0.0
    %2648 = vmatpush1.msra.mxu0 0.0
    %2649 = vmatprep.subr.mxu0 0.0
    %2650 = vmatpush1.msra.mxu0 0.0
    %2651 = vmatprep.subr.mxu0 0.0
    %2652 = vmatpush1.msra.mxu0 0.0
    %2653 = vmatprep.subr.mxu0 0.0
    %2654 = vmatpush1.msra.mxu0 0.0
    %2655 = vmatprep.subr.mxu0 0.0
    %2656 = vmatpush1.msra.mxu0 0.0
    %2657 = vmatprep.subr.mxu0 0.0
    %2658 = vmatpush1.msra.mxu0 0.0
    %2659 = vmatprep.subr.mxu0 0.0
    %2660 = vmatpush1.msra.mxu0 0.0
    %2661 = vmatprep.subr.mxu0 0.0
    %2662 = vmatpush1.msra.mxu0 0.0
    %2663 = vmatprep.subr.mxu0 0.0
    %2664 = vmatpush1.msra.mxu0 0.0
    %2665 = vmatprep.subr.mxu0 0.0
    %2666 = vmatpush1.msra.mxu0 0.0
    %2667 = vmatprep.subr.mxu0 0.0
    %2668 = vmatpush1.msra.mxu0 0.0
    %2669 = vmatprep.subr.mxu0 0.0
    %2670 = vmatpush1.msra.mxu0 0.0
    %2671 = vmatprep.subr.mxu0 0.0
    %2672 = vmatpush1.msra.mxu0 0.0
    %2673 = vmatprep.subr.mxu0 0.0
    %2674 = vmatpush1.msra.mxu0 0.0
    %2675 = vmatprep.subr.mxu0 %v2420
    %2676 = vmatpush1.msra.mxu0 %v2419
    %2677 = vmatprep.subr.mxu0 0.0
    %2678 = vmatpush2.msra.mxu0 0.0
    %2679 = vmatprep.subr.mxu0 0.0
    %2680 = vmatpush2.msra.mxu0 0.0
    %2681 = vmatprep.subr.mxu0 0.0
    %2682 = vmatpush2.msra.mxu0 0.0
    %2683 = vmatprep.subr.mxu0 0.0
    %2684 = vmatpush2.msra.mxu0 0.0
    %2685 = vmatprep.subr.mxu0 0.0
    %2686 = vmatpush2.msra.mxu0 0.0
    %2687 = vmatprep.subr.mxu0 0.0
    %2688 = vmatpush2.msra.mxu0 0.0
    %2689 = vmatprep.subr.mxu0 0.0
    %2690 = vmatpush2.msra.mxu0 0.0
    %2691 = vmatprep.subr.mxu0 0.0
    %2692 = vmatpush2.msra.mxu0 0.0
    %2693 = vmatprep.subr.mxu0 0.0
    %2694 = vmatpush2.msra.mxu0 0.0
    %2695 = vmatprep.subr.mxu0 0.0
    %2696 = vmatpush2.msra.mxu0 0.0
    %2697 = vmatprep.subr.mxu0 0.0
    %2698 = vmatpush2.msra.mxu0 0.0
    %2699 = vmatprep.subr.mxu0 0.0
    %2700 = vmatpush2.msra.mxu0 0.0
    %2701 = vmatprep.subr.mxu0 0.0
    %2702 = vmatpush2.msra.mxu0 0.0
    %2703 = vmatprep.subr.mxu0 0.0
    %2704 = vmatpush2.msra.mxu0 0.0
    %2705 = vmatprep.subr.mxu0 0.0
    %2706 = vmatpush2.msra.mxu0 0.0
    %2707 = vmatprep.subr.mxu0 0.0
    %2708 = vmatpush2.msra.mxu0 0.0
    %2709 = vmatprep.mubr.f32.mxu0 0.0
    %2710 = vmatmul.mubr.f32.gmra.mxu0 %v2430
    %v2711 = vpop.f32.mrf.mxu0
    %v2712 = vadd.f32 0.0, %v2711
    %v2713 = vpop.f32.mrf.mxu0
    %v2714 = vadd.f32 0.0, %v2713
    %2715 = vdwg.mxu0
    %v2716 = vadd.f32 %v2385, %v2499
    %v2717 = vadd.f32 %v2386, %v2501
    %v2718 = vadd.f32 %v2387, %v2570
    %v2719 = vadd.f32 %v2388, %v2572
    %v2720 = vadd.f32 %v2389, %v2641
    %v2721 = vadd.f32 %v2390, %v2643
    %v2722 = vadd.f32 %v2391, %v2712
    %v2723 = vadd.f32 %v2392, %v2714
    %v2724 = vld [vmem:[%s1 + $0x40] sm:$0xff]
    %2725 = vrot.lane.b32.xlu0 %v1714, 107
    %v2726 = vpop.permute.xlu0 %2725
    %2727 = vrot.lane.b32.xlu0 %v1715, 107
    %v2728 = vpop.permute.xlu0 %2727
    %2729 = vrot.lane.b32.xlu0 %v1716, 107
    %v2730 = vpop.permute.xlu0 %2729
    %2731 = vrot.lane.b32.xlu0 %v1717, 107
    %v2732 = vpop.permute.xlu0 %2731
    %2733 = vrot.lane.b32.xlu0 %v1718, 107
    %v2734 = vpop.permute.xlu0 %2733
    %2735 = vrot.lane.b32.xlu0 %v1719, 107
    %v2736 = vpop.permute.xlu0 %2735
    %2737 = vrot.lane.b32.xlu0 %v1720, 107
    %v2738 = vpop.permute.xlu0 %2737
    %2739 = vrot.lane.b32.xlu0 %v1721, 107
    %v2740 = vpop.permute.xlu0 %2739
    %2741 = vrot.lane.b32.xlu0 %v1722, 107
    %v2742 = vpop.permute.xlu0 %2741
    %vm2743 = vcmask 875520
    %v2744 = vsel %vm2743, %v2726, %v2728
    %v2745 = vsel %vm2743, %v2728, %v2730
    %v2746 = vsel %vm2743, %v2730, %v2732
    %v2747 = vsel %vm2743, %v2732, %v2734
    %v2748 = vsel %vm2743, %v2734, %v2736
    %v2749 = vsel %vm2743, %v2736, %v2738
    %v2750 = vsel %vm2743, %v2738, %v2740
    %v2751 = vsel %vm2743, %v2740, %v2742
    %v2761 = vsel %vm145, %v2724, 0
    %2763 = vmatprep.subr.mxu0 0.0
    %2764 = vmatpush1.msra.mxu0 0.0
    %2765 = vmatprep.subr.mxu0 0.0
    %2766 = vmatpush1.msra.mxu0 0.0
    %2767 = vmatprep.subr.mxu0 0.0
    %2768 = vmatpush1.msra.mxu0 0.0
    %2769 = vmatprep.subr.mxu0 0.0
    %2770 = vmatpush1.msra.mxu0 0.0
    %2771 = vmatprep.subr.mxu0 0.0
    %2772 = vmatpush1.msra.mxu0 0.0
    %2773 = vmatprep.subr.mxu0 0.0
    %2774 = vmatpush1.msra.mxu0 0.0
    %2775 = vmatprep.subr.mxu0 0.0
    %2776 = vmatpush1.msra.mxu0 0.0
    %2777 = vmatprep.subr.mxu0 0.0
    %2778 = vmatpush1.msra.mxu0 0.0
    %2779 = vmatprep.subr.mxu0 0.0
    %2780 = vmatpush1.msra.mxu0 0.0
    %2781 = vmatprep.subr.mxu0 0.0
    %2782 = vmatpush1.msra.mxu0 0.0
    %2783 = vmatprep.subr.mxu0 0.0
    %2784 = vmatpush1.msra.mxu0 0.0
    %2785 = vmatprep.subr.mxu0 0.0
    %2786 = vmatpush1.msra.mxu0 0.0
    %2787 = vmatprep.subr.mxu0 0.0
    %2788 = vmatpush1.msra.mxu0 0.0
    %2789 = vmatprep.subr.mxu0 0.0
    %2790 = vmatpush1.msra.mxu0 0.0
    %2791 = vmatprep.subr.mxu0 0.0
    %2792 = vmatpush1.msra.mxu0 0.0
    %2793 = vmatprep.subr.mxu0 %v2745
    %2794 = vmatpush1.msra.mxu0 %v2744
    %2795 = vmatprep.subr.mxu0 0.0
    %2796 = vmatpush2.msra.mxu0 0.0
    %2797 = vmatprep.subr.mxu0 0.0
    %2798 = vmatpush2.msra.mxu0 0.0
    %2799 = vmatprep.subr.mxu0 0.0
    %2800 = vmatpush2.msra.mxu0 0.0
    %2801 = vmatprep.subr.mxu0 0.0
    %2802 = vmatpush2.msra.mxu0 0.0
    %2803 = vmatprep.subr.mxu0 0.0
    %2804 = vmatpush2.msra.mxu0 0.0
    %2805 = vmatprep.subr.mxu0 0.0
    %2806 = vmatpush2.msra.mxu0 0.0
    %2807 = vmatprep.subr.mxu0 0.0
    %2808 = vmatpush2.msra.mxu0 0.0
    %2809 = vmatprep.subr.mxu0 0.0
    %2810 = vmatpush2.msra.mxu0 0.0
    %2811 = vmatprep.subr.mxu0 0.0
    %2812 = vmatpush2.msra.mxu0 0.0
    %2813 = vmatprep.subr.mxu0 0.0
    %2814 = vmatpush2.msra.mxu0 0.0
    %2815 = vmatprep.subr.mxu0 0.0
    %2816 = vmatpush2.msra.mxu0 0.0
    %2817 = vmatprep.subr.mxu0 0.0
    %2818 = vmatpush2.msra.mxu0 0.0
    %2819 = vmatprep.subr.mxu0 0.0
    %2820 = vmatpush2.msra.mxu0 0.0
    %2821 = vmatprep.subr.mxu0 0.0
    %2822 = vmatpush2.msra.mxu0 0.0
    %2823 = vmatprep.subr.mxu0 0.0
    %2824 = vmatpush2.msra.mxu0 0.0
    %2825 = vmatprep.subr.mxu0 0.0
    %2826 = vmatpush2.msra.mxu0 0.0
    %2827 = vmatprep.mubr.f32.mxu0 0.0
    %2828 = vmatmul.mubr.f32.gmra.mxu0 %v2761
    %v2829 = vpop.f32.mrf.mxu0
    %v2830 = vadd.f32 0.0, %v2829
    %v2831 = vpop.f32.mrf.mxu0
    %v2832 = vadd.f32 0.0, %v2831
    %2833 = vdwg.mxu0
    %2834 = vmatprep.subr.mxu0 0.0
    %2835 = vmatpush1.msra.mxu0 0.0
    %2836 = vmatprep.subr.mxu0 0.0
    %2837 = vmatpush1.msra.mxu0 0.0
    %2838 = vmatprep.subr.mxu0 0.0
    %2839 = vmatpush1.msra.mxu0 0.0
    %2840 = vmatprep.subr.mxu0 0.0
    %2841 = vmatpush1.msra.mxu0 0.0
    %2842 = vmatprep.subr.mxu0 0.0
    %2843 = vmatpush1.msra.mxu0 0.0
    %2844 = vmatprep.subr.mxu0 0.0
    %2845 = vmatpush1.msra.mxu0 0.0
    %2846 = vmatprep.subr.mxu0 0.0
    %2847 = vmatpush1.msra.mxu0 0.0
    %2848 = vmatprep.subr.mxu0 0.0
    %2849 = vmatpush1.msra.mxu0 0.0
    %2850 = vmatprep.subr.mxu0 0.0
    %2851 = vmatpush1.msra.mxu0 0.0
    %2852 = vmatprep.subr.mxu0 0.0
    %2853 = vmatpush1.msra.mxu0 0.0
    %2854 = vmatprep.subr.mxu0 0.0
    %2855 = vmatpush1.msra.mxu0 0.0
    %2856 = vmatprep.subr.mxu0 0.0
    %2857 = vmatpush1.msra.mxu0 0.0
    %2858 = vmatprep.subr.mxu0 0.0
    %2859 = vmatpush1.msra.mxu0 0.0
    %2860 = vmatprep.subr.mxu0 0.0
    %2861 = vmatpush1.msra.mxu0 0.0
    %2862 = vmatprep.subr.mxu0 0.0
    %2863 = vmatpush1.msra.mxu0 0.0
    %2864 = vmatprep.subr.mxu0 %v2747
    %2865 = vmatpush1.msra.mxu0 %v2746
    %2866 = vmatprep.subr.mxu0 0.0
    %2867 = vmatpush2.msra.mxu0 0.0
    %2868 = vmatprep.subr.mxu0 0.0
    %2869 = vmatpush2.msra.mxu0 0.0
    %2870 = vmatprep.subr.mxu0 0.0
    %2871 = vmatpush2.msra.mxu0 0.0
    %2872 = vmatprep.subr.mxu0 0.0
    %2873 = vmatpush2.msra.mxu0 0.0
    %2874 = vmatprep.subr.mxu0 0.0
    %2875 = vmatpush2.msra.mxu0 0.0
    %2876 = vmatprep.subr.mxu0 0.0
    %2877 = vmatpush2.msra.mxu0 0.0
    %2878 = vmatprep.subr.mxu0 0.0
    %2879 = vmatpush2.msra.mxu0 0.0
    %2880 = vmatprep.subr.mxu0 0.0
    %2881 = vmatpush2.msra.mxu0 0.0
    %2882 = vmatprep.subr.mxu0 0.0
    %2883 = vmatpush2.msra.mxu0 0.0
    %2884 = vmatprep.subr.mxu0 0.0
    %2885 = vmatpush2.msra.mxu0 0.0
    %2886 = vmatprep.subr.mxu0 0.0
    %2887 = vmatpush2.msra.mxu0 0.0
    %2888 = vmatprep.subr.mxu0 0.0
    %2889 = vmatpush2.msra.mxu0 0.0
    %2890 = vmatprep.subr.mxu0 0.0
    %2891 = vmatpush2.msra.mxu0 0.0
    %2892 = vmatprep.subr.mxu0 0.0
    %2893 = vmatpush2.msra.mxu0 0.0
    %2894 = vmatprep.subr.mxu0 0.0
    %2895 = vmatpush2.msra.mxu0 0.0
    %2896 = vmatprep.subr.mxu0 0.0
    %2897 = vmatpush2.msra.mxu0 0.0
    %2898 = vmatprep.mubr.f32.mxu0 0.0
    %2899 = vmatmul.mubr.f32.gmra.mxu0 %v2761
    %v2900 = vpop.f32.mrf.mxu0
    %v2901 = vadd.f32 0.0, %v2900
    %v2902 = vpop.f32.mrf.mxu0
    %v2903 = vadd.f32 0.0, %v2902
    %2904 = vdwg.mxu0
    %2905 = vmatprep.subr.mxu0 0.0
    %2906 = vmatpush1.msra.mxu0 0.0
    %2907 = vmatprep.subr.mxu0 0.0
    %2908 = vmatpush1.msra.mxu0 0.0
    %2909 = vmatprep.subr.mxu0 0.0
    %2910 = vmatpush1.msra.mxu0 0.0
    %2911 = vmatprep.subr.mxu0 0.0
    %2912 = vmatpush1.msra.mxu0 0.0
    %2913 = vmatprep.subr.mxu0 0.0
    %2914 = vmatpush1.msra.mxu0 0.0
    %2915 = vmatprep.subr.mxu0 0.0
    %2916 = vmatpush1.msra.mxu0 0.0
    %2917 = vmatprep.subr.mxu0 0.0
    %2918 = vmatpush1.msra.mxu0 0.0
    %2919 = vmatprep.subr.mxu0 0.0
    %2920 = vmatpush1.msra.mxu0 0.0
    %2921 = vmatprep.subr.mxu0 0.0
    %2922 = vmatpush1.msra.mxu0 0.0
    %2923 = vmatprep.subr.mxu0 0.0
    %2924 = vmatpush1.msra.mxu0 0.0
    %2925 = vmatprep.subr.mxu0 0.0
    %2926 = vmatpush1.msra.mxu0 0.0
    %2927 = vmatprep.subr.mxu0 0.0
    %2928 = vmatpush1.msra.mxu0 0.0
    %2929 = vmatprep.subr.mxu0 0.0
    %2930 = vmatpush1.msra.mxu0 0.0
    %2931 = vmatprep.subr.mxu0 0.0
    %2932 = vmatpush1.msra.mxu0 0.0
    %2933 = vmatprep.subr.mxu0 0.0
    %2934 = vmatpush1.msra.mxu0 0.0
    %2935 = vmatprep.subr.mxu0 %v2749
    %2936 = vmatpush1.msra.mxu0 %v2748
    %2937 = vmatprep.subr.mxu0 0.0
    %2938 = vmatpush2.msra.mxu0 0.0
    %2939 = vmatprep.subr.mxu0 0.0
    %2940 = vmatpush2.msra.mxu0 0.0
    %2941 = vmatprep.subr.mxu0 0.0
    %2942 = vmatpush2.msra.mxu0 0.0
    %2943 = vmatprep.subr.mxu0 0.0
    %2944 = vmatpush2.msra.mxu0 0.0
    %2945 = vmatprep.subr.mxu0 0.0
    %2946 = vmatpush2.msra.mxu0 0.0
    %2947 = vmatprep.subr.mxu0 0.0
    %2948 = vmatpush2.msra.mxu0 0.0
    %2949 = vmatprep.subr.mxu0 0.0
    %2950 = vmatpush2.msra.mxu0 0.0
    %2951 = vmatprep.subr.mxu0 0.0
    %2952 = vmatpush2.msra.mxu0 0.0
    %2953 = vmatprep.subr.mxu0 0.0
    %2954 = vmatpush2.msra.mxu0 0.0
    %2955 = vmatprep.subr.mxu0 0.0
    %2956 = vmatpush2.msra.mxu0 0.0
    %2957 = vmatprep.subr.mxu0 0.0
    %2958 = vmatpush2.msra.mxu0 0.0
    %2959 = vmatprep.subr.mxu0 0.0
    %2960 = vmatpush2.msra.mxu0 0.0
    %2961 = vmatprep.subr.mxu0 0.0
    %2962 = vmatpush2.msra.mxu0 0.0
    %2963 = vmatprep.subr.mxu0 0.0
    %2964 = vmatpush2.msra.mxu0 0.0
    %2965 = vmatprep.subr.mxu0 0.0
    %2966 = vmatpush2.msra.mxu0 0.0
    %2967 = vmatprep.subr.mxu0 0.0
    %2968 = vmatpush2.msra.mxu0 0.0
    %2969 = vmatprep.mubr.f32.mxu0 0.0
    %2970 = vmatmul.mubr.f32.gmra.mxu0 %v2761
    %v2971 = vpop.f32.mrf.mxu0
    %v2972 = vadd.f32 0.0, %v2971
    %v2973 = vpop.f32.mrf.mxu0
    %v2974 = vadd.f32 0.0, %v2973
    %2975 = vdwg.mxu0
    %2976 = vmatprep.subr.mxu0 0.0
    %2977 = vmatpush1.msra.mxu0 0.0
    %2978 = vmatprep.subr.mxu0 0.0
    %2979 = vmatpush1.msra.mxu0 0.0
    %2980 = vmatprep.subr.mxu0 0.0
    %2981 = vmatpush1.msra.mxu0 0.0
    %2982 = vmatprep.subr.mxu0 0.0
    %2983 = vmatpush1.msra.mxu0 0.0
    %2984 = vmatprep.subr.mxu0 0.0
    %2985 = vmatpush1.msra.mxu0 0.0
    %2986 = vmatprep.subr.mxu0 0.0
    %2987 = vmatpush1.msra.mxu0 0.0
    %2988 = vmatprep.subr.mxu0 0.0
    %2989 = vmatpush1.msra.mxu0 0.0
    %2990 = vmatprep.subr.mxu0 0.0
    %2991 = vmatpush1.msra.mxu0 0.0
    %2992 = vmatprep.subr.mxu0 0.0
    %2993 = vmatpush1.msra.mxu0 0.0
    %2994 = vmatprep.subr.mxu0 0.0
    %2995 = vmatpush1.msra.mxu0 0.0
    %2996 = vmatprep.subr.mxu0 0.0
    %2997 = vmatpush1.msra.mxu0 0.0
    %2998 = vmatprep.subr.mxu0 0.0
    %2999 = vmatpush1.msra.mxu0 0.0
    %3000 = vmatprep.subr.mxu0 0.0
    %3001 = vmatpush1.msra.mxu0 0.0
    %3002 = vmatprep.subr.mxu0 0.0
    %3003 = vmatpush1.msra.mxu0 0.0
    %3004 = vmatprep.subr.mxu0 0.0
    %3005 = vmatpush1.msra.mxu0 0.0
    %3006 = vmatprep.subr.mxu0 %v2751
    %3007 = vmatpush1.msra.mxu0 %v2750
    %3008 = vmatprep.subr.mxu0 0.0
    %3009 = vmatpush2.msra.mxu0 0.0
    %3010 = vmatprep.subr.mxu0 0.0
    %3011 = vmatpush2.msra.mxu0 0.0
    %3012 = vmatprep.subr.mxu0 0.0
    %3013 = vmatpush2.msra.mxu0 0.0
    %3014 = vmatprep.subr.mxu0 0.0
    %3015 = vmatpush2.msra.mxu0 0.0
    %3016 = vmatprep.subr.mxu0 0.0
    %3017 = vmatpush2.msra.mxu0 0.0
    %3018 = vmatprep.subr.mxu0 0.0
    %3019 = vmatpush2.msra.mxu0 0.0
    %3020 = vmatprep.subr.mxu0 0.0
    %3021 = vmatpush2.msra.mxu0 0.0
    %3022 = vmatprep.subr.mxu0 0.0
    %3023 = vmatpush2.msra.mxu0 0.0
    %3024 = vmatprep.subr.mxu0 0.0
    %3025 = vmatpush2.msra.mxu0 0.0
    %3026 = vmatprep.subr.mxu0 0.0
    %3027 = vmatpush2.msra.mxu0 0.0
    %3028 = vmatprep.subr.mxu0 0.0
    %3029 = vmatpush2.msra.mxu0 0.0
    %3030 = vmatprep.subr.mxu0 0.0
    %3031 = vmatpush2.msra.mxu0 0.0
    %3032 = vmatprep.subr.mxu0 0.0
    %3033 = vmatpush2.msra.mxu0 0.0
    %3034 = vmatprep.subr.mxu0 0.0
    %3035 = vmatpush2.msra.mxu0 0.0
    %3036 = vmatprep.subr.mxu0 0.0
    %3037 = vmatpush2.msra.mxu0 0.0
    %3038 = vmatprep.subr.mxu0 0.0
    %3039 = vmatpush2.msra.mxu0 0.0
    %3040 = vmatprep.mubr.f32.mxu0 0.0
    %3041 = vmatmul.mubr.f32.gmra.mxu0 %v2761
    %v3042 = vpop.f32.mrf.mxu0
    %v3043 = vadd.f32 0.0, %v3042
    %v3044 = vpop.f32.mrf.mxu0
    %v3045 = vadd.f32 0.0, %v3044
    %3046 = vdwg.mxu0
    %v3047 = vadd.f32 %v2716, %v2830
    %v3048 = vadd.f32 %v2717, %v2832
    %v3049 = vadd.f32 %v2718, %v2901
    %v3050 = vadd.f32 %v2719, %v2903
    %v3051 = vadd.f32 %v2720, %v2972
    %v3052 = vadd.f32 %v2721, %v2974
    %v3053 = vadd.f32 %v2722, %v3043
    %v3054 = vadd.f32 %v2723, %v3045
    %v3055 = vld [vmem:[%s2] sm:$0xff]
    %3057 = vset.pattern.permute.xlu0 0
    %3058 = vperm.xlu0 %3057, %v3055
    %v3059 = vpop.permute.xlu0 %3058
    %v3061 = vadd.f32 %v3047, %v3059
    %v3062 = vadd.f32 %v3048, %v3059
    %v3063 = vadd.f32 %v3049, %v3059
    %v3064 = vadd.f32 %v3050, %v3059
    %v3065 = vadd.f32 %v3051, %v3059
    %v3066 = vadd.f32 %v3052, %v3059
    %v3067 = vadd.f32 %v3053, %v3059
    %v3068 = vadd.f32 %v3054, %v3059
    %v3069 = vmul.f32 %v3061, %v53
    %v3070 = vmul.f32 %v3062, %v57
    %v3071 = vmul.f32 %v3063, %v61
    %v3072 = vmul.f32 %v3064, %v65
    %v3073 = vmul.f32 %v3065, %v69
    %v3074 = vmul.f32 %v3066, %v73
    %v3075 = vmul.f32 %v3067, %v77
    %v3076 = vmul.f32 %v3068, %v81
    %3077 = vst [vmem:[#allocation2 + $0x8] sm:$0xff] %v3069
    %3078 = vst [vmem:[#allocation2 + $0x10] sm:$0xff] %v3070
    %3079 = vst [vmem:[#allocation2 + $0x18] sm:$0xff] %v3071
    %3080 = vst [vmem:[#allocation2 + $0x20] sm:$0xff] %v3072
    %3081 = vst [vmem:[#allocation2 + $0x28] sm:$0xff] %v3073
    %3082 = vst [vmem:[#allocation2 + $0x30] sm:$0xff] %v3074
    %3083 = vst [vmem:[#allocation2 + $0x38] sm:$0xff] %v3075
    %3084 = vst [vmem:[#allocation2 + $0x40] sm:$0xff] %v3076
    %v3085 = vld [vmem:[%s3] sm:$0xff]
    %v3086 = vld [vmem:[#allocation2] sm:$0xff]
    %v3087 = vld [vmem:[#allocation2 + $0x8] sm:$0xff]
    %v3088 = vld [vmem:[#allocation2 + $0x10] sm:$0xff]
    %v3089 = vld [vmem:[#allocation2 + $0x18] sm:$0xff]
    %v3090 = vld [vmem:[#allocation2 + $0x20] sm:$0xff]
    %v3091 = vld [vmem:[#allocation2 + $0x28] sm:$0xff]
    %v3092 = vld [vmem:[#allocation2 + $0x30] sm:$0xff]
    %v3093 = vld [vmem:[#allocation2 + $0x38] sm:$0xff]
    %v3094 = vld [vmem:[#allocation2 + $0x40] sm:$0xff]
    %v3095 = vld [vmem:[%s3 + $0x8] sm:$0xff]
    %3105 = vrot.lane.b32.xlu0 %v3086, 40
    %v3106 = vpop.permute.xlu0 %3105
    %3107 = vrot.lane.b32.xlu0 %v3087, 40
    %v3108 = vpop.permute.xlu0 %3107
    %3109 = vrot.lane.b32.xlu0 %v3088, 40
    %v3110 = vpop.permute.xlu0 %3109
    %3111 = vrot.lane.b32.xlu0 %v3089, 40
    %v3112 = vpop.permute.xlu0 %3111
    %3113 = vrot.lane.b32.xlu0 %v3090, 40
    %v3114 = vpop.permute.xlu0 %3113
    %3115 = vrot.lane.b32.xlu0 %v3091, 40
    %v3116 = vpop.permute.xlu0 %3115
    %3117 = vrot.lane.b32.xlu0 %v3092, 40
    %v3118 = vpop.permute.xlu0 %3117
    %3119 = vrot.lane.b32.xlu0 %v3093, 40
    %v3120 = vpop.permute.xlu0 %3119
    %3121 = vrot.lane.b32.xlu0 %v3094, 40
    %v3122 = vpop.permute.xlu0 %3121
    %vm3123 = vcmask 326656
    %v3124 = vsel %vm3123, %v3106, %v3108
    %v3125 = vsel %vm3123, %v3108, %v3110
    %v3126 = vsel %vm3123, %v3110, %v3112
    %v3127 = vsel %vm3123, %v3112, %v3114
    %v3128 = vsel %vm3123, %v3114, %v3116
    %v3129 = vsel %vm3123, %v3116, %v3118
    %v3130 = vsel %vm3123, %v3118, %v3120
    %v3131 = vsel %vm3123, %v3120, %v3122
    %v3141 = vsel %vm145, %v3095, 0
    %3143 = vmatprep.subr.mxu0 0.0
    %3144 = vmatpush1.msra.mxu0 0.0
    %3145 = vmatprep.subr.mxu0 0.0
    %3146 = vmatpush1.msra.mxu0 0.0
    %3147 = vmatprep.subr.mxu0 0.0
    %3148 = vmatpush1.msra.mxu0 0.0
    %3149 = vmatprep.subr.mxu0 0.0
    %3150 = vmatpush1.msra.mxu0 0.0
    %3151 = vmatprep.subr.mxu0 0.0
    %3152 = vmatpush1.msra.mxu0 0.0
    %3153 = vmatprep.subr.mxu0 0.0
    %3154 = vmatpush1.msra.mxu0 0.0
    %3155 = vmatprep.subr.mxu0 0.0
    %3156 = vmatpush1.msra.mxu0 0.0
    %3157 = vmatprep.subr.mxu0 0.0
    %3158 = vmatpush1.msra.mxu0 0.0
    %3159 = vmatprep.subr.mxu0 0.0
    %3160 = vmatpush1.msra.mxu0 0.0
    %3161 = vmatprep.subr.mxu0 0.0
    %3162 = vmatpush1.msra.mxu0 0.0
    %3163 = vmatprep.subr.mxu0 0.0
    %3164 = vmatpush1.msra.mxu0 0.0
    %3165 = vmatprep.subr.mxu0 0.0
    %3166 = vmatpush1.msra.mxu0 0.0
    %3167 = vmatprep.subr.mxu0 0.0
    %3168 = vmatpush1.msra.mxu0 0.0
    %3169 = vmatprep.subr.mxu0 0.0
    %3170 = vmatpush1.msra.mxu0 0.0
    %3171 = vmatprep.subr.mxu0 0.0
    %3172 = vmatpush1.msra.mxu0 0.0
    %3173 = vmatprep.subr.mxu0 %v3125
    %3174 = vmatpush1.msra.mxu0 %v3124
    %3175 = vmatprep.subr.mxu0 0.0
    %3176 = vmatpush2.msra.mxu0 0.0
    %3177 = vmatprep.subr.mxu0 0.0
    %3178 = vmatpush2.msra.mxu0 0.0
    %3179 = vmatprep.subr.mxu0 0.0
    %3180 = vmatpush2.msra.mxu0 0.0
    %3181 = vmatprep.subr.mxu0 0.0
    %3182 = vmatpush2.msra.mxu0 0.0
    %3183 = vmatprep.subr.mxu0 0.0
    %3184 = vmatpush2.msra.mxu0 0.0
    %3185 = vmatprep.subr.mxu0 0.0
    %3186 = vmatpush2.msra.mxu0 0.0
    %3187 = vmatprep.subr.mxu0 0.0
    %3188 = vmatpush2.msra.mxu0 0.0
    %3189 = vmatprep.subr.mxu0 0.0
    %3190 = vmatpush2.msra.mxu0 0.0
    %3191 = vmatprep.subr.mxu0 0.0
    %3192 = vmatpush2.msra.mxu0 0.0
    %3193 = vmatprep.subr.mxu0 0.0
    %3194 = vmatpush2.msra.mxu0 0.0
    %3195 = vmatprep.subr.mxu0 0.0
    %3196 = vmatpush2.msra.mxu0 0.0
    %3197 = vmatprep.subr.mxu0 0.0
    %3198 = vmatpush2.msra.mxu0 0.0
    %3199 = vmatprep.subr.mxu0 0.0
    %3200 = vmatpush2.msra.mxu0 0.0
    %3201 = vmatprep.subr.mxu0 0.0
    %3202 = vmatpush2.msra.mxu0 0.0
    %3203 = vmatprep.subr.mxu0 0.0
    %3204 = vmatpush2.msra.mxu0 0.0
    %3205 = vmatprep.subr.mxu0 0.0
    %3206 = vmatpush2.msra.mxu0 0.0
    %3207 = vmatprep.mubr.f32.mxu0 0.0
    %3208 = vmatmul.mubr.f32.gmra.mxu0 %v3141
    %v3209 = vpop.f32.mrf.mxu0
    %v3210 = vadd.f32 0.0, %v3209
    %v3211 = vpop.f32.mrf.mxu0
    %v3212 = vadd.f32 0.0, %v3211
    %3213 = vdwg.mxu0
    %3214 = vmatprep.subr.mxu0 0.0
    %3215 = vmatpush1.msra.mxu0 0.0
    %3216 = vmatprep.subr.mxu0 0.0
    %3217 = vmatpush1.msra.mxu0 0.0
    %3218 = vmatprep.subr.mxu0 0.0
    %3219 = vmatpush1.msra.mxu0 0.0
    %3220 = vmatprep.subr.mxu0 0.0
    %3221 = vmatpush1.msra.mxu0 0.0
    %3222 = vmatprep.subr.mxu0 0.0
    %3223 = vmatpush1.msra.mxu0 0.0
    %3224 = vmatprep.subr.mxu0 0.0
    %3225 = vmatpush1.msra.mxu0 0.0
    %3226 = vmatprep.subr.mxu0 0.0
    %3227 = vmatpush1.msra.mxu0 0.0
    %3228 = vmatprep.subr.mxu0 0.0
    %3229 = vmatpush1.msra.mxu0 0.0
    %3230 = vmatprep.subr.mxu0 0.0
    %3231 = vmatpush1.msra.mxu0 0.0
    %3232 = vmatprep.subr.mxu0 0.0
    %3233 = vmatpush1.msra.mxu0 0.0
    %3234 = vmatprep.subr.mxu0 0.0
    %3235 = vmatpush1.msra.mxu0 0.0
    %3236 = vmatprep.subr.mxu0 0.0
    %3237 = vmatpush1.msra.mxu0 0.0
    %3238 = vmatprep.subr.mxu0 0.0
    %3239 = vmatpush1.msra.mxu0 0.0
    %3240 = vmatprep.subr.mxu0 0.0
    %3241 = vmatpush1.msra.mxu0 0.0
    %3242 = vmatprep.subr.mxu0 0.0
    %3243 = vmatpush1.msra.mxu0 0.0
    %3244 = vmatprep.subr.mxu0 %v3127
    %3245 = vmatpush1.msra.mxu0 %v3126
    %3246 = vmatprep.subr.mxu0 0.0
    %3247 = vmatpush2.msra.mxu0 0.0
    %3248 = vmatprep.subr.mxu0 0.0
    %3249 = vmatpush2.msra.mxu0 0.0
    %3250 = vmatprep.subr.mxu0 0.0
    %3251 = vmatpush2.msra.mxu0 0.0
    %3252 = vmatprep.subr.mxu0 0.0
    %3253 = vmatpush2.msra.mxu0 0.0
    %3254 = vmatprep.subr.mxu0 0.0
    %3255 = vmatpush2.msra.mxu0 0.0
    %3256 = vmatprep.subr.mxu0 0.0
    %3257 = vmatpush2.msra.mxu0 0.0
    %3258 = vmatprep.subr.mxu0 0.0
    %3259 = vmatpush2.msra.mxu0 0.0
    %3260 = vmatprep.subr.mxu0 0.0
    %3261 = vmatpush2.msra.mxu0 0.0
    %3262 = vmatprep.subr.mxu0 0.0
    %3263 = vmatpush2.msra.mxu0 0.0
    %3264 = vmatprep.subr.mxu0 0.0
    %3265 = vmatpush2.msra.mxu0 0.0
    %3266 = vmatprep.subr.mxu0 0.0
    %3267 = vmatpush2.msra.mxu0 0.0
    %3268 = vmatprep.subr.mxu0 0.0
    %3269 = vmatpush2.msra.mxu0 0.0
    %3270 = vmatprep.subr.mxu0 0.0
    %3271 = vmatpush2.msra.mxu0 0.0
    %3272 = vmatprep.subr.mxu0 0.0
    %3273 = vmatpush2.msra.mxu0 0.0
    %3274 = vmatprep.subr.mxu0 0.0
    %3275 = vmatpush2.msra.mxu0 0.0
    %3276 = vmatprep.subr.mxu0 0.0
    %3277 = vmatpush2.msra.mxu0 0.0
    %3278 = vmatprep.mubr.f32.mxu0 0.0
    %3279 = vmatmul.mubr.f32.gmra.mxu0 %v3141
    %v3280 = vpop.f32.mrf.mxu0
    %v3281 = vadd.f32 0.0, %v3280
    %v3282 = vpop.f32.mrf.mxu0
    %v3283 = vadd.f32 0.0, %v3282
    %3284 = vdwg.mxu0
    %3285 = vmatprep.subr.mxu0 0.0
    %3286 = vmatpush1.msra.mxu0 0.0
    %3287 = vmatprep.subr.mxu0 0.0
    %3288 = vmatpush1.msra.mxu0 0.0
    %3289 = vmatprep.subr.mxu0 0.0
    %3290 = vmatpush1.msra.mxu0 0.0
    %3291 = vmatprep.subr.mxu0 0.0
    %3292 = vmatpush1.msra.mxu0 0.0
    %3293 = vmatprep.subr.mxu0 0.0
    %3294 = vmatpush1.msra.mxu0 0.0
    %3295 = vmatprep.subr.mxu0 0.0
    %3296 = vmatpush1.msra.mxu0 0.0
    %3297 = vmatprep.subr.mxu0 0.0
    %3298 = vmatpush1.msra.mxu0 0.0
    %3299 = vmatprep.subr.mxu0 0.0
    %3300 = vmatpush1.msra.mxu0 0.0
    %3301 = vmatprep.subr.mxu0 0.0
    %3302 = vmatpush1.msra.mxu0 0.0
    %3303 = vmatprep.subr.mxu0 0.0
    %3304 = vmatpush1.msra.mxu0 0.0
    %3305 = vmatprep.subr.mxu0 0.0
    %3306 = vmatpush1.msra.mxu0 0.0
    %3307 = vmatprep.subr.mxu0 0.0
    %3308 = vmatpush1.msra.mxu0 0.0
    %3309 = vmatprep.subr.mxu0 0.0
    %3310 = vmatpush1.msra.mxu0 0.0
    %3311 = vmatprep.subr.mxu0 0.0
    %3312 = vmatpush1.msra.mxu0 0.0
    %3313 = vmatprep.subr.mxu0 0.0
    %3314 = vmatpush1.msra.mxu0 0.0
    %3315 = vmatprep.subr.mxu0 %v3129
    %3316 = vmatpush1.msra.mxu0 %v3128
    %3317 = vmatprep.subr.mxu0 0.0
    %3318 = vmatpush2.msra.mxu0 0.0
    %3319 = vmatprep.subr.mxu0 0.0
    %3320 = vmatpush2.msra.mxu0 0.0
    %3321 = vmatprep.subr.mxu0 0.0
    %3322 = vmatpush2.msra.mxu0 0.0
    %3323 = vmatprep.subr.mxu0 0.0
    %3324 = vmatpush2.msra.mxu0 0.0
    %3325 = vmatprep.subr.mxu0 0.0
    %3326 = vmatpush2.msra.mxu0 0.0
    %3327 = vmatprep.subr.mxu0 0.0
    %3328 = vmatpush2.msra.mxu0 0.0
    %3329 = vmatprep.subr.mxu0 0.0
    %3330 = vmatpush2.msra.mxu0 0.0
    %3331 = vmatprep.subr.mxu0 0.0
    %3332 = vmatpush2.msra.mxu0 0.0
    %3333 = vmatprep.subr.mxu0 0.0
    %3334 = vmatpush2.msra.mxu0 0.0
    %3335 = vmatprep.subr.mxu0 0.0
    %3336 = vmatpush2.msra.mxu0 0.0
    %3337 = vmatprep.subr.mxu0 0.0
    %3338 = vmatpush2.msra.mxu0 0.0
    %3339 = vmatprep.subr.mxu0 0.0
    %3340 = vmatpush2.msra.mxu0 0.0
    %3341 = vmatprep.subr.mxu0 0.0
    %3342 = vmatpush2.msra.mxu0 0.0
    %3343 = vmatprep.subr.mxu0 0.0
    %3344 = vmatpush2.msra.mxu0 0.0
    %3345 = vmatprep.subr.mxu0 0.0
    %3346 = vmatpush2.msra.mxu0 0.0
    %3347 = vmatprep.subr.mxu0 0.0
    %3348 = vmatpush2.msra.mxu0 0.0
    %3349 = vmatprep.mubr.f32.mxu0 0.0
    %3350 = vmatmul.mubr.f32.gmra.mxu0 %v3141
    %v3351 = vpop.f32.mrf.mxu0
    %v3352 = vadd.f32 0.0, %v3351
    %v3353 = vpop.f32.mrf.mxu0
    %v3354 = vadd.f32 0.0, %v3353
    %3355 = vdwg.mxu0
    %3356 = vmatprep.subr.mxu0 0.0
    %3357 = vmatpush1.msra.mxu0 0.0
    %3358 = vmatprep.subr.mxu0 0.0
    %3359 = vmatpush1.msra.mxu0 0.0
    %3360 = vmatprep.subr.mxu0 0.0
    %3361 = vmatpush1.msra.mxu0 0.0
    %3362 = vmatprep.subr.mxu0 0.0
    %3363 = vmatpush1.msra.mxu0 0.0
    %3364 = vmatprep.subr.mxu0 0.0
    %3365 = vmatpush1.msra.mxu0 0.0
    %3366 = vmatprep.subr.mxu0 0.0
    %3367 = vmatpush1.msra.mxu0 0.0
    %3368 = vmatprep.subr.mxu0 0.0
    %3369 = vmatpush1.msra.mxu0 0.0
    %3370 = vmatprep.subr.mxu0 0.0
    %3371 = vmatpush1.msra.mxu0 0.0
    %3372 = vmatprep.subr.mxu0 0.0
    %3373 = vmatpush1.msra.mxu0 0.0
    %3374 = vmatprep.subr.mxu0 0.0
    %3375 = vmatpush1.msra.mxu0 0.0
    %3376 = vmatprep.subr.mxu0 0.0
    %3377 = vmatpush1.msra.mxu0 0.0
    %3378 = vmatprep.subr.mxu0 0.0
    %3379 = vmatpush1.msra.mxu0 0.0
    %3380 = vmatprep.subr.mxu0 0.0
    %3381 = vmatpush1.msra.mxu0 0.0
    %3382 = vmatprep.subr.mxu0 0.0
    %3383 = vmatpush1.msra.mxu0 0.0
    %3384 = vmatprep.subr.mxu0 0.0
    %3385 = vmatpush1.msra.mxu0 0.0
    %3386 = vmatprep.subr.mxu0 %v3131
    %3387 = vmatpush1.msra.mxu0 %v3130
    %3388 = vmatprep.subr.mxu0 0.0
    %3389 = vmatpush2.msra.mxu0 0.0
    %3390 = vmatprep.subr.mxu0 0.0
    %3391 = vmatpush2.msra.mxu0 0.0
    %3392 = vmatprep.subr.mxu0 0.0
    %3393 = vmatpush2.msra.mxu0 0.0
    %3394 = vmatprep.subr.mxu0 0.0
    %3395 = vmatpush2.msra.mxu0 0.0
    %3396 = vmatprep.subr.mxu0 0.0
    %3397 = vmatpush2.msra.mxu0 0.0
    %3398 = vmatprep.subr.mxu0 0.0
    %3399 = vmatpush2.msra.mxu0 0.0
    %3400 = vmatprep.subr.mxu0 0.0
    %3401 = vmatpush2.msra.mxu0 0.0
    %3402 = vmatprep.subr.mxu0 0.0
    %3403 = vmatpush2.msra.mxu0 0.0
    %3404 = vmatprep.subr.mxu0 0.0
    %3405 = vmatpush2.msra.mxu0 0.0
    %3406 = vmatprep.subr.mxu0 0.0
    %3407 = vmatpush2.msra.mxu0 0.0
    %3408 = vmatprep.subr.mxu0 0.0
    %3409 = vmatpush2.msra.mxu0 0.0
    %3410 = vmatprep.subr.mxu0 0.0
    %3411 = vmatpush2.msra.mxu0 0.0
    %3412 = vmatprep.subr.mxu0 0.0
    %3413 = vmatpush2.msra.mxu0 0.0
    %3414 = vmatprep.subr.mxu0 0.0
    %3415 = vmatpush2.msra.mxu0 0.0
    %3416 = vmatprep.subr.mxu0 0.0
    %3417 = vmatpush2.msra.mxu0 0.0
    %3418 = vmatprep.subr.mxu0 0.0
    %3419 = vmatpush2.msra.mxu0 0.0
    %3420 = vmatprep.mubr.f32.mxu0 0.0
    %3421 = vmatmul.mubr.f32.gmra.mxu0 %v3141
    %v3422 = vpop.f32.mrf.mxu0
    %v3423 = vadd.f32 0.0, %v3422
    %v3424 = vpop.f32.mrf.mxu0
    %v3425 = vadd.f32 0.0, %v3424
    %3426 = vdwg.mxu0
    %3427 = vrot.lane.b32.xlu0 %v3086, 42
    %v3428 = vpop.permute.xlu0 %3427
    %3429 = vrot.lane.b32.xlu0 %v3087, 42
    %v3430 = vpop.permute.xlu0 %3429
    %3431 = vrot.lane.b32.xlu0 %v3088, 42
    %v3432 = vpop.permute.xlu0 %3431
    %3433 = vrot.lane.b32.xlu0 %v3089, 42
    %v3434 = vpop.permute.xlu0 %3433
    %3435 = vrot.lane.b32.xlu0 %v3090, 42
    %v3436 = vpop.permute.xlu0 %3435
    %3437 = vrot.lane.b32.xlu0 %v3091, 42
    %v3438 = vpop.permute.xlu0 %3437
    %3439 = vrot.lane.b32.xlu0 %v3092, 42
    %v3440 = vpop.permute.xlu0 %3439
    %3441 = vrot.lane.b32.xlu0 %v3093, 42
    %v3442 = vpop.permute.xlu0 %3441
    %3443 = vrot.lane.b32.xlu0 %v3094, 42
    %v3444 = vpop.permute.xlu0 %3443
    %vm3445 = vcmask 343040
    %v3446 = vsel %vm3445, %v3428, %v3430
    %v3447 = vsel %vm3445, %v3430, %v3432
    %v3448 = vsel %vm3445, %v3432, %v3434
    %v3449 = vsel %vm3445, %v3434, %v3436
    %v3450 = vsel %vm3445, %v3436, %v3438
    %v3451 = vsel %vm3445, %v3438, %v3440
    %v3452 = vsel %vm3445, %v3440, %v3442
    %v3453 = vsel %vm3445, %v3442, %v3444
    %v3463 = vsel %vm145, %v3085, 0
    %3465 = vmatprep.subr.mxu0 0.0
    %3466 = vmatpush1.msra.mxu0 0.0
    %3467 = vmatprep.subr.mxu0 0.0
    %3468 = vmatpush1.msra.mxu0 0.0
    %3469 = vmatprep.subr.mxu0 0.0
    %3470 = vmatpush1.msra.mxu0 0.0
    %3471 = vmatprep.subr.mxu0 0.0
    %3472 = vmatpush1.msra.mxu0 0.0
    %3473 = vmatprep.subr.mxu0 0.0
    %3474 = vmatpush1.msra.mxu0 0.0
    %3475 = vmatprep.subr.mxu0 0.0
    %3476 = vmatpush1.msra.mxu0 0.0
    %3477 = vmatprep.subr.mxu0 0.0
    %3478 = vmatpush1.msra.mxu0 0.0
    %3479 = vmatprep.subr.mxu0 0.0
    %3480 = vmatpush1.msra.mxu0 0.0
    %3481 = vmatprep.subr.mxu0 0.0
    %3482 = vmatpush1.msra.mxu0 0.0
    %3483 = vmatprep.subr.mxu0 0.0
    %3484 = vmatpush1.msra.mxu0 0.0
    %3485 = vmatprep.subr.mxu0 0.0
    %3486 = vmatpush1.msra.mxu0 0.0
    %3487 = vmatprep.subr.mxu0 0.0
    %3488 = vmatpush1.msra.mxu0 0.0
    %3489 = vmatprep.subr.mxu0 0.0
    %3490 = vmatpush1.msra.mxu0 0.0
    %3491 = vmatprep.subr.mxu0 0.0
    %3492 = vmatpush1.msra.mxu0 0.0
    %3493 = vmatprep.subr.mxu0 0.0
    %3494 = vmatpush1.msra.mxu0 0.0
    %3495 = vmatprep.subr.mxu0 %v3447
    %3496 = vmatpush1.msra.mxu0 %v3446
    %3497 = vmatprep.subr.mxu0 0.0
    %3498 = vmatpush2.msra.mxu0 0.0
    %3499 = vmatprep.subr.mxu0 0.0
    %3500 = vmatpush2.msra.mxu0 0.0
    %3501 = vmatprep.subr.mxu0 0.0
    %3502 = vmatpush2.msra.mxu0 0.0
    %3503 = vmatprep.subr.mxu0 0.0
    %3504 = vmatpush2.msra.mxu0 0.0
    %3505 = vmatprep.subr.mxu0 0.0
    %3506 = vmatpush2.msra.mxu0 0.0
    %3507 = vmatprep.subr.mxu0 0.0
    %3508 = vmatpush2.msra.mxu0 0.0
    %3509 = vmatprep.subr.mxu0 0.0
    %3510 = vmatpush2.msra.mxu0 0.0
    %3511 = vmatprep.subr.mxu0 0.0
    %3512 = vmatpush2.msra.mxu0 0.0
    %3513 = vmatprep.subr.mxu0 0.0
    %3514 = vmatpush2.msra.mxu0 0.0
    %3515 = vmatprep.subr.mxu0 0.0
    %3516 = vmatpush2.msra.mxu0 0.0
    %3517 = vmatprep.subr.mxu0 0.0
    %3518 = vmatpush2.msra.mxu0 0.0
    %3519 = vmatprep.subr.mxu0 0.0
    %3520 = vmatpush2.msra.mxu0 0.0
    %3521 = vmatprep.subr.mxu0 0.0
    %3522 = vmatpush2.msra.mxu0 0.0
    %3523 = vmatprep.subr.mxu0 0.0
    %3524 = vmatpush2.msra.mxu0 0.0
    %3525 = vmatprep.subr.mxu0 0.0
    %3526 = vmatpush2.msra.mxu0 0.0
    %3527 = vmatprep.subr.mxu0 0.0
    %3528 = vmatpush2.msra.mxu0 0.0
    %3529 = vmatprep.mubr.f32.mxu0 0.0
    %3530 = vmatmul.mubr.f32.gmra.mxu0 %v3463
    %v3531 = vpop.f32.mrf.mxu0
    %v3532 = vadd.f32 %v3210, %v3531
    %v3533 = vpop.f32.mrf.mxu0
    %v3534 = vadd.f32 %v3212, %v3533
    %3535 = vdwg.mxu0
    %3536 = vmatprep.subr.mxu0 0.0
    %3537 = vmatpush1.msra.mxu0 0.0
    %3538 = vmatprep.subr.mxu0 0.0
    %3539 = vmatpush1.msra.mxu0 0.0
    %3540 = vmatprep.subr.mxu0 0.0
    %3541 = vmatpush1.msra.mxu0 0.0
    %3542 = vmatprep.subr.mxu0 0.0
    %3543 = vmatpush1.msra.mxu0 0.0
    %3544 = vmatprep.subr.mxu0 0.0
    %3545 = vmatpush1.msra.mxu0 0.0
    %3546 = vmatprep.subr.mxu0 0.0
    %3547 = vmatpush1.msra.mxu0 0.0
    %3548 = vmatprep.subr.mxu0 0.0
    %3549 = vmatpush1.msra.mxu0 0.0
    %3550 = vmatprep.subr.mxu0 0.0
    %3551 = vmatpush1.msra.mxu0 0.0
    %3552 = vmatprep.subr.mxu0 0.0
    %3553 = vmatpush1.msra.mxu0 0.0
    %3554 = vmatprep.subr.mxu0 0.0
    %3555 = vmatpush1.msra.mxu0 0.0
    %3556 = vmatprep.subr.mxu0 0.0
    %3557 = vmatpush1.msra.mxu0 0.0
    %3558 = vmatprep.subr.mxu0 0.0
    %3559 = vmatpush1.msra.mxu0 0.0
    %3560 = vmatprep.subr.mxu0 0.0
    %3561 = vmatpush1.msra.mxu0 0.0
    %3562 = vmatprep.subr.mxu0 0.0
    %3563 = vmatpush1.msra.mxu0 0.0
    %3564 = vmatprep.subr.mxu0 0.0
    %3565 = vmatpush1.msra.mxu0 0.0
    %3566 = vmatprep.subr.mxu0 %v3449
    %3567 = vmatpush1.msra.mxu0 %v3448
    %3568 = vmatprep.subr.mxu0 0.0
    %3569 = vmatpush2.msra.mxu0 0.0
    %3570 = vmatprep.subr.mxu0 0.0
    %3571 = vmatpush2.msra.mxu0 0.0
    %3572 = vmatprep.subr.mxu0 0.0
    %3573 = vmatpush2.msra.mxu0 0.0
    %3574 = vmatprep.subr.mxu0 0.0
    %3575 = vmatpush2.msra.mxu0 0.0
    %3576 = vmatprep.subr.mxu0 0.0
    %3577 = vmatpush2.msra.mxu0 0.0
    %3578 = vmatprep.subr.mxu0 0.0
    %3579 = vmatpush2.msra.mxu0 0.0
    %3580 = vmatprep.subr.mxu0 0.0
    %3581 = vmatpush2.msra.mxu0 0.0
    %3582 = vmatprep.subr.mxu0 0.0
    %3583 = vmatpush2.msra.mxu0 0.0
    %3584 = vmatprep.subr.mxu0 0.0
    %3585 = vmatpush2.msra.mxu0 0.0
    %3586 = vmatprep.subr.mxu0 0.0
    %3587 = vmatpush2.msra.mxu0 0.0
    %3588 = vmatprep.subr.mxu0 0.0
    %3589 = vmatpush2.msra.mxu0 0.0
    %3590 = vmatprep.subr.mxu0 0.0
    %3591 = vmatpush2.msra.mxu0 0.0
    %3592 = vmatprep.subr.mxu0 0.0
    %3593 = vmatpush2.msra.mxu0 0.0
    %3594 = vmatprep.subr.mxu0 0.0
    %3595 = vmatpush2.msra.mxu0 0.0
    %3596 = vmatprep.subr.mxu0 0.0
    %3597 = vmatpush2.msra.mxu0 0.0
    %3598 = vmatprep.subr.mxu0 0.0
    %3599 = vmatpush2.msra.mxu0 0.0
    %3600 = vmatprep.mubr.f32.mxu0 0.0
    %3601 = vmatmul.mubr.f32.gmra.mxu0 %v3463
    %v3602 = vpop.f32.mrf.mxu0
    %v3603 = vadd.f32 %v3281, %v3602
    %v3604 = vpop.f32.mrf.mxu0
    %v3605 = vadd.f32 %v3283, %v3604
    %3606 = vdwg.mxu0
    %3607 = vmatprep.subr.mxu0 0.0
    %3608 = vmatpush1.msra.mxu0 0.0
    %3609 = vmatprep.subr.mxu0 0.0
    %3610 = vmatpush1.msra.mxu0 0.0
    %3611 = vmatprep.subr.mxu0 0.0
    %3612 = vmatpush1.msra.mxu0 0.0
    %3613 = vmatprep.subr.mxu0 0.0
    %3614 = vmatpush1.msra.mxu0 0.0
    %3615 = vmatprep.subr.mxu0 0.0
    %3616 = vmatpush1.msra.mxu0 0.0
    %3617 = vmatprep.subr.mxu0 0.0
    %3618 = vmatpush1.msra.mxu0 0.0
    %3619 = vmatprep.subr.mxu0 0.0
    %3620 = vmatpush1.msra.mxu0 0.0
    %3621 = vmatprep.subr.mxu0 0.0
    %3622 = vmatpush1.msra.mxu0 0.0
    %3623 = vmatprep.subr.mxu0 0.0
    %3624 = vmatpush1.msra.mxu0 0.0
    %3625 = vmatprep.subr.mxu0 0.0
    %3626 = vmatpush1.msra.mxu0 0.0
    %3627 = vmatprep.subr.mxu0 0.0
    %3628 = vmatpush1.msra.mxu0 0.0
    %3629 = vmatprep.subr.mxu0 0.0
    %3630 = vmatpush1.msra.mxu0 0.0
    %3631 = vmatprep.subr.mxu0 0.0
    %3632 = vmatpush1.msra.mxu0 0.0
    %3633 = vmatprep.subr.mxu0 0.0
    %3634 = vmatpush1.msra.mxu0 0.0
    %3635 = vmatprep.subr.mxu0 0.0
    %3636 = vmatpush1.msra.mxu0 0.0
    %3637 = vmatprep.subr.mxu0 %v3451
    %3638 = vmatpush1.msra.mxu0 %v3450
    %3639 = vmatprep.subr.mxu0 0.0
    %3640 = vmatpush2.msra.mxu0 0.0
    %3641 = vmatprep.subr.mxu0 0.0
    %3642 = vmatpush2.msra.mxu0 0.0
    %3643 = vmatprep.subr.mxu0 0.0
    %3644 = vmatpush2.msra.mxu0 0.0
    %3645 = vmatprep.subr.mxu0 0.0
    %3646 = vmatpush2.msra.mxu0 0.0
    %3647 = vmatprep.subr.mxu0 0.0
    %3648 = vmatpush2.msra.mxu0 0.0
    %3649 = vmatprep.subr.mxu0 0.0
    %3650 = vmatpush2.msra.mxu0 0.0
    %3651 = vmatprep.subr.mxu0 0.0
    %3652 = vmatpush2.msra.mxu0 0.0
    %3653 = vmatprep.subr.mxu0 0.0
    %3654 = vmatpush2.msra.mxu0 0.0
    %3655 = vmatprep.subr.mxu0 0.0
    %3656 = vmatpush2.msra.mxu0 0.0
    %3657 = vmatprep.subr.mxu0 0.0
    %3658 = vmatpush2.msra.mxu0 0.0
    %3659 = vmatprep.subr.mxu0 0.0
    %3660 = vmatpush2.msra.mxu0 0.0
    %3661 = vmatprep.subr.mxu0 0.0
    %3662 = vmatpush2.msra.mxu0 0.0
    %3663 = vmatprep.subr.mxu0 0.0
    %3664 = vmatpush2.msra.mxu0 0.0
    %3665 = vmatprep.subr.mxu0 0.0
    %3666 = vmatpush2.msra.mxu0 0.0
    %3667 = vmatprep.subr.mxu0 0.0
    %3668 = vmatpush2.msra.mxu0 0.0
    %3669 = vmatprep.subr.mxu0 0.0
    %3670 = vmatpush2.msra.mxu0 0.0
    %3671 = vmatprep.mubr.f32.mxu0 0.0
    %3672 = vmatmul.mubr.f32.gmra.mxu0 %v3463
    %v3673 = vpop.f32.mrf.mxu0
    %v3674 = vadd.f32 %v3352, %v3673
    %v3675 = vpop.f32.mrf.mxu0
    %v3676 = vadd.f32 %v3354, %v3675
    %3677 = vdwg.mxu0
    %3678 = vmatprep.subr.mxu0 0.0
    %3679 = vmatpush1.msra.mxu0 0.0
    %3680 = vmatprep.subr.mxu0 0.0
    %3681 = vmatpush1.msra.mxu0 0.0
    %3682 = vmatprep.subr.mxu0 0.0
    %3683 = vmatpush1.msra.mxu0 0.0
    %3684 = vmatprep.subr.mxu0 0.0
    %3685 = vmatpush1.msra.mxu0 0.0
    %3686 = vmatprep.subr.mxu0 0.0
    %3687 = vmatpush1.msra.mxu0 0.0
    %3688 = vmatprep.subr.mxu0 0.0
    %3689 = vmatpush1.msra.mxu0 0.0
    %3690 = vmatprep.subr.mxu0 0.0
    %3691 = vmatpush1.msra.mxu0 0.0
    %3692 = vmatprep.subr.mxu0 0.0
    %3693 = vmatpush1.msra.mxu0 0.0
    %3694 = vmatprep.subr.mxu0 0.0
    %3695 = vmatpush1.msra.mxu0 0.0
    %3696 = vmatprep.subr.mxu0 0.0
    %3697 = vmatpush1.msra.mxu0 0.0
    %3698 = vmatprep.subr.mxu0 0.0
    %3699 = vmatpush1.msra.mxu0 0.0
    %3700 = vmatprep.subr.mxu0 0.0
    %3701 = vmatpush1.msra.mxu0 0.0
    %3702 = vmatprep.subr.mxu0 0.0
    %3703 = vmatpush1.msra.mxu0 0.0
    %3704 = vmatprep.subr.mxu0 0.0
    %3705 = vmatpush1.msra.mxu0 0.0
    %3706 = vmatprep.subr.mxu0 0.0
    %3707 = vmatpush1.msra.mxu0 0.0
    %3708 = vmatprep.subr.mxu0 %v3453
    %3709 = vmatpush1.msra.mxu0 %v3452
    %3710 = vmatprep.subr.mxu0 0.0
    %3711 = vmatpush2.msra.mxu0 0.0
    %3712 = vmatprep.subr.mxu0 0.0
    %3713 = vmatpush2.msra.mxu0 0.0
    %3714 = vmatprep.subr.mxu0 0.0
    %3715 = vmatpush2.msra.mxu0 0.0
    %3716 = vmatprep.subr.mxu0 0.0
    %3717 = vmatpush2.msra.mxu0 0.0
    %3718 = vmatprep.subr.mxu0 0.0
    %3719 = vmatpush2.msra.mxu0 0.0
    %3720 = vmatprep.subr.mxu0 0.0
    %3721 = vmatpush2.msra.mxu0 0.0
    %3722 = vmatprep.subr.mxu0 0.0
    %3723 = vmatpush2.msra.mxu0 0.0
    %3724 = vmatprep.subr.mxu0 0.0
    %3725 = vmatpush2.msra.mxu0 0.0
    %3726 = vmatprep.subr.mxu0 0.0
    %3727 = vmatpush2.msra.mxu0 0.0
    %3728 = vmatprep.subr.mxu0 0.0
    %3729 = vmatpush2.msra.mxu0 0.0
    %3730 = vmatprep.subr.mxu0 0.0
    %3731 = vmatpush2.msra.mxu0 0.0
    %3732 = vmatprep.subr.mxu0 0.0
    %3733 = vmatpush2.msra.mxu0 0.0
    %3734 = vmatprep.subr.mxu0 0.0
    %3735 = vmatpush2.msra.mxu0 0.0
    %3736 = vmatprep.subr.mxu0 0.0
    %3737 = vmatpush2.msra.mxu0 0.0
    %3738 = vmatprep.subr.mxu0 0.0
    %3739 = vmatpush2.msra.mxu0 0.0
    %3740 = vmatprep.subr.mxu0 0.0
    %3741 = vmatpush2.msra.mxu0 0.0
    %3742 = vmatprep.mubr.f32.mxu0 0.0
    %3743 = vmatmul.mubr.f32.gmra.mxu0 %v3463
    %v3744 = vpop.f32.mrf.mxu0
    %v3745 = vadd.f32 %v3423, %v3744
    %v3746 = vpop.f32.mrf.mxu0
    %v3747 = vadd.f32 %v3425, %v3746
    %3748 = vdwg.mxu0
    %v3749 = vld [vmem:[%s3 + $0x10] sm:$0xff]
    %3750 = vrot.lane.b32.xlu0 %v3086, 38
    %v3751 = vpop.permute.xlu0 %3750
    %3752 = vrot.lane.b32.xlu0 %v3087, 38
    %v3753 = vpop.permute.xlu0 %3752
    %3754 = vrot.lane.b32.xlu0 %v3088, 38
    %v3755 = vpop.permute.xlu0 %3754
    %3756 = vrot.lane.b32.xlu0 %v3089, 38
    %v3757 = vpop.permute.xlu0 %3756
    %3758 = vrot.lane.b32.xlu0 %v3090, 38
    %v3759 = vpop.permute.xlu0 %3758
    %3760 = vrot.lane.b32.xlu0 %v3091, 38
    %v3761 = vpop.permute.xlu0 %3760
    %3762 = vrot.lane.b32.xlu0 %v3092, 38
    %v3763 = vpop.permute.xlu0 %3762
    %3764 = vrot.lane.b32.xlu0 %v3093, 38
    %v3765 = vpop.permute.xlu0 %3764
    %3766 = vrot.lane.b32.xlu0 %v3094, 38
    %v3767 = vpop.permute.xlu0 %3766
    %vm3768 = vcmask 310272
    %v3769 = vsel %vm3768, %v3751, %v3753
    %v3770 = vsel %vm3768, %v3753, %v3755
    %v3771 = vsel %vm3768, %v3755, %v3757
    %v3772 = vsel %vm3768, %v3757, %v3759
    %v3773 = vsel %vm3768, %v3759, %v3761
    %v3774 = vsel %vm3768, %v3761, %v3763
    %v3775 = vsel %vm3768, %v3763, %v3765
    %v3776 = vsel %vm3768, %v3765, %v3767
    %v3786 = vsel %vm145, %v3749, 0
    %3788 = vmatprep.subr.mxu0 0.0
    %3789 = vmatpush1.msra.mxu0 0.0
    %3790 = vmatprep.subr.mxu0 0.0
    %3791 = vmatpush1.msra.mxu0 0.0
    %3792 = vmatprep.subr.mxu0 0.0
    %3793 = vmatpush1.msra.mxu0 0.0
    %3794 = vmatprep.subr.mxu0 0.0
    %3795 = vmatpush1.msra.mxu0 0.0
    %3796 = vmatprep.subr.mxu0 0.0
    %3797 = vmatpush1.msra.mxu0 0.0
    %3798 = vmatprep.subr.mxu0 0.0
    %3799 = vmatpush1.msra.mxu0 0.0
    %3800 = vmatprep.subr.mxu0 0.0
    %3801 = vmatpush1.msra.mxu0 0.0
    %3802 = vmatprep.subr.mxu0 0.0
    %3803 = vmatpush1.msra.mxu0 0.0
    %3804 = vmatprep.subr.mxu0 0.0
    %3805 = vmatpush1.msra.mxu0 0.0
    %3806 = vmatprep.subr.mxu0 0.0
    %3807 = vmatpush1.msra.mxu0 0.0
    %3808 = vmatprep.subr.mxu0 0.0
    %3809 = vmatpush1.msra.mxu0 0.0
    %3810 = vmatprep.subr.mxu0 0.0
    %3811 = vmatpush1.msra.mxu0 0.0
    %3812 = vmatprep.subr.mxu0 0.0
    %3813 = vmatpush1.msra.mxu0 0.0
    %3814 = vmatprep.subr.mxu0 0.0
    %3815 = vmatpush1.msra.mxu0 0.0
    %3816 = vmatprep.subr.mxu0 0.0
    %3817 = vmatpush1.msra.mxu0 0.0
    %3818 = vmatprep.subr.mxu0 %v3770
    %3819 = vmatpush1.msra.mxu0 %v3769
    %3820 = vmatprep.subr.mxu0 0.0
    %3821 = vmatpush2.msra.mxu0 0.0
    %3822 = vmatprep.subr.mxu0 0.0
    %3823 = vmatpush2.msra.mxu0 0.0
    %3824 = vmatprep.subr.mxu0 0.0
    %3825 = vmatpush2.msra.mxu0 0.0
    %3826 = vmatprep.subr.mxu0 0.0
    %3827 = vmatpush2.msra.mxu0 0.0
    %3828 = vmatprep.subr.mxu0 0.0
    %3829 = vmatpush2.msra.mxu0 0.0
    %3830 = vmatprep.subr.mxu0 0.0
    %3831 = vmatpush2.msra.mxu0 0.0
    %3832 = vmatprep.subr.mxu0 0.0
    %3833 = vmatpush2.msra.mxu0 0.0
    %3834 = vmatprep.subr.mxu0 0.0
    %3835 = vmatpush2.msra.mxu0 0.0
    %3836 = vmatprep.subr.mxu0 0.0
    %3837 = vmatpush2.msra.mxu0 0.0
    %3838 = vmatprep.subr.mxu0 0.0
    %3839 = vmatpush2.msra.mxu0 0.0
    %3840 = vmatprep.subr.mxu0 0.0
    %3841 = vmatpush2.msra.mxu0 0.0
    %3842 = vmatprep.subr.mxu0 0.0
    %3843 = vmatpush2.msra.mxu0 0.0
    %3844 = vmatprep.subr.mxu0 0.0
    %3845 = vmatpush2.msra.mxu0 0.0
    %3846 = vmatprep.subr.mxu0 0.0
    %3847 = vmatpush2.msra.mxu0 0.0
    %3848 = vmatprep.subr.mxu0 0.0
    %3849 = vmatpush2.msra.mxu0 0.0
    %3850 = vmatprep.subr.mxu0 0.0
    %3851 = vmatpush2.msra.mxu0 0.0
    %3852 = vmatprep.mubr.f32.mxu0 0.0
    %3853 = vmatmul.mubr.f32.gmra.mxu0 %v3786
    %v3854 = vpop.f32.mrf.mxu0
    %v3855 = vadd.f32 0.0, %v3854
    %v3856 = vpop.f32.mrf.mxu0
    %v3857 = vadd.f32 0.0, %v3856
    %3858 = vdwg.mxu0
    %3859 = vmatprep.subr.mxu0 0.0
    %3860 = vmatpush1.msra.mxu0 0.0
    %3861 = vmatprep.subr.mxu0 0.0
    %3862 = vmatpush1.msra.mxu0 0.0
    %3863 = vmatprep.subr.mxu0 0.0
    %3864 = vmatpush1.msra.mxu0 0.0
    %3865 = vmatprep.subr.mxu0 0.0
    %3866 = vmatpush1.msra.mxu0 0.0
    %3867 = vmatprep.subr.mxu0 0.0
    %3868 = vmatpush1.msra.mxu0 0.0
    %3869 = vmatprep.subr.mxu0 0.0
    %3870 = vmatpush1.msra.mxu0 0.0
    %3871 = vmatprep.subr.mxu0 0.0
    %3872 = vmatpush1.msra.mxu0 0.0
    %3873 = vmatprep.subr.mxu0 0.0
    %3874 = vmatpush1.msra.mxu0 0.0
    %3875 = vmatprep.subr.mxu0 0.0
    %3876 = vmatpush1.msra.mxu0 0.0
    %3877 = vmatprep.subr.mxu0 0.0
    %3878 = vmatpush1.msra.mxu0 0.0
    %3879 = vmatprep.subr.mxu0 0.0
    %3880 = vmatpush1.msra.mxu0 0.0
    %3881 = vmatprep.subr.mxu0 0.0
    %3882 = vmatpush1.msra.mxu0 0.0
    %3883 = vmatprep.subr.mxu0 0.0
    %3884 = vmatpush1.msra.mxu0 0.0
    %3885 = vmatprep.subr.mxu0 0.0
    %3886 = vmatpush1.msra.mxu0 0.0
    %3887 = vmatprep.subr.mxu0 0.0
    %3888 = vmatpush1.msra.mxu0 0.0
    %3889 = vmatprep.subr.mxu0 %v3772
    %3890 = vmatpush1.msra.mxu0 %v3771
    %3891 = vmatprep.subr.mxu0 0.0
    %3892 = vmatpush2.msra.mxu0 0.0
    %3893 = vmatprep.subr.mxu0 0.0
    %3894 = vmatpush2.msra.mxu0 0.0
    %3895 = vmatprep.subr.mxu0 0.0
    %3896 = vmatpush2.msra.mxu0 0.0
    %3897 = vmatprep.subr.mxu0 0.0
    %3898 = vmatpush2.msra.mxu0 0.0
    %3899 = vmatprep.subr.mxu0 0.0
    %3900 = vmatpush2.msra.mxu0 0.0
    %3901 = vmatprep.subr.mxu0 0.0
    %3902 = vmatpush2.msra.mxu0 0.0
    %3903 = vmatprep.subr.mxu0 0.0
    %3904 = vmatpush2.msra.mxu0 0.0
    %3905 = vmatprep.subr.mxu0 0.0
    %3906 = vmatpush2.msra.mxu0 0.0
    %3907 = vmatprep.subr.mxu0 0.0
    %3908 = vmatpush2.msra.mxu0 0.0
    %3909 = vmatprep.subr.mxu0 0.0
    %3910 = vmatpush2.msra.mxu0 0.0
    %3911 = vmatprep.subr.mxu0 0.0
    %3912 = vmatpush2.msra.mxu0 0.0
    %3913 = vmatprep.subr.mxu0 0.0
    %3914 = vmatpush2.msra.mxu0 0.0
    %3915 = vmatprep.subr.mxu0 0.0
    %3916 = vmatpush2.msra.mxu0 0.0
    %3917 = vmatprep.subr.mxu0 0.0
    %3918 = vmatpush2.msra.mxu0 0.0
    %3919 = vmatprep.subr.mxu0 0.0
    %3920 = vmatpush2.msra.mxu0 0.0
    %3921 = vmatprep.subr.mxu0 0.0
    %3922 = vmatpush2.msra.mxu0 0.0
    %3923 = vmatprep.mubr.f32.mxu0 0.0
    %3924 = vmatmul.mubr.f32.gmra.mxu0 %v3786
    %v3925 = vpop.f32.mrf.mxu0
    %v3926 = vadd.f32 0.0, %v3925
    %v3927 = vpop.f32.mrf.mxu0
    %v3928 = vadd.f32 0.0, %v3927
    %3929 = vdwg.mxu0
    %3930 = vmatprep.subr.mxu0 0.0
    %3931 = vmatpush1.msra.mxu0 0.0
    %3932 = vmatprep.subr.mxu0 0.0
    %3933 = vmatpush1.msra.mxu0 0.0
    %3934 = vmatprep.subr.mxu0 0.0
    %3935 = vmatpush1.msra.mxu0 0.0
    %3936 = vmatprep.subr.mxu0 0.0
    %3937 = vmatpush1.msra.mxu0 0.0
    %3938 = vmatprep.subr.mxu0 0.0
    %3939 = vmatpush1.msra.mxu0 0.0
    %3940 = vmatprep.subr.mxu0 0.0
    %3941 = vmatpush1.msra.mxu0 0.0
    %3942 = vmatprep.subr.mxu0 0.0
    %3943 = vmatpush1.msra.mxu0 0.0
    %3944 = vmatprep.subr.mxu0 0.0
    %3945 = vmatpush1.msra.mxu0 0.0
    %3946 = vmatprep.subr.mxu0 0.0
    %3947 = vmatpush1.msra.mxu0 0.0
    %3948 = vmatprep.subr.mxu0 0.0
    %3949 = vmatpush1.msra.mxu0 0.0
    %3950 = vmatprep.subr.mxu0 0.0
    %3951 = vmatpush1.msra.mxu0 0.0
    %3952 = vmatprep.subr.mxu0 0.0
    %3953 = vmatpush1.msra.mxu0 0.0
    %3954 = vmatprep.subr.mxu0 0.0
    %3955 = vmatpush1.msra.mxu0 0.0
    %3956 = vmatprep.subr.mxu0 0.0
    %3957 = vmatpush1.msra.mxu0 0.0
    %3958 = vmatprep.subr.mxu0 0.0
    %3959 = vmatpush1.msra.mxu0 0.0
    %3960 = vmatprep.subr.mxu0 %v3774
    %3961 = vmatpush1.msra.mxu0 %v3773
    %3962 = vmatprep.subr.mxu0 0.0
    %3963 = vmatpush2.msra.mxu0 0.0
    %3964 = vmatprep.subr.mxu0 0.0
    %3965 = vmatpush2.msra.mxu0 0.0
    %3966 = vmatprep.subr.mxu0 0.0
    %3967 = vmatpush2.msra.mxu0 0.0
    %3968 = vmatprep.subr.mxu0 0.0
    %3969 = vmatpush2.msra.mxu0 0.0
    %3970 = vmatprep.subr.mxu0 0.0
    %3971 = vmatpush2.msra.mxu0 0.0
    %3972 = vmatprep.subr.mxu0 0.0
    %3973 = vmatpush2.msra.mxu0 0.0
    %3974 = vmatprep.subr.mxu0 0.0
    %3975 = vmatpush2.msra.mxu0 0.0
    %3976 = vmatprep.subr.mxu0 0.0
    %3977 = vmatpush2.msra.mxu0 0.0
    %3978 = vmatprep.subr.mxu0 0.0
    %3979 = vmatpush2.msra.mxu0 0.0
    %3980 = vmatprep.subr.mxu0 0.0
    %3981 = vmatpush2.msra.mxu0 0.0
    %3982 = vmatprep.subr.mxu0 0.0
    %3983 = vmatpush2.msra.mxu0 0.0
    %3984 = vmatprep.subr.mxu0 0.0
    %3985 = vmatpush2.msra.mxu0 0.0
    %3986 = vmatprep.subr.mxu0 0.0
    %3987 = vmatpush2.msra.mxu0 0.0
    %3988 = vmatprep.subr.mxu0 0.0
    %3989 = vmatpush2.msra.mxu0 0.0
    %3990 = vmatprep.subr.mxu0 0.0
    %3991 = vmatpush2.msra.mxu0 0.0
    %3992 = vmatprep.subr.mxu0 0.0
    %3993 = vmatpush2.msra.mxu0 0.0
    %3994 = vmatprep.mubr.f32.mxu0 0.0
    %3995 = vmatmul.mubr.f32.gmra.mxu0 %v3786
    %v3996 = vpop.f32.mrf.mxu0
    %v3997 = vadd.f32 0.0, %v3996
    %v3998 = vpop.f32.mrf.mxu0
    %v3999 = vadd.f32 0.0, %v3998
    %4000 = vdwg.mxu0
    %4001 = vmatprep.subr.mxu0 0.0
    %4002 = vmatpush1.msra.mxu0 0.0
    %4003 = vmatprep.subr.mxu0 0.0
    %4004 = vmatpush1.msra.mxu0 0.0
    %4005 = vmatprep.subr.mxu0 0.0
    %4006 = vmatpush1.msra.mxu0 0.0
    %4007 = vmatprep.subr.mxu0 0.0
    %4008 = vmatpush1.msra.mxu0 0.0
    %4009 = vmatprep.subr.mxu0 0.0
    %4010 = vmatpush1.msra.mxu0 0.0
    %4011 = vmatprep.subr.mxu0 0.0
    %4012 = vmatpush1.msra.mxu0 0.0
    %4013 = vmatprep.subr.mxu0 0.0
    %4014 = vmatpush1.msra.mxu0 0.0
    %4015 = vmatprep.subr.mxu0 0.0
    %4016 = vmatpush1.msra.mxu0 0.0
    %4017 = vmatprep.subr.mxu0 0.0
    %4018 = vmatpush1.msra.mxu0 0.0
    %4019 = vmatprep.subr.mxu0 0.0
    %4020 = vmatpush1.msra.mxu0 0.0
    %4021 = vmatprep.subr.mxu0 0.0
    %4022 = vmatpush1.msra.mxu0 0.0
    %4023 = vmatprep.subr.mxu0 0.0
    %4024 = vmatpush1.msra.mxu0 0.0
    %4025 = vmatprep.subr.mxu0 0.0
    %4026 = vmatpush1.msra.mxu0 0.0
    %4027 = vmatprep.subr.mxu0 0.0
    %4028 = vmatpush1.msra.mxu0 0.0
    %4029 = vmatprep.subr.mxu0 0.0
    %4030 = vmatpush1.msra.mxu0 0.0
    %4031 = vmatprep.subr.mxu0 %v3776
    %4032 = vmatpush1.msra.mxu0 %v3775
    %4033 = vmatprep.subr.mxu0 0.0
    %4034 = vmatpush2.msra.mxu0 0.0
    %4035 = vmatprep.subr.mxu0 0.0
    %4036 = vmatpush2.msra.mxu0 0.0
    %4037 = vmatprep.subr.mxu0 0.0
    %4038 = vmatpush2.msra.mxu0 0.0
    %4039 = vmatprep.subr.mxu0 0.0
    %4040 = vmatpush2.msra.mxu0 0.0
    %4041 = vmatprep.subr.mxu0 0.0
    %4042 = vmatpush2.msra.mxu0 0.0
    %4043 = vmatprep.subr.mxu0 0.0
    %4044 = vmatpush2.msra.mxu0 0.0
    %4045 = vmatprep.subr.mxu0 0.0
    %4046 = vmatpush2.msra.mxu0 0.0
    %4047 = vmatprep.subr.mxu0 0.0
    %4048 = vmatpush2.msra.mxu0 0.0
    %4049 = vmatprep.subr.mxu0 0.0
    %4050 = vmatpush2.msra.mxu0 0.0
    %4051 = vmatprep.subr.mxu0 0.0
    %4052 = vmatpush2.msra.mxu0 0.0
    %4053 = vmatprep.subr.mxu0 0.0
    %4054 = vmatpush2.msra.mxu0 0.0
    %4055 = vmatprep.subr.mxu0 0.0
    %4056 = vmatpush2.msra.mxu0 0.0
    %4057 = vmatprep.subr.mxu0 0.0
    %4058 = vmatpush2.msra.mxu0 0.0
    %4059 = vmatprep.subr.mxu0 0.0
    %4060 = vmatpush2.msra.mxu0 0.0
    %4061 = vmatprep.subr.mxu0 0.0
    %4062 = vmatpush2.msra.mxu0 0.0
    %4063 = vmatprep.subr.mxu0 0.0
    %4064 = vmatpush2.msra.mxu0 0.0
    %4065 = vmatprep.mubr.f32.mxu0 0.0
    %4066 = vmatmul.mubr.f32.gmra.mxu0 %v3786
    %v4067 = vpop.f32.mrf.mxu0
    %v4068 = vadd.f32 0.0, %v4067
    %v4069 = vpop.f32.mrf.mxu0
    %v4070 = vadd.f32 0.0, %v4069
    %4071 = vdwg.mxu0
    %v4072 = vadd.f32 %v3532, %v3855
    %v4073 = vadd.f32 %v3534, %v3857
    %v4074 = vadd.f32 %v3603, %v3926
    %v4075 = vadd.f32 %v3605, %v3928
    %v4076 = vadd.f32 %v3674, %v3997
    %v4077 = vadd.f32 %v3676, %v3999
    %v4078 = vadd.f32 %v3745, %v4068
    %v4079 = vadd.f32 %v3747, %v4070
    %v4080 = vld [vmem:[%s3 + $0x18] sm:$0xff]
    %4081 = vrot.lane.b32.xlu0 %v3086, 2
    %v4082 = vpop.permute.xlu0 %4081
    %4083 = vrot.lane.b32.xlu0 %v3087, 2
    %v4084 = vpop.permute.xlu0 %4083
    %4085 = vrot.lane.b32.xlu0 %v3088, 2
    %v4086 = vpop.permute.xlu0 %4085
    %4087 = vrot.lane.b32.xlu0 %v3089, 2
    %v4088 = vpop.permute.xlu0 %4087
    %4089 = vrot.lane.b32.xlu0 %v3090, 2
    %v4090 = vpop.permute.xlu0 %4089
    %4091 = vrot.lane.b32.xlu0 %v3091, 2
    %v4092 = vpop.permute.xlu0 %4091
    %4093 = vrot.lane.b32.xlu0 %v3092, 2
    %v4094 = vpop.permute.xlu0 %4093
    %4095 = vrot.lane.b32.xlu0 %v3093, 2
    %v4096 = vpop.permute.xlu0 %4095
    %4097 = vrot.lane.b32.xlu0 %v3094, 2
    %v4098 = vpop.permute.xlu0 %4097
    %vm4099 = vcmask 15360
    %v4100 = vsel %vm4099, %v4082, %v4084
    %v4101 = vsel %vm4099, %v4084, %v4086
    %v4102 = vsel %vm4099, %v4086, %v4088
    %v4103 = vsel %vm4099, %v4088, %v4090
    %v4104 = vsel %vm4099, %v4090, %v4092
    %v4105 = vsel %vm4099, %v4092, %v4094
    %v4106 = vsel %vm4099, %v4094, %v4096
    %v4107 = vsel %vm4099, %v4096, %v4098
    %v4117 = vsel %vm145, %v4080, 0
    %4119 = vmatprep.subr.mxu0 0.0
    %4120 = vmatpush1.msra.mxu0 0.0
    %4121 = vmatprep.subr.mxu0 0.0
    %4122 = vmatpush1.msra.mxu0 0.0
    %4123 = vmatprep.subr.mxu0 0.0
    %4124 = vmatpush1.msra.mxu0 0.0
    %4125 = vmatprep.subr.mxu0 0.0
    %4126 = vmatpush1.msra.mxu0 0.0
    %4127 = vmatprep.subr.mxu0 0.0
    %4128 = vmatpush1.msra.mxu0 0.0
    %4129 = vmatprep.subr.mxu0 0.0
    %4130 = vmatpush1.msra.mxu0 0.0
    %4131 = vmatprep.subr.mxu0 0.0
    %4132 = vmatpush1.msra.mxu0 0.0
    %4133 = vmatprep.subr.mxu0 0.0
    %4134 = vmatpush1.msra.mxu0 0.0
    %4135 = vmatprep.subr.mxu0 0.0
    %4136 = vmatpush1.msra.mxu0 0.0
    %4137 = vmatprep.subr.mxu0 0.0
    %4138 = vmatpush1.msra.mxu0 0.0
    %4139 = vmatprep.subr.mxu0 0.0
    %4140 = vmatpush1.msra.mxu0 0.0
    %4141 = vmatprep.subr.mxu0 0.0
    %4142 = vmatpush1.msra.mxu0 0.0
    %4143 = vmatprep.subr.mxu0 0.0
    %4144 = vmatpush1.msra.mxu0 0.0
    %4145 = vmatprep.subr.mxu0 0.0
    %4146 = vmatpush1.msra.mxu0 0.0
    %4147 = vmatprep.subr.mxu0 0.0
    %4148 = vmatpush1.msra.mxu0 0.0
    %4149 = vmatprep.subr.mxu0 %v4101
    %4150 = vmatpush1.msra.mxu0 %v4100
    %4151 = vmatprep.subr.mxu0 0.0
    %4152 = vmatpush2.msra.mxu0 0.0
    %4153 = vmatprep.subr.mxu0 0.0
    %4154 = vmatpush2.msra.mxu0 0.0
    %4155 = vmatprep.subr.mxu0 0.0
    %4156 = vmatpush2.msra.mxu0 0.0
    %4157 = vmatprep.subr.mxu0 0.0
    %4158 = vmatpush2.msra.mxu0 0.0
    %4159 = vmatprep.subr.mxu0 0.0
    %4160 = vmatpush2.msra.mxu0 0.0
    %4161 = vmatprep.subr.mxu0 0.0
    %4162 = vmatpush2.msra.mxu0 0.0
    %4163 = vmatprep.subr.mxu0 0.0
    %4164 = vmatpush2.msra.mxu0 0.0
    %4165 = vmatprep.subr.mxu0 0.0
    %4166 = vmatpush2.msra.mxu0 0.0
    %4167 = vmatprep.subr.mxu0 0.0
    %4168 = vmatpush2.msra.mxu0 0.0
    %4169 = vmatprep.subr.mxu0 0.0
    %4170 = vmatpush2.msra.mxu0 0.0
    %4171 = vmatprep.subr.mxu0 0.0
    %4172 = vmatpush2.msra.mxu0 0.0
    %4173 = vmatprep.subr.mxu0 0.0
    %4174 = vmatpush2.msra.mxu0 0.0
    %4175 = vmatprep.subr.mxu0 0.0
    %4176 = vmatpush2.msra.mxu0 0.0
    %4177 = vmatprep.subr.mxu0 0.0
    %4178 = vmatpush2.msra.mxu0 0.0
    %4179 = vmatprep.subr.mxu0 0.0
    %4180 = vmatpush2.msra.mxu0 0.0
    %4181 = vmatprep.subr.mxu0 0.0
    %4182 = vmatpush2.msra.mxu0 0.0
    %4183 = vmatprep.mubr.f32.mxu0 0.0
    %4184 = vmatmul.mubr.f32.gmra.mxu0 %v4117
    %v4185 = vpop.f32.mrf.mxu0
    %v4186 = vadd.f32 0.0, %v4185
    %v4187 = vpop.f32.mrf.mxu0
    %v4188 = vadd.f32 0.0, %v4187
    %4189 = vdwg.mxu0
    %4190 = vmatprep.subr.mxu0 0.0
    %4191 = vmatpush1.msra.mxu0 0.0
    %4192 = vmatprep.subr.mxu0 0.0
    %4193 = vmatpush1.msra.mxu0 0.0
    %4194 = vmatprep.subr.mxu0 0.0
    %4195 = vmatpush1.msra.mxu0 0.0
    %4196 = vmatprep.subr.mxu0 0.0
    %4197 = vmatpush1.msra.mxu0 0.0
    %4198 = vmatprep.subr.mxu0 0.0
    %4199 = vmatpush1.msra.mxu0 0.0
    %4200 = vmatprep.subr.mxu0 0.0
    %4201 = vmatpush1.msra.mxu0 0.0
    %4202 = vmatprep.subr.mxu0 0.0
    %4203 = vmatpush1.msra.mxu0 0.0
    %4204 = vmatprep.subr.mxu0 0.0
    %4205 = vmatpush1.msra.mxu0 0.0
    %4206 = vmatprep.subr.mxu0 0.0
    %4207 = vmatpush1.msra.mxu0 0.0
    %4208 = vmatprep.subr.mxu0 0.0
    %4209 = vmatpush1.msra.mxu0 0.0
    %4210 = vmatprep.subr.mxu0 0.0
    %4211 = vmatpush1.msra.mxu0 0.0
    %4212 = vmatprep.subr.mxu0 0.0
    %4213 = vmatpush1.msra.mxu0 0.0
    %4214 = vmatprep.subr.mxu0 0.0
    %4215 = vmatpush1.msra.mxu0 0.0
    %4216 = vmatprep.subr.mxu0 0.0
    %4217 = vmatpush1.msra.mxu0 0.0
    %4218 = vmatprep.subr.mxu0 0.0
    %4219 = vmatpush1.msra.mxu0 0.0
    %4220 = vmatprep.subr.mxu0 %v4103
    %4221 = vmatpush1.msra.mxu0 %v4102
    %4222 = vmatprep.subr.mxu0 0.0
    %4223 = vmatpush2.msra.mxu0 0.0
    %4224 = vmatprep.subr.mxu0 0.0
    %4225 = vmatpush2.msra.mxu0 0.0
    %4226 = vmatprep.subr.mxu0 0.0
    %4227 = vmatpush2.msra.mxu0 0.0
    %4228 = vmatprep.subr.mxu0 0.0
    %4229 = vmatpush2.msra.mxu0 0.0
    %4230 = vmatprep.subr.mxu0 0.0
    %4231 = vmatpush2.msra.mxu0 0.0
    %4232 = vmatprep.subr.mxu0 0.0
    %4233 = vmatpush2.msra.mxu0 0.0
    %4234 = vmatprep.subr.mxu0 0.0
    %4235 = vmatpush2.msra.mxu0 0.0
    %4236 = vmatprep.subr.mxu0 0.0
    %4237 = vmatpush2.msra.mxu0 0.0
    %4238 = vmatprep.subr.mxu0 0.0
    %4239 = vmatpush2.msra.mxu0 0.0
    %4240 = vmatprep.subr.mxu0 0.0
    %4241 = vmatpush2.msra.mxu0 0.0
    %4242 = vmatprep.subr.mxu0 0.0
    %4243 = vmatpush2.msra.mxu0 0.0
    %4244 = vmatprep.subr.mxu0 0.0
    %4245 = vmatpush2.msra.mxu0 0.0
    %4246 = vmatprep.subr.mxu0 0.0
    %4247 = vmatpush2.msra.mxu0 0.0
    %4248 = vmatprep.subr.mxu0 0.0
    %4249 = vmatpush2.msra.mxu0 0.0
    %4250 = vmatprep.subr.mxu0 0.0
    %4251 = vmatpush2.msra.mxu0 0.0
    %4252 = vmatprep.subr.mxu0 0.0
    %4253 = vmatpush2.msra.mxu0 0.0
    %4254 = vmatprep.mubr.f32.mxu0 0.0
    %4255 = vmatmul.mubr.f32.gmra.mxu0 %v4117
    %v4256 = vpop.f32.mrf.mxu0
    %v4257 = vadd.f32 0.0, %v4256
    %v4258 = vpop.f32.mrf.mxu0
    %v4259 = vadd.f32 0.0, %v4258
    %4260 = vdwg.mxu0
    %4261 = vmatprep.subr.mxu0 0.0
    %4262 = vmatpush1.msra.mxu0 0.0
    %4263 = vmatprep.subr.mxu0 0.0
    %4264 = vmatpush1.msra.mxu0 0.0
    %4265 = vmatprep.subr.mxu0 0.0
    %4266 = vmatpush1.msra.mxu0 0.0
    %4267 = vmatprep.subr.mxu0 0.0
    %4268 = vmatpush1.msra.mxu0 0.0
    %4269 = vmatprep.subr.mxu0 0.0
    %4270 = vmatpush1.msra.mxu0 0.0
    %4271 = vmatprep.subr.mxu0 0.0
    %4272 = vmatpush1.msra.mxu0 0.0
    %4273 = vmatprep.subr.mxu0 0.0
    %4274 = vmatpush1.msra.mxu0 0.0
    %4275 = vmatprep.subr.mxu0 0.0
    %4276 = vmatpush1.msra.mxu0 0.0
    %4277 = vmatprep.subr.mxu0 0.0
    %4278 = vmatpush1.msra.mxu0 0.0
    %4279 = vmatprep.subr.mxu0 0.0
    %4280 = vmatpush1.msra.mxu0 0.0
    %4281 = vmatprep.subr.mxu0 0.0
    %4282 = vmatpush1.msra.mxu0 0.0
    %4283 = vmatprep.subr.mxu0 0.0
    %4284 = vmatpush1.msra.mxu0 0.0
    %4285 = vmatprep.subr.mxu0 0.0
    %4286 = vmatpush1.msra.mxu0 0.0
    %4287 = vmatprep.subr.mxu0 0.0
    %4288 = vmatpush1.msra.mxu0 0.0
    %4289 = vmatprep.subr.mxu0 0.0
    %4290 = vmatpush1.msra.mxu0 0.0
    %4291 = vmatprep.subr.mxu0 %v4105
    %4292 = vmatpush1.msra.mxu0 %v4104
    %4293 = vmatprep.subr.mxu0 0.0
    %4294 = vmatpush2.msra.mxu0 0.0
    %4295 = vmatprep.subr.mxu0 0.0
    %4296 = vmatpush2.msra.mxu0 0.0
    %4297 = vmatprep.subr.mxu0 0.0
    %4298 = vmatpush2.msra.mxu0 0.0
    %4299 = vmatprep.subr.mxu0 0.0
    %4300 = vmatpush2.msra.mxu0 0.0
    %4301 = vmatprep.subr.mxu0 0.0
    %4302 = vmatpush2.msra.mxu0 0.0
    %4303 = vmatprep.subr.mxu0 0.0
    %4304 = vmatpush2.msra.mxu0 0.0
    %4305 = vmatprep.subr.mxu0 0.0
    %4306 = vmatpush2.msra.mxu0 0.0
    %4307 = vmatprep.subr.mxu0 0.0
    %4308 = vmatpush2.msra.mxu0 0.0
    %4309 = vmatprep.subr.mxu0 0.0
    %4310 = vmatpush2.msra.mxu0 0.0
    %4311 = vmatprep.subr.mxu0 0.0
    %4312 = vmatpush2.msra.mxu0 0.0
    %4313 = vmatprep.subr.mxu0 0.0
    %4314 = vmatpush2.msra.mxu0 0.0
    %4315 = vmatprep.subr.mxu0 0.0
    %4316 = vmatpush2.msra.mxu0 0.0
    %4317 = vmatprep.subr.mxu0 0.0
    %4318 = vmatpush2.msra.mxu0 0.0
    %4319 = vmatprep.subr.mxu0 0.0
    %4320 = vmatpush2.msra.mxu0 0.0
    %4321 = vmatprep.subr.mxu0 0.0
    %4322 = vmatpush2.msra.mxu0 0.0
    %4323 = vmatprep.subr.mxu0 0.0
    %4324 = vmatpush2.msra.mxu0 0.0
    %4325 = vmatprep.mubr.f32.mxu0 0.0
    %4326 = vmatmul.mubr.f32.gmra.mxu0 %v4117
    %v4327 = vpop.f32.mrf.mxu0
    %v4328 = vadd.f32 0.0, %v4327
    %v4329 = vpop.f32.mrf.mxu0
    %v4330 = vadd.f32 0.0, %v4329
    %4331 = vdwg.mxu0
    %4332 = vmatprep.subr.mxu0 0.0
    %4333 = vmatpush1.msra.mxu0 0.0
    %4334 = vmatprep.subr.mxu0 0.0
    %4335 = vmatpush1.msra.mxu0 0.0
    %4336 = vmatprep.subr.mxu0 0.0
    %4337 = vmatpush1.msra.mxu0 0.0
    %4338 = vmatprep.subr.mxu0 0.0
    %4339 = vmatpush1.msra.mxu0 0.0
    %4340 = vmatprep.subr.mxu0 0.0
    %4341 = vmatpush1.msra.mxu0 0.0
    %4342 = vmatprep.subr.mxu0 0.0
    %4343 = vmatpush1.msra.mxu0 0.0
    %4344 = vmatprep.subr.mxu0 0.0
    %4345 = vmatpush1.msra.mxu0 0.0
    %4346 = vmatprep.subr.mxu0 0.0
    %4347 = vmatpush1.msra.mxu0 0.0
    %4348 = vmatprep.subr.mxu0 0.0
    %4349 = vmatpush1.msra.mxu0 0.0
    %4350 = vmatprep.subr.mxu0 0.0
    %4351 = vmatpush1.msra.mxu0 0.0
    %4352 = vmatprep.subr.mxu0 0.0
    %4353 = vmatpush1.msra.mxu0 0.0
    %4354 = vmatprep.subr.mxu0 0.0
    %4355 = vmatpush1.msra.mxu0 0.0
    %4356 = vmatprep.subr.mxu0 0.0
    %4357 = vmatpush1.msra.mxu0 0.0
    %4358 = vmatprep.subr.mxu0 0.0
    %4359 = vmatpush1.msra.mxu0 0.0
    %4360 = vmatprep.subr.mxu0 0.0
    %4361 = vmatpush1.msra.mxu0 0.0
    %4362 = vmatprep.subr.mxu0 %v4107
    %4363 = vmatpush1.msra.mxu0 %v4106
    %4364 = vmatprep.subr.mxu0 0.0
    %4365 = vmatpush2.msra.mxu0 0.0
    %4366 = vmatprep.subr.mxu0 0.0
    %4367 = vmatpush2.msra.mxu0 0.0
    %4368 = vmatprep.subr.mxu0 0.0
    %4369 = vmatpush2.msra.mxu0 0.0
    %4370 = vmatprep.subr.mxu0 0.0
    %4371 = vmatpush2.msra.mxu0 0.0
    %4372 = vmatprep.subr.mxu0 0.0
    %4373 = vmatpush2.msra.mxu0 0.0
    %4374 = vmatprep.subr.mxu0 0.0
    %4375 = vmatpush2.msra.mxu0 0.0
    %4376 = vmatprep.subr.mxu0 0.0
    %4377 = vmatpush2.msra.mxu0 0.0
    %4378 = vmatprep.subr.mxu0 0.0
    %4379 = vmatpush2.msra.mxu0 0.0
    %4380 = vmatprep.subr.mxu0 0.0
    %4381 = vmatpush2.msra.mxu0 0.0
    %4382 = vmatprep.subr.mxu0 0.0
    %4383 = vmatpush2.msra.mxu0 0.0
    %4384 = vmatprep.subr.mxu0 0.0
    %4385 = vmatpush2.msra.mxu0 0.0
    %4386 = vmatprep.subr.mxu0 0.0
    %4387 = vmatpush2.msra.mxu0 0.0
    %4388 = vmatprep.subr.mxu0 0.0
    %4389 = vmatpush2.msra.mxu0 0.0
    %4390 = vmatprep.subr.mxu0 0.0
    %4391 = vmatpush2.msra.mxu0 0.0
    %4392 = vmatprep.subr.mxu0 0.0
    %4393 = vmatpush2.msra.mxu0 0.0
    %4394 = vmatprep.subr.mxu0 0.0
    %4395 = vmatpush2.msra.mxu0 0.0
    %4396 = vmatprep.mubr.f32.mxu0 0.0
    %4397 = vmatmul.mubr.f32.gmra.mxu0 %v4117
    %v4398 = vpop.f32.mrf.mxu0
    %v4399 = vadd.f32 0.0, %v4398
    %v4400 = vpop.f32.mrf.mxu0
    %v4401 = vadd.f32 0.0, %v4400
    %4402 = vdwg.mxu0
    %v4403 = vadd.f32 %v4072, %v4186
    %v4404 = vadd.f32 %v4073, %v4188
    %v4405 = vadd.f32 %v4074, %v4257
    %v4406 = vadd.f32 %v4075, %v4259
    %v4407 = vadd.f32 %v4076, %v4328
    %v4408 = vadd.f32 %v4077, %v4330
    %v4409 = vadd.f32 %v4078, %v4399
    %v4410 = vadd.f32 %v4079, %v4401
    %v4411 = vld [vmem:[%s3 + $0x20] sm:$0xff]
    %v4413 = vsel %vm145, %v4411, 0
    %4415 = vmatprep.subr.mxu0 0.0
    %4416 = vmatpush1.msra.mxu0 0.0
    %4417 = vmatprep.subr.mxu0 0.0
    %4418 = vmatpush1.msra.mxu0 0.0
    %4419 = vmatprep.subr.mxu0 0.0
    %4420 = vmatpush1.msra.mxu0 0.0
    %4421 = vmatprep.subr.mxu0 0.0
    %4422 = vmatpush1.msra.mxu0 0.0
    %4423 = vmatprep.subr.mxu0 0.0
    %4424 = vmatpush1.msra.mxu0 0.0
    %4425 = vmatprep.subr.mxu0 0.0
    %4426 = vmatpush1.msra.mxu0 0.0
    %4427 = vmatprep.subr.mxu0 0.0
    %4428 = vmatpush1.msra.mxu0 0.0
    %4429 = vmatprep.subr.mxu0 0.0
    %4430 = vmatpush1.msra.mxu0 0.0
    %4431 = vmatprep.subr.mxu0 0.0
    %4432 = vmatpush1.msra.mxu0 0.0
    %4433 = vmatprep.subr.mxu0 0.0
    %4434 = vmatpush1.msra.mxu0 0.0
    %4435 = vmatprep.subr.mxu0 0.0
    %4436 = vmatpush1.msra.mxu0 0.0
    %4437 = vmatprep.subr.mxu0 0.0
    %4438 = vmatpush1.msra.mxu0 0.0
    %4439 = vmatprep.subr.mxu0 0.0
    %4440 = vmatpush1.msra.mxu0 0.0
    %4441 = vmatprep.subr.mxu0 0.0
    %4442 = vmatpush1.msra.mxu0 0.0
    %4443 = vmatprep.subr.mxu0 0.0
    %4444 = vmatpush1.msra.mxu0 0.0
    %4445 = vmatprep.subr.mxu0 %v3088
    %4446 = vmatpush1.msra.mxu0 %v3087
    %4447 = vmatprep.subr.mxu0 0.0
    %4448 = vmatpush2.msra.mxu0 0.0
    %4449 = vmatprep.subr.mxu0 0.0
    %4450 = vmatpush2.msra.mxu0 0.0
    %4451 = vmatprep.subr.mxu0 0.0
    %4452 = vmatpush2.msra.mxu0 0.0
    %4453 = vmatprep.subr.mxu0 0.0
    %4454 = vmatpush2.msra.mxu0 0.0
    %4455 = vmatprep.subr.mxu0 0.0
    %4456 = vmatpush2.msra.mxu0 0.0
    %4457 = vmatprep.subr.mxu0 0.0
    %4458 = vmatpush2.msra.mxu0 0.0
    %4459 = vmatprep.subr.mxu0 0.0
    %4460 = vmatpush2.msra.mxu0 0.0
    %4461 = vmatprep.subr.mxu0 0.0
    %4462 = vmatpush2.msra.mxu0 0.0
    %4463 = vmatprep.subr.mxu0 0.0
    %4464 = vmatpush2.msra.mxu0 0.0
    %4465 = vmatprep.subr.mxu0 0.0
    %4466 = vmatpush2.msra.mxu0 0.0
    %4467 = vmatprep.subr.mxu0 0.0
    %4468 = vmatpush2.msra.mxu0 0.0
    %4469 = vmatprep.subr.mxu0 0.0
    %4470 = vmatpush2.msra.mxu0 0.0
    %4471 = vmatprep.subr.mxu0 0.0
    %4472 = vmatpush2.msra.mxu0 0.0
    %4473 = vmatprep.subr.mxu0 0.0
    %4474 = vmatpush2.msra.mxu0 0.0
    %4475 = vmatprep.subr.mxu0 0.0
    %4476 = vmatpush2.msra.mxu0 0.0
    %4477 = vmatprep.subr.mxu0 0.0
    %4478 = vmatpush2.msra.mxu0 0.0
    %4479 = vmatprep.mubr.f32.mxu0 0.0
    %4480 = vmatmul.mubr.f32.gmra.mxu0 %v4413
    %v4481 = vpop.f32.mrf.mxu0
    %v4482 = vadd.f32 0.0, %v4481
    %v4483 = vpop.f32.mrf.mxu0
    %v4484 = vadd.f32 0.0, %v4483
    %4485 = vdwg.mxu0
    %4486 = vmatprep.subr.mxu0 0.0
    %4487 = vmatpush1.msra.mxu0 0.0
    %4488 = vmatprep.subr.mxu0 0.0
    %4489 = vmatpush1.msra.mxu0 0.0
    %4490 = vmatprep.subr.mxu0 0.0
    %4491 = vmatpush1.msra.mxu0 0.0
    %4492 = vmatprep.subr.mxu0 0.0
    %4493 = vmatpush1.msra.mxu0 0.0
    %4494 = vmatprep.subr.mxu0 0.0
    %4495 = vmatpush1.msra.mxu0 0.0
    %4496 = vmatprep.subr.mxu0 0.0
    %4497 = vmatpush1.msra.mxu0 0.0
    %4498 = vmatprep.subr.mxu0 0.0
    %4499 = vmatpush1.msra.mxu0 0.0
    %4500 = vmatprep.subr.mxu0 0.0
    %4501 = vmatpush1.msra.mxu0 0.0
    %4502 = vmatprep.subr.mxu0 0.0
    %4503 = vmatpush1.msra.mxu0 0.0
    %4504 = vmatprep.subr.mxu0 0.0
    %4505 = vmatpush1.msra.mxu0 0.0
    %4506 = vmatprep.subr.mxu0 0.0
    %4507 = vmatpush1.msra.mxu0 0.0
    %4508 = vmatprep.subr.mxu0 0.0
    %4509 = vmatpush1.msra.mxu0 0.0
    %4510 = vmatprep.subr.mxu0 0.0
    %4511 = vmatpush1.msra.mxu0 0.0
    %4512 = vmatprep.subr.mxu0 0.0
    %4513 = vmatpush1.msra.mxu0 0.0
    %4514 = vmatprep.subr.mxu0 0.0
    %4515 = vmatpush1.msra.mxu0 0.0
    %4516 = vmatprep.subr.mxu0 %v3090
    %4517 = vmatpush1.msra.mxu0 %v3089
    %4518 = vmatprep.subr.mxu0 0.0
    %4519 = vmatpush2.msra.mxu0 0.0
    %4520 = vmatprep.subr.mxu0 0.0
    %4521 = vmatpush2.msra.mxu0 0.0
    %4522 = vmatprep.subr.mxu0 0.0
    %4523 = vmatpush2.msra.mxu0 0.0
    %4524 = vmatprep.subr.mxu0 0.0
    %4525 = vmatpush2.msra.mxu0 0.0
    %4526 = vmatprep.subr.mxu0 0.0
    %4527 = vmatpush2.msra.mxu0 0.0
    %4528 = vmatprep.subr.mxu0 0.0
    %4529 = vmatpush2.msra.mxu0 0.0
    %4530 = vmatprep.subr.mxu0 0.0
    %4531 = vmatpush2.msra.mxu0 0.0
    %4532 = vmatprep.subr.mxu0 0.0
    %4533 = vmatpush2.msra.mxu0 0.0
    %4534 = vmatprep.subr.mxu0 0.0
    %4535 = vmatpush2.msra.mxu0 0.0
    %4536 = vmatprep.subr.mxu0 0.0
    %4537 = vmatpush2.msra.mxu0 0.0
    %4538 = vmatprep.subr.mxu0 0.0
    %4539 = vmatpush2.msra.mxu0 0.0
    %4540 = vmatprep.subr.mxu0 0.0
    %4541 = vmatpush2.msra.mxu0 0.0
    %4542 = vmatprep.subr.mxu0 0.0
    %4543 = vmatpush2.msra.mxu0 0.0
    %4544 = vmatprep.subr.mxu0 0.0
    %4545 = vmatpush2.msra.mxu0 0.0
    %4546 = vmatprep.subr.mxu0 0.0
    %4547 = vmatpush2.msra.mxu0 0.0
    %4548 = vmatprep.subr.mxu0 0.0
    %4549 = vmatpush2.msra.mxu0 0.0
    %4550 = vmatprep.mubr.f32.mxu0 0.0
    %4551 = vmatmul.mubr.f32.gmra.mxu0 %v4413
    %v4552 = vpop.f32.mrf.mxu0
    %v4553 = vadd.f32 0.0, %v4552
    %v4554 = vpop.f32.mrf.mxu0
    %v4555 = vadd.f32 0.0, %v4554
    %4556 = vdwg.mxu0
    %4557 = vmatprep.subr.mxu0 0.0
    %4558 = vmatpush1.msra.mxu0 0.0
    %4559 = vmatprep.subr.mxu0 0.0
    %4560 = vmatpush1.msra.mxu0 0.0
    %4561 = vmatprep.subr.mxu0 0.0
    %4562 = vmatpush1.msra.mxu0 0.0
    %4563 = vmatprep.subr.mxu0 0.0
    %4564 = vmatpush1.msra.mxu0 0.0
    %4565 = vmatprep.subr.mxu0 0.0
    %4566 = vmatpush1.msra.mxu0 0.0
    %4567 = vmatprep.subr.mxu0 0.0
    %4568 = vmatpush1.msra.mxu0 0.0
    %4569 = vmatprep.subr.mxu0 0.0
    %4570 = vmatpush1.msra.mxu0 0.0
    %4571 = vmatprep.subr.mxu0 0.0
    %4572 = vmatpush1.msra.mxu0 0.0
    %4573 = vmatprep.subr.mxu0 0.0
    %4574 = vmatpush1.msra.mxu0 0.0
    %4575 = vmatprep.subr.mxu0 0.0
    %4576 = vmatpush1.msra.mxu0 0.0
    %4577 = vmatprep.subr.mxu0 0.0
    %4578 = vmatpush1.msra.mxu0 0.0
    %4579 = vmatprep.subr.mxu0 0.0
    %4580 = vmatpush1.msra.mxu0 0.0
    %4581 = vmatprep.subr.mxu0 0.0
    %4582 = vmatpush1.msra.mxu0 0.0
    %4583 = vmatprep.subr.mxu0 0.0
    %4584 = vmatpush1.msra.mxu0 0.0
    %4585 = vmatprep.subr.mxu0 0.0
    %4586 = vmatpush1.msra.mxu0 0.0
    %4587 = vmatprep.subr.mxu0 %v3092
    %4588 = vmatpush1.msra.mxu0 %v3091
    %4589 = vmatprep.subr.mxu0 0.0
    %4590 = vmatpush2.msra.mxu0 0.0
    %4591 = vmatprep.subr.mxu0 0.0
    %4592 = vmatpush2.msra.mxu0 0.0
    %4593 = vmatprep.subr.mxu0 0.0
    %4594 = vmatpush2.msra.mxu0 0.0
    %4595 = vmatprep.subr.mxu0 0.0
    %4596 = vmatpush2.msra.mxu0 0.0
    %4597 = vmatprep.subr.mxu0 0.0
    %4598 = vmatpush2.msra.mxu0 0.0
    %4599 = vmatprep.subr.mxu0 0.0
    %4600 = vmatpush2.msra.mxu0 0.0
    %4601 = vmatprep.subr.mxu0 0.0
    %4602 = vmatpush2.msra.mxu0 0.0
    %4603 = vmatprep.subr.mxu0 0.0
    %4604 = vmatpush2.msra.mxu0 0.0
    %4605 = vmatprep.subr.mxu0 0.0
    %4606 = vmatpush2.msra.mxu0 0.0
    %4607 = vmatprep.subr.mxu0 0.0
    %4608 = vmatpush2.msra.mxu0 0.0
    %4609 = vmatprep.subr.mxu0 0.0
    %4610 = vmatpush2.msra.mxu0 0.0
    %4611 = vmatprep.subr.mxu0 0.0
    %4612 = vmatpush2.msra.mxu0 0.0
    %4613 = vmatprep.subr.mxu0 0.0
    %4614 = vmatpush2.msra.mxu0 0.0
    %4615 = vmatprep.subr.mxu0 0.0
    %4616 = vmatpush2.msra.mxu0 0.0
    %4617 = vmatprep.subr.mxu0 0.0
    %4618 = vmatpush2.msra.mxu0 0.0
    %4619 = vmatprep.subr.mxu0 0.0
    %4620 = vmatpush2.msra.mxu0 0.0
    %4621 = vmatprep.mubr.f32.mxu0 0.0
    %4622 = vmatmul.mubr.f32.gmra.mxu0 %v4413
    %v4623 = vpop.f32.mrf.mxu0
    %v4624 = vadd.f32 0.0, %v4623
    %v4625 = vpop.f32.mrf.mxu0
    %v4626 = vadd.f32 0.0, %v4625
    %4627 = vdwg.mxu0
    %4628 = vmatprep.subr.mxu0 0.0
    %4629 = vmatpush1.msra.mxu0 0.0
    %4630 = vmatprep.subr.mxu0 0.0
    %4631 = vmatpush1.msra.mxu0 0.0
    %4632 = vmatprep.subr.mxu0 0.0
    %4633 = vmatpush1.msra.mxu0 0.0
    %4634 = vmatprep.subr.mxu0 0.0
    %4635 = vmatpush1.msra.mxu0 0.0
    %4636 = vmatprep.subr.mxu0 0.0
    %4637 = vmatpush1.msra.mxu0 0.0
    %4638 = vmatprep.subr.mxu0 0.0
    %4639 = vmatpush1.msra.mxu0 0.0
    %4640 = vmatprep.subr.mxu0 0.0
    %4641 = vmatpush1.msra.mxu0 0.0
    %4642 = vmatprep.subr.mxu0 0.0
    %4643 = vmatpush1.msra.mxu0 0.0
    %4644 = vmatprep.subr.mxu0 0.0
    %4645 = vmatpush1.msra.mxu0 0.0
    %4646 = vmatprep.subr.mxu0 0.0
    %4647 = vmatpush1.msra.mxu0 0.0
    %4648 = vmatprep.subr.mxu0 0.0
    %4649 = vmatpush1.msra.mxu0 0.0
    %4650 = vmatprep.subr.mxu0 0.0
    %4651 = vmatpush1.msra.mxu0 0.0
    %4652 = vmatprep.subr.mxu0 0.0
    %4653 = vmatpush1.msra.mxu0 0.0
    %4654 = vmatprep.subr.mxu0 0.0
    %4655 = vmatpush1.msra.mxu0 0.0
    %4656 = vmatprep.subr.mxu0 0.0
    %4657 = vmatpush1.msra.mxu0 0.0
    %4658 = vmatprep.subr.mxu0 %v3094
    %4659 = vmatpush1.msra.mxu0 %v3093
    %4660 = vmatprep.subr.mxu0 0.0
    %4661 = vmatpush2.msra.mxu0 0.0
    %4662 = vmatprep.subr.mxu0 0.0
    %4663 = vmatpush2.msra.mxu0 0.0
    %4664 = vmatprep.subr.mxu0 0.0
    %4665 = vmatpush2.msra.mxu0 0.0
    %4666 = vmatprep.subr.mxu0 0.0
    %4667 = vmatpush2.msra.mxu0 0.0
    %4668 = vmatprep.subr.mxu0 0.0
    %4669 = vmatpush2.msra.mxu0 0.0
    %4670 = vmatprep.subr.mxu0 0.0
    %4671 = vmatpush2.msra.mxu0 0.0
    %4672 = vmatprep.subr.mxu0 0.0
    %4673 = vmatpush2.msra.mxu0 0.0
    %4674 = vmatprep.subr.mxu0 0.0
    %4675 = vmatpush2.msra.mxu0 0.0
    %4676 = vmatprep.subr.mxu0 0.0
    %4677 = vmatpush2.msra.mxu0 0.0
    %4678 = vmatprep.subr.mxu0 0.0
    %4679 = vmatpush2.msra.mxu0 0.0
    %4680 = vmatprep.subr.mxu0 0.0
    %4681 = vmatpush2.msra.mxu0 0.0
    %4682 = vmatprep.subr.mxu0 0.0
    %4683 = vmatpush2.msra.mxu0 0.0
    %4684 = vmatprep.subr.mxu0 0.0
    %4685 = vmatpush2.msra.mxu0 0.0
    %4686 = vmatprep.subr.mxu0 0.0
    %4687 = vmatpush2.msra.mxu0 0.0
    %4688 = vmatprep.subr.mxu0 0.0
    %4689 = vmatpush2.msra.mxu0 0.0
    %4690 = vmatprep.subr.mxu0 0.0
    %4691 = vmatpush2.msra.mxu0 0.0
    %4692 = vmatprep.mubr.f32.mxu0 0.0
    %4693 = vmatmul.mubr.f32.gmra.mxu0 %v4413
    %v4694 = vpop.f32.mrf.mxu0
    %v4695 = vadd.f32 0.0, %v4694
    %v4696 = vpop.f32.mrf.mxu0
    %v4697 = vadd.f32 0.0, %v4696
    %4698 = vdwg.mxu0
    %v4699 = vadd.f32 %v4403, %v4482
    %v4700 = vadd.f32 %v4404, %v4484
    %v4701 = vadd.f32 %v4405, %v4553
    %v4702 = vadd.f32 %v4406, %v4555
    %v4703 = vadd.f32 %v4407, %v4624
    %v4704 = vadd.f32 %v4408, %v4626
    %v4705 = vadd.f32 %v4409, %v4695
    %v4706 = vadd.f32 %v4410, %v4697
    %v4707 = vld [vmem:[%s3 + $0x28] sm:$0xff]
    %v4708 = vld [vmem:[#allocation2 + $0x8] sm:$0xff]
    %v4709 = vld [vmem:[#allocation2 + $0x10] sm:$0xff]
    %v4710 = vld [vmem:[#allocation2 + $0x18] sm:$0xff]
    %v4711 = vld [vmem:[#allocation2 + $0x20] sm:$0xff]
    %v4712 = vld [vmem:[#allocation2 + $0x28] sm:$0xff]
    %v4713 = vld [vmem:[#allocation2 + $0x30] sm:$0xff]
    %v4714 = vld [vmem:[#allocation2 + $0x38] sm:$0xff]
    %v4715 = vld [vmem:[#allocation2 + $0x40] sm:$0xff]
    %v4716 = vld [vmem:[#allocation2 + $0x48] sm:$0xff]
    %4726 = vrot.lane.b32.xlu0 %v4708, 126
    %v4727 = vpop.permute.xlu0 %4726
    %4728 = vrot.lane.b32.xlu0 %v4709, 126
    %v4729 = vpop.permute.xlu0 %4728
    %4730 = vrot.lane.b32.xlu0 %v4710, 126
    %v4731 = vpop.permute.xlu0 %4730
    %4732 = vrot.lane.b32.xlu0 %v4711, 126
    %v4733 = vpop.permute.xlu0 %4732
    %4734 = vrot.lane.b32.xlu0 %v4712, 126
    %v4735 = vpop.permute.xlu0 %4734
    %4736 = vrot.lane.b32.xlu0 %v4713, 126
    %v4737 = vpop.permute.xlu0 %4736
    %4738 = vrot.lane.b32.xlu0 %v4714, 126
    %v4739 = vpop.permute.xlu0 %4738
    %4740 = vrot.lane.b32.xlu0 %v4715, 126
    %v4741 = vpop.permute.xlu0 %4740
    %4742 = vrot.lane.b32.xlu0 %v4716, 126
    %v4743 = vpop.permute.xlu0 %4742
    %vm4744 = vcmask 1031168
    %v4745 = vsel %vm4744, %v4727, %v4729
    %v4746 = vsel %vm4744, %v4729, %v4731
    %v4747 = vsel %vm4744, %v4731, %v4733
    %v4748 = vsel %vm4744, %v4733, %v4735
    %v4749 = vsel %vm4744, %v4735, %v4737
    %v4750 = vsel %vm4744, %v4737, %v4739
    %v4751 = vsel %vm4744, %v4739, %v4741
    %v4752 = vsel %vm4744, %v4741, %v4743
    %v4762 = vsel %vm145, %v4707, 0
    %4764 = vmatprep.subr.mxu0 0.0
    %4765 = vmatpush1.msra.mxu0 0.0
    %4766 = vmatprep.subr.mxu0 0.0
    %4767 = vmatpush1.msra.mxu0 0.0
    %4768 = vmatprep.subr.mxu0 0.0
    %4769 = vmatpush1.msra.mxu0 0.0
    %4770 = vmatprep.subr.mxu0 0.0
    %4771 = vmatpush1.msra.mxu0 0.0
    %4772 = vmatprep.subr.mxu0 0.0
    %4773 = vmatpush1.msra.mxu0 0.0
    %4774 = vmatprep.subr.mxu0 0.0
    %4775 = vmatpush1.msra.mxu0 0.0
    %4776 = vmatprep.subr.mxu0 0.0
    %4777 = vmatpush1.msra.mxu0 0.0
    %4778 = vmatprep.subr.mxu0 0.0
    %4779 = vmatpush1.msra.mxu0 0.0
    %4780 = vmatprep.subr.mxu0 0.0
    %4781 = vmatpush1.msra.mxu0 0.0
    %4782 = vmatprep.subr.mxu0 0.0
    %4783 = vmatpush1.msra.mxu0 0.0
    %4784 = vmatprep.subr.mxu0 0.0
    %4785 = vmatpush1.msra.mxu0 0.0
    %4786 = vmatprep.subr.mxu0 0.0
    %4787 = vmatpush1.msra.mxu0 0.0
    %4788 = vmatprep.subr.mxu0 0.0
    %4789 = vmatpush1.msra.mxu0 0.0
    %4790 = vmatprep.subr.mxu0 0.0
    %4791 = vmatpush1.msra.mxu0 0.0
    %4792 = vmatprep.subr.mxu0 0.0
    %4793 = vmatpush1.msra.mxu0 0.0
    %4794 = vmatprep.subr.mxu0 %v4746
    %4795 = vmatpush1.msra.mxu0 %v4745
    %4796 = vmatprep.subr.mxu0 0.0
    %4797 = vmatpush2.msra.mxu0 0.0
    %4798 = vmatprep.subr.mxu0 0.0
    %4799 = vmatpush2.msra.mxu0 0.0
    %4800 = vmatprep.subr.mxu0 0.0
    %4801 = vmatpush2.msra.mxu0 0.0
    %4802 = vmatprep.subr.mxu0 0.0
    %4803 = vmatpush2.msra.mxu0 0.0
    %4804 = vmatprep.subr.mxu0 0.0
    %4805 = vmatpush2.msra.mxu0 0.0
    %4806 = vmatprep.subr.mxu0 0.0
    %4807 = vmatpush2.msra.mxu0 0.0
    %4808 = vmatprep.subr.mxu0 0.0
    %4809 = vmatpush2.msra.mxu0 0.0
    %4810 = vmatprep.subr.mxu0 0.0
    %4811 = vmatpush2.msra.mxu0 0.0
    %4812 = vmatprep.subr.mxu0 0.0
    %4813 = vmatpush2.msra.mxu0 0.0
    %4814 = vmatprep.subr.mxu0 0.0
    %4815 = vmatpush2.msra.mxu0 0.0
    %4816 = vmatprep.subr.mxu0 0.0
    %4817 = vmatpush2.msra.mxu0 0.0
    %4818 = vmatprep.subr.mxu0 0.0
    %4819 = vmatpush2.msra.mxu0 0.0
    %4820 = vmatprep.subr.mxu0 0.0
    %4821 = vmatpush2.msra.mxu0 0.0
    %4822 = vmatprep.subr.mxu0 0.0
    %4823 = vmatpush2.msra.mxu0 0.0
    %4824 = vmatprep.subr.mxu0 0.0
    %4825 = vmatpush2.msra.mxu0 0.0
    %4826 = vmatprep.subr.mxu0 0.0
    %4827 = vmatpush2.msra.mxu0 0.0
    %4828 = vmatprep.mubr.f32.mxu0 0.0
    %4829 = vmatmul.mubr.f32.gmra.mxu0 %v4762
    %v4830 = vpop.f32.mrf.mxu0
    %v4831 = vadd.f32 0.0, %v4830
    %v4832 = vpop.f32.mrf.mxu0
    %v4833 = vadd.f32 0.0, %v4832
    %4834 = vdwg.mxu0
    %4835 = vmatprep.subr.mxu0 0.0
    %4836 = vmatpush1.msra.mxu0 0.0
    %4837 = vmatprep.subr.mxu0 0.0
    %4838 = vmatpush1.msra.mxu0 0.0
    %4839 = vmatprep.subr.mxu0 0.0
    %4840 = vmatpush1.msra.mxu0 0.0
    %4841 = vmatprep.subr.mxu0 0.0
    %4842 = vmatpush1.msra.mxu0 0.0
    %4843 = vmatprep.subr.mxu0 0.0
    %4844 = vmatpush1.msra.mxu0 0.0
    %4845 = vmatprep.subr.mxu0 0.0
    %4846 = vmatpush1.msra.mxu0 0.0
    %4847 = vmatprep.subr.mxu0 0.0
    %4848 = vmatpush1.msra.mxu0 0.0
    %4849 = vmatprep.subr.mxu0 0.0
    %4850 = vmatpush1.msra.mxu0 0.0
    %4851 = vmatprep.subr.mxu0 0.0
    %4852 = vmatpush1.msra.mxu0 0.0
    %4853 = vmatprep.subr.mxu0 0.0
    %4854 = vmatpush1.msra.mxu0 0.0
    %4855 = vmatprep.subr.mxu0 0.0
    %4856 = vmatpush1.msra.mxu0 0.0
    %4857 = vmatprep.subr.mxu0 0.0
    %4858 = vmatpush1.msra.mxu0 0.0
    %4859 = vmatprep.subr.mxu0 0.0
    %4860 = vmatpush1.msra.mxu0 0.0
    %4861 = vmatprep.subr.mxu0 0.0
    %4862 = vmatpush1.msra.mxu0 0.0
    %4863 = vmatprep.subr.mxu0 0.0
    %4864 = vmatpush1.msra.mxu0 0.0
    %4865 = vmatprep.subr.mxu0 %v4748
    %4866 = vmatpush1.msra.mxu0 %v4747
    %4867 = vmatprep.subr.mxu0 0.0
    %4868 = vmatpush2.msra.mxu0 0.0
    %4869 = vmatprep.subr.mxu0 0.0
    %4870 = vmatpush2.msra.mxu0 0.0
    %4871 = vmatprep.subr.mxu0 0.0
    %4872 = vmatpush2.msra.mxu0 0.0
    %4873 = vmatprep.subr.mxu0 0.0
    %4874 = vmatpush2.msra.mxu0 0.0
    %4875 = vmatprep.subr.mxu0 0.0
    %4876 = vmatpush2.msra.mxu0 0.0
    %4877 = vmatprep.subr.mxu0 0.0
    %4878 = vmatpush2.msra.mxu0 0.0
    %4879 = vmatprep.subr.mxu0 0.0
    %4880 = vmatpush2.msra.mxu0 0.0
    %4881 = vmatprep.subr.mxu0 0.0
    %4882 = vmatpush2.msra.mxu0 0.0
    %4883 = vmatprep.subr.mxu0 0.0
    %4884 = vmatpush2.msra.mxu0 0.0
    %4885 = vmatprep.subr.mxu0 0.0
    %4886 = vmatpush2.msra.mxu0 0.0
    %4887 = vmatprep.subr.mxu0 0.0
    %4888 = vmatpush2.msra.mxu0 0.0
    %4889 = vmatprep.subr.mxu0 0.0
    %4890 = vmatpush2.msra.mxu0 0.0
    %4891 = vmatprep.subr.mxu0 0.0
    %4892 = vmatpush2.msra.mxu0 0.0
    %4893 = vmatprep.subr.mxu0 0.0
    %4894 = vmatpush2.msra.mxu0 0.0
    %4895 = vmatprep.subr.mxu0 0.0
    %4896 = vmatpush2.msra.mxu0 0.0
    %4897 = vmatprep.subr.mxu0 0.0
    %4898 = vmatpush2.msra.mxu0 0.0
    %4899 = vmatprep.mubr.f32.mxu0 0.0
    %4900 = vmatmul.mubr.f32.gmra.mxu0 %v4762
    %v4901 = vpop.f32.mrf.mxu0
    %v4902 = vadd.f32 0.0, %v4901
    %v4903 = vpop.f32.mrf.mxu0
    %v4904 = vadd.f32 0.0, %v4903
    %4905 = vdwg.mxu0
    %4906 = vmatprep.subr.mxu0 0.0
    %4907 = vmatpush1.msra.mxu0 0.0
    %4908 = vmatprep.subr.mxu0 0.0
    %4909 = vmatpush1.msra.mxu0 0.0
    %4910 = vmatprep.subr.mxu0 0.0
    %4911 = vmatpush1.msra.mxu0 0.0
    %4912 = vmatprep.subr.mxu0 0.0
    %4913 = vmatpush1.msra.mxu0 0.0
    %4914 = vmatprep.subr.mxu0 0.0
    %4915 = vmatpush1.msra.mxu0 0.0
    %4916 = vmatprep.subr.mxu0 0.0
    %4917 = vmatpush1.msra.mxu0 0.0
    %4918 = vmatprep.subr.mxu0 0.0
    %4919 = vmatpush1.msra.mxu0 0.0
    %4920 = vmatprep.subr.mxu0 0.0
    %4921 = vmatpush1.msra.mxu0 0.0
    %4922 = vmatprep.subr.mxu0 0.0
    %4923 = vmatpush1.msra.mxu0 0.0
    %4924 = vmatprep.subr.mxu0 0.0
    %4925 = vmatpush1.msra.mxu0 0.0
    %4926 = vmatprep.subr.mxu0 0.0
    %4927 = vmatpush1.msra.mxu0 0.0
    %4928 = vmatprep.subr.mxu0 0.0
    %4929 = vmatpush1.msra.mxu0 0.0
    %4930 = vmatprep.subr.mxu0 0.0
    %4931 = vmatpush1.msra.mxu0 0.0
    %4932 = vmatprep.subr.mxu0 0.0
    %4933 = vmatpush1.msra.mxu0 0.0
    %4934 = vmatprep.subr.mxu0 0.0
    %4935 = vmatpush1.msra.mxu0 0.0
    %4936 = vmatprep.subr.mxu0 %v4750
    %4937 = vmatpush1.msra.mxu0 %v4749
    %4938 = vmatprep.subr.mxu0 0.0
    %4939 = vmatpush2.msra.mxu0 0.0
    %4940 = vmatprep.subr.mxu0 0.0
    %4941 = vmatpush2.msra.mxu0 0.0
    %4942 = vmatprep.subr.mxu0 0.0
    %4943 = vmatpush2.msra.mxu0 0.0
    %4944 = vmatprep.subr.mxu0 0.0
    %4945 = vmatpush2.msra.mxu0 0.0
    %4946 = vmatprep.subr.mxu0 0.0
    %4947 = vmatpush2.msra.mxu0 0.0
    %4948 = vmatprep.subr.mxu0 0.0
    %4949 = vmatpush2.msra.mxu0 0.0
    %4950 = vmatprep.subr.mxu0 0.0
    %4951 = vmatpush2.msra.mxu0 0.0
    %4952 = vmatprep.subr.mxu0 0.0
    %4953 = vmatpush2.msra.mxu0 0.0
    %4954 = vmatprep.subr.mxu0 0.0
    %4955 = vmatpush2.msra.mxu0 0.0
    %4956 = vmatprep.subr.mxu0 0.0
    %4957 = vmatpush2.msra.mxu0 0.0
    %4958 = vmatprep.subr.mxu0 0.0
    %4959 = vmatpush2.msra.mxu0 0.0
    %4960 = vmatprep.subr.mxu0 0.0
    %4961 = vmatpush2.msra.mxu0 0.0
    %4962 = vmatprep.subr.mxu0 0.0
    %4963 = vmatpush2.msra.mxu0 0.0
    %4964 = vmatprep.subr.mxu0 0.0
    %4965 = vmatpush2.msra.mxu0 0.0
    %4966 = vmatprep.subr.mxu0 0.0
    %4967 = vmatpush2.msra.mxu0 0.0
    %4968 = vmatprep.subr.mxu0 0.0
    %4969 = vmatpush2.msra.mxu0 0.0
    %4970 = vmatprep.mubr.f32.mxu0 0.0
    %4971 = vmatmul.mubr.f32.gmra.mxu0 %v4762
    %v4972 = vpop.f32.mrf.mxu0
    %v4973 = vadd.f32 0.0, %v4972
    %v4974 = vpop.f32.mrf.mxu0
    %v4975 = vadd.f32 0.0, %v4974
    %4976 = vdwg.mxu0
    %4977 = vmatprep.subr.mxu0 0.0
    %4978 = vmatpush1.msra.mxu0 0.0
    %4979 = vmatprep.subr.mxu0 0.0
    %4980 = vmatpush1.msra.mxu0 0.0
    %4981 = vmatprep.subr.mxu0 0.0
    %4982 = vmatpush1.msra.mxu0 0.0
    %4983 = vmatprep.subr.mxu0 0.0
    %4984 = vmatpush1.msra.mxu0 0.0
    %4985 = vmatprep.subr.mxu0 0.0
    %4986 = vmatpush1.msra.mxu0 0.0
    %4987 = vmatprep.subr.mxu0 0.0
    %4988 = vmatpush1.msra.mxu0 0.0
    %4989 = vmatprep.subr.mxu0 0.0
    %4990 = vmatpush1.msra.mxu0 0.0
    %4991 = vmatprep.subr.mxu0 0.0
    %4992 = vmatpush1.msra.mxu0 0.0
    %4993 = vmatprep.subr.mxu0 0.0
    %4994 = vmatpush1.msra.mxu0 0.0
    %4995 = vmatprep.subr.mxu0 0.0
    %4996 = vmatpush1.msra.mxu0 0.0
    %4997 = vmatprep.subr.mxu0 0.0
    %4998 = vmatpush1.msra.mxu0 0.0
    %4999 = vmatprep.subr.mxu0 0.0
    %5000 = vmatpush1.msra.mxu0 0.0
    %5001 = vmatprep.subr.mxu0 0.0
    %5002 = vmatpush1.msra.mxu0 0.0
    %5003 = vmatprep.subr.mxu0 0.0
    %5004 = vmatpush1.msra.mxu0 0.0
    %5005 = vmatprep.subr.mxu0 0.0
    %5006 = vmatpush1.msra.mxu0 0.0
    %5007 = vmatprep.subr.mxu0 %v4752
    %5008 = vmatpush1.msra.mxu0 %v4751
    %5009 = vmatprep.subr.mxu0 0.0
    %5010 = vmatpush2.msra.mxu0 0.0
    %5011 = vmatprep.subr.mxu0 0.0
    %5012 = vmatpush2.msra.mxu0 0.0
    %5013 = vmatprep.subr.mxu0 0.0
    %5014 = vmatpush2.msra.mxu0 0.0
    %5015 = vmatprep.subr.mxu0 0.0
    %5016 = vmatpush2.msra.mxu0 0.0
    %5017 = vmatprep.subr.mxu0 0.0
    %5018 = vmatpush2.msra.mxu0 0.0
    %5019 = vmatprep.subr.mxu0 0.0
    %5020 = vmatpush2.msra.mxu0 0.0
    %5021 = vmatprep.subr.mxu0 0.0
    %5022 = vmatpush2.msra.mxu0 0.0
    %5023 = vmatprep.subr.mxu0 0.0
    %5024 = vmatpush2.msra.mxu0 0.0
    %5025 = vmatprep.subr.mxu0 0.0
    %5026 = vmatpush2.msra.mxu0 0.0
    %5027 = vmatprep.subr.mxu0 0.0
    %5028 = vmatpush2.msra.mxu0 0.0
    %5029 = vmatprep.subr.mxu0 0.0
    %5030 = vmatpush2.msra.mxu0 0.0
    %5031 = vmatprep.subr.mxu0 0.0
    %5032 = vmatpush2.msra.mxu0 0.0
    %5033 = vmatprep.subr.mxu0 0.0
    %5034 = vmatpush2.msra.mxu0 0.0
    %5035 = vmatprep.subr.mxu0 0.0
    %5036 = vmatpush2.msra.mxu0 0.0
    %5037 = vmatprep.subr.mxu0 0.0
    %5038 = vmatpush2.msra.mxu0 0.0
    %5039 = vmatprep.subr.mxu0 0.0
    %5040 = vmatpush2.msra.mxu0 0.0
    %5041 = vmatprep.mubr.f32.mxu0 0.0
    %5042 = vmatmul.mubr.f32.gmra.mxu0 %v4762
    %v5043 = vpop.f32.mrf.mxu0
    %v5044 = vadd.f32 0.0, %v5043
    %v5045 = vpop.f32.mrf.mxu0
    %v5046 = vadd.f32 0.0, %v5045
    %5047 = vdwg.mxu0
    %v5048 = vadd.f32 %v4699, %v4831
    %v5049 = vadd.f32 %v4700, %v4833
    %v5050 = vadd.f32 %v4701, %v4902
    %v5051 = vadd.f32 %v4702, %v4904
    %v5052 = vadd.f32 %v4703, %v4973
    %v5053 = vadd.f32 %v4704, %v4975
    %v5054 = vadd.f32 %v4705, %v5044
    %v5055 = vadd.f32 %v4706, %v5046
    %v5056 = vld [vmem:[%s3 + $0x30] sm:$0xff]
    %5057 = vrot.lane.b32.xlu0 %v4708, 90
    %v5058 = vpop.permute.xlu0 %5057
    %5059 = vrot.lane.b32.xlu0 %v4709, 90
    %v5060 = vpop.permute.xlu0 %5059
    %5061 = vrot.lane.b32.xlu0 %v4710, 90
    %v5062 = vpop.permute.xlu0 %5061
    %5063 = vrot.lane.b32.xlu0 %v4711, 90
    %v5064 = vpop.permute.xlu0 %5063
    %5065 = vrot.lane.b32.xlu0 %v4712, 90
    %v5066 = vpop.permute.xlu0 %5065
    %5067 = vrot.lane.b32.xlu0 %v4713, 90
    %v5068 = vpop.permute.xlu0 %5067
    %5069 = vrot.lane.b32.xlu0 %v4714, 90
    %v5070 = vpop.permute.xlu0 %5069
    %5071 = vrot.lane.b32.xlu0 %v4715, 90
    %v5072 = vpop.permute.xlu0 %5071
    %5073 = vrot.lane.b32.xlu0 %v4716, 90
    %v5074 = vpop.permute.xlu0 %5073
    %vm5075 = vcmask 736256
    %v5076 = vsel %vm5075, %v5058, %v5060
    %v5077 = vsel %vm5075, %v5060, %v5062
    %v5078 = vsel %vm5075, %v5062, %v5064
    %v5079 = vsel %vm5075, %v5064, %v5066
    %v5080 = vsel %vm5075, %v5066, %v5068
    %v5081 = vsel %vm5075, %v5068, %v5070
    %v5082 = vsel %vm5075, %v5070, %v5072
    %v5083 = vsel %vm5075, %v5072, %v5074
    %v5093 = vsel %vm145, %v5056, 0
    %5095 = vmatprep.subr.mxu0 0.0
    %5096 = vmatpush1.msra.mxu0 0.0
    %5097 = vmatprep.subr.mxu0 0.0
    %5098 = vmatpush1.msra.mxu0 0.0
    %5099 = vmatprep.subr.mxu0 0.0
    %5100 = vmatpush1.msra.mxu0 0.0
    %5101 = vmatprep.subr.mxu0 0.0
    %5102 = vmatpush1.msra.mxu0 0.0
    %5103 = vmatprep.subr.mxu0 0.0
    %5104 = vmatpush1.msra.mxu0 0.0
    %5105 = vmatprep.subr.mxu0 0.0
    %5106 = vmatpush1.msra.mxu0 0.0
    %5107 = vmatprep.subr.mxu0 0.0
    %5108 = vmatpush1.msra.mxu0 0.0
    %5109 = vmatprep.subr.mxu0 0.0
    %5110 = vmatpush1.msra.mxu0 0.0
    %5111 = vmatprep.subr.mxu0 0.0
    %5112 = vmatpush1.msra.mxu0 0.0
    %5113 = vmatprep.subr.mxu0 0.0
    %5114 = vmatpush1.msra.mxu0 0.0
    %5115 = vmatprep.subr.mxu0 0.0
    %5116 = vmatpush1.msra.mxu0 0.0
    %5117 = vmatprep.subr.mxu0 0.0
    %5118 = vmatpush1.msra.mxu0 0.0
    %5119 = vmatprep.subr.mxu0 0.0
    %5120 = vmatpush1.msra.mxu0 0.0
    %5121 = vmatprep.subr.mxu0 0.0
    %5122 = vmatpush1.msra.mxu0 0.0
    %5123 = vmatprep.subr.mxu0 0.0
    %5124 = vmatpush1.msra.mxu0 0.0
    %5125 = vmatprep.subr.mxu0 %v5077
    %5126 = vmatpush1.msra.mxu0 %v5076
    %5127 = vmatprep.subr.mxu0 0.0
    %5128 = vmatpush2.msra.mxu0 0.0
    %5129 = vmatprep.subr.mxu0 0.0
    %5130 = vmatpush2.msra.mxu0 0.0
    %5131 = vmatprep.subr.mxu0 0.0
    %5132 = vmatpush2.msra.mxu0 0.0
    %5133 = vmatprep.subr.mxu0 0.0
    %5134 = vmatpush2.msra.mxu0 0.0
    %5135 = vmatprep.subr.mxu0 0.0
    %5136 = vmatpush2.msra.mxu0 0.0
    %5137 = vmatprep.subr.mxu0 0.0
    %5138 = vmatpush2.msra.mxu0 0.0
    %5139 = vmatprep.subr.mxu0 0.0
    %5140 = vmatpush2.msra.mxu0 0.0
    %5141 = vmatprep.subr.mxu0 0.0
    %5142 = vmatpush2.msra.mxu0 0.0
    %5143 = vmatprep.subr.mxu0 0.0
    %5144 = vmatpush2.msra.mxu0 0.0
    %5145 = vmatprep.subr.mxu0 0.0
    %5146 = vmatpush2.msra.mxu0 0.0
    %5147 = vmatprep.subr.mxu0 0.0
    %5148 = vmatpush2.msra.mxu0 0.0
    %5149 = vmatprep.subr.mxu0 0.0
    %5150 = vmatpush2.msra.mxu0 0.0
    %5151 = vmatprep.subr.mxu0 0.0
    %5152 = vmatpush2.msra.mxu0 0.0
    %5153 = vmatprep.subr.mxu0 0.0
    %5154 = vmatpush2.msra.mxu0 0.0
    %5155 = vmatprep.subr.mxu0 0.0
    %5156 = vmatpush2.msra.mxu0 0.0
    %5157 = vmatprep.subr.mxu0 0.0
    %5158 = vmatpush2.msra.mxu0 0.0
    %5159 = vmatprep.mubr.f32.mxu0 0.0
    %5160 = vmatmul.mubr.f32.gmra.mxu0 %v5093
    %v5161 = vpop.f32.mrf.mxu0
    %v5162 = vadd.f32 0.0, %v5161
    %v5163 = vpop.f32.mrf.mxu0
    %v5164 = vadd.f32 0.0, %v5163
    %5165 = vdwg.mxu0
    %5166 = vmatprep.subr.mxu0 0.0
    %5167 = vmatpush1.msra.mxu0 0.0
    %5168 = vmatprep.subr.mxu0 0.0
    %5169 = vmatpush1.msra.mxu0 0.0
    %5170 = vmatprep.subr.mxu0 0.0
    %5171 = vmatpush1.msra.mxu0 0.0
    %5172 = vmatprep.subr.mxu0 0.0
    %5173 = vmatpush1.msra.mxu0 0.0
    %5174 = vmatprep.subr.mxu0 0.0
    %5175 = vmatpush1.msra.mxu0 0.0
    %5176 = vmatprep.subr.mxu0 0.0
    %5177 = vmatpush1.msra.mxu0 0.0
    %5178 = vmatprep.subr.mxu0 0.0
    %5179 = vmatpush1.msra.mxu0 0.0
    %5180 = vmatprep.subr.mxu0 0.0
    %5181 = vmatpush1.msra.mxu0 0.0
    %5182 = vmatprep.subr.mxu0 0.0
    %5183 = vmatpush1.msra.mxu0 0.0
    %5184 = vmatprep.subr.mxu0 0.0
    %5185 = vmatpush1.msra.mxu0 0.0
    %5186 = vmatprep.subr.mxu0 0.0
    %5187 = vmatpush1.msra.mxu0 0.0
    %5188 = vmatprep.subr.mxu0 0.0
    %5189 = vmatpush1.msra.mxu0 0.0
    %5190 = vmatprep.subr.mxu0 0.0
    %5191 = vmatpush1.msra.mxu0 0.0
    %5192 = vmatprep.subr.mxu0 0.0
    %5193 = vmatpush1.msra.mxu0 0.0
    %5194 = vmatprep.subr.mxu0 0.0
    %5195 = vmatpush1.msra.mxu0 0.0
    %5196 = vmatprep.subr.mxu0 %v5079
    %5197 = vmatpush1.msra.mxu0 %v5078
    %5198 = vmatprep.subr.mxu0 0.0
    %5199 = vmatpush2.msra.mxu0 0.0
    %5200 = vmatprep.subr.mxu0 0.0
    %5201 = vmatpush2.msra.mxu0 0.0
    %5202 = vmatprep.subr.mxu0 0.0
    %5203 = vmatpush2.msra.mxu0 0.0
    %5204 = vmatprep.subr.mxu0 0.0
    %5205 = vmatpush2.msra.mxu0 0.0
    %5206 = vmatprep.subr.mxu0 0.0
    %5207 = vmatpush2.msra.mxu0 0.0
    %5208 = vmatprep.subr.mxu0 0.0
    %5209 = vmatpush2.msra.mxu0 0.0
    %5210 = vmatprep.subr.mxu0 0.0
    %5211 = vmatpush2.msra.mxu0 0.0
    %5212 = vmatprep.subr.mxu0 0.0
    %5213 = vmatpush2.msra.mxu0 0.0
    %5214 = vmatprep.subr.mxu0 0.0
    %5215 = vmatpush2.msra.mxu0 0.0
    %5216 = vmatprep.subr.mxu0 0.0
    %5217 = vmatpush2.msra.mxu0 0.0
    %5218 = vmatprep.subr.mxu0 0.0
    %5219 = vmatpush2.msra.mxu0 0.0
    %5220 = vmatprep.subr.mxu0 0.0
    %5221 = vmatpush2.msra.mxu0 0.0
    %5222 = vmatprep.subr.mxu0 0.0
    %5223 = vmatpush2.msra.mxu0 0.0
    %5224 = vmatprep.subr.mxu0 0.0
    %5225 = vmatpush2.msra.mxu0 0.0
    %5226 = vmatprep.subr.mxu0 0.0
    %5227 = vmatpush2.msra.mxu0 0.0
    %5228 = vmatprep.subr.mxu0 0.0
    %5229 = vmatpush2.msra.mxu0 0.0
    %5230 = vmatprep.mubr.f32.mxu0 0.0
    %5231 = vmatmul.mubr.f32.gmra.mxu0 %v5093
    %v5232 = vpop.f32.mrf.mxu0
    %v5233 = vadd.f32 0.0, %v5232
    %v5234 = vpop.f32.mrf.mxu0
    %v5235 = vadd.f32 0.0, %v5234
    %5236 = vdwg.mxu0
    %5237 = vmatprep.subr.mxu0 0.0
    %5238 = vmatpush1.msra.mxu0 0.0
    %5239 = vmatprep.subr.mxu0 0.0
    %5240 = vmatpush1.msra.mxu0 0.0
    %5241 = vmatprep.subr.mxu0 0.0
    %5242 = vmatpush1.msra.mxu0 0.0
    %5243 = vmatprep.subr.mxu0 0.0
    %5244 = vmatpush1.msra.mxu0 0.0
    %5245 = vmatprep.subr.mxu0 0.0
    %5246 = vmatpush1.msra.mxu0 0.0
    %5247 = vmatprep.subr.mxu0 0.0
    %5248 = vmatpush1.msra.mxu0 0.0
    %5249 = vmatprep.subr.mxu0 0.0
    %5250 = vmatpush1.msra.mxu0 0.0
    %5251 = vmatprep.subr.mxu0 0.0
    %5252 = vmatpush1.msra.mxu0 0.0
    %5253 = vmatprep.subr.mxu0 0.0
    %5254 = vmatpush1.msra.mxu0 0.0
    %5255 = vmatprep.subr.mxu0 0.0
    %5256 = vmatpush1.msra.mxu0 0.0
    %5257 = vmatprep.subr.mxu0 0.0
    %5258 = vmatpush1.msra.mxu0 0.0
    %5259 = vmatprep.subr.mxu0 0.0
    %5260 = vmatpush1.msra.mxu0 0.0
    %5261 = vmatprep.subr.mxu0 0.0
    %5262 = vmatpush1.msra.mxu0 0.0
    %5263 = vmatprep.subr.mxu0 0.0
    %5264 = vmatpush1.msra.mxu0 0.0
    %5265 = vmatprep.subr.mxu0 0.0
    %5266 = vmatpush1.msra.mxu0 0.0
    %5267 = vmatprep.subr.mxu0 %v5081
    %5268 = vmatpush1.msra.mxu0 %v5080
    %5269 = vmatprep.subr.mxu0 0.0
    %5270 = vmatpush2.msra.mxu0 0.0
    %5271 = vmatprep.subr.mxu0 0.0
    %5272 = vmatpush2.msra.mxu0 0.0
    %5273 = vmatprep.subr.mxu0 0.0
    %5274 = vmatpush2.msra.mxu0 0.0
    %5275 = vmatprep.subr.mxu0 0.0
    %5276 = vmatpush2.msra.mxu0 0.0
    %5277 = vmatprep.subr.mxu0 0.0
    %5278 = vmatpush2.msra.mxu0 0.0
    %5279 = vmatprep.subr.mxu0 0.0
    %5280 = vmatpush2.msra.mxu0 0.0
    %5281 = vmatprep.subr.mxu0 0.0
    %5282 = vmatpush2.msra.mxu0 0.0
    %5283 = vmatprep.subr.mxu0 0.0
    %5284 = vmatpush2.msra.mxu0 0.0
    %5285 = vmatprep.subr.mxu0 0.0
    %5286 = vmatpush2.msra.mxu0 0.0
    %5287 = vmatprep.subr.mxu0 0.0
    %5288 = vmatpush2.msra.mxu0 0.0
    %5289 = vmatprep.subr.mxu0 0.0
    %5290 = vmatpush2.msra.mxu0 0.0
    %5291 = vmatprep.subr.mxu0 0.0
    %5292 = vmatpush2.msra.mxu0 0.0
    %5293 = vmatprep.subr.mxu0 0.0
    %5294 = vmatpush2.msra.mxu0 0.0
    %5295 = vmatprep.subr.mxu0 0.0
    %5296 = vmatpush2.msra.mxu0 0.0
    %5297 = vmatprep.subr.mxu0 0.0
    %5298 = vmatpush2.msra.mxu0 0.0
    %5299 = vmatprep.subr.mxu0 0.0
    %5300 = vmatpush2.msra.mxu0 0.0
    %5301 = vmatprep.mubr.f32.mxu0 0.0
    %5302 = vmatmul.mubr.f32.gmra.mxu0 %v5093
    %v5303 = vpop.f32.mrf.mxu0
    %v5304 = vadd.f32 0.0, %v5303
    %v5305 = vpop.f32.mrf.mxu0
    %v5306 = vadd.f32 0.0, %v5305
    %5307 = vdwg.mxu0
    %5308 = vmatprep.subr.mxu0 0.0
    %5309 = vmatpush1.msra.mxu0 0.0
    %5310 = vmatprep.subr.mxu0 0.0
    %5311 = vmatpush1.msra.mxu0 0.0
    %5312 = vmatprep.subr.mxu0 0.0
    %5313 = vmatpush1.msra.mxu0 0.0
    %5314 = vmatprep.subr.mxu0 0.0
    %5315 = vmatpush1.msra.mxu0 0.0
    %5316 = vmatprep.subr.mxu0 0.0
    %5317 = vmatpush1.msra.mxu0 0.0
    %5318 = vmatprep.subr.mxu0 0.0
    %5319 = vmatpush1.msra.mxu0 0.0
    %5320 = vmatprep.subr.mxu0 0.0
    %5321 = vmatpush1.msra.mxu0 0.0
    %5322 = vmatprep.subr.mxu0 0.0
    %5323 = vmatpush1.msra.mxu0 0.0
    %5324 = vmatprep.subr.mxu0 0.0
    %5325 = vmatpush1.msra.mxu0 0.0
    %5326 = vmatprep.subr.mxu0 0.0
    %5327 = vmatpush1.msra.mxu0 0.0
    %5328 = vmatprep.subr.mxu0 0.0
    %5329 = vmatpush1.msra.mxu0 0.0
    %5330 = vmatprep.subr.mxu0 0.0
    %5331 = vmatpush1.msra.mxu0 0.0
    %5332 = vmatprep.subr.mxu0 0.0
    %5333 = vmatpush1.msra.mxu0 0.0
    %5334 = vmatprep.subr.mxu0 0.0
    %5335 = vmatpush1.msra.mxu0 0.0
    %5336 = vmatprep.subr.mxu0 0.0
    %5337 = vmatpush1.msra.mxu0 0.0
    %5338 = vmatprep.subr.mxu0 %v5083
    %5339 = vmatpush1.msra.mxu0 %v5082
    %5340 = vmatprep.subr.mxu0 0.0
    %5341 = vmatpush2.msra.mxu0 0.0
    %5342 = vmatprep.subr.mxu0 0.0
    %5343 = vmatpush2.msra.mxu0 0.0
    %5344 = vmatprep.subr.mxu0 0.0
    %5345 = vmatpush2.msra.mxu0 0.0
    %5346 = vmatprep.subr.mxu0 0.0
    %5347 = vmatpush2.msra.mxu0 0.0
    %5348 = vmatprep.subr.mxu0 0.0
    %5349 = vmatpush2.msra.mxu0 0.0
    %5350 = vmatprep.subr.mxu0 0.0
    %5351 = vmatpush2.msra.mxu0 0.0
    %5352 = vmatprep.subr.mxu0 0.0
    %5353 = vmatpush2.msra.mxu0 0.0
    %5354 = vmatprep.subr.mxu0 0.0
    %5355 = vmatpush2.msra.mxu0 0.0
    %5356 = vmatprep.subr.mxu0 0.0
    %5357 = vmatpush2.msra.mxu0 0.0
    %5358 = vmatprep.subr.mxu0 0.0
    %5359 = vmatpush2.msra.mxu0 0.0
    %5360 = vmatprep.subr.mxu0 0.0
    %5361 = vmatpush2.msra.mxu0 0.0
    %5362 = vmatprep.subr.mxu0 0.0
    %5363 = vmatpush2.msra.mxu0 0.0
    %5364 = vmatprep.subr.mxu0 0.0
    %5365 = vmatpush2.msra.mxu0 0.0
    %5366 = vmatprep.subr.mxu0 0.0
    %5367 = vmatpush2.msra.mxu0 0.0
    %5368 = vmatprep.subr.mxu0 0.0
    %5369 = vmatpush2.msra.mxu0 0.0
    %5370 = vmatprep.subr.mxu0 0.0
    %5371 = vmatpush2.msra.mxu0 0.0
    %5372 = vmatprep.mubr.f32.mxu0 0.0
    %5373 = vmatmul.mubr.f32.gmra.mxu0 %v5093
    %v5374 = vpop.f32.mrf.mxu0
    %v5375 = vadd.f32 0.0, %v5374
    %v5376 = vpop.f32.mrf.mxu0
    %v5377 = vadd.f32 0.0, %v5376
    %5378 = vdwg.mxu0
    %v5379 = vadd.f32 %v5048, %v5162
    %v5380 = vadd.f32 %v5049, %v5164
    %v5381 = vadd.f32 %v5050, %v5233
    %v5382 = vadd.f32 %v5051, %v5235
    %v5383 = vadd.f32 %v5052, %v5304
    %v5384 = vadd.f32 %v5053, %v5306
    %v5385 = vadd.f32 %v5054, %v5375
    %v5386 = vadd.f32 %v5055, %v5377
    %v5387 = vld [vmem:[%s3 + $0x38] sm:$0xff]
    %5388 = vrot.lane.b32.xlu0 %v4708, 88
    %v5389 = vpop.permute.xlu0 %5388
    %5390 = vrot.lane.b32.xlu0 %v4709, 88
    %v5391 = vpop.permute.xlu0 %5390
    %5392 = vrot.lane.b32.xlu0 %v4710, 88
    %v5393 = vpop.permute.xlu0 %5392
    %5394 = vrot.lane.b32.xlu0 %v4711, 88
    %v5395 = vpop.permute.xlu0 %5394
    %5396 = vrot.lane.b32.xlu0 %v4712, 88
    %v5397 = vpop.permute.xlu0 %5396
    %5398 = vrot.lane.b32.xlu0 %v4713, 88
    %v5399 = vpop.permute.xlu0 %5398
    %5400 = vrot.lane.b32.xlu0 %v4714, 88
    %v5401 = vpop.permute.xlu0 %5400
    %5402 = vrot.lane.b32.xlu0 %v4715, 88
    %v5403 = vpop.permute.xlu0 %5402
    %5404 = vrot.lane.b32.xlu0 %v4716, 88
    %v5405 = vpop.permute.xlu0 %5404
    %vm5406 = vcmask 719872
    %v5407 = vsel %vm5406, %v5389, %v5391
    %v5408 = vsel %vm5406, %v5391, %v5393
    %v5409 = vsel %vm5406, %v5393, %v5395
    %v5410 = vsel %vm5406, %v5395, %v5397
    %v5411 = vsel %vm5406, %v5397, %v5399
    %v5412 = vsel %vm5406, %v5399, %v5401
    %v5413 = vsel %vm5406, %v5401, %v5403
    %v5414 = vsel %vm5406, %v5403, %v5405
    %v5424 = vsel %vm145, %v5387, 0
    %5426 = vmatprep.subr.mxu0 0.0
    %5427 = vmatpush1.msra.mxu0 0.0
    %5428 = vmatprep.subr.mxu0 0.0
    %5429 = vmatpush1.msra.mxu0 0.0
    %5430 = vmatprep.subr.mxu0 0.0
    %5431 = vmatpush1.msra.mxu0 0.0
    %5432 = vmatprep.subr.mxu0 0.0
    %5433 = vmatpush1.msra.mxu0 0.0
    %5434 = vmatprep.subr.mxu0 0.0
    %5435 = vmatpush1.msra.mxu0 0.0
    %5436 = vmatprep.subr.mxu0 0.0
    %5437 = vmatpush1.msra.mxu0 0.0
    %5438 = vmatprep.subr.mxu0 0.0
    %5439 = vmatpush1.msra.mxu0 0.0
    %5440 = vmatprep.subr.mxu0 0.0
    %5441 = vmatpush1.msra.mxu0 0.0
    %5442 = vmatprep.subr.mxu0 0.0
    %5443 = vmatpush1.msra.mxu0 0.0
    %5444 = vmatprep.subr.mxu0 0.0
    %5445 = vmatpush1.msra.mxu0 0.0
    %5446 = vmatprep.subr.mxu0 0.0
    %5447 = vmatpush1.msra.mxu0 0.0
    %5448 = vmatprep.subr.mxu0 0.0
    %5449 = vmatpush1.msra.mxu0 0.0
    %5450 = vmatprep.subr.mxu0 0.0
    %5451 = vmatpush1.msra.mxu0 0.0
    %5452 = vmatprep.subr.mxu0 0.0
    %5453 = vmatpush1.msra.mxu0 0.0
    %5454 = vmatprep.subr.mxu0 0.0
    %5455 = vmatpush1.msra.mxu0 0.0
    %5456 = vmatprep.subr.mxu0 %v5408
    %5457 = vmatpush1.msra.mxu0 %v5407
    %5458 = vmatprep.subr.mxu0 0.0
    %5459 = vmatpush2.msra.mxu0 0.0
    %5460 = vmatprep.subr.mxu0 0.0
    %5461 = vmatpush2.msra.mxu0 0.0
    %5462 = vmatprep.subr.mxu0 0.0
    %5463 = vmatpush2.msra.mxu0 0.0
    %5464 = vmatprep.subr.mxu0 0.0
    %5465 = vmatpush2.msra.mxu0 0.0
    %5466 = vmatprep.subr.mxu0 0.0
    %5467 = vmatpush2.msra.mxu0 0.0
    %5468 = vmatprep.subr.mxu0 0.0
    %5469 = vmatpush2.msra.mxu0 0.0
    %5470 = vmatprep.subr.mxu0 0.0
    %5471 = vmatpush2.msra.mxu0 0.0
    %5472 = vmatprep.subr.mxu0 0.0
    %5473 = vmatpush2.msra.mxu0 0.0
    %5474 = vmatprep.subr.mxu0 0.0
    %5475 = vmatpush2.msra.mxu0 0.0
    %5476 = vmatprep.subr.mxu0 0.0
    %5477 = vmatpush2.msra.mxu0 0.0
    %5478 = vmatprep.subr.mxu0 0.0
    %5479 = vmatpush2.msra.mxu0 0.0
    %5480 = vmatprep.subr.mxu0 0.0
    %5481 = vmatpush2.msra.mxu0 0.0
    %5482 = vmatprep.subr.mxu0 0.0
    %5483 = vmatpush2.msra.mxu0 0.0
    %5484 = vmatprep.subr.mxu0 0.0
    %5485 = vmatpush2.msra.mxu0 0.0
    %5486 = vmatprep.subr.mxu0 0.0
    %5487 = vmatpush2.msra.mxu0 0.0
    %5488 = vmatprep.subr.mxu0 0.0
    %5489 = vmatpush2.msra.mxu0 0.0
    %5490 = vmatprep.mubr.f32.mxu0 0.0
    %5491 = vmatmul.mubr.f32.gmra.mxu0 %v5424
    %v5492 = vpop.f32.mrf.mxu0
    %v5493 = vadd.f32 0.0, %v5492
    %v5494 = vpop.f32.mrf.mxu0
    %v5495 = vadd.f32 0.0, %v5494
    %5496 = vdwg.mxu0
    %5497 = vmatprep.subr.mxu0 0.0
    %5498 = vmatpush1.msra.mxu0 0.0
    %5499 = vmatprep.subr.mxu0 0.0
    %5500 = vmatpush1.msra.mxu0 0.0
    %5501 = vmatprep.subr.mxu0 0.0
    %5502 = vmatpush1.msra.mxu0 0.0
    %5503 = vmatprep.subr.mxu0 0.0
    %5504 = vmatpush1.msra.mxu0 0.0
    %5505 = vmatprep.subr.mxu0 0.0
    %5506 = vmatpush1.msra.mxu0 0.0
    %5507 = vmatprep.subr.mxu0 0.0
    %5508 = vmatpush1.msra.mxu0 0.0
    %5509 = vmatprep.subr.mxu0 0.0
    %5510 = vmatpush1.msra.mxu0 0.0
    %5511 = vmatprep.subr.mxu0 0.0
    %5512 = vmatpush1.msra.mxu0 0.0
    %5513 = vmatprep.subr.mxu0 0.0
    %5514 = vmatpush1.msra.mxu0 0.0
    %5515 = vmatprep.subr.mxu0 0.0
    %5516 = vmatpush1.msra.mxu0 0.0
    %5517 = vmatprep.subr.mxu0 0.0
    %5518 = vmatpush1.msra.mxu0 0.0
    %5519 = vmatprep.subr.mxu0 0.0
    %5520 = vmatpush1.msra.mxu0 0.0
    %5521 = vmatprep.subr.mxu0 0.0
    %5522 = vmatpush1.msra.mxu0 0.0
    %5523 = vmatprep.subr.mxu0 0.0
    %5524 = vmatpush1.msra.mxu0 0.0
    %5525 = vmatprep.subr.mxu0 0.0
    %5526 = vmatpush1.msra.mxu0 0.0
    %5527 = vmatprep.subr.mxu0 %v5410
    %5528 = vmatpush1.msra.mxu0 %v5409
    %5529 = vmatprep.subr.mxu0 0.0
    %5530 = vmatpush2.msra.mxu0 0.0
    %5531 = vmatprep.subr.mxu0 0.0
    %5532 = vmatpush2.msra.mxu0 0.0
    %5533 = vmatprep.subr.mxu0 0.0
    %5534 = vmatpush2.msra.mxu0 0.0
    %5535 = vmatprep.subr.mxu0 0.0
    %5536 = vmatpush2.msra.mxu0 0.0
    %5537 = vmatprep.subr.mxu0 0.0
    %5538 = vmatpush2.msra.mxu0 0.0
    %5539 = vmatprep.subr.mxu0 0.0
    %5540 = vmatpush2.msra.mxu0 0.0
    %5541 = vmatprep.subr.mxu0 0.0
    %5542 = vmatpush2.msra.mxu0 0.0
    %5543 = vmatprep.subr.mxu0 0.0
    %5544 = vmatpush2.msra.mxu0 0.0
    %5545 = vmatprep.subr.mxu0 0.0
    %5546 = vmatpush2.msra.mxu0 0.0
    %5547 = vmatprep.subr.mxu0 0.0
    %5548 = vmatpush2.msra.mxu0 0.0
    %5549 = vmatprep.subr.mxu0 0.0
    %5550 = vmatpush2.msra.mxu0 0.0
    %5551 = vmatprep.subr.mxu0 0.0
    %5552 = vmatpush2.msra.mxu0 0.0
    %5553 = vmatprep.subr.mxu0 0.0
    %5554 = vmatpush2.msra.mxu0 0.0
    %5555 = vmatprep.subr.mxu0 0.0
    %5556 = vmatpush2.msra.mxu0 0.0
    %5557 = vmatprep.subr.mxu0 0.0
    %5558 = vmatpush2.msra.mxu0 0.0
    %5559 = vmatprep.subr.mxu0 0.0
    %5560 = vmatpush2.msra.mxu0 0.0
    %5561 = vmatprep.mubr.f32.mxu0 0.0
    %5562 = vmatmul.mubr.f32.gmra.mxu0 %v5424
    %v5563 = vpop.f32.mrf.mxu0
    %v5564 = vadd.f32 0.0, %v5563
    %v5565 = vpop.f32.mrf.mxu0
    %v5566 = vadd.f32 0.0, %v5565
    %5567 = vdwg.mxu0
    %5568 = vmatprep.subr.mxu0 0.0
    %5569 = vmatpush1.msra.mxu0 0.0
    %5570 = vmatprep.subr.mxu0 0.0
    %5571 = vmatpush1.msra.mxu0 0.0
    %5572 = vmatprep.subr.mxu0 0.0
    %5573 = vmatpush1.msra.mxu0 0.0
    %5574 = vmatprep.subr.mxu0 0.0
    %5575 = vmatpush1.msra.mxu0 0.0
    %5576 = vmatprep.subr.mxu0 0.0
    %5577 = vmatpush1.msra.mxu0 0.0
    %5578 = vmatprep.subr.mxu0 0.0
    %5579 = vmatpush1.msra.mxu0 0.0
    %5580 = vmatprep.subr.mxu0 0.0
    %5581 = vmatpush1.msra.mxu0 0.0
    %5582 = vmatprep.subr.mxu0 0.0
    %5583 = vmatpush1.msra.mxu0 0.0
    %5584 = vmatprep.subr.mxu0 0.0
    %5585 = vmatpush1.msra.mxu0 0.0
    %5586 = vmatprep.subr.mxu0 0.0
    %5587 = vmatpush1.msra.mxu0 0.0
    %5588 = vmatprep.subr.mxu0 0.0
    %5589 = vmatpush1.msra.mxu0 0.0
    %5590 = vmatprep.subr.mxu0 0.0
    %5591 = vmatpush1.msra.mxu0 0.0
    %5592 = vmatprep.subr.mxu0 0.0
    %5593 = vmatpush1.msra.mxu0 0.0
    %5594 = vmatprep.subr.mxu0 0.0
    %5595 = vmatpush1.msra.mxu0 0.0
    %5596 = vmatprep.subr.mxu0 0.0
    %5597 = vmatpush1.msra.mxu0 0.0
    %5598 = vmatprep.subr.mxu0 %v5412
    %5599 = vmatpush1.msra.mxu0 %v5411
    %5600 = vmatprep.subr.mxu0 0.0
    %5601 = vmatpush2.msra.mxu0 0.0
    %5602 = vmatprep.subr.mxu0 0.0
    %5603 = vmatpush2.msra.mxu0 0.0
    %5604 = vmatprep.subr.mxu0 0.0
    %5605 = vmatpush2.msra.mxu0 0.0
    %5606 = vmatprep.subr.mxu0 0.0
    %5607 = vmatpush2.msra.mxu0 0.0
    %5608 = vmatprep.subr.mxu0 0.0
    %5609 = vmatpush2.msra.mxu0 0.0
    %5610 = vmatprep.subr.mxu0 0.0
    %5611 = vmatpush2.msra.mxu0 0.0
    %5612 = vmatprep.subr.mxu0 0.0
    %5613 = vmatpush2.msra.mxu0 0.0
    %5614 = vmatprep.subr.mxu0 0.0
    %5615 = vmatpush2.msra.mxu0 0.0
    %5616 = vmatprep.subr.mxu0 0.0
    %5617 = vmatpush2.msra.mxu0 0.0
    %5618 = vmatprep.subr.mxu0 0.0
    %5619 = vmatpush2.msra.mxu0 0.0
    %5620 = vmatprep.subr.mxu0 0.0
    %5621 = vmatpush2.msra.mxu0 0.0
    %5622 = vmatprep.subr.mxu0 0.0
    %5623 = vmatpush2.msra.mxu0 0.0
    %5624 = vmatprep.subr.mxu0 0.0
    %5625 = vmatpush2.msra.mxu0 0.0
    %5626 = vmatprep.subr.mxu0 0.0
    %5627 = vmatpush2.msra.mxu0 0.0
    %5628 = vmatprep.subr.mxu0 0.0
    %5629 = vmatpush2.msra.mxu0 0.0
    %5630 = vmatprep.subr.mxu0 0.0
    %5631 = vmatpush2.msra.mxu0 0.0
    %5632 = vmatprep.mubr.f32.mxu0 0.0
    %5633 = vmatmul.mubr.f32.gmra.mxu0 %v5424
    %v5634 = vpop.f32.mrf.mxu0
    %v5635 = vadd.f32 0.0, %v5634
    %v5636 = vpop.f32.mrf.mxu0
    %v5637 = vadd.f32 0.0, %v5636
    %5638 = vdwg.mxu0
    %5639 = vmatprep.subr.mxu0 0.0
    %5640 = vmatpush1.msra.mxu0 0.0
    %5641 = vmatprep.subr.mxu0 0.0
    %5642 = vmatpush1.msra.mxu0 0.0
    %5643 = vmatprep.subr.mxu0 0.0
    %5644 = vmatpush1.msra.mxu0 0.0
    %5645 = vmatprep.subr.mxu0 0.0
    %5646 = vmatpush1.msra.mxu0 0.0
    %5647 = vmatprep.subr.mxu0 0.0
    %5648 = vmatpush1.msra.mxu0 0.0
    %5649 = vmatprep.subr.mxu0 0.0
    %5650 = vmatpush1.msra.mxu0 0.0
    %5651 = vmatprep.subr.mxu0 0.0
    %5652 = vmatpush1.msra.mxu0 0.0
    %5653 = vmatprep.subr.mxu0 0.0
    %5654 = vmatpush1.msra.mxu0 0.0
    %5655 = vmatprep.subr.mxu0 0.0
    %5656 = vmatpush1.msra.mxu0 0.0
    %5657 = vmatprep.subr.mxu0 0.0
    %5658 = vmatpush1.msra.mxu0 0.0
    %5659 = vmatprep.subr.mxu0 0.0
    %5660 = vmatpush1.msra.mxu0 0.0
    %5661 = vmatprep.subr.mxu0 0.0
    %5662 = vmatpush1.msra.mxu0 0.0
    %5663 = vmatprep.subr.mxu0 0.0
    %5664 = vmatpush1.msra.mxu0 0.0
    %5665 = vmatprep.subr.mxu0 0.0
    %5666 = vmatpush1.msra.mxu0 0.0
    %5667 = vmatprep.subr.mxu0 0.0
    %5668 = vmatpush1.msra.mxu0 0.0
    %5669 = vmatprep.subr.mxu0 %v5414
    %5670 = vmatpush1.msra.mxu0 %v5413
    %5671 = vmatprep.subr.mxu0 0.0
    %5672 = vmatpush2.msra.mxu0 0.0
    %5673 = vmatprep.subr.mxu0 0.0
    %5674 = vmatpush2.msra.mxu0 0.0
    %5675 = vmatprep.subr.mxu0 0.0
    %5676 = vmatpush2.msra.mxu0 0.0
    %5677 = vmatprep.subr.mxu0 0.0
    %5678 = vmatpush2.msra.mxu0 0.0
    %5679 = vmatprep.subr.mxu0 0.0
    %5680 = vmatpush2.msra.mxu0 0.0
    %5681 = vmatprep.subr.mxu0 0.0
    %5682 = vmatpush2.msra.mxu0 0.0
    %5683 = vmatprep.subr.mxu0 0.0
    %5684 = vmatpush2.msra.mxu0 0.0
    %5685 = vmatprep.subr.mxu0 0.0
    %5686 = vmatpush2.msra.mxu0 0.0
    %5687 = vmatprep.subr.mxu0 0.0
    %5688 = vmatpush2.msra.mxu0 0.0
    %5689 = vmatprep.subr.mxu0 0.0
    %5690 = vmatpush2.msra.mxu0 0.0
    %5691 = vmatprep.subr.mxu0 0.0
    %5692 = vmatpush2.msra.mxu0 0.0
    %5693 = vmatprep.subr.mxu0 0.0
    %5694 = vmatpush2.msra.mxu0 0.0
    %5695 = vmatprep.subr.mxu0 0.0
    %5696 = vmatpush2.msra.mxu0 0.0
    %5697 = vmatprep.subr.mxu0 0.0
    %5698 = vmatpush2.msra.mxu0 0.0
    %5699 = vmatprep.subr.mxu0 0.0
    %5700 = vmatpush2.msra.mxu0 0.0
    %5701 = vmatprep.subr.mxu0 0.0
    %5702 = vmatpush2.msra.mxu0 0.0
    %5703 = vmatprep.mubr.f32.mxu0 0.0
    %5704 = vmatmul.mubr.f32.gmra.mxu0 %v5424
    %v5705 = vpop.f32.mrf.mxu0
    %v5706 = vadd.f32 0.0, %v5705
    %v5707 = vpop.f32.mrf.mxu0
    %v5708 = vadd.f32 0.0, %v5707
    %5709 = vdwg.mxu0
    %v5710 = vadd.f32 %v5379, %v5493
    %v5711 = vadd.f32 %v5380, %v5495
    %v5712 = vadd.f32 %v5381, %v5564
    %v5713 = vadd.f32 %v5382, %v5566
    %v5714 = vadd.f32 %v5383, %v5635
    %v5715 = vadd.f32 %v5384, %v5637
    %v5716 = vadd.f32 %v5385, %v5706
    %v5717 = vadd.f32 %v5386, %v5708
    %v5718 = vld [vmem:[%s3 + $0x40] sm:$0xff]
    %5719 = vrot.lane.b32.xlu0 %v4708, 86
    %v5720 = vpop.permute.xlu0 %5719
    %5721 = vrot.lane.b32.xlu0 %v4709, 86
    %v5722 = vpop.permute.xlu0 %5721
    %5723 = vrot.lane.b32.xlu0 %v4710, 86
    %v5724 = vpop.permute.xlu0 %5723
    %5725 = vrot.lane.b32.xlu0 %v4711, 86
    %v5726 = vpop.permute.xlu0 %5725
    %5727 = vrot.lane.b32.xlu0 %v4712, 86
    %v5728 = vpop.permute.xlu0 %5727
    %5729 = vrot.lane.b32.xlu0 %v4713, 86
    %v5730 = vpop.permute.xlu0 %5729
    %5731 = vrot.lane.b32.xlu0 %v4714, 86
    %v5732 = vpop.permute.xlu0 %5731
    %5733 = vrot.lane.b32.xlu0 %v4715, 86
    %v5734 = vpop.permute.xlu0 %5733
    %5735 = vrot.lane.b32.xlu0 %v4716, 86
    %v5736 = vpop.permute.xlu0 %5735
    %vm5737 = vcmask 703488
    %v5738 = vsel %vm5737, %v5720, %v5722
    %v5739 = vsel %vm5737, %v5722, %v5724
    %v5740 = vsel %vm5737, %v5724, %v5726
    %v5741 = vsel %vm5737, %v5726, %v5728
    %v5742 = vsel %vm5737, %v5728, %v5730
    %v5743 = vsel %vm5737, %v5730, %v5732
    %v5744 = vsel %vm5737, %v5732, %v5734
    %v5745 = vsel %vm5737, %v5734, %v5736
    %v5755 = vsel %vm145, %v5718, 0
    %5757 = vmatprep.subr.mxu0 0.0
    %5758 = vmatpush1.msra.mxu0 0.0
    %5759 = vmatprep.subr.mxu0 0.0
    %5760 = vmatpush1.msra.mxu0 0.0
    %5761 = vmatprep.subr.mxu0 0.0
    %5762 = vmatpush1.msra.mxu0 0.0
    %5763 = vmatprep.subr.mxu0 0.0
    %5764 = vmatpush1.msra.mxu0 0.0
    %5765 = vmatprep.subr.mxu0 0.0
    %5766 = vmatpush1.msra.mxu0 0.0
    %5767 = vmatprep.subr.mxu0 0.0
    %5768 = vmatpush1.msra.mxu0 0.0
    %5769 = vmatprep.subr.mxu0 0.0
    %5770 = vmatpush1.msra.mxu0 0.0
    %5771 = vmatprep.subr.mxu0 0.0
    %5772 = vmatpush1.msra.mxu0 0.0
    %5773 = vmatprep.subr.mxu0 0.0
    %5774 = vmatpush1.msra.mxu0 0.0
    %5775 = vmatprep.subr.mxu0 0.0
    %5776 = vmatpush1.msra.mxu0 0.0
    %5777 = vmatprep.subr.mxu0 0.0
    %5778 = vmatpush1.msra.mxu0 0.0
    %5779 = vmatprep.subr.mxu0 0.0
    %5780 = vmatpush1.msra.mxu0 0.0
    %5781 = vmatprep.subr.mxu0 0.0
    %5782 = vmatpush1.msra.mxu0 0.0
    %5783 = vmatprep.subr.mxu0 0.0
    %5784 = vmatpush1.msra.mxu0 0.0
    %5785 = vmatprep.subr.mxu0 0.0
    %5786 = vmatpush1.msra.mxu0 0.0
    %5787 = vmatprep.subr.mxu0 %v5739
    %5788 = vmatpush1.msra.mxu0 %v5738
    %5789 = vmatprep.subr.mxu0 0.0
    %5790 = vmatpush2.msra.mxu0 0.0
    %5791 = vmatprep.subr.mxu0 0.0
    %5792 = vmatpush2.msra.mxu0 0.0
    %5793 = vmatprep.subr.mxu0 0.0
    %5794 = vmatpush2.msra.mxu0 0.0
    %5795 = vmatprep.subr.mxu0 0.0
    %5796 = vmatpush2.msra.mxu0 0.0
    %5797 = vmatprep.subr.mxu0 0.0
    %5798 = vmatpush2.msra.mxu0 0.0
    %5799 = vmatprep.subr.mxu0 0.0
    %5800 = vmatpush2.msra.mxu0 0.0
    %5801 = vmatprep.subr.mxu0 0.0
    %5802 = vmatpush2.msra.mxu0 0.0
    %5803 = vmatprep.subr.mxu0 0.0
    %5804 = vmatpush2.msra.mxu0 0.0
    %5805 = vmatprep.subr.mxu0 0.0
    %5806 = vmatpush2.msra.mxu0 0.0
    %5807 = vmatprep.subr.mxu0 0.0
    %5808 = vmatpush2.msra.mxu0 0.0
    %5809 = vmatprep.subr.mxu0 0.0
    %5810 = vmatpush2.msra.mxu0 0.0
    %5811 = vmatprep.subr.mxu0 0.0
    %5812 = vmatpush2.msra.mxu0 0.0
    %5813 = vmatprep.subr.mxu0 0.0
    %5814 = vmatpush2.msra.mxu0 0.0
    %5815 = vmatprep.subr.mxu0 0.0
    %5816 = vmatpush2.msra.mxu0 0.0
    %5817 = vmatprep.subr.mxu0 0.0
    %5818 = vmatpush2.msra.mxu0 0.0
    %5819 = vmatprep.subr.mxu0 0.0
    %5820 = vmatpush2.msra.mxu0 0.0
    %5821 = vmatprep.mubr.f32.mxu0 0.0
    %5822 = vmatmul.mubr.f32.gmra.mxu0 %v5755
    %v5823 = vpop.f32.mrf.mxu0
    %v5824 = vadd.f32 0.0, %v5823
    %v5825 = vpop.f32.mrf.mxu0
    %v5826 = vadd.f32 0.0, %v5825
    %5827 = vdwg.mxu0
    %5828 = vmatprep.subr.mxu0 0.0
    %5829 = vmatpush1.msra.mxu0 0.0
    %5830 = vmatprep.subr.mxu0 0.0
    %5831 = vmatpush1.msra.mxu0 0.0
    %5832 = vmatprep.subr.mxu0 0.0
    %5833 = vmatpush1.msra.mxu0 0.0
    %5834 = vmatprep.subr.mxu0 0.0
    %5835 = vmatpush1.msra.mxu0 0.0
    %5836 = vmatprep.subr.mxu0 0.0
    %5837 = vmatpush1.msra.mxu0 0.0
    %5838 = vmatprep.subr.mxu0 0.0
    %5839 = vmatpush1.msra.mxu0 0.0
    %5840 = vmatprep.subr.mxu0 0.0
    %5841 = vmatpush1.msra.mxu0 0.0
    %5842 = vmatprep.subr.mxu0 0.0
    %5843 = vmatpush1.msra.mxu0 0.0
    %5844 = vmatprep.subr.mxu0 0.0
    %5845 = vmatpush1.msra.mxu0 0.0
    %5846 = vmatprep.subr.mxu0 0.0
    %5847 = vmatpush1.msra.mxu0 0.0
    %5848 = vmatprep.subr.mxu0 0.0
    %5849 = vmatpush1.msra.mxu0 0.0
    %5850 = vmatprep.subr.mxu0 0.0
    %5851 = vmatpush1.msra.mxu0 0.0
    %5852 = vmatprep.subr.mxu0 0.0
    %5853 = vmatpush1.msra.mxu0 0.0
    %5854 = vmatprep.subr.mxu0 0.0
    %5855 = vmatpush1.msra.mxu0 0.0
    %5856 = vmatprep.subr.mxu0 0.0
    %5857 = vmatpush1.msra.mxu0 0.0
    %5858 = vmatprep.subr.mxu0 %v5741
    %5859 = vmatpush1.msra.mxu0 %v5740
    %5860 = vmatprep.subr.mxu0 0.0
    %5861 = vmatpush2.msra.mxu0 0.0
    %5862 = vmatprep.subr.mxu0 0.0
    %5863 = vmatpush2.msra.mxu0 0.0
    %5864 = vmatprep.subr.mxu0 0.0
    %5865 = vmatpush2.msra.mxu0 0.0
    %5866 = vmatprep.subr.mxu0 0.0
    %5867 = vmatpush2.msra.mxu0 0.0
    %5868 = vmatprep.subr.mxu0 0.0
    %5869 = vmatpush2.msra.mxu0 0.0
    %5870 = vmatprep.subr.mxu0 0.0
    %5871 = vmatpush2.msra.mxu0 0.0
    %5872 = vmatprep.subr.mxu0 0.0
    %5873 = vmatpush2.msra.mxu0 0.0
    %5874 = vmatprep.subr.mxu0 0.0
    %5875 = vmatpush2.msra.mxu0 0.0
    %5876 = vmatprep.subr.mxu0 0.0
    %5877 = vmatpush2.msra.mxu0 0.0
    %5878 = vmatprep.subr.mxu0 0.0
    %5879 = vmatpush2.msra.mxu0 0.0
    %5880 = vmatprep.subr.mxu0 0.0
    %5881 = vmatpush2.msra.mxu0 0.0
    %5882 = vmatprep.subr.mxu0 0.0
    %5883 = vmatpush2.msra.mxu0 0.0
    %5884 = vmatprep.subr.mxu0 0.0
    %5885 = vmatpush2.msra.mxu0 0.0
    %5886 = vmatprep.subr.mxu0 0.0
    %5887 = vmatpush2.msra.mxu0 0.0
    %5888 = vmatprep.subr.mxu0 0.0
    %5889 = vmatpush2.msra.mxu0 0.0
    %5890 = vmatprep.subr.mxu0 0.0
    %5891 = vmatpush2.msra.mxu0 0.0
    %5892 = vmatprep.mubr.f32.mxu0 0.0
    %5893 = vmatmul.mubr.f32.gmra.mxu0 %v5755
    %v5894 = vpop.f32.mrf.mxu0
    %v5895 = vadd.f32 0.0, %v5894
    %v5896 = vpop.f32.mrf.mxu0
    %v5897 = vadd.f32 0.0, %v5896
    %5898 = vdwg.mxu0
    %5899 = vmatprep.subr.mxu0 0.0
    %5900 = vmatpush1.msra.mxu0 0.0
    %5901 = vmatprep.subr.mxu0 0.0
    %5902 = vmatpush1.msra.mxu0 0.0
    %5903 = vmatprep.subr.mxu0 0.0
    %5904 = vmatpush1.msra.mxu0 0.0
    %5905 = vmatprep.subr.mxu0 0.0
    %5906 = vmatpush1.msra.mxu0 0.0
    %5907 = vmatprep.subr.mxu0 0.0
    %5908 = vmatpush1.msra.mxu0 0.0
    %5909 = vmatprep.subr.mxu0 0.0
    %5910 = vmatpush1.msra.mxu0 0.0
    %5911 = vmatprep.subr.mxu0 0.0
    %5912 = vmatpush1.msra.mxu0 0.0
    %5913 = vmatprep.subr.mxu0 0.0
    %5914 = vmatpush1.msra.mxu0 0.0
    %5915 = vmatprep.subr.mxu0 0.0
    %5916 = vmatpush1.msra.mxu0 0.0
    %5917 = vmatprep.subr.mxu0 0.0
    %5918 = vmatpush1.msra.mxu0 0.0
    %5919 = vmatprep.subr.mxu0 0.0
    %5920 = vmatpush1.msra.mxu0 0.0
    %5921 = vmatprep.subr.mxu0 0.0
    %5922 = vmatpush1.msra.mxu0 0.0
    %5923 = vmatprep.subr.mxu0 0.0
    %5924 = vmatpush1.msra.mxu0 0.0
    %5925 = vmatprep.subr.mxu0 0.0
    %5926 = vmatpush1.msra.mxu0 0.0
    %5927 = vmatprep.subr.mxu0 0.0
    %5928 = vmatpush1.msra.mxu0 0.0
    %5929 = vmatprep.subr.mxu0 %v5743
    %5930 = vmatpush1.msra.mxu0 %v5742
    %5931 = vmatprep.subr.mxu0 0.0
    %5932 = vmatpush2.msra.mxu0 0.0
    %5933 = vmatprep.subr.mxu0 0.0
    %5934 = vmatpush2.msra.mxu0 0.0
    %5935 = vmatprep.subr.mxu0 0.0
    %5936 = vmatpush2.msra.mxu0 0.0
    %5937 = vmatprep.subr.mxu0 0.0
    %5938 = vmatpush2.msra.mxu0 0.0
    %5939 = vmatprep.subr.mxu0 0.0
    %5940 = vmatpush2.msra.mxu0 0.0
    %5941 = vmatprep.subr.mxu0 0.0
    %5942 = vmatpush2.msra.mxu0 0.0
    %5943 = vmatprep.subr.mxu0 0.0
    %5944 = vmatpush2.msra.mxu0 0.0
    %5945 = vmatprep.subr.mxu0 0.0
    %5946 = vmatpush2.msra.mxu0 0.0
    %5947 = vmatprep.subr.mxu0 0.0
    %5948 = vmatpush2.msra.mxu0 0.0
    %5949 = vmatprep.subr.mxu0 0.0
    %5950 = vmatpush2.msra.mxu0 0.0
    %5951 = vmatprep.subr.mxu0 0.0
    %5952 = vmatpush2.msra.mxu0 0.0
    %5953 = vmatprep.subr.mxu0 0.0
    %5954 = vmatpush2.msra.mxu0 0.0
    %5955 = vmatprep.subr.mxu0 0.0
    %5956 = vmatpush2.msra.mxu0 0.0
    %5957 = vmatprep.subr.mxu0 0.0
    %5958 = vmatpush2.msra.mxu0 0.0
    %5959 = vmatprep.subr.mxu0 0.0
    %5960 = vmatpush2.msra.mxu0 0.0
    %5961 = vmatprep.subr.mxu0 0.0
    %5962 = vmatpush2.msra.mxu0 0.0
    %5963 = vmatprep.mubr.f32.mxu0 0.0
    %5964 = vmatmul.mubr.f32.gmra.mxu0 %v5755
    %v5965 = vpop.f32.mrf.mxu0
    %v5966 = vadd.f32 0.0, %v5965
    %v5967 = vpop.f32.mrf.mxu0
    %v5968 = vadd.f32 0.0, %v5967
    %5969 = vdwg.mxu0
    %5970 = vmatprep.subr.mxu0 0.0
    %5971 = vmatpush1.msra.mxu0 0.0
    %5972 = vmatprep.subr.mxu0 0.0
    %5973 = vmatpush1.msra.mxu0 0.0
    %5974 = vmatprep.subr.mxu0 0.0
    %5975 = vmatpush1.msra.mxu0 0.0
    %5976 = vmatprep.subr.mxu0 0.0
    %5977 = vmatpush1.msra.mxu0 0.0
    %5978 = vmatprep.subr.mxu0 0.0
    %5979 = vmatpush1.msra.mxu0 0.0
    %5980 = vmatprep.subr.mxu0 0.0
    %5981 = vmatpush1.msra.mxu0 0.0
    %5982 = vmatprep.subr.mxu0 0.0
    %5983 = vmatpush1.msra.mxu0 0.0
    %5984 = vmatprep.subr.mxu0 0.0
    %5985 = vmatpush1.msra.mxu0 0.0
    %5986 = vmatprep.subr.mxu0 0.0
    %5987 = vmatpush1.msra.mxu0 0.0
    %5988 = vmatprep.subr.mxu0 0.0
    %5989 = vmatpush1.msra.mxu0 0.0
    %5990 = vmatprep.subr.mxu0 0.0
    %5991 = vmatpush1.msra.mxu0 0.0
    %5992 = vmatprep.subr.mxu0 0.0
    %5993 = vmatpush1.msra.mxu0 0.0
    %5994 = vmatprep.subr.mxu0 0.0
    %5995 = vmatpush1.msra.mxu0 0.0
    %5996 = vmatprep.subr.mxu0 0.0
    %5997 = vmatpush1.msra.mxu0 0.0
    %5998 = vmatprep.subr.mxu0 0.0
    %5999 = vmatpush1.msra.mxu0 0.0
    %6000 = vmatprep.subr.mxu0 %v5745
    %6001 = vmatpush1.msra.mxu0 %v5744
    %6002 = vmatprep.subr.mxu0 0.0
    %6003 = vmatpush2.msra.mxu0 0.0
    %6004 = vmatprep.subr.mxu0 0.0
    %6005 = vmatpush2.msra.mxu0 0.0
    %6006 = vmatprep.subr.mxu0 0.0
    %6007 = vmatpush2.msra.mxu0 0.0
    %6008 = vmatprep.subr.mxu0 0.0
    %6009 = vmatpush2.msra.mxu0 0.0
    %6010 = vmatprep.subr.mxu0 0.0
    %6011 = vmatpush2.msra.mxu0 0.0
    %6012 = vmatprep.subr.mxu0 0.0
    %6013 = vmatpush2.msra.mxu0 0.0
    %6014 = vmatprep.subr.mxu0 0.0
    %6015 = vmatpush2.msra.mxu0 0.0
    %6016 = vmatprep.subr.mxu0 0.0
    %6017 = vmatpush2.msra.mxu0 0.0
    %6018 = vmatprep.subr.mxu0 0.0
    %6019 = vmatpush2.msra.mxu0 0.0
    %6020 = vmatprep.subr.mxu0 0.0
    %6021 = vmatpush2.msra.mxu0 0.0
    %6022 = vmatprep.subr.mxu0 0.0
    %6023 = vmatpush2.msra.mxu0 0.0
    %6024 = vmatprep.subr.mxu0 0.0
    %6025 = vmatpush2.msra.mxu0 0.0
    %6026 = vmatprep.subr.mxu0 0.0
    %6027 = vmatpush2.msra.mxu0 0.0
    %6028 = vmatprep.subr.mxu0 0.0
    %6029 = vmatpush2.msra.mxu0 0.0
    %6030 = vmatprep.subr.mxu0 0.0
    %6031 = vmatpush2.msra.mxu0 0.0
    %6032 = vmatprep.subr.mxu0 0.0
    %6033 = vmatpush2.msra.mxu0 0.0
    %6034 = vmatprep.mubr.f32.mxu0 0.0
    %6035 = vmatmul.mubr.f32.gmra.mxu0 %v5755
    %v6036 = vpop.f32.mrf.mxu0
    %v6037 = vadd.f32 0.0, %v6036
    %v6038 = vpop.f32.mrf.mxu0
    %v6039 = vadd.f32 0.0, %v6038
    %6040 = vdwg.mxu0
    %v6041 = vadd.f32 %v5710, %v5824
    %v6042 = vadd.f32 %v5711, %v5826
    %v6043 = vadd.f32 %v5712, %v5895
    %v6044 = vadd.f32 %v5713, %v5897
    %v6045 = vadd.f32 %v5714, %v5966
    %v6046 = vadd.f32 %v5715, %v5968
    %v6047 = vadd.f32 %v5716, %v6037
    %v6048 = vadd.f32 %v5717, %v6039
    %v6049 = vld [vmem:[%s4] sm:$0xff]
    %6051 = vset.pattern.permute.xlu0 0
    %6052 = vperm.xlu0 %6051, %v6049
    %v6053 = vpop.permute.xlu0 %6052
    %v6055 = vadd.f32 %v6041, %v6053
    %v6056 = vadd.f32 %v6042, %v6053
    %v6057 = vadd.f32 %v6043, %v6053
    %v6058 = vadd.f32 %v6044, %v6053
    %v6059 = vadd.f32 %v6045, %v6053
    %v6060 = vadd.f32 %v6046, %v6053
    %v6061 = vadd.f32 %v6047, %v6053
    %v6062 = vadd.f32 %v6048, %v6053
    %v6063 = vmul.f32 %v6055, %v53
    %v6064 = vmul.f32 %v6056, %v57
    %v6065 = vmul.f32 %v6057, %v61
    %v6066 = vmul.f32 %v6058, %v65
    %v6067 = vmul.f32 %v6059, %v69
    %v6068 = vmul.f32 %v6060, %v73
    %v6069 = vmul.f32 %v6061, %v77
    %v6070 = vmul.f32 %v6062, %v81
    %6071 = vst [vmem:[#allocation2 + $0x8] sm:$0xff] %v6063
    %6072 = vst [vmem:[#allocation2 + $0x10] sm:$0xff] %v6064
    %6073 = vst [vmem:[#allocation2 + $0x18] sm:$0xff] %v6065
    %6074 = vst [vmem:[#allocation2 + $0x20] sm:$0xff] %v6066
    %6075 = vst [vmem:[#allocation2 + $0x28] sm:$0xff] %v6067
    %6076 = vst [vmem:[#allocation2 + $0x30] sm:$0xff] %v6068
    %6077 = vst [vmem:[#allocation2 + $0x38] sm:$0xff] %v6069
    %6078 = vst [vmem:[#allocation2 + $0x40] sm:$0xff] %v6070
    %v6079 = vld [vmem:[%s5] sm:$0xff]
    %v6080 = vld [vmem:[#allocation2] sm:$0xff]
    %v6081 = vld [vmem:[#allocation2 + $0x8] sm:$0xff]
    %v6082 = vld [vmem:[#allocation2 + $0x10] sm:$0xff]
    %v6083 = vld [vmem:[#allocation2 + $0x18] sm:$0xff]
    %v6084 = vld [vmem:[#allocation2 + $0x20] sm:$0xff]
    %v6085 = vld [vmem:[#allocation2 + $0x28] sm:$0xff]
    %v6086 = vld [vmem:[#allocation2 + $0x30] sm:$0xff]
    %v6087 = vld [vmem:[#allocation2 + $0x38] sm:$0xff]
    %v6088 = vld [vmem:[#allocation2 + $0x40] sm:$0xff]
    %v6089 = vld [vmem:[%s5 + $0x8] sm:$0xff]
    %6099 = vrot.lane.b32.xlu0 %v6080, 20
    %v6100 = vpop.permute.xlu0 %6099
    %6101 = vrot.lane.b32.xlu0 %v6081, 20
    %v6102 = vpop.permute.xlu0 %6101
    %6103 = vrot.lane.b32.xlu0 %v6082, 20
    %v6104 = vpop.permute.xlu0 %6103
    %6105 = vrot.lane.b32.xlu0 %v6083, 20
    %v6106 = vpop.permute.xlu0 %6105
    %6107 = vrot.lane.b32.xlu0 %v6084, 20
    %v6108 = vpop.permute.xlu0 %6107
    %6109 = vrot.lane.b32.xlu0 %v6085, 20
    %v6110 = vpop.permute.xlu0 %6109
    %6111 = vrot.lane.b32.xlu0 %v6086, 20
    %v6112 = vpop.permute.xlu0 %6111
    %6113 = vrot.lane.b32.xlu0 %v6087, 20
    %v6114 = vpop.permute.xlu0 %6113
    %6115 = vrot.lane.b32.xlu0 %v6088, 20
    %v6116 = vpop.permute.xlu0 %6115
    %v6117 = vsel %vm128, %v6100, %v6102
    %v6118 = vsel %vm128, %v6102, %v6104
    %v6119 = vsel %vm128, %v6104, %v6106
    %v6120 = vsel %vm128, %v6106, %v6108
    %v6121 = vsel %vm128, %v6108, %v6110
    %v6122 = vsel %vm128, %v6110, %v6112
    %v6123 = vsel %vm128, %v6112, %v6114
    %v6124 = vsel %vm128, %v6114, %v6116
    %v6134 = vsel %vm145, %v6089, 0
    %6136 = vmatprep.subr.mxu0 0.0
    %6137 = vmatpush1.msra.mxu0 0.0
    %6138 = vmatprep.subr.mxu0 0.0
    %6139 = vmatpush1.msra.mxu0 0.0
    %6140 = vmatprep.subr.mxu0 0.0
    %6141 = vmatpush1.msra.mxu0 0.0
    %6142 = vmatprep.subr.mxu0 0.0
    %6143 = vmatpush1.msra.mxu0 0.0
    %6144 = vmatprep.subr.mxu0 0.0
    %6145 = vmatpush1.msra.mxu0 0.0
    %6146 = vmatprep.subr.mxu0 0.0
    %6147 = vmatpush1.msra.mxu0 0.0
    %6148 = vmatprep.subr.mxu0 0.0
    %6149 = vmatpush1.msra.mxu0 0.0
    %6150 = vmatprep.subr.mxu0 0.0
    %6151 = vmatpush1.msra.mxu0 0.0
    %6152 = vmatprep.subr.mxu0 0.0
    %6153 = vmatpush1.msra.mxu0 0.0
    %6154 = vmatprep.subr.mxu0 0.0
    %6155 = vmatpush1.msra.mxu0 0.0
    %6156 = vmatprep.subr.mxu0 0.0
    %6157 = vmatpush1.msra.mxu0 0.0
    %6158 = vmatprep.subr.mxu0 0.0
    %6159 = vmatpush1.msra.mxu0 0.0
    %6160 = vmatprep.subr.mxu0 0.0
    %6161 = vmatpush1.msra.mxu0 0.0
    %6162 = vmatprep.subr.mxu0 0.0
    %6163 = vmatpush1.msra.mxu0 0.0
    %6164 = vmatprep.subr.mxu0 0.0
    %6165 = vmatpush1.msra.mxu0 0.0
    %6166 = vmatprep.subr.mxu0 %v6118
    %6167 = vmatpush1.msra.mxu0 %v6117
    %6168 = vmatprep.subr.mxu0 0.0
    %6169 = vmatpush2.msra.mxu0 0.0
    %6170 = vmatprep.subr.mxu0 0.0
    %6171 = vmatpush2.msra.mxu0 0.0
    %6172 = vmatprep.subr.mxu0 0.0
    %6173 = vmatpush2.msra.mxu0 0.0
    %6174 = vmatprep.subr.mxu0 0.0
    %6175 = vmatpush2.msra.mxu0 0.0
    %6176 = vmatprep.subr.mxu0 0.0
    %6177 = vmatpush2.msra.mxu0 0.0
    %6178 = vmatprep.subr.mxu0 0.0
    %6179 = vmatpush2.msra.mxu0 0.0
    %6180 = vmatprep.subr.mxu0 0.0
    %6181 = vmatpush2.msra.mxu0 0.0
    %6182 = vmatprep.subr.mxu0 0.0
    %6183 = vmatpush2.msra.mxu0 0.0
    %6184 = vmatprep.subr.mxu0 0.0
    %6185 = vmatpush2.msra.mxu0 0.0
    %6186 = vmatprep.subr.mxu0 0.0
    %6187 = vmatpush2.msra.mxu0 0.0
    %6188 = vmatprep.subr.mxu0 0.0
    %6189 = vmatpush2.msra.mxu0 0.0
    %6190 = vmatprep.subr.mxu0 0.0
    %6191 = vmatpush2.msra.mxu0 0.0
    %6192 = vmatprep.subr.mxu0 0.0
    %6193 = vmatpush2.msra.mxu0 0.0
    %6194 = vmatprep.subr.mxu0 0.0
    %6195 = vmatpush2.msra.mxu0 0.0
    %6196 = vmatprep.subr.mxu0 0.0
    %6197 = vmatpush2.msra.mxu0 0.0
    %6198 = vmatprep.subr.mxu0 0.0
    %6199 = vmatpush2.msra.mxu0 0.0
    %6200 = vmatprep.mubr.f32.mxu0 0.0
    %6201 = vmatmul.mubr.f32.gmra.mxu0 %v6134
    %v6202 = vpop.f32.mrf.mxu0
    %v6203 = vadd.f32 0.0, %v6202
    %v6204 = vpop.f32.mrf.mxu0
    %v6205 = vadd.f32 0.0, %v6204
    %6206 = vdwg.mxu0
    %6207 = vmatprep.subr.mxu0 0.0
    %6208 = vmatpush1.msra.mxu0 0.0
    %6209 = vmatprep.subr.mxu0 0.0
    %6210 = vmatpush1.msra.mxu0 0.0
    %6211 = vmatprep.subr.mxu0 0.0
    %6212 = vmatpush1.msra.mxu0 0.0
    %6213 = vmatprep.subr.mxu0 0.0
    %6214 = vmatpush1.msra.mxu0 0.0
    %6215 = vmatprep.subr.mxu0 0.0
    %6216 = vmatpush1.msra.mxu0 0.0
    %6217 = vmatprep.subr.mxu0 0.0
    %6218 = vmatpush1.msra.mxu0 0.0
    %6219 = vmatprep.subr.mxu0 0.0
    %6220 = vmatpush1.msra.mxu0 0.0
    %6221 = vmatprep.subr.mxu0 0.0
    %6222 = vmatpush1.msra.mxu0 0.0
    %6223 = vmatprep.subr.mxu0 0.0
    %6224 = vmatpush1.msra.mxu0 0.0
    %6225 = vmatprep.subr.mxu0 0.0
    %6226 = vmatpush1.msra.mxu0 0.0
    %6227 = vmatprep.subr.mxu0 0.0
    %6228 = vmatpush1.msra.mxu0 0.0
    %6229 = vmatprep.subr.mxu0 0.0
    %6230 = vmatpush1.msra.mxu0 0.0
    %6231 = vmatprep.subr.mxu0 0.0
    %6232 = vmatpush1.msra.mxu0 0.0
    %6233 = vmatprep.subr.mxu0 0.0
    %6234 = vmatpush1.msra.mxu0 0.0
    %6235 = vmatprep.subr.mxu0 0.0
    %6236 = vmatpush1.msra.mxu0 0.0
    %6237 = vmatprep.subr.mxu0 %v6120
    %6238 = vmatpush1.msra.mxu0 %v6119
    %6239 = vmatprep.subr.mxu0 0.0
    %6240 = vmatpush2.msra.mxu0 0.0
    %6241 = vmatprep.subr.mxu0 0.0
    %6242 = vmatpush2.msra.mxu0 0.0
    %6243 = vmatprep.subr.mxu0 0.0
    %6244 = vmatpush2.msra.mxu0 0.0
    %6245 = vmatprep.subr.mxu0 0.0
    %6246 = vmatpush2.msra.mxu0 0.0
    %6247 = vmatprep.subr.mxu0 0.0
    %6248 = vmatpush2.msra.mxu0 0.0
    %6249 = vmatprep.subr.mxu0 0.0
    %6250 = vmatpush2.msra.mxu0 0.0
    %6251 = vmatprep.subr.mxu0 0.0
    %6252 = vmatpush2.msra.mxu0 0.0
    %6253 = vmatprep.subr.mxu0 0.0
    %6254 = vmatpush2.msra.mxu0 0.0
    %6255 = vmatprep.subr.mxu0 0.0
    %6256 = vmatpush2.msra.mxu0 0.0
    %6257 = vmatprep.subr.mxu0 0.0
    %6258 = vmatpush2.msra.mxu0 0.0
    %6259 = vmatprep.subr.mxu0 0.0
    %6260 = vmatpush2.msra.mxu0 0.0
    %6261 = vmatprep.subr.mxu0 0.0
    %6262 = vmatpush2.msra.mxu0 0.0
    %6263 = vmatprep.subr.mxu0 0.0
    %6264 = vmatpush2.msra.mxu0 0.0
    %6265 = vmatprep.subr.mxu0 0.0
    %6266 = vmatpush2.msra.mxu0 0.0
    %6267 = vmatprep.subr.mxu0 0.0
    %6268 = vmatpush2.msra.mxu0 0.0
    %6269 = vmatprep.subr.mxu0 0.0
    %6270 = vmatpush2.msra.mxu0 0.0
    %6271 = vmatprep.mubr.f32.mxu0 0.0
    %6272 = vmatmul.mubr.f32.gmra.mxu0 %v6134
    %v6273 = vpop.f32.mrf.mxu0
    %v6274 = vadd.f32 0.0, %v6273
    %v6275 = vpop.f32.mrf.mxu0
    %v6276 = vadd.f32 0.0, %v6275
    %6277 = vdwg.mxu0
    %6278 = vmatprep.subr.mxu0 0.0
    %6279 = vmatpush1.msra.mxu0 0.0
    %6280 = vmatprep.subr.mxu0 0.0
    %6281 = vmatpush1.msra.mxu0 0.0
    %6282 = vmatprep.subr.mxu0 0.0
    %6283 = vmatpush1.msra.mxu0 0.0
    %6284 = vmatprep.subr.mxu0 0.0
    %6285 = vmatpush1.msra.mxu0 0.0
    %6286 = vmatprep.subr.mxu0 0.0
    %6287 = vmatpush1.msra.mxu0 0.0
    %6288 = vmatprep.subr.mxu0 0.0
    %6289 = vmatpush1.msra.mxu0 0.0
    %6290 = vmatprep.subr.mxu0 0.0
    %6291 = vmatpush1.msra.mxu0 0.0
    %6292 = vmatprep.subr.mxu0 0.0
    %6293 = vmatpush1.msra.mxu0 0.0
    %6294 = vmatprep.subr.mxu0 0.0
    %6295 = vmatpush1.msra.mxu0 0.0
    %6296 = vmatprep.subr.mxu0 0.0
    %6297 = vmatpush1.msra.mxu0 0.0
    %6298 = vmatprep.subr.mxu0 0.0
    %6299 = vmatpush1.msra.mxu0 0.0
    %6300 = vmatprep.subr.mxu0 0.0
    %6301 = vmatpush1.msra.mxu0 0.0
    %6302 = vmatprep.subr.mxu0 0.0
    %6303 = vmatpush1.msra.mxu0 0.0
    %6304 = vmatprep.subr.mxu0 0.0
    %6305 = vmatpush1.msra.mxu0 0.0
    %6306 = vmatprep.subr.mxu0 0.0
    %6307 = vmatpush1.msra.mxu0 0.0
    %6308 = vmatprep.subr.mxu0 %v6122
    %6309 = vmatpush1.msra.mxu0 %v6121
    %6310 = vmatprep.subr.mxu0 0.0
    %6311 = vmatpush2.msra.mxu0 0.0
    %6312 = vmatprep.subr.mxu0 0.0
    %6313 = vmatpush2.msra.mxu0 0.0
    %6314 = vmatprep.subr.mxu0 0.0
    %6315 = vmatpush2.msra.mxu0 0.0
    %6316 = vmatprep.subr.mxu0 0.0
    %6317 = vmatpush2.msra.mxu0 0.0
    %6318 = vmatprep.subr.mxu0 0.0
    %6319 = vmatpush2.msra.mxu0 0.0
    %6320 = vmatprep.subr.mxu0 0.0
    %6321 = vmatpush2.msra.mxu0 0.0
    %6322 = vmatprep.subr.mxu0 0.0
    %6323 = vmatpush2.msra.mxu0 0.0
    %6324 = vmatprep.subr.mxu0 0.0
    %6325 = vmatpush2.msra.mxu0 0.0
    %6326 = vmatprep.subr.mxu0 0.0
    %6327 = vmatpush2.msra.mxu0 0.0
    %6328 = vmatprep.subr.mxu0 0.0
    %6329 = vmatpush2.msra.mxu0 0.0
    %6330 = vmatprep.subr.mxu0 0.0
    %6331 = vmatpush2.msra.mxu0 0.0
    %6332 = vmatprep.subr.mxu0 0.0
    %6333 = vmatpush2.msra.mxu0 0.0
    %6334 = vmatprep.subr.mxu0 0.0
    %6335 = vmatpush2.msra.mxu0 0.0
    %6336 = vmatprep.subr.mxu0 0.0
    %6337 = vmatpush2.msra.mxu0 0.0
    %6338 = vmatprep.subr.mxu0 0.0
    %6339 = vmatpush2.msra.mxu0 0.0
    %6340 = vmatprep.subr.mxu0 0.0
    %6341 = vmatpush2.msra.mxu0 0.0
    %6342 = vmatprep.mubr.f32.mxu0 0.0
    %6343 = vmatmul.mubr.f32.gmra.mxu0 %v6134
    %v6344 = vpop.f32.mrf.mxu0
    %v6345 = vadd.f32 0.0, %v6344
    %v6346 = vpop.f32.mrf.mxu0
    %v6347 = vadd.f32 0.0, %v6346
    %6348 = vdwg.mxu0
    %6349 = vmatprep.subr.mxu0 0.0
    %6350 = vmatpush1.msra.mxu0 0.0
    %6351 = vmatprep.subr.mxu0 0.0
    %6352 = vmatpush1.msra.mxu0 0.0
    %6353 = vmatprep.subr.mxu0 0.0
    %6354 = vmatpush1.msra.mxu0 0.0
    %6355 = vmatprep.subr.mxu0 0.0
    %6356 = vmatpush1.msra.mxu0 0.0
    %6357 = vmatprep.subr.mxu0 0.0
    %6358 = vmatpush1.msra.mxu0 0.0
    %6359 = vmatprep.subr.mxu0 0.0
    %6360 = vmatpush1.msra.mxu0 0.0
    %6361 = vmatprep.subr.mxu0 0.0
    %6362 = vmatpush1.msra.mxu0 0.0
    %6363 = vmatprep.subr.mxu0 0.0
    %6364 = vmatpush1.msra.mxu0 0.0
    %6365 = vmatprep.subr.mxu0 0.0
    %6366 = vmatpush1.msra.mxu0 0.0
    %6367 = vmatprep.subr.mxu0 0.0
    %6368 = vmatpush1.msra.mxu0 0.0
    %6369 = vmatprep.subr.mxu0 0.0
    %6370 = vmatpush1.msra.mxu0 0.0
    %6371 = vmatprep.subr.mxu0 0.0
    %6372 = vmatpush1.msra.mxu0 0.0
    %6373 = vmatprep.subr.mxu0 0.0
    %6374 = vmatpush1.msra.mxu0 0.0
    %6375 = vmatprep.subr.mxu0 0.0
    %6376 = vmatpush1.msra.mxu0 0.0
    %6377 = vmatprep.subr.mxu0 0.0
    %6378 = vmatpush1.msra.mxu0 0.0
    %6379 = vmatprep.subr.mxu0 %v6124
    %6380 = vmatpush1.msra.mxu0 %v6123
    %6381 = vmatprep.subr.mxu0 0.0
    %6382 = vmatpush2.msra.mxu0 0.0
    %6383 = vmatprep.subr.mxu0 0.0
    %6384 = vmatpush2.msra.mxu0 0.0
    %6385 = vmatprep.subr.mxu0 0.0
    %6386 = vmatpush2.msra.mxu0 0.0
    %6387 = vmatprep.subr.mxu0 0.0
    %6388 = vmatpush2.msra.mxu0 0.0
    %6389 = vmatprep.subr.mxu0 0.0
    %6390 = vmatpush2.msra.mxu0 0.0
    %6391 = vmatprep.subr.mxu0 0.0
    %6392 = vmatpush2.msra.mxu0 0.0
    %6393 = vmatprep.subr.mxu0 0.0
    %6394 = vmatpush2.msra.mxu0 0.0
    %6395 = vmatprep.subr.mxu0 0.0
    %6396 = vmatpush2.msra.mxu0 0.0
    %6397 = vmatprep.subr.mxu0 0.0
    %6398 = vmatpush2.msra.mxu0 0.0
    %6399 = vmatprep.subr.mxu0 0.0
    %6400 = vmatpush2.msra.mxu0 0.0
    %6401 = vmatprep.subr.mxu0 0.0
    %6402 = vmatpush2.msra.mxu0 0.0
    %6403 = vmatprep.subr.mxu0 0.0
    %6404 = vmatpush2.msra.mxu0 0.0
    %6405 = vmatprep.subr.mxu0 0.0
    %6406 = vmatpush2.msra.mxu0 0.0
    %6407 = vmatprep.subr.mxu0 0.0
    %6408 = vmatpush2.msra.mxu0 0.0
    %6409 = vmatprep.subr.mxu0 0.0
    %6410 = vmatpush2.msra.mxu0 0.0
    %6411 = vmatprep.subr.mxu0 0.0
    %6412 = vmatpush2.msra.mxu0 0.0
    %6413 = vmatprep.mubr.f32.mxu0 0.0
    %6414 = vmatmul.mubr.f32.gmra.mxu0 %v6134
    %v6415 = vpop.f32.mrf.mxu0
    %v6416 = vadd.f32 0.0, %v6415
    %v6417 = vpop.f32.mrf.mxu0
    %v6418 = vadd.f32 0.0, %v6417
    %6419 = vdwg.mxu0
    %6420 = vrot.lane.b32.xlu0 %v6080, 21
    %v6421 = vpop.permute.xlu0 %6420
    %6422 = vrot.lane.b32.xlu0 %v6081, 21
    %v6423 = vpop.permute.xlu0 %6422
    %6424 = vrot.lane.b32.xlu0 %v6082, 21
    %v6425 = vpop.permute.xlu0 %6424
    %6426 = vrot.lane.b32.xlu0 %v6083, 21
    %v6427 = vpop.permute.xlu0 %6426
    %6428 = vrot.lane.b32.xlu0 %v6084, 21
    %v6429 = vpop.permute.xlu0 %6428
    %6430 = vrot.lane.b32.xlu0 %v6085, 21
    %v6431 = vpop.permute.xlu0 %6430
    %6432 = vrot.lane.b32.xlu0 %v6086, 21
    %v6433 = vpop.permute.xlu0 %6432
    %6434 = vrot.lane.b32.xlu0 %v6087, 21
    %v6435 = vpop.permute.xlu0 %6434
    %6436 = vrot.lane.b32.xlu0 %v6088, 21
    %v6437 = vpop.permute.xlu0 %6436
    %v6438 = vsel %vm451, %v6421, %v6423
    %v6439 = vsel %vm451, %v6423, %v6425
    %v6440 = vsel %vm451, %v6425, %v6427
    %v6441 = vsel %vm451, %v6427, %v6429
    %v6442 = vsel %vm451, %v6429, %v6431
    %v6443 = vsel %vm451, %v6431, %v6433
    %v6444 = vsel %vm451, %v6433, %v6435
    %v6445 = vsel %vm451, %v6435, %v6437
    %v6455 = vsel %vm145, %v6079, 0
    %6457 = vmatprep.subr.mxu0 0.0
    %6458 = vmatpush1.msra.mxu0 0.0
    %6459 = vmatprep.subr.mxu0 0.0
    %6460 = vmatpush1.msra.mxu0 0.0
    %6461 = vmatprep.subr.mxu0 0.0
    %6462 = vmatpush1.msra.mxu0 0.0
    %6463 = vmatprep.subr.mxu0 0.0
    %6464 = vmatpush1.msra.mxu0 0.0
    %6465 = vmatprep.subr.mxu0 0.0
    %6466 = vmatpush1.msra.mxu0 0.0
    %6467 = vmatprep.subr.mxu0 0.0
    %6468 = vmatpush1.msra.mxu0 0.0
    %6469 = vmatprep.subr.mxu0 0.0
    %6470 = vmatpush1.msra.mxu0 0.0
    %6471 = vmatprep.subr.mxu0 0.0
    %6472 = vmatpush1.msra.mxu0 0.0
    %6473 = vmatprep.subr.mxu0 0.0
    %6474 = vmatpush1.msra.mxu0 0.0
    %6475 = vmatprep.subr.mxu0 0.0
    %6476 = vmatpush1.msra.mxu0 0.0
    %6477 = vmatprep.subr.mxu0 0.0
    %6478 = vmatpush1.msra.mxu0 0.0
    %6479 = vmatprep.subr.mxu0 0.0
    %6480 = vmatpush1.msra.mxu0 0.0
    %6481 = vmatprep.subr.mxu0 0.0
    %6482 = vmatpush1.msra.mxu0 0.0
    %6483 = vmatprep.subr.mxu0 0.0
    %6484 = vmatpush1.msra.mxu0 0.0
    %6485 = vmatprep.subr.mxu0 0.0
    %6486 = vmatpush1.msra.mxu0 0.0
    %6487 = vmatprep.subr.mxu0 %v6439
    %6488 = vmatpush1.msra.mxu0 %v6438
    %6489 = vmatprep.subr.mxu0 0.0
    %6490 = vmatpush2.msra.mxu0 0.0
    %6491 = vmatprep.subr.mxu0 0.0
    %6492 = vmatpush2.msra.mxu0 0.0
    %6493 = vmatprep.subr.mxu0 0.0
    %6494 = vmatpush2.msra.mxu0 0.0
    %6495 = vmatprep.subr.mxu0 0.0
    %6496 = vmatpush2.msra.mxu0 0.0
    %6497 = vmatprep.subr.mxu0 0.0
    %6498 = vmatpush2.msra.mxu0 0.0
    %6499 = vmatprep.subr.mxu0 0.0
    %6500 = vmatpush2.msra.mxu0 0.0
    %6501 = vmatprep.subr.mxu0 0.0
    %6502 = vmatpush2.msra.mxu0 0.0
    %6503 = vmatprep.subr.mxu0 0.0
    %6504 = vmatpush2.msra.mxu0 0.0
    %6505 = vmatprep.subr.mxu0 0.0
    %6506 = vmatpush2.msra.mxu0 0.0
    %6507 = vmatprep.subr.mxu0 0.0
    %6508 = vmatpush2.msra.mxu0 0.0
    %6509 = vmatprep.subr.mxu0 0.0
    %6510 = vmatpush2.msra.mxu0 0.0
    %6511 = vmatprep.subr.mxu0 0.0
    %6512 = vmatpush2.msra.mxu0 0.0
    %6513 = vmatprep.subr.mxu0 0.0
    %6514 = vmatpush2.msra.mxu0 0.0
    %6515 = vmatprep.subr.mxu0 0.0
    %6516 = vmatpush2.msra.mxu0 0.0
    %6517 = vmatprep.subr.mxu0 0.0
    %6518 = vmatpush2.msra.mxu0 0.0
    %6519 = vmatprep.subr.mxu0 0.0
    %6520 = vmatpush2.msra.mxu0 0.0
    %6521 = vmatprep.mubr.f32.mxu0 0.0
    %6522 = vmatmul.mubr.f32.gmra.mxu0 %v6455
    %v6523 = vpop.f32.mrf.mxu0
    %v6524 = vadd.f32 %v6203, %v6523
    %v6525 = vpop.f32.mrf.mxu0
    %v6526 = vadd.f32 %v6205, %v6525
    %6527 = vdwg.mxu0
    %6528 = vmatprep.subr.mxu0 0.0
    %6529 = vmatpush1.msra.mxu0 0.0
    %6530 = vmatprep.subr.mxu0 0.0
    %6531 = vmatpush1.msra.mxu0 0.0
    %6532 = vmatprep.subr.mxu0 0.0
    %6533 = vmatpush1.msra.mxu0 0.0
    %6534 = vmatprep.subr.mxu0 0.0
    %6535 = vmatpush1.msra.mxu0 0.0
    %6536 = vmatprep.subr.mxu0 0.0
    %6537 = vmatpush1.msra.mxu0 0.0
    %6538 = vmatprep.subr.mxu0 0.0
    %6539 = vmatpush1.msra.mxu0 0.0
    %6540 = vmatprep.subr.mxu0 0.0
    %6541 = vmatpush1.msra.mxu0 0.0
    %6542 = vmatprep.subr.mxu0 0.0
    %6543 = vmatpush1.msra.mxu0 0.0
    %6544 = vmatprep.subr.mxu0 0.0
    %6545 = vmatpush1.msra.mxu0 0.0
    %6546 = vmatprep.subr.mxu0 0.0
    %6547 = vmatpush1.msra.mxu0 0.0
    %6548 = vmatprep.subr.mxu0 0.0
    %6549 = vmatpush1.msra.mxu0 0.0
    %6550 = vmatprep.subr.mxu0 0.0
    %6551 = vmatpush1.msra.mxu0 0.0
    %6552 = vmatprep.subr.mxu0 0.0
    %6553 = vmatpush1.msra.mxu0 0.0
    %6554 = vmatprep.subr.mxu0 0.0
    %6555 = vmatpush1.msra.mxu0 0.0
    %6556 = vmatprep.subr.mxu0 0.0
    %6557 = vmatpush1.msra.mxu0 0.0
    %6558 = vmatprep.subr.mxu0 %v6441
    %6559 = vmatpush1.msra.mxu0 %v6440
    %6560 = vmatprep.subr.mxu0 0.0
    %6561 = vmatpush2.msra.mxu0 0.0
    %6562 = vmatprep.subr.mxu0 0.0
    %6563 = vmatpush2.msra.mxu0 0.0
    %6564 = vmatprep.subr.mxu0 0.0
    %6565 = vmatpush2.msra.mxu0 0.0
    %6566 = vmatprep.subr.mxu0 0.0
    %6567 = vmatpush2.msra.mxu0 0.0
    %6568 = vmatprep.subr.mxu0 0.0
    %6569 = vmatpush2.msra.mxu0 0.0
    %6570 = vmatprep.subr.mxu0 0.0
    %6571 = vmatpush2.msra.mxu0 0.0
    %6572 = vmatprep.subr.mxu0 0.0
    %6573 = vmatpush2.msra.mxu0 0.0
    %6574 = vmatprep.subr.mxu0 0.0
    %6575 = vmatpush2.msra.mxu0 0.0
    %6576 = vmatprep.subr.mxu0 0.0
    %6577 = vmatpush2.msra.mxu0 0.0
    %6578 = vmatprep.subr.mxu0 0.0
    %6579 = vmatpush2.msra.mxu0 0.0
    %6580 = vmatprep.subr.mxu0 0.0
    %6581 = vmatpush2.msra.mxu0 0.0
    %6582 = vmatprep.subr.mxu0 0.0
    %6583 = vmatpush2.msra.mxu0 0.0
    %6584 = vmatprep.subr.mxu0 0.0
    %6585 = vmatpush2.msra.mxu0 0.0
    %6586 = vmatprep.subr.mxu0 0.0
    %6587 = vmatpush2.msra.mxu0 0.0
    %6588 = vmatprep.subr.mxu0 0.0
    %6589 = vmatpush2.msra.mxu0 0.0
    %6590 = vmatprep.subr.mxu0 0.0
    %6591 = vmatpush2.msra.mxu0 0.0
    %6592 = vmatprep.mubr.f32.mxu0 0.0
    %6593 = vmatmul.mubr.f32.gmra.mxu0 %v6455
    %v6594 = vpop.f32.mrf.mxu0
    %v6595 = vadd.f32 %v6274, %v6594
    %v6596 = vpop.f32.mrf.mxu0
    %v6597 = vadd.f32 %v6276, %v6596
    %6598 = vdwg.mxu0
    %6599 = vmatprep.subr.mxu0 0.0
    %6600 = vmatpush1.msra.mxu0 0.0
    %6601 = vmatprep.subr.mxu0 0.0
    %6602 = vmatpush1.msra.mxu0 0.0
    %6603 = vmatprep.subr.mxu0 0.0
    %6604 = vmatpush1.msra.mxu0 0.0
    %6605 = vmatprep.subr.mxu0 0.0
    %6606 = vmatpush1.msra.mxu0 0.0
    %6607 = vmatprep.subr.mxu0 0.0
    %6608 = vmatpush1.msra.mxu0 0.0
    %6609 = vmatprep.subr.mxu0 0.0
    %6610 = vmatpush1.msra.mxu0 0.0
    %6611 = vmatprep.subr.mxu0 0.0
    %6612 = vmatpush1.msra.mxu0 0.0
    %6613 = vmatprep.subr.mxu0 0.0
    %6614 = vmatpush1.msra.mxu0 0.0
    %6615 = vmatprep.subr.mxu0 0.0
    %6616 = vmatpush1.msra.mxu0 0.0
    %6617 = vmatprep.subr.mxu0 0.0
    %6618 = vmatpush1.msra.mxu0 0.0
    %6619 = vmatprep.subr.mxu0 0.0
    %6620 = vmatpush1.msra.mxu0 0.0
    %6621 = vmatprep.subr.mxu0 0.0
    %6622 = vmatpush1.msra.mxu0 0.0
    %6623 = vmatprep.subr.mxu0 0.0
    %6624 = vmatpush1.msra.mxu0 0.0
    %6625 = vmatprep.subr.mxu0 0.0
    %6626 = vmatpush1.msra.mxu0 0.0
    %6627 = vmatprep.subr.mxu0 0.0
    %6628 = vmatpush1.msra.mxu0 0.0
    %6629 = vmatprep.subr.mxu0 %v6443
    %6630 = vmatpush1.msra.mxu0 %v6442
    %6631 = vmatprep.subr.mxu0 0.0
    %6632 = vmatpush2.msra.mxu0 0.0
    %6633 = vmatprep.subr.mxu0 0.0
    %6634 = vmatpush2.msra.mxu0 0.0
    %6635 = vmatprep.subr.mxu0 0.0
    %6636 = vmatpush2.msra.mxu0 0.0
    %6637 = vmatprep.subr.mxu0 0.0
    %6638 = vmatpush2.msra.mxu0 0.0
    %6639 = vmatprep.subr.mxu0 0.0
    %6640 = vmatpush2.msra.mxu0 0.0
    %6641 = vmatprep.subr.mxu0 0.0
    %6642 = vmatpush2.msra.mxu0 0.0
    %6643 = vmatprep.subr.mxu0 0.0
    %6644 = vmatpush2.msra.mxu0 0.0
    %6645 = vmatprep.subr.mxu0 0.0
    %6646 = vmatpush2.msra.mxu0 0.0
    %6647 = vmatprep.subr.mxu0 0.0
    %6648 = vmatpush2.msra.mxu0 0.0
    %6649 = vmatprep.subr.mxu0 0.0
    %6650 = vmatpush2.msra.mxu0 0.0
    %6651 = vmatprep.subr.mxu0 0.0
    %6652 = vmatpush2.msra.mxu0 0.0
    %6653 = vmatprep.subr.mxu0 0.0
    %6654 = vmatpush2.msra.mxu0 0.0
    %6655 = vmatprep.subr.mxu0 0.0
    %6656 = vmatpush2.msra.mxu0 0.0
    %6657 = vmatprep.subr.mxu0 0.0
    %6658 = vmatpush2.msra.mxu0 0.0
    %6659 = vmatprep.subr.mxu0 0.0
    %6660 = vmatpush2.msra.mxu0 0.0
    %6661 = vmatprep.subr.mxu0 0.0
    %6662 = vmatpush2.msra.mxu0 0.0
    %6663 = vmatprep.mubr.f32.mxu0 0.0
    %6664 = vmatmul.mubr.f32.gmra.mxu0 %v6455
    %v6665 = vpop.f32.mrf.mxu0
    %v6666 = vadd.f32 %v6345, %v6665
    %v6667 = vpop.f32.mrf.mxu0
    %v6668 = vadd.f32 %v6347, %v6667
    %6669 = vdwg.mxu0
    %6670 = vmatprep.subr.mxu0 0.0
    %6671 = vmatpush1.msra.mxu0 0.0
    %6672 = vmatprep.subr.mxu0 0.0
    %6673 = vmatpush1.msra.mxu0 0.0
    %6674 = vmatprep.subr.mxu0 0.0
    %6675 = vmatpush1.msra.mxu0 0.0
    %6676 = vmatprep.subr.mxu0 0.0
    %6677 = vmatpush1.msra.mxu0 0.0
    %6678 = vmatprep.subr.mxu0 0.0
    %6679 = vmatpush1.msra.mxu0 0.0
    %6680 = vmatprep.subr.mxu0 0.0
    %6681 = vmatpush1.msra.mxu0 0.0
    %6682 = vmatprep.subr.mxu0 0.0
    %6683 = vmatpush1.msra.mxu0 0.0
    %6684 = vmatprep.subr.mxu0 0.0
    %6685 = vmatpush1.msra.mxu0 0.0
    %6686 = vmatprep.subr.mxu0 0.0
    %6687 = vmatpush1.msra.mxu0 0.0
    %6688 = vmatprep.subr.mxu0 0.0
    %6689 = vmatpush1.msra.mxu0 0.0
    %6690 = vmatprep.subr.mxu0 0.0
    %6691 = vmatpush1.msra.mxu0 0.0
    %6692 = vmatprep.subr.mxu0 0.0
    %6693 = vmatpush1.msra.mxu0 0.0
    %6694 = vmatprep.subr.mxu0 0.0
    %6695 = vmatpush1.msra.mxu0 0.0
    %6696 = vmatprep.subr.mxu0 0.0
    %6697 = vmatpush1.msra.mxu0 0.0
    %6698 = vmatprep.subr.mxu0 0.0
    %6699 = vmatpush1.msra.mxu0 0.0
    %6700 = vmatprep.subr.mxu0 %v6445
    %6701 = vmatpush1.msra.mxu0 %v6444
    %6702 = vmatprep.subr.mxu0 0.0
    %6703 = vmatpush2.msra.mxu0 0.0
    %6704 = vmatprep.subr.mxu0 0.0
    %6705 = vmatpush2.msra.mxu0 0.0
    %6706 = vmatprep.subr.mxu0 0.0
    %6707 = vmatpush2.msra.mxu0 0.0
    %6708 = vmatprep.subr.mxu0 0.0
    %6709 = vmatpush2.msra.mxu0 0.0
    %6710 = vmatprep.subr.mxu0 0.0
    %6711 = vmatpush2.msra.mxu0 0.0
    %6712 = vmatprep.subr.mxu0 0.0
    %6713 = vmatpush2.msra.mxu0 0.0
    %6714 = vmatprep.subr.mxu0 0.0
    %6715 = vmatpush2.msra.mxu0 0.0
    %6716 = vmatprep.subr.mxu0 0.0
    %6717 = vmatpush2.msra.mxu0 0.0
    %6718 = vmatprep.subr.mxu0 0.0
    %6719 = vmatpush2.msra.mxu0 0.0
    %6720 = vmatprep.subr.mxu0 0.0
    %6721 = vmatpush2.msra.mxu0 0.0
    %6722 = vmatprep.subr.mxu0 0.0
    %6723 = vmatpush2.msra.mxu0 0.0
    %6724 = vmatprep.subr.mxu0 0.0
    %6725 = vmatpush2.msra.mxu0 0.0
    %6726 = vmatprep.subr.mxu0 0.0
    %6727 = vmatpush2.msra.mxu0 0.0
    %6728 = vmatprep.subr.mxu0 0.0
    %6729 = vmatpush2.msra.mxu0 0.0
    %6730 = vmatprep.subr.mxu0 0.0
    %6731 = vmatpush2.msra.mxu0 0.0
    %6732 = vmatprep.subr.mxu0 0.0
    %6733 = vmatpush2.msra.mxu0 0.0
    %6734 = vmatprep.mubr.f32.mxu0 0.0
    %6735 = vmatmul.mubr.f32.gmra.mxu0 %v6455
    %v6736 = vpop.f32.mrf.mxu0
    %v6737 = vadd.f32 %v6416, %v6736
    %v6738 = vpop.f32.mrf.mxu0
    %v6739 = vadd.f32 %v6418, %v6738
    %6740 = vdwg.mxu0
    %v6741 = vld [vmem:[%s5 + $0x10] sm:$0xff]
    %6742 = vrot.lane.b32.xlu0 %v6080, 19
    %v6743 = vpop.permute.xlu0 %6742
    %6744 = vrot.lane.b32.xlu0 %v6081, 19
    %v6745 = vpop.permute.xlu0 %6744
    %6746 = vrot.lane.b32.xlu0 %v6082, 19
    %v6747 = vpop.permute.xlu0 %6746
    %6748 = vrot.lane.b32.xlu0 %v6083, 19
    %v6749 = vpop.permute.xlu0 %6748
    %6750 = vrot.lane.b32.xlu0 %v6084, 19
    %v6751 = vpop.permute.xlu0 %6750
    %6752 = vrot.lane.b32.xlu0 %v6085, 19
    %v6753 = vpop.permute.xlu0 %6752
    %6754 = vrot.lane.b32.xlu0 %v6086, 19
    %v6755 = vpop.permute.xlu0 %6754
    %6756 = vrot.lane.b32.xlu0 %v6087, 19
    %v6757 = vpop.permute.xlu0 %6756
    %6758 = vrot.lane.b32.xlu0 %v6088, 19
    %v6759 = vpop.permute.xlu0 %6758
    %v6760 = vsel %vm774, %v6743, %v6745
    %v6761 = vsel %vm774, %v6745, %v6747
    %v6762 = vsel %vm774, %v6747, %v6749
    %v6763 = vsel %vm774, %v6749, %v6751
    %v6764 = vsel %vm774, %v6751, %v6753
    %v6765 = vsel %vm774, %v6753, %v6755
    %v6766 = vsel %vm774, %v6755, %v6757
    %v6767 = vsel %vm774, %v6757, %v6759
    %v6777 = vsel %vm145, %v6741, 0
    %6779 = vmatprep.subr.mxu0 0.0
    %6780 = vmatpush1.msra.mxu0 0.0
    %6781 = vmatprep.subr.mxu0 0.0
    %6782 = vmatpush1.msra.mxu0 0.0
    %6783 = vmatprep.subr.mxu0 0.0
    %6784 = vmatpush1.msra.mxu0 0.0
    %6785 = vmatprep.subr.mxu0 0.0
    %6786 = vmatpush1.msra.mxu0 0.0
    %6787 = vmatprep.subr.mxu0 0.0
    %6788 = vmatpush1.msra.mxu0 0.0
    %6789 = vmatprep.subr.mxu0 0.0
    %6790 = vmatpush1.msra.mxu0 0.0
    %6791 = vmatprep.subr.mxu0 0.0
    %6792 = vmatpush1.msra.mxu0 0.0
    %6793 = vmatprep.subr.mxu0 0.0
    %6794 = vmatpush1.msra.mxu0 0.0
    %6795 = vmatprep.subr.mxu0 0.0
    %6796 = vmatpush1.msra.mxu0 0.0
    %6797 = vmatprep.subr.mxu0 0.0
    %6798 = vmatpush1.msra.mxu0 0.0
    %6799 = vmatprep.subr.mxu0 0.0
    %6800 = vmatpush1.msra.mxu0 0.0
    %6801 = vmatprep.subr.mxu0 0.0
    %6802 = vmatpush1.msra.mxu0 0.0
    %6803 = vmatprep.subr.mxu0 0.0
    %6804 = vmatpush1.msra.mxu0 0.0
    %6805 = vmatprep.subr.mxu0 0.0
    %6806 = vmatpush1.msra.mxu0 0.0
    %6807 = vmatprep.subr.mxu0 0.0
    %6808 = vmatpush1.msra.mxu0 0.0
    %6809 = vmatprep.subr.mxu0 %v6761
    %6810 = vmatpush1.msra.mxu0 %v6760
    %6811 = vmatprep.subr.mxu0 0.0
    %6812 = vmatpush2.msra.mxu0 0.0
    %6813 = vmatprep.subr.mxu0 0.0
    %6814 = vmatpush2.msra.mxu0 0.0
    %6815 = vmatprep.subr.mxu0 0.0
    %6816 = vmatpush2.msra.mxu0 0.0
    %6817 = vmatprep.subr.mxu0 0.0
    %6818 = vmatpush2.msra.mxu0 0.0
    %6819 = vmatprep.subr.mxu0 0.0
    %6820 = vmatpush2.msra.mxu0 0.0
    %6821 = vmatprep.subr.mxu0 0.0
    %6822 = vmatpush2.msra.mxu0 0.0
    %6823 = vmatprep.subr.mxu0 0.0
    %6824 = vmatpush2.msra.mxu0 0.0
    %6825 = vmatprep.subr.mxu0 0.0
    %6826 = vmatpush2.msra.mxu0 0.0
    %6827 = vmatprep.subr.mxu0 0.0
    %6828 = vmatpush2.msra.mxu0 0.0
    %6829 = vmatprep.subr.mxu0 0.0
    %6830 = vmatpush2.msra.mxu0 0.0
    %6831 = vmatprep.subr.mxu0 0.0
    %6832 = vmatpush2.msra.mxu0 0.0
    %6833 = vmatprep.subr.mxu0 0.0
    %6834 = vmatpush2.msra.mxu0 0.0
    %6835 = vmatprep.subr.mxu0 0.0
    %6836 = vmatpush2.msra.mxu0 0.0
    %6837 = vmatprep.subr.mxu0 0.0
    %6838 = vmatpush2.msra.mxu0 0.0
    %6839 = vmatprep.subr.mxu0 0.0
    %6840 = vmatpush2.msra.mxu0 0.0
    %6841 = vmatprep.subr.mxu0 0.0
    %6842 = vmatpush2.msra.mxu0 0.0
    %6843 = vmatprep.mubr.f32.mxu0 0.0
    %6844 = vmatmul.mubr.f32.gmra.mxu0 %v6777
    %v6845 = vpop.f32.mrf.mxu0
    %v6846 = vadd.f32 0.0, %v6845
    %v6847 = vpop.f32.mrf.mxu0
    %v6848 = vadd.f32 0.0, %v6847
    %6849 = vdwg.mxu0
    %6850 = vmatprep.subr.mxu0 0.0
    %6851 = vmatpush1.msra.mxu0 0.0
    %6852 = vmatprep.subr.mxu0 0.0
    %6853 = vmatpush1.msra.mxu0 0.0
    %6854 = vmatprep.subr.mxu0 0.0
    %6855 = vmatpush1.msra.mxu0 0.0
    %6856 = vmatprep.subr.mxu0 0.0
    %6857 = vmatpush1.msra.mxu0 0.0
    %6858 = vmatprep.subr.mxu0 0.0
    %6859 = vmatpush1.msra.mxu0 0.0
    %6860 = vmatprep.subr.mxu0 0.0
    %6861 = vmatpush1.msra.mxu0 0.0
    %6862 = vmatprep.subr.mxu0 0.0
    %6863 = vmatpush1.msra.mxu0 0.0
    %6864 = vmatprep.subr.mxu0 0.0
    %6865 = vmatpush1.msra.mxu0 0.0
    %6866 = vmatprep.subr.mxu0 0.0
    %6867 = vmatpush1.msra.mxu0 0.0
    %6868 = vmatprep.subr.mxu0 0.0
    %6869 = vmatpush1.msra.mxu0 0.0
    %6870 = vmatprep.subr.mxu0 0.0
    %6871 = vmatpush1.msra.mxu0 0.0
    %6872 = vmatprep.subr.mxu0 0.0
    %6873 = vmatpush1.msra.mxu0 0.0
    %6874 = vmatprep.subr.mxu0 0.0
    %6875 = vmatpush1.msra.mxu0 0.0
    %6876 = vmatprep.subr.mxu0 0.0
    %6877 = vmatpush1.msra.mxu0 0.0
    %6878 = vmatprep.subr.mxu0 0.0
    %6879 = vmatpush1.msra.mxu0 0.0
    %6880 = vmatprep.subr.mxu0 %v6763
    %6881 = vmatpush1.msra.mxu0 %v6762
    %6882 = vmatprep.subr.mxu0 0.0
    %6883 = vmatpush2.msra.mxu0 0.0
    %6884 = vmatprep.subr.mxu0 0.0
    %6885 = vmatpush2.msra.mxu0 0.0
    %6886 = vmatprep.subr.mxu0 0.0
    %6887 = vmatpush2.msra.mxu0 0.0
    %6888 = vmatprep.subr.mxu0 0.0
    %6889 = vmatpush2.msra.mxu0 0.0
    %6890 = vmatprep.subr.mxu0 0.0
    %6891 = vmatpush2.msra.mxu0 0.0
    %6892 = vmatprep.subr.mxu0 0.0
    %6893 = vmatpush2.msra.mxu0 0.0
    %6894 = vmatprep.subr.mxu0 0.0
    %6895 = vmatpush2.msra.mxu0 0.0
    %6896 = vmatprep.subr.mxu0 0.0
    %6897 = vmatpush2.msra.mxu0 0.0
    %6898 = vmatprep.subr.mxu0 0.0
    %6899 = vmatpush2.msra.mxu0 0.0
    %6900 = vmatprep.subr.mxu0 0.0
    %6901 = vmatpush2.msra.mxu0 0.0
    %6902 = vmatprep.subr.mxu0 0.0
    %6903 = vmatpush2.msra.mxu0 0.0
    %6904 = vmatprep.subr.mxu0 0.0
    %6905 = vmatpush2.msra.mxu0 0.0
    %6906 = vmatprep.subr.mxu0 0.0
    %6907 = vmatpush2.msra.mxu0 0.0
    %6908 = vmatprep.subr.mxu0 0.0
    %6909 = vmatpush2.msra.mxu0 0.0
    %6910 = vmatprep.subr.mxu0 0.0
    %6911 = vmatpush2.msra.mxu0 0.0
    %6912 = vmatprep.subr.mxu0 0.0
    %6913 = vmatpush2.msra.mxu0 0.0
    %6914 = vmatprep.mubr.f32.mxu0 0.0
    %6915 = vmatmul.mubr.f32.gmra.mxu0 %v6777
    %v6916 = vpop.f32.mrf.mxu0
    %v6917 = vadd.f32 0.0, %v6916
    %v6918 = vpop.f32.mrf.mxu0
    %v6919 = vadd.f32 0.0, %v6918
    %6920 = vdwg.mxu0
    %6921 = vmatprep.subr.mxu0 0.0
    %6922 = vmatpush1.msra.mxu0 0.0
    %6923 = vmatprep.subr.mxu0 0.0
    %6924 = vmatpush1.msra.mxu0 0.0
    %6925 = vmatprep.subr.mxu0 0.0
    %6926 = vmatpush1.msra.mxu0 0.0
    %6927 = vmatprep.subr.mxu0 0.0
    %6928 = vmatpush1.msra.mxu0 0.0
    %6929 = vmatprep.subr.mxu0 0.0
    %6930 = vmatpush1.msra.mxu0 0.0
    %6931 = vmatprep.subr.mxu0 0.0
    %6932 = vmatpush1.msra.mxu0 0.0
    %6933 = vmatprep.subr.mxu0 0.0
    %6934 = vmatpush1.msra.mxu0 0.0
    %6935 = vmatprep.subr.mxu0 0.0
    %6936 = vmatpush1.msra.mxu0 0.0
    %6937 = vmatprep.subr.mxu0 0.0
    %6938 = vmatpush1.msra.mxu0 0.0
    %6939 = vmatprep.subr.mxu0 0.0
    %6940 = vmatpush1.msra.mxu0 0.0
    %6941 = vmatprep.subr.mxu0 0.0
    %6942 = vmatpush1.msra.mxu0 0.0
    %6943 = vmatprep.subr.mxu0 0.0
    %6944 = vmatpush1.msra.mxu0 0.0
    %6945 = vmatprep.subr.mxu0 0.0
    %6946 = vmatpush1.msra.mxu0 0.0
    %6947 = vmatprep.subr.mxu0 0.0
    %6948 = vmatpush1.msra.mxu0 0.0
    %6949 = vmatprep.subr.mxu0 0.0
    %6950 = vmatpush1.msra.mxu0 0.0
    %6951 = vmatprep.subr.mxu0 %v6765
    %6952 = vmatpush1.msra.mxu0 %v6764
    %6953 = vmatprep.subr.mxu0 0.0
    %6954 = vmatpush2.msra.mxu0 0.0
    %6955 = vmatprep.subr.mxu0 0.0
    %6956 = vmatpush2.msra.mxu0 0.0
    %6957 = vmatprep.subr.mxu0 0.0
    %6958 = vmatpush2.msra.mxu0 0.0
    %6959 = vmatprep.subr.mxu0 0.0
    %6960 = vmatpush2.msra.mxu0 0.0
    %6961 = vmatprep.subr.mxu0 0.0
    %6962 = vmatpush2.msra.mxu0 0.0
    %6963 = vmatprep.subr.mxu0 0.0
    %6964 = vmatpush2.msra.mxu0 0.0
    %6965 = vmatprep.subr.mxu0 0.0
    %6966 = vmatpush2.msra.mxu0 0.0
    %6967 = vmatprep.subr.mxu0 0.0
    %6968 = vmatpush2.msra.mxu0 0.0
    %6969 = vmatprep.subr.mxu0 0.0
    %6970 = vmatpush2.msra.mxu0 0.0
    %6971 = vmatprep.subr.mxu0 0.0
    %6972 = vmatpush2.msra.mxu0 0.0
    %6973 = vmatprep.subr.mxu0 0.0
    %6974 = vmatpush2.msra.mxu0 0.0
    %6975 = vmatprep.subr.mxu0 0.0
    %6976 = vmatpush2.msra.mxu0 0.0
    %6977 = vmatprep.subr.mxu0 0.0
    %6978 = vmatpush2.msra.mxu0 0.0
    %6979 = vmatprep.subr.mxu0 0.0
    %6980 = vmatpush2.msra.mxu0 0.0
    %6981 = vmatprep.subr.mxu0 0.0
    %6982 = vmatpush2.msra.mxu0 0.0
    %6983 = vmatprep.subr.mxu0 0.0
    %6984 = vmatpush2.msra.mxu0 0.0
    %6985 = vmatprep.mubr.f32.mxu0 0.0
    %6986 = vmatmul.mubr.f32.gmra.mxu0 %v6777
    %v6987 = vpop.f32.mrf.mxu0
    %v6988 = vadd.f32 0.0, %v6987
    %v6989 = vpop.f32.mrf.mxu0
    %v6990 = vadd.f32 0.0, %v6989
    %6991 = vdwg.mxu0
    %6992 = vmatprep.subr.mxu0 0.0
    %6993 = vmatpush1.msra.mxu0 0.0
    %6994 = vmatprep.subr.mxu0 0.0
    %6995 = vmatpush1.msra.mxu0 0.0
    %6996 = vmatprep.subr.mxu0 0.0
    %6997 = vmatpush1.msra.mxu0 0.0
    %6998 = vmatprep.subr.mxu0 0.0
    %6999 = vmatpush1.msra.mxu0 0.0
    %7000 = vmatprep.subr.mxu0 0.0
    %7001 = vmatpush1.msra.mxu0 0.0
    %7002 = vmatprep.subr.mxu0 0.0
    %7003 = vmatpush1.msra.mxu0 0.0
    %7004 = vmatprep.subr.mxu0 0.0
    %7005 = vmatpush1.msra.mxu0 0.0
    %7006 = vmatprep.subr.mxu0 0.0
    %7007 = vmatpush1.msra.mxu0 0.0
    %7008 = vmatprep.subr.mxu0 0.0
    %7009 = vmatpush1.msra.mxu0 0.0
    %7010 = vmatprep.subr.mxu0 0.0
    %7011 = vmatpush1.msra.mxu0 0.0
    %7012 = vmatprep.subr.mxu0 0.0
    %7013 = vmatpush1.msra.mxu0 0.0
    %7014 = vmatprep.subr.mxu0 0.0
    %7015 = vmatpush1.msra.mxu0 0.0
    %7016 = vmatprep.subr.mxu0 0.0
    %7017 = vmatpush1.msra.mxu0 0.0
    %7018 = vmatprep.subr.mxu0 0.0
    %7019 = vmatpush1.msra.mxu0 0.0
    %7020 = vmatprep.subr.mxu0 0.0
    %7021 = vmatpush1.msra.mxu0 0.0
    %7022 = vmatprep.subr.mxu0 %v6767
    %7023 = vmatpush1.msra.mxu0 %v6766
    %7024 = vmatprep.subr.mxu0 0.0
    %7025 = vmatpush2.msra.mxu0 0.0
    %7026 = vmatprep.subr.mxu0 0.0
    %7027 = vmatpush2.msra.mxu0 0.0
    %7028 = vmatprep.subr.mxu0 0.0
    %7029 = vmatpush2.msra.mxu0 0.0
    %7030 = vmatprep.subr.mxu0 0.0
    %7031 = vmatpush2.msra.mxu0 0.0
    %7032 = vmatprep.subr.mxu0 0.0
    %7033 = vmatpush2.msra.mxu0 0.0
    %7034 = vmatprep.subr.mxu0 0.0
    %7035 = vmatpush2.msra.mxu0 0.0
    %7036 = vmatprep.subr.mxu0 0.0
    %7037 = vmatpush2.msra.mxu0 0.0
    %7038 = vmatprep.subr.mxu0 0.0
    %7039 = vmatpush2.msra.mxu0 0.0
    %7040 = vmatprep.subr.mxu0 0.0
    %7041 = vmatpush2.msra.mxu0 0.0
    %7042 = vmatprep.subr.mxu0 0.0
    %7043 = vmatpush2.msra.mxu0 0.0
    %7044 = vmatprep.subr.mxu0 0.0
    %7045 = vmatpush2.msra.mxu0 0.0
    %7046 = vmatprep.subr.mxu0 0.0
    %7047 = vmatpush2.msra.mxu0 0.0
    %7048 = vmatprep.subr.mxu0 0.0
    %7049 = vmatpush2.msra.mxu0 0.0
    %7050 = vmatprep.subr.mxu0 0.0
    %7051 = vmatpush2.msra.mxu0 0.0
    %7052 = vmatprep.subr.mxu0 0.0
    %7053 = vmatpush2.msra.mxu0 0.0
    %7054 = vmatprep.subr.mxu0 0.0
    %7055 = vmatpush2.msra.mxu0 0.0
    %7056 = vmatprep.mubr.f32.mxu0 0.0
    %7057 = vmatmul.mubr.f32.gmra.mxu0 %v6777
    %v7058 = vpop.f32.mrf.mxu0
    %v7059 = vadd.f32 0.0, %v7058
    %v7060 = vpop.f32.mrf.mxu0
    %v7061 = vadd.f32 0.0, %v7060
    %7062 = vdwg.mxu0
    %v7063 = vadd.f32 %v6524, %v6846
    %v7064 = vadd.f32 %v6526, %v6848
    %v7065 = vadd.f32 %v6595, %v6917
    %v7066 = vadd.f32 %v6597, %v6919
    %v7067 = vadd.f32 %v6666, %v6988
    %v7068 = vadd.f32 %v6668, %v6990
    %v7069 = vadd.f32 %v6737, %v7059
    %v7070 = vadd.f32 %v6739, %v7061
    %v7071 = vld [vmem:[%s5 + $0x18] sm:$0xff]
    %7072 = vrot.lane.b32.xlu0 %v6080, 1
    %v7073 = vpop.permute.xlu0 %7072
    %7074 = vrot.lane.b32.xlu0 %v6081, 1
    %v7075 = vpop.permute.xlu0 %7074
    %7076 = vrot.lane.b32.xlu0 %v6082, 1
    %v7077 = vpop.permute.xlu0 %7076
    %7078 = vrot.lane.b32.xlu0 %v6083, 1
    %v7079 = vpop.permute.xlu0 %7078
    %7080 = vrot.lane.b32.xlu0 %v6084, 1
    %v7081 = vpop.permute.xlu0 %7080
    %7082 = vrot.lane.b32.xlu0 %v6085, 1
    %v7083 = vpop.permute.xlu0 %7082
    %7084 = vrot.lane.b32.xlu0 %v6086, 1
    %v7085 = vpop.permute.xlu0 %7084
    %7086 = vrot.lane.b32.xlu0 %v6087, 1
    %v7087 = vpop.permute.xlu0 %7086
    %7088 = vrot.lane.b32.xlu0 %v6088, 1
    %v7089 = vpop.permute.xlu0 %7088
    %v7090 = vsel %vm1105, %v7073, %v7075
    %v7091 = vsel %vm1105, %v7075, %v7077
    %v7092 = vsel %vm1105, %v7077, %v7079
    %v7093 = vsel %vm1105, %v7079, %v7081
    %v7094 = vsel %vm1105, %v7081, %v7083
    %v7095 = vsel %vm1105, %v7083, %v7085
    %v7096 = vsel %vm1105, %v7085, %v7087
    %v7097 = vsel %vm1105, %v7087, %v7089
    %v7107 = vsel %vm145, %v7071, 0
    %7109 = vmatprep.subr.mxu0 0.0
    %7110 = vmatpush1.msra.mxu0 0.0
    %7111 = vmatprep.subr.mxu0 0.0
    %7112 = vmatpush1.msra.mxu0 0.0
    %7113 = vmatprep.subr.mxu0 0.0
    %7114 = vmatpush1.msra.mxu0 0.0
    %7115 = vmatprep.subr.mxu0 0.0
    %7116 = vmatpush1.msra.mxu0 0.0
    %7117 = vmatprep.subr.mxu0 0.0
    %7118 = vmatpush1.msra.mxu0 0.0
    %7119 = vmatprep.subr.mxu0 0.0
    %7120 = vmatpush1.msra.mxu0 0.0
    %7121 = vmatprep.subr.mxu0 0.0
    %7122 = vmatpush1.msra.mxu0 0.0
    %7123 = vmatprep.subr.mxu0 0.0
    %7124 = vmatpush1.msra.mxu0 0.0
    %7125 = vmatprep.subr.mxu0 0.0
    %7126 = vmatpush1.msra.mxu0 0.0
    %7127 = vmatprep.subr.mxu0 0.0
    %7128 = vmatpush1.msra.mxu0 0.0
    %7129 = vmatprep.subr.mxu0 0.0
    %7130 = vmatpush1.msra.mxu0 0.0
    %7131 = vmatprep.subr.mxu0 0.0
    %7132 = vmatpush1.msra.mxu0 0.0
    %7133 = vmatprep.subr.mxu0 0.0
    %7134 = vmatpush1.msra.mxu0 0.0
    %7135 = vmatprep.subr.mxu0 0.0
    %7136 = vmatpush1.msra.mxu0 0.0
    %7137 = vmatprep.subr.mxu0 0.0
    %7138 = vmatpush1.msra.mxu0 0.0
    %7139 = vmatprep.subr.mxu0 %v7091
    %7140 = vmatpush1.msra.mxu0 %v7090
    %7141 = vmatprep.subr.mxu0 0.0
    %7142 = vmatpush2.msra.mxu0 0.0
    %7143 = vmatprep.subr.mxu0 0.0
    %7144 = vmatpush2.msra.mxu0 0.0
    %7145 = vmatprep.subr.mxu0 0.0
    %7146 = vmatpush2.msra.mxu0 0.0
    %7147 = vmatprep.subr.mxu0 0.0
    %7148 = vmatpush2.msra.mxu0 0.0
    %7149 = vmatprep.subr.mxu0 0.0
    %7150 = vmatpush2.msra.mxu0 0.0
    %7151 = vmatprep.subr.mxu0 0.0
    %7152 = vmatpush2.msra.mxu0 0.0
    %7153 = vmatprep.subr.mxu0 0.0
    %7154 = vmatpush2.msra.mxu0 0.0
    %7155 = vmatprep.subr.mxu0 0.0
    %7156 = vmatpush2.msra.mxu0 0.0
    %7157 = vmatprep.subr.mxu0 0.0
    %7158 = vmatpush2.msra.mxu0 0.0
    %7159 = vmatprep.subr.mxu0 0.0
    %7160 = vmatpush2.msra.mxu0 0.0
    %7161 = vmatprep.subr.mxu0 0.0
    %7162 = vmatpush2.msra.mxu0 0.0
    %7163 = vmatprep.subr.mxu0 0.0
    %7164 = vmatpush2.msra.mxu0 0.0
    %7165 = vmatprep.subr.mxu0 0.0
    %7166 = vmatpush2.msra.mxu0 0.0
    %7167 = vmatprep.subr.mxu0 0.0
    %7168 = vmatpush2.msra.mxu0 0.0
    %7169 = vmatprep.subr.mxu0 0.0
    %7170 = vmatpush2.msra.mxu0 0.0
    %7171 = vmatprep.subr.mxu0 0.0
    %7172 = vmatpush2.msra.mxu0 0.0
    %7173 = vmatprep.mubr.f32.mxu0 0.0
    %7174 = vmatmul.mubr.f32.gmra.mxu0 %v7107
    %v7175 = vpop.f32.mrf.mxu0
    %v7176 = vadd.f32 0.0, %v7175
    %v7177 = vpop.f32.mrf.mxu0
    %v7178 = vadd.f32 0.0, %v7177
    %7179 = vdwg.mxu0
    %7180 = vmatprep.subr.mxu0 0.0
    %7181 = vmatpush1.msra.mxu0 0.0
    %7182 = vmatprep.subr.mxu0 0.0
    %7183 = vmatpush1.msra.mxu0 0.0
    %7184 = vmatprep.subr.mxu0 0.0
    %7185 = vmatpush1.msra.mxu0 0.0
    %7186 = vmatprep.subr.mxu0 0.0
    %7187 = vmatpush1.msra.mxu0 0.0
    %7188 = vmatprep.subr.mxu0 0.0
    %7189 = vmatpush1.msra.mxu0 0.0
    %7190 = vmatprep.subr.mxu0 0.0
    %7191 = vmatpush1.msra.mxu0 0.0
    %7192 = vmatprep.subr.mxu0 0.0
    %7193 = vmatpush1.msra.mxu0 0.0
    %7194 = vmatprep.subr.mxu0 0.0
    %7195 = vmatpush1.msra.mxu0 0.0
    %7196 = vmatprep.subr.mxu0 0.0
    %7197 = vmatpush1.msra.mxu0 0.0
    %7198 = vmatprep.subr.mxu0 0.0
    %7199 = vmatpush1.msra.mxu0 0.0
    %7200 = vmatprep.subr.mxu0 0.0
    %7201 = vmatpush1.msra.mxu0 0.0
    %7202 = vmatprep.subr.mxu0 0.0
    %7203 = vmatpush1.msra.mxu0 0.0
    %7204 = vmatprep.subr.mxu0 0.0
    %7205 = vmatpush1.msra.mxu0 0.0
    %7206 = vmatprep.subr.mxu0 0.0
    %7207 = vmatpush1.msra.mxu0 0.0
    %7208 = vmatprep.subr.mxu0 0.0
    %7209 = vmatpush1.msra.mxu0 0.0
    %7210 = vmatprep.subr.mxu0 %v7093
    %7211 = vmatpush1.msra.mxu0 %v7092
    %7212 = vmatprep.subr.mxu0 0.0
    %7213 = vmatpush2.msra.mxu0 0.0
    %7214 = vmatprep.subr.mxu0 0.0
    %7215 = vmatpush2.msra.mxu0 0.0
    %7216 = vmatprep.subr.mxu0 0.0
    %7217 = vmatpush2.msra.mxu0 0.0
    %7218 = vmatprep.subr.mxu0 0.0
    %7219 = vmatpush2.msra.mxu0 0.0
    %7220 = vmatprep.subr.mxu0 0.0
    %7221 = vmatpush2.msra.mxu0 0.0
    %7222 = vmatprep.subr.mxu0 0.0
    %7223 = vmatpush2.msra.mxu0 0.0
    %7224 = vmatprep.subr.mxu0 0.0
    %7225 = vmatpush2.msra.mxu0 0.0
    %7226 = vmatprep.subr.mxu0 0.0
    %7227 = vmatpush2.msra.mxu0 0.0
    %7228 = vmatprep.subr.mxu0 0.0
    %7229 = vmatpush2.msra.mxu0 0.0
    %7230 = vmatprep.subr.mxu0 0.0
    %7231 = vmatpush2.msra.mxu0 0.0
    %7232 = vmatprep.subr.mxu0 0.0
    %7233 = vmatpush2.msra.mxu0 0.0
    %7234 = vmatprep.subr.mxu0 0.0
    %7235 = vmatpush2.msra.mxu0 0.0
    %7236 = vmatprep.subr.mxu0 0.0
    %7237 = vmatpush2.msra.mxu0 0.0
    %7238 = vmatprep.subr.mxu0 0.0
    %7239 = vmatpush2.msra.mxu0 0.0
    %7240 = vmatprep.subr.mxu0 0.0
    %7241 = vmatpush2.msra.mxu0 0.0
    %7242 = vmatprep.subr.mxu0 0.0
    %7243 = vmatpush2.msra.mxu0 0.0
    %7244 = vmatprep.mubr.f32.mxu0 0.0
    %7245 = vmatmul.mubr.f32.gmra.mxu0 %v7107
    %v7246 = vpop.f32.mrf.mxu0
    %v7247 = vadd.f32 0.0, %v7246
    %v7248 = vpop.f32.mrf.mxu0
    %v7249 = vadd.f32 0.0, %v7248
    %7250 = vdwg.mxu0
    %7251 = vmatprep.subr.mxu0 0.0
    %7252 = vmatpush1.msra.mxu0 0.0
    %7253 = vmatprep.subr.mxu0 0.0
    %7254 = vmatpush1.msra.mxu0 0.0
    %7255 = vmatprep.subr.mxu0 0.0
    %7256 = vmatpush1.msra.mxu0 0.0
    %7257 = vmatprep.subr.mxu0 0.0
    %7258 = vmatpush1.msra.mxu0 0.0
    %7259 = vmatprep.subr.mxu0 0.0
    %7260 = vmatpush1.msra.mxu0 0.0
    %7261 = vmatprep.subr.mxu0 0.0
    %7262 = vmatpush1.msra.mxu0 0.0
    %7263 = vmatprep.subr.mxu0 0.0
    %7264 = vmatpush1.msra.mxu0 0.0
    %7265 = vmatprep.subr.mxu0 0.0
    %7266 = vmatpush1.msra.mxu0 0.0
    %7267 = vmatprep.subr.mxu0 0.0
    %7268 = vmatpush1.msra.mxu0 0.0
    %7269 = vmatprep.subr.mxu0 0.0
    %7270 = vmatpush1.msra.mxu0 0.0
    %7271 = vmatprep.subr.mxu0 0.0
    %7272 = vmatpush1.msra.mxu0 0.0
    %7273 = vmatprep.subr.mxu0 0.0
    %7274 = vmatpush1.msra.mxu0 0.0
    %7275 = vmatprep.subr.mxu0 0.0
    %7276 = vmatpush1.msra.mxu0 0.0
    %7277 = vmatprep.subr.mxu0 0.0
    %7278 = vmatpush1.msra.mxu0 0.0
    %7279 = vmatprep.subr.mxu0 0.0
    %7280 = vmatpush1.msra.mxu0 0.0
    %7281 = vmatprep.subr.mxu0 %v7095
    %7282 = vmatpush1.msra.mxu0 %v7094
    %7283 = vmatprep.subr.mxu0 0.0
    %7284 = vmatpush2.msra.mxu0 0.0
    %7285 = vmatprep.subr.mxu0 0.0
    %7286 = vmatpush2.msra.mxu0 0.0
    %7287 = vmatprep.subr.mxu0 0.0
    %7288 = vmatpush2.msra.mxu0 0.0
    %7289 = vmatprep.subr.mxu0 0.0
    %7290 = vmatpush2.msra.mxu0 0.0
    %7291 = vmatprep.subr.mxu0 0.0
    %7292 = vmatpush2.msra.mxu0 0.0
    %7293 = vmatprep.subr.mxu0 0.0
    %7294 = vmatpush2.msra.mxu0 0.0
    %7295 = vmatprep.subr.mxu0 0.0
    %7296 = vmatpush2.msra.mxu0 0.0
    %7297 = vmatprep.subr.mxu0 0.0
    %7298 = vmatpush2.msra.mxu0 0.0
    %7299 = vmatprep.subr.mxu0 0.0
    %7300 = vmatpush2.msra.mxu0 0.0
    %7301 = vmatprep.subr.mxu0 0.0
    %7302 = vmatpush2.msra.mxu0 0.0
    %7303 = vmatprep.subr.mxu0 0.0
    %7304 = vmatpush2.msra.mxu0 0.0
    %7305 = vmatprep.subr.mxu0 0.0
    %7306 = vmatpush2.msra.mxu0 0.0
    %7307 = vmatprep.subr.mxu0 0.0
    %7308 = vmatpush2.msra.mxu0 0.0
    %7309 = vmatprep.subr.mxu0 0.0
    %7310 = vmatpush2.msra.mxu0 0.0
    %7311 = vmatprep.subr.mxu0 0.0
    %7312 = vmatpush2.msra.mxu0 0.0
    %7313 = vmatprep.subr.mxu0 0.0
    %7314 = vmatpush2.msra.mxu0 0.0
    %7315 = vmatprep.mubr.f32.mxu0 0.0
    %7316 = vmatmul.mubr.f32.gmra.mxu0 %v7107
    %v7317 = vpop.f32.mrf.mxu0
    %v7318 = vadd.f32 0.0, %v7317
    %v7319 = vpop.f32.mrf.mxu0
    %v7320 = vadd.f32 0.0, %v7319
    %7321 = vdwg.mxu0
    %7322 = vmatprep.subr.mxu0 0.0
    %7323 = vmatpush1.msra.mxu0 0.0
    %7324 = vmatprep.subr.mxu0 0.0
    %7325 = vmatpush1.msra.mxu0 0.0
    %7326 = vmatprep.subr.mxu0 0.0
    %7327 = vmatpush1.msra.mxu0 0.0
    %7328 = vmatprep.subr.mxu0 0.0
    %7329 = vmatpush1.msra.mxu0 0.0
    %7330 = vmatprep.subr.mxu0 0.0
    %7331 = vmatpush1.msra.mxu0 0.0
    %7332 = vmatprep.subr.mxu0 0.0
    %7333 = vmatpush1.msra.mxu0 0.0
    %7334 = vmatprep.subr.mxu0 0.0
    %7335 = vmatpush1.msra.mxu0 0.0
    %7336 = vmatprep.subr.mxu0 0.0
    %7337 = vmatpush1.msra.mxu0 0.0
    %7338 = vmatprep.subr.mxu0 0.0
    %7339 = vmatpush1.msra.mxu0 0.0
    %7340 = vmatprep.subr.mxu0 0.0
    %7341 = vmatpush1.msra.mxu0 0.0
    %7342 = vmatprep.subr.mxu0 0.0
    %7343 = vmatpush1.msra.mxu0 0.0
    %7344 = vmatprep.subr.mxu0 0.0
    %7345 = vmatpush1.msra.mxu0 0.0
    %7346 = vmatprep.subr.mxu0 0.0
    %7347 = vmatpush1.msra.mxu0 0.0
    %7348 = vmatprep.subr.mxu0 0.0
    %7349 = vmatpush1.msra.mxu0 0.0
    %7350 = vmatprep.subr.mxu0 0.0
    %7351 = vmatpush1.msra.mxu0 0.0
    %7352 = vmatprep.subr.mxu0 %v7097
    %7353 = vmatpush1.msra.mxu0 %v7096
    %7354 = vmatprep.subr.mxu0 0.0
    %7355 = vmatpush2.msra.mxu0 0.0
    %7356 = vmatprep.subr.mxu0 0.0
    %7357 = vmatpush2.msra.mxu0 0.0
    %7358 = vmatprep.subr.mxu0 0.0
    %7359 = vmatpush2.msra.mxu0 0.0
    %7360 = vmatprep.subr.mxu0 0.0
    %7361 = vmatpush2.msra.mxu0 0.0
    %7362 = vmatprep.subr.mxu0 0.0
    %7363 = vmatpush2.msra.mxu0 0.0
    %7364 = vmatprep.subr.mxu0 0.0
    %7365 = vmatpush2.msra.mxu0 0.0
    %7366 = vmatprep.subr.mxu0 0.0
    %7367 = vmatpush2.msra.mxu0 0.0
    %7368 = vmatprep.subr.mxu0 0.0
    %7369 = vmatpush2.msra.mxu0 0.0
    %7370 = vmatprep.subr.mxu0 0.0
    %7371 = vmatpush2.msra.mxu0 0.0
    %7372 = vmatprep.subr.mxu0 0.0
    %7373 = vmatpush2.msra.mxu0 0.0
    %7374 = vmatprep.subr.mxu0 0.0
    %7375 = vmatpush2.msra.mxu0 0.0
    %7376 = vmatprep.subr.mxu0 0.0
    %7377 = vmatpush2.msra.mxu0 0.0
    %7378 = vmatprep.subr.mxu0 0.0
    %7379 = vmatpush2.msra.mxu0 0.0
    %7380 = vmatprep.subr.mxu0 0.0
    %7381 = vmatpush2.msra.mxu0 0.0
    %7382 = vmatprep.subr.mxu0 0.0
    %7383 = vmatpush2.msra.mxu0 0.0
    %7384 = vmatprep.subr.mxu0 0.0
    %7385 = vmatpush2.msra.mxu0 0.0
    %7386 = vmatprep.mubr.f32.mxu0 0.0
    %7387 = vmatmul.mubr.f32.gmra.mxu0 %v7107
    %v7388 = vpop.f32.mrf.mxu0
    %v7389 = vadd.f32 0.0, %v7388
    %v7390 = vpop.f32.mrf.mxu0
    %v7391 = vadd.f32 0.0, %v7390
    %7392 = vdwg.mxu0
    %v7393 = vadd.f32 %v7063, %v7176
    %v7394 = vadd.f32 %v7064, %v7178
    %v7395 = vadd.f32 %v7065, %v7247
    %v7396 = vadd.f32 %v7066, %v7249
    %v7397 = vadd.f32 %v7067, %v7318
    %v7398 = vadd.f32 %v7068, %v7320
    %v7399 = vadd.f32 %v7069, %v7389
    %v7400 = vadd.f32 %v7070, %v7391
    %v7401 = vld [vmem:[%s5 + $0x20] sm:$0xff]
    %v7403 = vsel %vm145, %v7401, 0
    %7405 = vmatprep.subr.mxu0 0.0
    %7406 = vmatpush1.msra.mxu0 0.0
    %7407 = vmatprep.subr.mxu0 0.0
    %7408 = vmatpush1.msra.mxu0 0.0
    %7409 = vmatprep.subr.mxu0 0.0
    %7410 = vmatpush1.msra.mxu0 0.0
    %7411 = vmatprep.subr.mxu0 0.0
    %7412 = vmatpush1.msra.mxu0 0.0
    %7413 = vmatprep.subr.mxu0 0.0
    %7414 = vmatpush1.msra.mxu0 0.0
    %7415 = vmatprep.subr.mxu0 0.0
    %7416 = vmatpush1.msra.mxu0 0.0
    %7417 = vmatprep.subr.mxu0 0.0
    %7418 = vmatpush1.msra.mxu0 0.0
    %7419 = vmatprep.subr.mxu0 0.0
    %7420 = vmatpush1.msra.mxu0 0.0
    %7421 = vmatprep.subr.mxu0 0.0
    %7422 = vmatpush1.msra.mxu0 0.0
    %7423 = vmatprep.subr.mxu0 0.0
    %7424 = vmatpush1.msra.mxu0 0.0
    %7425 = vmatprep.subr.mxu0 0.0
    %7426 = vmatpush1.msra.mxu0 0.0
    %7427 = vmatprep.subr.mxu0 0.0
    %7428 = vmatpush1.msra.mxu0 0.0
    %7429 = vmatprep.subr.mxu0 0.0
    %7430 = vmatpush1.msra.mxu0 0.0
    %7431 = vmatprep.subr.mxu0 0.0
    %7432 = vmatpush1.msra.mxu0 0.0
    %7433 = vmatprep.subr.mxu0 0.0
    %7434 = vmatpush1.msra.mxu0 0.0
    %7435 = vmatprep.subr.mxu0 %v6082
    %7436 = vmatpush1.msra.mxu0 %v6081
    %7437 = vmatprep.subr.mxu0 0.0
    %7438 = vmatpush2.msra.mxu0 0.0
    %7439 = vmatprep.subr.mxu0 0.0
    %7440 = vmatpush2.msra.mxu0 0.0
    %7441 = vmatprep.subr.mxu0 0.0
    %7442 = vmatpush2.msra.mxu0 0.0
    %7443 = vmatprep.subr.mxu0 0.0
    %7444 = vmatpush2.msra.mxu0 0.0
    %7445 = vmatprep.subr.mxu0 0.0
    %7446 = vmatpush2.msra.mxu0 0.0
    %7447 = vmatprep.subr.mxu0 0.0
    %7448 = vmatpush2.msra.mxu0 0.0
    %7449 = vmatprep.subr.mxu0 0.0
    %7450 = vmatpush2.msra.mxu0 0.0
    %7451 = vmatprep.subr.mxu0 0.0
    %7452 = vmatpush2.msra.mxu0 0.0
    %7453 = vmatprep.subr.mxu0 0.0
    %7454 = vmatpush2.msra.mxu0 0.0
    %7455 = vmatprep.subr.mxu0 0.0
    %7456 = vmatpush2.msra.mxu0 0.0
    %7457 = vmatprep.subr.mxu0 0.0
    %7458 = vmatpush2.msra.mxu0 0.0
    %7459 = vmatprep.subr.mxu0 0.0
    %7460 = vmatpush2.msra.mxu0 0.0
    %7461 = vmatprep.subr.mxu0 0.0
    %7462 = vmatpush2.msra.mxu0 0.0
    %7463 = vmatprep.subr.mxu0 0.0
    %7464 = vmatpush2.msra.mxu0 0.0
    %7465 = vmatprep.subr.mxu0 0.0
    %7466 = vmatpush2.msra.mxu0 0.0
    %7467 = vmatprep.subr.mxu0 0.0
    %7468 = vmatpush2.msra.mxu0 0.0
    %7469 = vmatprep.mubr.f32.mxu0 0.0
    %7470 = vmatmul.mubr.f32.gmra.mxu0 %v7403
    %v7471 = vpop.f32.mrf.mxu0
    %v7472 = vadd.f32 0.0, %v7471
    %v7473 = vpop.f32.mrf.mxu0
    %v7474 = vadd.f32 0.0, %v7473
    %7475 = vdwg.mxu0
    %7476 = vmatprep.subr.mxu0 0.0
    %7477 = vmatpush1.msra.mxu0 0.0
    %7478 = vmatprep.subr.mxu0 0.0
    %7479 = vmatpush1.msra.mxu0 0.0
    %7480 = vmatprep.subr.mxu0 0.0
    %7481 = vmatpush1.msra.mxu0 0.0
    %7482 = vmatprep.subr.mxu0 0.0
    %7483 = vmatpush1.msra.mxu0 0.0
    %7484 = vmatprep.subr.mxu0 0.0
    %7485 = vmatpush1.msra.mxu0 0.0
    %7486 = vmatprep.subr.mxu0 0.0
    %7487 = vmatpush1.msra.mxu0 0.0
    %7488 = vmatprep.subr.mxu0 0.0
    %7489 = vmatpush1.msra.mxu0 0.0
    %7490 = vmatprep.subr.mxu0 0.0
    %7491 = vmatpush1.msra.mxu0 0.0
    %7492 = vmatprep.subr.mxu0 0.0
    %7493 = vmatpush1.msra.mxu0 0.0
    %7494 = vmatprep.subr.mxu0 0.0
    %7495 = vmatpush1.msra.mxu0 0.0
    %7496 = vmatprep.subr.mxu0 0.0
    %7497 = vmatpush1.msra.mxu0 0.0
    %7498 = vmatprep.subr.mxu0 0.0
    %7499 = vmatpush1.msra.mxu0 0.0
    %7500 = vmatprep.subr.mxu0 0.0
    %7501 = vmatpush1.msra.mxu0 0.0
    %7502 = vmatprep.subr.mxu0 0.0
    %7503 = vmatpush1.msra.mxu0 0.0
    %7504 = vmatprep.subr.mxu0 0.0
    %7505 = vmatpush1.msra.mxu0 0.0
    %7506 = vmatprep.subr.mxu0 %v6084
    %7507 = vmatpush1.msra.mxu0 %v6083
    %7508 = vmatprep.subr.mxu0 0.0
    %7509 = vmatpush2.msra.mxu0 0.0
    %7510 = vmatprep.subr.mxu0 0.0
    %7511 = vmatpush2.msra.mxu0 0.0
    %7512 = vmatprep.subr.mxu0 0.0
    %7513 = vmatpush2.msra.mxu0 0.0
    %7514 = vmatprep.subr.mxu0 0.0
    %7515 = vmatpush2.msra.mxu0 0.0
    %7516 = vmatprep.subr.mxu0 0.0
    %7517 = vmatpush2.msra.mxu0 0.0
    %7518 = vmatprep.subr.mxu0 0.0
    %7519 = vmatpush2.msra.mxu0 0.0
    %7520 = vmatprep.subr.mxu0 0.0
    %7521 = vmatpush2.msra.mxu0 0.0
    %7522 = vmatprep.subr.mxu0 0.0
    %7523 = vmatpush2.msra.mxu0 0.0
    %7524 = vmatprep.subr.mxu0 0.0
    %7525 = vmatpush2.msra.mxu0 0.0
    %7526 = vmatprep.subr.mxu0 0.0
    %7527 = vmatpush2.msra.mxu0 0.0
    %7528 = vmatprep.subr.mxu0 0.0
    %7529 = vmatpush2.msra.mxu0 0.0
    %7530 = vmatprep.subr.mxu0 0.0
    %7531 = vmatpush2.msra.mxu0 0.0
    %7532 = vmatprep.subr.mxu0 0.0
    %7533 = vmatpush2.msra.mxu0 0.0
    %7534 = vmatprep.subr.mxu0 0.0
    %7535 = vmatpush2.msra.mxu0 0.0
    %7536 = vmatprep.subr.mxu0 0.0
    %7537 = vmatpush2.msra.mxu0 0.0
    %7538 = vmatprep.subr.mxu0 0.0
    %7539 = vmatpush2.msra.mxu0 0.0
    %7540 = vmatprep.mubr.f32.mxu0 0.0
    %7541 = vmatmul.mubr.f32.gmra.mxu0 %v7403
    %v7542 = vpop.f32.mrf.mxu0
    %v7543 = vadd.f32 0.0, %v7542
    %v7544 = vpop.f32.mrf.mxu0
    %v7545 = vadd.f32 0.0, %v7544
    %7546 = vdwg.mxu0
    %7547 = vmatprep.subr.mxu0 0.0
    %7548 = vmatpush1.msra.mxu0 0.0
    %7549 = vmatprep.subr.mxu0 0.0
    %7550 = vmatpush1.msra.mxu0 0.0
    %7551 = vmatprep.subr.mxu0 0.0
    %7552 = vmatpush1.msra.mxu0 0.0
    %7553 = vmatprep.subr.mxu0 0.0
    %7554 = vmatpush1.msra.mxu0 0.0
    %7555 = vmatprep.subr.mxu0 0.0
    %7556 = vmatpush1.msra.mxu0 0.0
    %7557 = vmatprep.subr.mxu0 0.0
    %7558 = vmatpush1.msra.mxu0 0.0
    %7559 = vmatprep.subr.mxu0 0.0
    %7560 = vmatpush1.msra.mxu0 0.0
    %7561 = vmatprep.subr.mxu0 0.0
    %7562 = vmatpush1.msra.mxu0 0.0
    %7563 = vmatprep.subr.mxu0 0.0
    %7564 = vmatpush1.msra.mxu0 0.0
    %7565 = vmatprep.subr.mxu0 0.0
    %7566 = vmatpush1.msra.mxu0 0.0
    %7567 = vmatprep.subr.mxu0 0.0
    %7568 = vmatpush1.msra.mxu0 0.0
    %7569 = vmatprep.subr.mxu0 0.0
    %7570 = vmatpush1.msra.mxu0 0.0
    %7571 = vmatprep.subr.mxu0 0.0
    %7572 = vmatpush1.msra.mxu0 0.0
    %7573 = vmatprep.subr.mxu0 0.0
    %7574 = vmatpush1.msra.mxu0 0.0
    %7575 = vmatprep.subr.mxu0 0.0
    %7576 = vmatpush1.msra.mxu0 0.0
    %7577 = vmatprep.subr.mxu0 %v6086
    %7578 = vmatpush1.msra.mxu0 %v6085
    %7579 = vmatprep.subr.mxu0 0.0
    %7580 = vmatpush2.msra.mxu0 0.0
    %7581 = vmatprep.subr.mxu0 0.0
    %7582 = vmatpush2.msra.mxu0 0.0
    %7583 = vmatprep.subr.mxu0 0.0
    %7584 = vmatpush2.msra.mxu0 0.0
    %7585 = vmatprep.subr.mxu0 0.0
    %7586 = vmatpush2.msra.mxu0 0.0
    %7587 = vmatprep.subr.mxu0 0.0
    %7588 = vmatpush2.msra.mxu0 0.0
    %7589 = vmatprep.subr.mxu0 0.0
    %7590 = vmatpush2.msra.mxu0 0.0
    %7591 = vmatprep.subr.mxu0 0.0
    %7592 = vmatpush2.msra.mxu0 0.0
    %7593 = vmatprep.subr.mxu0 0.0
    %7594 = vmatpush2.msra.mxu0 0.0
    %7595 = vmatprep.subr.mxu0 0.0
    %7596 = vmatpush2.msra.mxu0 0.0
    %7597 = vmatprep.subr.mxu0 0.0
    %7598 = vmatpush2.msra.mxu0 0.0
    %7599 = vmatprep.subr.mxu0 0.0
    %7600 = vmatpush2.msra.mxu0 0.0
    %7601 = vmatprep.subr.mxu0 0.0
    %7602 = vmatpush2.msra.mxu0 0.0
    %7603 = vmatprep.subr.mxu0 0.0
    %7604 = vmatpush2.msra.mxu0 0.0
    %7605 = vmatprep.subr.mxu0 0.0
    %7606 = vmatpush2.msra.mxu0 0.0
    %7607 = vmatprep.subr.mxu0 0.0
    %7608 = vmatpush2.msra.mxu0 0.0
    %7609 = vmatprep.subr.mxu0 0.0
    %7610 = vmatpush2.msra.mxu0 0.0
    %7611 = vmatprep.mubr.f32.mxu0 0.0
    %7612 = vmatmul.mubr.f32.gmra.mxu0 %v7403
    %v7613 = vpop.f32.mrf.mxu0
    %v7614 = vadd.f32 0.0, %v7613
    %v7615 = vpop.f32.mrf.mxu0
    %v7616 = vadd.f32 0.0, %v7615
    %7617 = vdwg.mxu0
    %7618 = vmatprep.subr.mxu0 0.0
    %7619 = vmatpush1.msra.mxu0 0.0
    %7620 = vmatprep.subr.mxu0 0.0
    %7621 = vmatpush1.msra.mxu0 0.0
    %7622 = vmatprep.subr.mxu0 0.0
    %7623 = vmatpush1.msra.mxu0 0.0
    %7624 = vmatprep.subr.mxu0 0.0
    %7625 = vmatpush1.msra.mxu0 0.0
    %7626 = vmatprep.subr.mxu0 0.0
    %7627 = vmatpush1.msra.mxu0 0.0
    %7628 = vmatprep.subr.mxu0 0.0
    %7629 = vmatpush1.msra.mxu0 0.0
    %7630 = vmatprep.subr.mxu0 0.0
    %7631 = vmatpush1.msra.mxu0 0.0
    %7632 = vmatprep.subr.mxu0 0.0
    %7633 = vmatpush1.msra.mxu0 0.0
    %7634 = vmatprep.subr.mxu0 0.0
    %7635 = vmatpush1.msra.mxu0 0.0
    %7636 = vmatprep.subr.mxu0 0.0
    %7637 = vmatpush1.msra.mxu0 0.0
    %7638 = vmatprep.subr.mxu0 0.0
    %7639 = vmatpush1.msra.mxu0 0.0
    %7640 = vmatprep.subr.mxu0 0.0
    %7641 = vmatpush1.msra.mxu0 0.0
    %7642 = vmatprep.subr.mxu0 0.0
    %7643 = vmatpush1.msra.mxu0 0.0
    %7644 = vmatprep.subr.mxu0 0.0
    %7645 = vmatpush1.msra.mxu0 0.0
    %7646 = vmatprep.subr.mxu0 0.0
    %7647 = vmatpush1.msra.mxu0 0.0
    %7648 = vmatprep.subr.mxu0 %v6088
    %7649 = vmatpush1.msra.mxu0 %v6087
    %7650 = vmatprep.subr.mxu0 0.0
    %7651 = vmatpush2.msra.mxu0 0.0
    %7652 = vmatprep.subr.mxu0 0.0
    %7653 = vmatpush2.msra.mxu0 0.0
    %7654 = vmatprep.subr.mxu0 0.0
    %7655 = vmatpush2.msra.mxu0 0.0
    %7656 = vmatprep.subr.mxu0 0.0
    %7657 = vmatpush2.msra.mxu0 0.0
    %7658 = vmatprep.subr.mxu0 0.0
    %7659 = vmatpush2.msra.mxu0 0.0
    %7660 = vmatprep.subr.mxu0 0.0
    %7661 = vmatpush2.msra.mxu0 0.0
    %7662 = vmatprep.subr.mxu0 0.0
    %7663 = vmatpush2.msra.mxu0 0.0
    %7664 = vmatprep.subr.mxu0 0.0
    %7665 = vmatpush2.msra.mxu0 0.0
    %7666 = vmatprep.subr.mxu0 0.0
    %7667 = vmatpush2.msra.mxu0 0.0
    %7668 = vmatprep.subr.mxu0 0.0
    %7669 = vmatpush2.msra.mxu0 0.0
    %7670 = vmatprep.subr.mxu0 0.0
    %7671 = vmatpush2.msra.mxu0 0.0
    %7672 = vmatprep.subr.mxu0 0.0
    %7673 = vmatpush2.msra.mxu0 0.0
    %7674 = vmatprep.subr.mxu0 0.0
    %7675 = vmatpush2.msra.mxu0 0.0
    %7676 = vmatprep.subr.mxu0 0.0
    %7677 = vmatpush2.msra.mxu0 0.0
    %7678 = vmatprep.subr.mxu0 0.0
    %7679 = vmatpush2.msra.mxu0 0.0
    %7680 = vmatprep.subr.mxu0 0.0
    %7681 = vmatpush2.msra.mxu0 0.0
    %7682 = vmatprep.mubr.f32.mxu0 0.0
    %7683 = vmatmul.mubr.f32.gmra.mxu0 %v7403
    %v7684 = vpop.f32.mrf.mxu0
    %v7685 = vadd.f32 0.0, %v7684
    %v7686 = vpop.f32.mrf.mxu0
    %v7687 = vadd.f32 0.0, %v7686
    %7688 = vdwg.mxu0
    %v7689 = vadd.f32 %v7393, %v7472
    %v7690 = vadd.f32 %v7394, %v7474
    %v7691 = vadd.f32 %v7395, %v7543
    %v7692 = vadd.f32 %v7396, %v7545
    %v7693 = vadd.f32 %v7397, %v7614
    %v7694 = vadd.f32 %v7398, %v7616
    %v7695 = vadd.f32 %v7399, %v7685
    %v7696 = vadd.f32 %v7400, %v7687
    %v7697 = vld [vmem:[%s5 + $0x28] sm:$0xff]
    %v7698 = vld [vmem:[#allocation2 + $0x8] sm:$0xff]
    %v7699 = vld [vmem:[#allocation2 + $0x10] sm:$0xff]
    %v7700 = vld [vmem:[#allocation2 + $0x18] sm:$0xff]
    %v7701 = vld [vmem:[#allocation2 + $0x20] sm:$0xff]
    %v7702 = vld [vmem:[#allocation2 + $0x28] sm:$0xff]
    %v7703 = vld [vmem:[#allocation2 + $0x30] sm:$0xff]
    %v7704 = vld [vmem:[#allocation2 + $0x38] sm:$0xff]
    %v7705 = vld [vmem:[#allocation2 + $0x40] sm:$0xff]
    %v7706 = vld [vmem:[#allocation2 + $0x48] sm:$0xff]
    %7716 = vrot.lane.b32.xlu0 %v7698, 127
    %v7717 = vpop.permute.xlu0 %7716
    %7718 = vrot.lane.b32.xlu0 %v7699, 127
    %v7719 = vpop.permute.xlu0 %7718
    %7720 = vrot.lane.b32.xlu0 %v7700, 127
    %v7721 = vpop.permute.xlu0 %7720
    %7722 = vrot.lane.b32.xlu0 %v7701, 127
    %v7723 = vpop.permute.xlu0 %7722
    %7724 = vrot.lane.b32.xlu0 %v7702, 127
    %v7725 = vpop.permute.xlu0 %7724
    %7726 = vrot.lane.b32.xlu0 %v7703, 127
    %v7727 = vpop.permute.xlu0 %7726
    %7728 = vrot.lane.b32.xlu0 %v7704, 127
    %v7729 = vpop.permute.xlu0 %7728
    %7730 = vrot.lane.b32.xlu0 %v7705, 127
    %v7731 = vpop.permute.xlu0 %7730
    %7732 = vrot.lane.b32.xlu0 %v7706, 127
    %v7733 = vpop.permute.xlu0 %7732
    %v7734 = vsel %vm1750, %v7717, %v7719
    %v7735 = vsel %vm1750, %v7719, %v7721
    %v7736 = vsel %vm1750, %v7721, %v7723
    %v7737 = vsel %vm1750, %v7723, %v7725
    %v7738 = vsel %vm1750, %v7725, %v7727
    %v7739 = vsel %vm1750, %v7727, %v7729
    %v7740 = vsel %vm1750, %v7729, %v7731
    %v7741 = vsel %vm1750, %v7731, %v7733
    %v7751 = vsel %vm145, %v7697, 0
    %7753 = vmatprep.subr.mxu0 0.0
    %7754 = vmatpush1.msra.mxu0 0.0
    %7755 = vmatprep.subr.mxu0 0.0
    %7756 = vmatpush1.msra.mxu0 0.0
    %7757 = vmatprep.subr.mxu0 0.0
    %7758 = vmatpush1.msra.mxu0 0.0
    %7759 = vmatprep.subr.mxu0 0.0
    %7760 = vmatpush1.msra.mxu0 0.0
    %7761 = vmatprep.subr.mxu0 0.0
    %7762 = vmatpush1.msra.mxu0 0.0
    %7763 = vmatprep.subr.mxu0 0.0
    %7764 = vmatpush1.msra.mxu0 0.0
    %7765 = vmatprep.subr.mxu0 0.0
    %7766 = vmatpush1.msra.mxu0 0.0
    %7767 = vmatprep.subr.mxu0 0.0
    %7768 = vmatpush1.msra.mxu0 0.0
    %7769 = vmatprep.subr.mxu0 0.0
    %7770 = vmatpush1.msra.mxu0 0.0
    %7771 = vmatprep.subr.mxu0 0.0
    %7772 = vmatpush1.msra.mxu0 0.0
    %7773 = vmatprep.subr.mxu0 0.0
    %7774 = vmatpush1.msra.mxu0 0.0
    %7775 = vmatprep.subr.mxu0 0.0
    %7776 = vmatpush1.msra.mxu0 0.0
    %7777 = vmatprep.subr.mxu0 0.0
    %7778 = vmatpush1.msra.mxu0 0.0
    %7779 = vmatprep.subr.mxu0 0.0
    %7780 = vmatpush1.msra.mxu0 0.0
    %7781 = vmatprep.subr.mxu0 0.0
    %7782 = vmatpush1.msra.mxu0 0.0
    %7783 = vmatprep.subr.mxu0 %v7735
    %7784 = vmatpush1.msra.mxu0 %v7734
    %7785 = vmatprep.subr.mxu0 0.0
    %7786 = vmatpush2.msra.mxu0 0.0
    %7787 = vmatprep.subr.mxu0 0.0
    %7788 = vmatpush2.msra.mxu0 0.0
    %7789 = vmatprep.subr.mxu0 0.0
    %7790 = vmatpush2.msra.mxu0 0.0
    %7791 = vmatprep.subr.mxu0 0.0
    %7792 = vmatpush2.msra.mxu0 0.0
    %7793 = vmatprep.subr.mxu0 0.0
    %7794 = vmatpush2.msra.mxu0 0.0
    %7795 = vmatprep.subr.mxu0 0.0
    %7796 = vmatpush2.msra.mxu0 0.0
    %7797 = vmatprep.subr.mxu0 0.0
    %7798 = vmatpush2.msra.mxu0 0.0
    %7799 = vmatprep.subr.mxu0 0.0
    %7800 = vmatpush2.msra.mxu0 0.0
    %7801 = vmatprep.subr.mxu0 0.0
    %7802 = vmatpush2.msra.mxu0 0.0
    %7803 = vmatprep.subr.mxu0 0.0
    %7804 = vmatpush2.msra.mxu0 0.0
    %7805 = vmatprep.subr.mxu0 0.0
    %7806 = vmatpush2.msra.mxu0 0.0
    %7807 = vmatprep.subr.mxu0 0.0
    %7808 = vmatpush2.msra.mxu0 0.0
    %7809 = vmatprep.subr.mxu0 0.0
    %7810 = vmatpush2.msra.mxu0 0.0
    %7811 = vmatprep.subr.mxu0 0.0
    %7812 = vmatpush2.msra.mxu0 0.0
    %7813 = vmatprep.subr.mxu0 0.0
    %7814 = vmatpush2.msra.mxu0 0.0
    %7815 = vmatprep.subr.mxu0 0.0
    %7816 = vmatpush2.msra.mxu0 0.0
    %7817 = vmatprep.mubr.f32.mxu0 0.0
    %7818 = vmatmul.mubr.f32.gmra.mxu0 %v7751
    %v7819 = vpop.f32.mrf.mxu0
    %v7820 = vadd.f32 0.0, %v7819
    %v7821 = vpop.f32.mrf.mxu0
    %v7822 = vadd.f32 0.0, %v7821
    %7823 = vdwg.mxu0
    %7824 = vmatprep.subr.mxu0 0.0
    %7825 = vmatpush1.msra.mxu0 0.0
    %7826 = vmatprep.subr.mxu0 0.0
    %7827 = vmatpush1.msra.mxu0 0.0
    %7828 = vmatprep.subr.mxu0 0.0
    %7829 = vmatpush1.msra.mxu0 0.0
    %7830 = vmatprep.subr.mxu0 0.0
    %7831 = vmatpush1.msra.mxu0 0.0
    %7832 = vmatprep.subr.mxu0 0.0
    %7833 = vmatpush1.msra.mxu0 0.0
    %7834 = vmatprep.subr.mxu0 0.0
    %7835 = vmatpush1.msra.mxu0 0.0
    %7836 = vmatprep.subr.mxu0 0.0
    %7837 = vmatpush1.msra.mxu0 0.0
    %7838 = vmatprep.subr.mxu0 0.0
    %7839 = vmatpush1.msra.mxu0 0.0
    %7840 = vmatprep.subr.mxu0 0.0
    %7841 = vmatpush1.msra.mxu0 0.0
    %7842 = vmatprep.subr.mxu0 0.0
    %7843 = vmatpush1.msra.mxu0 0.0
    %7844 = vmatprep.subr.mxu0 0.0
    %7845 = vmatpush1.msra.mxu0 0.0
    %7846 = vmatprep.subr.mxu0 0.0
    %7847 = vmatpush1.msra.mxu0 0.0
    %7848 = vmatprep.subr.mxu0 0.0
    %7849 = vmatpush1.msra.mxu0 0.0
    %7850 = vmatprep.subr.mxu0 0.0
    %7851 = vmatpush1.msra.mxu0 0.0
    %7852 = vmatprep.subr.mxu0 0.0
    %7853 = vmatpush1.msra.mxu0 0.0
    %7854 = vmatprep.subr.mxu0 %v7737
    %7855 = vmatpush1.msra.mxu0 %v7736
    %7856 = vmatprep.subr.mxu0 0.0
    %7857 = vmatpush2.msra.mxu0 0.0
    %7858 = vmatprep.subr.mxu0 0.0
    %7859 = vmatpush2.msra.mxu0 0.0
    %7860 = vmatprep.subr.mxu0 0.0
    %7861 = vmatpush2.msra.mxu0 0.0
    %7862 = vmatprep.subr.mxu0 0.0
    %7863 = vmatpush2.msra.mxu0 0.0
    %7864 = vmatprep.subr.mxu0 0.0
    %7865 = vmatpush2.msra.mxu0 0.0
    %7866 = vmatprep.subr.mxu0 0.0
    %7867 = vmatpush2.msra.mxu0 0.0
    %7868 = vmatprep.subr.mxu0 0.0
    %7869 = vmatpush2.msra.mxu0 0.0
    %7870 = vmatprep.subr.mxu0 0.0
    %7871 = vmatpush2.msra.mxu0 0.0
    %7872 = vmatprep.subr.mxu0 0.0
    %7873 = vmatpush2.msra.mxu0 0.0
    %7874 = vmatprep.subr.mxu0 0.0
    %7875 = vmatpush2.msra.mxu0 0.0
    %7876 = vmatprep.subr.mxu0 0.0
    %7877 = vmatpush2.msra.mxu0 0.0
    %7878 = vmatprep.subr.mxu0 0.0
    %7879 = vmatpush2.msra.mxu0 0.0
    %7880 = vmatprep.subr.mxu0 0.0
    %7881 = vmatpush2.msra.mxu0 0.0
    %7882 = vmatprep.subr.mxu0 0.0
    %7883 = vmatpush2.msra.mxu0 0.0
    %7884 = vmatprep.subr.mxu0 0.0
    %7885 = vmatpush2.msra.mxu0 0.0
    %7886 = vmatprep.subr.mxu0 0.0
    %7887 = vmatpush2.msra.mxu0 0.0
    %7888 = vmatprep.mubr.f32.mxu0 0.0
    %7889 = vmatmul.mubr.f32.gmra.mxu0 %v7751
    %v7890 = vpop.f32.mrf.mxu0
    %v7891 = vadd.f32 0.0, %v7890
    %v7892 = vpop.f32.mrf.mxu0
    %v7893 = vadd.f32 0.0, %v7892
    %7894 = vdwg.mxu0
    %7895 = vmatprep.subr.mxu0 0.0
    %7896 = vmatpush1.msra.mxu0 0.0
    %7897 = vmatprep.subr.mxu0 0.0
    %7898 = vmatpush1.msra.mxu0 0.0
    %7899 = vmatprep.subr.mxu0 0.0
    %7900 = vmatpush1.msra.mxu0 0.0
    %7901 = vmatprep.subr.mxu0 0.0
    %7902 = vmatpush1.msra.mxu0 0.0
    %7903 = vmatprep.subr.mxu0 0.0
    %7904 = vmatpush1.msra.mxu0 0.0
    %7905 = vmatprep.subr.mxu0 0.0
    %7906 = vmatpush1.msra.mxu0 0.0
    %7907 = vmatprep.subr.mxu0 0.0
    %7908 = vmatpush1.msra.mxu0 0.0
    %7909 = vmatprep.subr.mxu0 0.0
    %7910 = vmatpush1.msra.mxu0 0.0
    %7911 = vmatprep.subr.mxu0 0.0
    %7912 = vmatpush1.msra.mxu0 0.0
    %7913 = vmatprep.subr.mxu0 0.0
    %7914 = vmatpush1.msra.mxu0 0.0
    %7915 = vmatprep.subr.mxu0 0.0
    %7916 = vmatpush1.msra.mxu0 0.0
    %7917 = vmatprep.subr.mxu0 0.0
    %7918 = vmatpush1.msra.mxu0 0.0
    %7919 = vmatprep.subr.mxu0 0.0
    %7920 = vmatpush1.msra.mxu0 0.0
    %7921 = vmatprep.subr.mxu0 0.0
    %7922 = vmatpush1.msra.mxu0 0.0
    %7923 = vmatprep.subr.mxu0 0.0
    %7924 = vmatpush1.msra.mxu0 0.0
    %7925 = vmatprep.subr.mxu0 %v7739
    %7926 = vmatpush1.msra.mxu0 %v7738
    %7927 = vmatprep.subr.mxu0 0.0
    %7928 = vmatpush2.msra.mxu0 0.0
    %7929 = vmatprep.subr.mxu0 0.0
    %7930 = vmatpush2.msra.mxu0 0.0
    %7931 = vmatprep.subr.mxu0 0.0
    %7932 = vmatpush2.msra.mxu0 0.0
    %7933 = vmatprep.subr.mxu0 0.0
    %7934 = vmatpush2.msra.mxu0 0.0
    %7935 = vmatprep.subr.mxu0 0.0
    %7936 = vmatpush2.msra.mxu0 0.0
    %7937 = vmatprep.subr.mxu0 0.0
    %7938 = vmatpush2.msra.mxu0 0.0
    %7939 = vmatprep.subr.mxu0 0.0
    %7940 = vmatpush2.msra.mxu0 0.0
    %7941 = vmatprep.subr.mxu0 0.0
    %7942 = vmatpush2.msra.mxu0 0.0
    %7943 = vmatprep.subr.mxu0 0.0
    %7944 = vmatpush2.msra.mxu0 0.0
    %7945 = vmatprep.subr.mxu0 0.0
    %7946 = vmatpush2.msra.mxu0 0.0
    %7947 = vmatprep.subr.mxu0 0.0
    %7948 = vmatpush2.msra.mxu0 0.0
    %7949 = vmatprep.subr.mxu0 0.0
    %7950 = vmatpush2.msra.mxu0 0.0
    %7951 = vmatprep.subr.mxu0 0.0
    %7952 = vmatpush2.msra.mxu0 0.0
    %7953 = vmatprep.subr.mxu0 0.0
    %7954 = vmatpush2.msra.mxu0 0.0
    %7955 = vmatprep.subr.mxu0 0.0
    %7956 = vmatpush2.msra.mxu0 0.0
    %7957 = vmatprep.subr.mxu0 0.0
    %7958 = vmatpush2.msra.mxu0 0.0
    %7959 = vmatprep.mubr.f32.mxu0 0.0
    %7960 = vmatmul.mubr.f32.gmra.mxu0 %v7751
    %v7961 = vpop.f32.mrf.mxu0
    %v7962 = vadd.f32 0.0, %v7961
    %v7963 = vpop.f32.mrf.mxu0
    %v7964 = vadd.f32 0.0, %v7963
    %7965 = vdwg.mxu0
    %7966 = vmatprep.subr.mxu0 0.0
    %7967 = vmatpush1.msra.mxu0 0.0
    %7968 = vmatprep.subr.mxu0 0.0
    %7969 = vmatpush1.msra.mxu0 0.0
    %7970 = vmatprep.subr.mxu0 0.0
    %7971 = vmatpush1.msra.mxu0 0.0
    %7972 = vmatprep.subr.mxu0 0.0
    %7973 = vmatpush1.msra.mxu0 0.0
    %7974 = vmatprep.subr.mxu0 0.0
    %7975 = vmatpush1.msra.mxu0 0.0
    %7976 = vmatprep.subr.mxu0 0.0
    %7977 = vmatpush1.msra.mxu0 0.0
    %7978 = vmatprep.subr.mxu0 0.0
    %7979 = vmatpush1.msra.mxu0 0.0
    %7980 = vmatprep.subr.mxu0 0.0
    %7981 = vmatpush1.msra.mxu0 0.0
    %7982 = vmatprep.subr.mxu0 0.0
    %7983 = vmatpush1.msra.mxu0 0.0
    %7984 = vmatprep.subr.mxu0 0.0
    %7985 = vmatpush1.msra.mxu0 0.0
    %7986 = vmatprep.subr.mxu0 0.0
    %7987 = vmatpush1.msra.mxu0 0.0
    %7988 = vmatprep.subr.mxu0 0.0
    %7989 = vmatpush1.msra.mxu0 0.0
    %7990 = vmatprep.subr.mxu0 0.0
    %7991 = vmatpush1.msra.mxu0 0.0
    %7992 = vmatprep.subr.mxu0 0.0
    %7993 = vmatpush1.msra.mxu0 0.0
    %7994 = vmatprep.subr.mxu0 0.0
    %7995 = vmatpush1.msra.mxu0 0.0
    %7996 = vmatprep.subr.mxu0 %v7741
    %7997 = vmatpush1.msra.mxu0 %v7740
    %7998 = vmatprep.subr.mxu0 0.0
    %7999 = vmatpush2.msra.mxu0 0.0
    %8000 = vmatprep.subr.mxu0 0.0
    %8001 = vmatpush2.msra.mxu0 0.0
    %8002 = vmatprep.subr.mxu0 0.0
    %8003 = vmatpush2.msra.mxu0 0.0
    %8004 = vmatprep.subr.mxu0 0.0
    %8005 = vmatpush2.msra.mxu0 0.0
    %8006 = vmatprep.subr.mxu0 0.0
    %8007 = vmatpush2.msra.mxu0 0.0
    %8008 = vmatprep.subr.mxu0 0.0
    %8009 = vmatpush2.msra.mxu0 0.0
    %8010 = vmatprep.subr.mxu0 0.0
    %8011 = vmatpush2.msra.mxu0 0.0
    %8012 = vmatprep.subr.mxu0 0.0
    %8013 = vmatpush2.msra.mxu0 0.0
    %8014 = vmatprep.subr.mxu0 0.0
    %8015 = vmatpush2.msra.mxu0 0.0
    %8016 = vmatprep.subr.mxu0 0.0
    %8017 = vmatpush2.msra.mxu0 0.0
    %8018 = vmatprep.subr.mxu0 0.0
    %8019 = vmatpush2.msra.mxu0 0.0
    %8020 = vmatprep.subr.mxu0 0.0
    %8021 = vmatpush2.msra.mxu0 0.0
    %8022 = vmatprep.subr.mxu0 0.0
    %8023 = vmatpush2.msra.mxu0 0.0
    %8024 = vmatprep.subr.mxu0 0.0
    %8025 = vmatpush2.msra.mxu0 0.0
    %8026 = vmatprep.subr.mxu0 0.0
    %8027 = vmatpush2.msra.mxu0 0.0
    %8028 = vmatprep.subr.mxu0 0.0
    %8029 = vmatpush2.msra.mxu0 0.0
    %8030 = vmatprep.mubr.f32.mxu0 0.0
    %8031 = vmatmul.mubr.f32.gmra.mxu0 %v7751
    %v8032 = vpop.f32.mrf.mxu0
    %v8033 = vadd.f32 0.0, %v8032
    %v8034 = vpop.f32.mrf.mxu0
    %v8035 = vadd.f32 0.0, %v8034
    %8036 = vdwg.mxu0
    %v8037 = vadd.f32 %v7689, %v7820
    %v8038 = vadd.f32 %v7690, %v7822
    %v8039 = vadd.f32 %v7691, %v7891
    %v8040 = vadd.f32 %v7692, %v7893
    %v8041 = vadd.f32 %v7693, %v7962
    %v8042 = vadd.f32 %v7694, %v7964
    %v8043 = vadd.f32 %v7695, %v8033
    %v8044 = vadd.f32 %v7696, %v8035
    %v8045 = vld [vmem:[%s5 + $0x30] sm:$0xff]
    %8046 = vrot.lane.b32.xlu0 %v7698, 109
    %v8047 = vpop.permute.xlu0 %8046
    %8048 = vrot.lane.b32.xlu0 %v7699, 109
    %v8049 = vpop.permute.xlu0 %8048
    %8050 = vrot.lane.b32.xlu0 %v7700, 109
    %v8051 = vpop.permute.xlu0 %8050
    %8052 = vrot.lane.b32.xlu0 %v7701, 109
    %v8053 = vpop.permute.xlu0 %8052
    %8054 = vrot.lane.b32.xlu0 %v7702, 109
    %v8055 = vpop.permute.xlu0 %8054
    %8056 = vrot.lane.b32.xlu0 %v7703, 109
    %v8057 = vpop.permute.xlu0 %8056
    %8058 = vrot.lane.b32.xlu0 %v7704, 109
    %v8059 = vpop.permute.xlu0 %8058
    %8060 = vrot.lane.b32.xlu0 %v7705, 109
    %v8061 = vpop.permute.xlu0 %8060
    %8062 = vrot.lane.b32.xlu0 %v7706, 109
    %v8063 = vpop.permute.xlu0 %8062
    %v8064 = vsel %vm2081, %v8047, %v8049
    %v8065 = vsel %vm2081, %v8049, %v8051
    %v8066 = vsel %vm2081, %v8051, %v8053
    %v8067 = vsel %vm2081, %v8053, %v8055
    %v8068 = vsel %vm2081, %v8055, %v8057
    %v8069 = vsel %vm2081, %v8057, %v8059
    %v8070 = vsel %vm2081, %v8059, %v8061
    %v8071 = vsel %vm2081, %v8061, %v8063
    %v8081 = vsel %vm145, %v8045, 0
    %8083 = vmatprep.subr.mxu0 0.0
    %8084 = vmatpush1.msra.mxu0 0.0
    %8085 = vmatprep.subr.mxu0 0.0
    %8086 = vmatpush1.msra.mxu0 0.0
    %8087 = vmatprep.subr.mxu0 0.0
    %8088 = vmatpush1.msra.mxu0 0.0
    %8089 = vmatprep.subr.mxu0 0.0
    %8090 = vmatpush1.msra.mxu0 0.0
    %8091 = vmatprep.subr.mxu0 0.0
    %8092 = vmatpush1.msra.mxu0 0.0
    %8093 = vmatprep.subr.mxu0 0.0
    %8094 = vmatpush1.msra.mxu0 0.0
    %8095 = vmatprep.subr.mxu0 0.0
    %8096 = vmatpush1.msra.mxu0 0.0
    %8097 = vmatprep.subr.mxu0 0.0
    %8098 = vmatpush1.msra.mxu0 0.0
    %8099 = vmatprep.subr.mxu0 0.0
    %8100 = vmatpush1.msra.mxu0 0.0
    %8101 = vmatprep.subr.mxu0 0.0
    %8102 = vmatpush1.msra.mxu0 0.0
    %8103 = vmatprep.subr.mxu0 0.0
    %8104 = vmatpush1.msra.mxu0 0.0
    %8105 = vmatprep.subr.mxu0 0.0
    %8106 = vmatpush1.msra.mxu0 0.0
    %8107 = vmatprep.subr.mxu0 0.0
    %8108 = vmatpush1.msra.mxu0 0.0
    %8109 = vmatprep.subr.mxu0 0.0
    %8110 = vmatpush1.msra.mxu0 0.0
    %8111 = vmatprep.subr.mxu0 0.0
    %8112 = vmatpush1.msra.mxu0 0.0
    %8113 = vmatprep.subr.mxu0 %v8065
    %8114 = vmatpush1.msra.mxu0 %v8064
    %8115 = vmatprep.subr.mxu0 0.0
    %8116 = vmatpush2.msra.mxu0 0.0
    %8117 = vmatprep.subr.mxu0 0.0
    %8118 = vmatpush2.msra.mxu0 0.0
    %8119 = vmatprep.subr.mxu0 0.0
    %8120 = vmatpush2.msra.mxu0 0.0
    %8121 = vmatprep.subr.mxu0 0.0
    %8122 = vmatpush2.msra.mxu0 0.0
    %8123 = vmatprep.subr.mxu0 0.0
    %8124 = vmatpush2.msra.mxu0 0.0
    %8125 = vmatprep.subr.mxu0 0.0
    %8126 = vmatpush2.msra.mxu0 0.0
    %8127 = vmatprep.subr.mxu0 0.0
    %8128 = vmatpush2.msra.mxu0 0.0
    %8129 = vmatprep.subr.mxu0 0.0
    %8130 = vmatpush2.msra.mxu0 0.0
    %8131 = vmatprep.subr.mxu0 0.0
    %8132 = vmatpush2.msra.mxu0 0.0
    %8133 = vmatprep.subr.mxu0 0.0
    %8134 = vmatpush2.msra.mxu0 0.0
    %8135 = vmatprep.subr.mxu0 0.0
    %8136 = vmatpush2.msra.mxu0 0.0
    %8137 = vmatprep.subr.mxu0 0.0
    %8138 = vmatpush2.msra.mxu0 0.0
    %8139 = vmatprep.subr.mxu0 0.0
    %8140 = vmatpush2.msra.mxu0 0.0
    %8141 = vmatprep.subr.mxu0 0.0
    %8142 = vmatpush2.msra.mxu0 0.0
    %8143 = vmatprep.subr.mxu0 0.0
    %8144 = vmatpush2.msra.mxu0 0.0
    %8145 = vmatprep.subr.mxu0 0.0
    %8146 = vmatpush2.msra.mxu0 0.0
    %8147 = vmatprep.mubr.f32.mxu0 0.0
    %8148 = vmatmul.mubr.f32.gmra.mxu0 %v8081
    %v8149 = vpop.f32.mrf.mxu0
    %v8150 = vadd.f32 0.0, %v8149
    %v8151 = vpop.f32.mrf.mxu0
    %v8152 = vadd.f32 0.0, %v8151
    %8153 = vdwg.mxu0
    %8154 = vmatprep.subr.mxu0 0.0
    %8155 = vmatpush1.msra.mxu0 0.0
    %8156 = vmatprep.subr.mxu0 0.0
    %8157 = vmatpush1.msra.mxu0 0.0
    %8158 = vmatprep.subr.mxu0 0.0
    %8159 = vmatpush1.msra.mxu0 0.0
    %8160 = vmatprep.subr.mxu0 0.0
    %8161 = vmatpush1.msra.mxu0 0.0
    %8162 = vmatprep.subr.mxu0 0.0
    %8163 = vmatpush1.msra.mxu0 0.0
    %8164 = vmatprep.subr.mxu0 0.0
    %8165 = vmatpush1.msra.mxu0 0.0
    %8166 = vmatprep.subr.mxu0 0.0
    %8167 = vmatpush1.msra.mxu0 0.0
    %8168 = vmatprep.subr.mxu0 0.0
    %8169 = vmatpush1.msra.mxu0 0.0
    %8170 = vmatprep.subr.mxu0 0.0
    %8171 = vmatpush1.msra.mxu0 0.0
    %8172 = vmatprep.subr.mxu0 0.0
    %8173 = vmatpush1.msra.mxu0 0.0
    %8174 = vmatprep.subr.mxu0 0.0
    %8175 = vmatpush1.msra.mxu0 0.0
    %8176 = vmatprep.subr.mxu0 0.0
    %8177 = vmatpush1.msra.mxu0 0.0
    %8178 = vmatprep.subr.mxu0 0.0
    %8179 = vmatpush1.msra.mxu0 0.0
    %8180 = vmatprep.subr.mxu0 0.0
    %8181 = vmatpush1.msra.mxu0 0.0
    %8182 = vmatprep.subr.mxu0 0.0
    %8183 = vmatpush1.msra.mxu0 0.0
    %8184 = vmatprep.subr.mxu0 %v8067
    %8185 = vmatpush1.msra.mxu0 %v8066
    %8186 = vmatprep.subr.mxu0 0.0
    %8187 = vmatpush2.msra.mxu0 0.0
    %8188 = vmatprep.subr.mxu0 0.0
    %8189 = vmatpush2.msra.mxu0 0.0
    %8190 = vmatprep.subr.mxu0 0.0
    %8191 = vmatpush2.msra.mxu0 0.0
    %8192 = vmatprep.subr.mxu0 0.0
    %8193 = vmatpush2.msra.mxu0 0.0
    %8194 = vmatprep.subr.mxu0 0.0
    %8195 = vmatpush2.msra.mxu0 0.0
    %8196 = vmatprep.subr.mxu0 0.0
    %8197 = vmatpush2.msra.mxu0 0.0
    %8198 = vmatprep.subr.mxu0 0.0
    %8199 = vmatpush2.msra.mxu0 0.0
    %8200 = vmatprep.subr.mxu0 0.0
    %8201 = vmatpush2.msra.mxu0 0.0
    %8202 = vmatprep.subr.mxu0 0.0
    %8203 = vmatpush2.msra.mxu0 0.0
    %8204 = vmatprep.subr.mxu0 0.0
    %8205 = vmatpush2.msra.mxu0 0.0
    %8206 = vmatprep.subr.mxu0 0.0
    %8207 = vmatpush2.msra.mxu0 0.0
    %8208 = vmatprep.subr.mxu0 0.0
    %8209 = vmatpush2.msra.mxu0 0.0
    %8210 = vmatprep.subr.mxu0 0.0
    %8211 = vmatpush2.msra.mxu0 0.0
    %8212 = vmatprep.subr.mxu0 0.0
    %8213 = vmatpush2.msra.mxu0 0.0
    %8214 = vmatprep.subr.mxu0 0.0
    %8215 = vmatpush2.msra.mxu0 0.0
    %8216 = vmatprep.subr.mxu0 0.0
    %8217 = vmatpush2.msra.mxu0 0.0
    %8218 = vmatprep.mubr.f32.mxu0 0.0
    %8219 = vmatmul.mubr.f32.gmra.mxu0 %v8081
    %v8220 = vpop.f32.mrf.mxu0
    %v8221 = vadd.f32 0.0, %v8220
    %v8222 = vpop.f32.mrf.mxu0
    %v8223 = vadd.f32 0.0, %v8222
    %8224 = vdwg.mxu0
    %8225 = vmatprep.subr.mxu0 0.0
    %8226 = vmatpush1.msra.mxu0 0.0
    %8227 = vmatprep.subr.mxu0 0.0
    %8228 = vmatpush1.msra.mxu0 0.0
    %8229 = vmatprep.subr.mxu0 0.0
    %8230 = vmatpush1.msra.mxu0 0.0
    %8231 = vmatprep.subr.mxu0 0.0
    %8232 = vmatpush1.msra.mxu0 0.0
    %8233 = vmatprep.subr.mxu0 0.0
    %8234 = vmatpush1.msra.mxu0 0.0
    %8235 = vmatprep.subr.mxu0 0.0
    %8236 = vmatpush1.msra.mxu0 0.0
    %8237 = vmatprep.subr.mxu0 0.0
    %8238 = vmatpush1.msra.mxu0 0.0
    %8239 = vmatprep.subr.mxu0 0.0
    %8240 = vmatpush1.msra.mxu0 0.0
    %8241 = vmatprep.subr.mxu0 0.0
    %8242 = vmatpush1.msra.mxu0 0.0
    %8243 = vmatprep.subr.mxu0 0.0
    %8244 = vmatpush1.msra.mxu0 0.0
    %8245 = vmatprep.subr.mxu0 0.0
    %8246 = vmatpush1.msra.mxu0 0.0
    %8247 = vmatprep.subr.mxu0 0.0
    %8248 = vmatpush1.msra.mxu0 0.0
    %8249 = vmatprep.subr.mxu0 0.0
    %8250 = vmatpush1.msra.mxu0 0.0
    %8251 = vmatprep.subr.mxu0 0.0
    %8252 = vmatpush1.msra.mxu0 0.0
    %8253 = vmatprep.subr.mxu0 0.0
    %8254 = vmatpush1.msra.mxu0 0.0
    %8255 = vmatprep.subr.mxu0 %v8069
    %8256 = vmatpush1.msra.mxu0 %v8068
    %8257 = vmatprep.subr.mxu0 0.0
    %8258 = vmatpush2.msra.mxu0 0.0
    %8259 = vmatprep.subr.mxu0 0.0
    %8260 = vmatpush2.msra.mxu0 0.0
    %8261 = vmatprep.subr.mxu0 0.0
    %8262 = vmatpush2.msra.mxu0 0.0
    %8263 = vmatprep.subr.mxu0 0.0
    %8264 = vmatpush2.msra.mxu0 0.0
    %8265 = vmatprep.subr.mxu0 0.0
    %8266 = vmatpush2.msra.mxu0 0.0
    %8267 = vmatprep.subr.mxu0 0.0
    %8268 = vmatpush2.msra.mxu0 0.0
    %8269 = vmatprep.subr.mxu0 0.0
    %8270 = vmatpush2.msra.mxu0 0.0
    %8271 = vmatprep.subr.mxu0 0.0
    %8272 = vmatpush2.msra.mxu0 0.0
    %8273 = vmatprep.subr.mxu0 0.0
    %8274 = vmatpush2.msra.mxu0 0.0
    %8275 = vmatprep.subr.mxu0 0.0
    %8276 = vmatpush2.msra.mxu0 0.0
    %8277 = vmatprep.subr.mxu0 0.0
    %8278 = vmatpush2.msra.mxu0 0.0
    %8279 = vmatprep.subr.mxu0 0.0
    %8280 = vmatpush2.msra.mxu0 0.0
    %8281 = vmatprep.subr.mxu0 0.0
    %8282 = vmatpush2.msra.mxu0 0.0
    %8283 = vmatprep.subr.mxu0 0.0
    %8284 = vmatpush2.msra.mxu0 0.0
    %8285 = vmatprep.subr.mxu0 0.0
    %8286 = vmatpush2.msra.mxu0 0.0
    %8287 = vmatprep.subr.mxu0 0.0
    %8288 = vmatpush2.msra.mxu0 0.0
    %8289 = vmatprep.mubr.f32.mxu0 0.0
    %8290 = vmatmul.mubr.f32.gmra.mxu0 %v8081
    %v8291 = vpop.f32.mrf.mxu0
    %v8292 = vadd.f32 0.0, %v8291
    %v8293 = vpop.f32.mrf.mxu0
    %v8294 = vadd.f32 0.0, %v8293
    %8295 = vdwg.mxu0
    %8296 = vmatprep.subr.mxu0 0.0
    %8297 = vmatpush1.msra.mxu0 0.0
    %8298 = vmatprep.subr.mxu0 0.0
    %8299 = vmatpush1.msra.mxu0 0.0
    %8300 = vmatprep.subr.mxu0 0.0
    %8301 = vmatpush1.msra.mxu0 0.0
    %8302 = vmatprep.subr.mxu0 0.0
    %8303 = vmatpush1.msra.mxu0 0.0
    %8304 = vmatprep.subr.mxu0 0.0
    %8305 = vmatpush1.msra.mxu0 0.0
    %8306 = vmatprep.subr.mxu0 0.0
    %8307 = vmatpush1.msra.mxu0 0.0
    %8308 = vmatprep.subr.mxu0 0.0
    %8309 = vmatpush1.msra.mxu0 0.0
    %8310 = vmatprep.subr.mxu0 0.0
    %8311 = vmatpush1.msra.mxu0 0.0
    %8312 = vmatprep.subr.mxu0 0.0
    %8313 = vmatpush1.msra.mxu0 0.0
    %8314 = vmatprep.subr.mxu0 0.0
    %8315 = vmatpush1.msra.mxu0 0.0
    %8316 = vmatprep.subr.mxu0 0.0
    %8317 = vmatpush1.msra.mxu0 0.0
    %8318 = vmatprep.subr.mxu0 0.0
    %8319 = vmatpush1.msra.mxu0 0.0
    %8320 = vmatprep.subr.mxu0 0.0
    %8321 = vmatpush1.msra.mxu0 0.0
    %8322 = vmatprep.subr.mxu0 0.0
    %8323 = vmatpush1.msra.mxu0 0.0
    %8324 = vmatprep.subr.mxu0 0.0
    %8325 = vmatpush1.msra.mxu0 0.0
    %8326 = vmatprep.subr.mxu0 %v8071
    %8327 = vmatpush1.msra.mxu0 %v8070
    %8328 = vmatprep.subr.mxu0 0.0
    %8329 = vmatpush2.msra.mxu0 0.0
    %8330 = vmatprep.subr.mxu0 0.0
    %8331 = vmatpush2.msra.mxu0 0.0
    %8332 = vmatprep.subr.mxu0 0.0
    %8333 = vmatpush2.msra.mxu0 0.0
    %8334 = vmatprep.subr.mxu0 0.0
    %8335 = vmatpush2.msra.mxu0 0.0
    %8336 = vmatprep.subr.mxu0 0.0
    %8337 = vmatpush2.msra.mxu0 0.0
    %8338 = vmatprep.subr.mxu0 0.0
    %8339 = vmatpush2.msra.mxu0 0.0
    %8340 = vmatprep.subr.mxu0 0.0
    %8341 = vmatpush2.msra.mxu0 0.0
    %8342 = vmatprep.subr.mxu0 0.0
    %8343 = vmatpush2.msra.mxu0 0.0
    %8344 = vmatprep.subr.mxu0 0.0
    %8345 = vmatpush2.msra.mxu0 0.0
    %8346 = vmatprep.subr.mxu0 0.0
    %8347 = vmatpush2.msra.mxu0 0.0
    %8348 = vmatprep.subr.mxu0 0.0
    %8349 = vmatpush2.msra.mxu0 0.0
    %8350 = vmatprep.subr.mxu0 0.0
    %8351 = vmatpush2.msra.mxu0 0.0
    %8352 = vmatprep.subr.mxu0 0.0
    %8353 = vmatpush2.msra.mxu0 0.0
    %8354 = vmatprep.subr.mxu0 0.0
    %8355 = vmatpush2.msra.mxu0 0.0
    %8356 = vmatprep.subr.mxu0 0.0
    %8357 = vmatpush2.msra.mxu0 0.0
    %8358 = vmatprep.subr.mxu0 0.0
    %8359 = vmatpush2.msra.mxu0 0.0
    %8360 = vmatprep.mubr.f32.mxu0 0.0
    %8361 = vmatmul.mubr.f32.gmra.mxu0 %v8081
    %v8362 = vpop.f32.mrf.mxu0
    %v8363 = vadd.f32 0.0, %v8362
    %v8364 = vpop.f32.mrf.mxu0
    %v8365 = vadd.f32 0.0, %v8364
    %8366 = vdwg.mxu0
    %v8367 = vadd.f32 %v8037, %v8150
    %v8368 = vadd.f32 %v8038, %v8152
    %v8369 = vadd.f32 %v8039, %v8221
    %v8370 = vadd.f32 %v8040, %v8223
    %v8371 = vadd.f32 %v8041, %v8292
    %v8372 = vadd.f32 %v8042, %v8294
    %v8373 = vadd.f32 %v8043, %v8363
    %v8374 = vadd.f32 %v8044, %v8365
    %v8375 = vld [vmem:[%s5 + $0x38] sm:$0xff]
    %8376 = vrot.lane.b32.xlu0 %v7698, 108
    %v8377 = vpop.permute.xlu0 %8376
    %8378 = vrot.lane.b32.xlu0 %v7699, 108
    %v8379 = vpop.permute.xlu0 %8378
    %8380 = vrot.lane.b32.xlu0 %v7700, 108
    %v8381 = vpop.permute.xlu0 %8380
    %8382 = vrot.lane.b32.xlu0 %v7701, 108
    %v8383 = vpop.permute.xlu0 %8382
    %8384 = vrot.lane.b32.xlu0 %v7702, 108
    %v8385 = vpop.permute.xlu0 %8384
    %8386 = vrot.lane.b32.xlu0 %v7703, 108
    %v8387 = vpop.permute.xlu0 %8386
    %8388 = vrot.lane.b32.xlu0 %v7704, 108
    %v8389 = vpop.permute.xlu0 %8388
    %8390 = vrot.lane.b32.xlu0 %v7705, 108
    %v8391 = vpop.permute.xlu0 %8390
    %8392 = vrot.lane.b32.xlu0 %v7706, 108
    %v8393 = vpop.permute.xlu0 %8392
    %v8394 = vsel %vm2412, %v8377, %v8379
    %v8395 = vsel %vm2412, %v8379, %v8381
    %v8396 = vsel %vm2412, %v8381, %v8383
    %v8397 = vsel %vm2412, %v8383, %v8385
    %v8398 = vsel %vm2412, %v8385, %v8387
    %v8399 = vsel %vm2412, %v8387, %v8389
    %v8400 = vsel %vm2412, %v8389, %v8391
    %v8401 = vsel %vm2412, %v8391, %v8393
    %v8411 = vsel %vm145, %v8375, 0
    %8413 = vmatprep.subr.mxu0 0.0
    %8414 = vmatpush1.msra.mxu0 0.0
    %8415 = vmatprep.subr.mxu0 0.0
    %8416 = vmatpush1.msra.mxu0 0.0
    %8417 = vmatprep.subr.mxu0 0.0
    %8418 = vmatpush1.msra.mxu0 0.0
    %8419 = vmatprep.subr.mxu0 0.0
    %8420 = vmatpush1.msra.mxu0 0.0
    %8421 = vmatprep.subr.mxu0 0.0
    %8422 = vmatpush1.msra.mxu0 0.0
    %8423 = vmatprep.subr.mxu0 0.0
    %8424 = vmatpush1.msra.mxu0 0.0
    %8425 = vmatprep.subr.mxu0 0.0
    %8426 = vmatpush1.msra.mxu0 0.0
    %8427 = vmatprep.subr.mxu0 0.0
    %8428 = vmatpush1.msra.mxu0 0.0
    %8429 = vmatprep.subr.mxu0 0.0
    %8430 = vmatpush1.msra.mxu0 0.0
    %8431 = vmatprep.subr.mxu0 0.0
    %8432 = vmatpush1.msra.mxu0 0.0
    %8433 = vmatprep.subr.mxu0 0.0
    %8434 = vmatpush1.msra.mxu0 0.0
    %8435 = vmatprep.subr.mxu0 0.0
    %8436 = vmatpush1.msra.mxu0 0.0
    %8437 = vmatprep.subr.mxu0 0.0
    %8438 = vmatpush1.msra.mxu0 0.0
    %8439 = vmatprep.subr.mxu0 0.0
    %8440 = vmatpush1.msra.mxu0 0.0
    %8441 = vmatprep.subr.mxu0 0.0
    %8442 = vmatpush1.msra.mxu0 0.0
    %8443 = vmatprep.subr.mxu0 %v8395
    %8444 = vmatpush1.msra.mxu0 %v8394
    %8445 = vmatprep.subr.mxu0 0.0
    %8446 = vmatpush2.msra.mxu0 0.0
    %8447 = vmatprep.subr.mxu0 0.0
    %8448 = vmatpush2.msra.mxu0 0.0
    %8449 = vmatprep.subr.mxu0 0.0
    %8450 = vmatpush2.msra.mxu0 0.0
    %8451 = vmatprep.subr.mxu0 0.0
    %8452 = vmatpush2.msra.mxu0 0.0
    %8453 = vmatprep.subr.mxu0 0.0
    %8454 = vmatpush2.msra.mxu0 0.0
    %8455 = vmatprep.subr.mxu0 0.0
    %8456 = vmatpush2.msra.mxu0 0.0
    %8457 = vmatprep.subr.mxu0 0.0
    %8458 = vmatpush2.msra.mxu0 0.0
    %8459 = vmatprep.subr.mxu0 0.0
    %8460 = vmatpush2.msra.mxu0 0.0
    %8461 = vmatprep.subr.mxu0 0.0
    %8462 = vmatpush2.msra.mxu0 0.0
    %8463 = vmatprep.subr.mxu0 0.0
    %8464 = vmatpush2.msra.mxu0 0.0
    %8465 = vmatprep.subr.mxu0 0.0
    %8466 = vmatpush2.msra.mxu0 0.0
    %8467 = vmatprep.subr.mxu0 0.0
    %8468 = vmatpush2.msra.mxu0 0.0
    %8469 = vmatprep.subr.mxu0 0.0
    %8470 = vmatpush2.msra.mxu0 0.0
    %8471 = vmatprep.subr.mxu0 0.0
    %8472 = vmatpush2.msra.mxu0 0.0
    %8473 = vmatprep.subr.mxu0 0.0
    %8474 = vmatpush2.msra.mxu0 0.0
    %8475 = vmatprep.subr.mxu0 0.0
    %8476 = vmatpush2.msra.mxu0 0.0
    %8477 = vmatprep.mubr.f32.mxu0 0.0
    %8478 = vmatmul.mubr.f32.gmra.mxu0 %v8411
    %v8479 = vpop.f32.mrf.mxu0
    %v8480 = vadd.f32 0.0, %v8479
    %v8481 = vpop.f32.mrf.mxu0
    %v8482 = vadd.f32 0.0, %v8481
    %8483 = vdwg.mxu0
    %8484 = vmatprep.subr.mxu0 0.0
    %8485 = vmatpush1.msra.mxu0 0.0
    %8486 = vmatprep.subr.mxu0 0.0
    %8487 = vmatpush1.msra.mxu0 0.0
    %8488 = vmatprep.subr.mxu0 0.0
    %8489 = vmatpush1.msra.mxu0 0.0
    %8490 = vmatprep.subr.mxu0 0.0
    %8491 = vmatpush1.msra.mxu0 0.0
    %8492 = vmatprep.subr.mxu0 0.0
    %8493 = vmatpush1.msra.mxu0 0.0
    %8494 = vmatprep.subr.mxu0 0.0
    %8495 = vmatpush1.msra.mxu0 0.0
    %8496 = vmatprep.subr.mxu0 0.0
    %8497 = vmatpush1.msra.mxu0 0.0
    %8498 = vmatprep.subr.mxu0 0.0
    %8499 = vmatpush1.msra.mxu0 0.0
    %8500 = vmatprep.subr.mxu0 0.0
    %8501 = vmatpush1.msra.mxu0 0.0
    %8502 = vmatprep.subr.mxu0 0.0
    %8503 = vmatpush1.msra.mxu0 0.0
    %8504 = vmatprep.subr.mxu0 0.0
    %8505 = vmatpush1.msra.mxu0 0.0
    %8506 = vmatprep.subr.mxu0 0.0
    %8507 = vmatpush1.msra.mxu0 0.0
    %8508 = vmatprep.subr.mxu0 0.0
    %8509 = vmatpush1.msra.mxu0 0.0
    %8510 = vmatprep.subr.mxu0 0.0
    %8511 = vmatpush1.msra.mxu0 0.0
    %8512 = vmatprep.subr.mxu0 0.0
    %8513 = vmatpush1.msra.mxu0 0.0
    %8514 = vmatprep.subr.mxu0 %v8397
    %8515 = vmatpush1.msra.mxu0 %v8396
    %8516 = vmatprep.subr.mxu0 0.0
    %8517 = vmatpush2.msra.mxu0 0.0
    %8518 = vmatprep.subr.mxu0 0.0
    %8519 = vmatpush2.msra.mxu0 0.0
    %8520 = vmatprep.subr.mxu0 0.0
    %8521 = vmatpush2.msra.mxu0 0.0
    %8522 = vmatprep.subr.mxu0 0.0
    %8523 = vmatpush2.msra.mxu0 0.0
    %8524 = vmatprep.subr.mxu0 0.0
    %8525 = vmatpush2.msra.mxu0 0.0
    %8526 = vmatprep.subr.mxu0 0.0
    %8527 = vmatpush2.msra.mxu0 0.0
    %8528 = vmatprep.subr.mxu0 0.0
    %8529 = vmatpush2.msra.mxu0 0.0
    %8530 = vmatprep.subr.mxu0 0.0
    %8531 = vmatpush2.msra.mxu0 0.0
    %8532 = vmatprep.subr.mxu0 0.0
    %8533 = vmatpush2.msra.mxu0 0.0
    %8534 = vmatprep.subr.mxu0 0.0
    %8535 = vmatpush2.msra.mxu0 0.0
    %8536 = vmatprep.subr.mxu0 0.0
    %8537 = vmatpush2.msra.mxu0 0.0
    %8538 = vmatprep.subr.mxu0 0.0
    %8539 = vmatpush2.msra.mxu0 0.0
    %8540 = vmatprep.subr.mxu0 0.0
    %8541 = vmatpush2.msra.mxu0 0.0
    %8542 = vmatprep.subr.mxu0 0.0
    %8543 = vmatpush2.msra.mxu0 0.0
    %8544 = vmatprep.subr.mxu0 0.0
    %8545 = vmatpush2.msra.mxu0 0.0
    %8546 = vmatprep.subr.mxu0 0.0
    %8547 = vmatpush2.msra.mxu0 0.0
    %8548 = vmatprep.mubr.f32.mxu0 0.0
    %8549 = vmatmul.mubr.f32.gmra.mxu0 %v8411
    %v8550 = vpop.f32.mrf.mxu0
    %v8551 = vadd.f32 0.0, %v8550
    %v8552 = vpop.f32.mrf.mxu0
    %v8553 = vadd.f32 0.0, %v8552
    %8554 = vdwg.mxu0
    %8555 = vmatprep.subr.mxu0 0.0
    %8556 = vmatpush1.msra.mxu0 0.0
    %8557 = vmatprep.subr.mxu0 0.0
    %8558 = vmatpush1.msra.mxu0 0.0
    %8559 = vmatprep.subr.mxu0 0.0
    %8560 = vmatpush1.msra.mxu0 0.0
    %8561 = vmatprep.subr.mxu0 0.0
    %8562 = vmatpush1.msra.mxu0 0.0
    %8563 = vmatprep.subr.mxu0 0.0
    %8564 = vmatpush1.msra.mxu0 0.0
    %8565 = vmatprep.subr.mxu0 0.0
    %8566 = vmatpush1.msra.mxu0 0.0
    %8567 = vmatprep.subr.mxu0 0.0
    %8568 = vmatpush1.msra.mxu0 0.0
    %8569 = vmatprep.subr.mxu0 0.0
    %8570 = vmatpush1.msra.mxu0 0.0
    %8571 = vmatprep.subr.mxu0 0.0
    %8572 = vmatpush1.msra.mxu0 0.0
    %8573 = vmatprep.subr.mxu0 0.0
    %8574 = vmatpush1.msra.mxu0 0.0
    %8575 = vmatprep.subr.mxu0 0.0
    %8576 = vmatpush1.msra.mxu0 0.0
    %8577 = vmatprep.subr.mxu0 0.0
    %8578 = vmatpush1.msra.mxu0 0.0
    %8579 = vmatprep.subr.mxu0 0.0
    %8580 = vmatpush1.msra.mxu0 0.0
    %8581 = vmatprep.subr.mxu0 0.0
    %8582 = vmatpush1.msra.mxu0 0.0
    %8583 = vmatprep.subr.mxu0 0.0
    %8584 = vmatpush1.msra.mxu0 0.0
    %8585 = vmatprep.subr.mxu0 %v8399
    %8586 = vmatpush1.msra.mxu0 %v8398
    %8587 = vmatprep.subr.mxu0 0.0
    %8588 = vmatpush2.msra.mxu0 0.0
    %8589 = vmatprep.subr.mxu0 0.0
    %8590 = vmatpush2.msra.mxu0 0.0
    %8591 = vmatprep.subr.mxu0 0.0
    %8592 = vmatpush2.msra.mxu0 0.0
    %8593 = vmatprep.subr.mxu0 0.0
    %8594 = vmatpush2.msra.mxu0 0.0
    %8595 = vmatprep.subr.mxu0 0.0
    %8596 = vmatpush2.msra.mxu0 0.0
    %8597 = vmatprep.subr.mxu0 0.0
    %8598 = vmatpush2.msra.mxu0 0.0
    %8599 = vmatprep.subr.mxu0 0.0
    %8600 = vmatpush2.msra.mxu0 0.0
    %8601 = vmatprep.subr.mxu0 0.0
    %8602 = vmatpush2.msra.mxu0 0.0
    %8603 = vmatprep.subr.mxu0 0.0
    %8604 = vmatpush2.msra.mxu0 0.0
    %8605 = vmatprep.subr.mxu0 0.0
    %8606 = vmatpush2.msra.mxu0 0.0
    %8607 = vmatprep.subr.mxu0 0.0
    %8608 = vmatpush2.msra.mxu0 0.0
    %8609 = vmatprep.subr.mxu0 0.0
    %8610 = vmatpush2.msra.mxu0 0.0
    %8611 = vmatprep.subr.mxu0 0.0
    %8612 = vmatpush2.msra.mxu0 0.0
    %8613 = vmatprep.subr.mxu0 0.0
    %8614 = vmatpush2.msra.mxu0 0.0
    %8615 = vmatprep.subr.mxu0 0.0
    %8616 = vmatpush2.msra.mxu0 0.0
    %8617 = vmatprep.subr.mxu0 0.0
    %8618 = vmatpush2.msra.mxu0 0.0
    %8619 = vmatprep.mubr.f32.mxu0 0.0
    %8620 = vmatmul.mubr.f32.gmra.mxu0 %v8411
    %v8621 = vpop.f32.mrf.mxu0
    %v8622 = vadd.f32 0.0, %v8621
    %v8623 = vpop.f32.mrf.mxu0
    %v8624 = vadd.f32 0.0, %v8623
    %8625 = vdwg.mxu0
    %8626 = vmatprep.subr.mxu0 0.0
    %8627 = vmatpush1.msra.mxu0 0.0
    %8628 = vmatprep.subr.mxu0 0.0
    %8629 = vmatpush1.msra.mxu0 0.0
    %8630 = vmatprep.subr.mxu0 0.0
    %8631 = vmatpush1.msra.mxu0 0.0
    %8632 = vmatprep.subr.mxu0 0.0
    %8633 = vmatpush1.msra.mxu0 0.0
    %8634 = vmatprep.subr.mxu0 0.0
    %8635 = vmatpush1.msra.mxu0 0.0
    %8636 = vmatprep.subr.mxu0 0.0
    %8637 = vmatpush1.msra.mxu0 0.0
    %8638 = vmatprep.subr.mxu0 0.0
    %8639 = vmatpush1.msra.mxu0 0.0
    %8640 = vmatprep.subr.mxu0 0.0
    %8641 = vmatpush1.msra.mxu0 0.0
    %8642 = vmatprep.subr.mxu0 0.0
    %8643 = vmatpush1.msra.mxu0 0.0
    %8644 = vmatprep.subr.mxu0 0.0
    %8645 = vmatpush1.msra.mxu0 0.0
    %8646 = vmatprep.subr.mxu0 0.0
    %8647 = vmatpush1.msra.mxu0 0.0
    %8648 = vmatprep.subr.mxu0 0.0
    %8649 = vmatpush1.msra.mxu0 0.0
    %8650 = vmatprep.subr.mxu0 0.0
    %8651 = vmatpush1.msra.mxu0 0.0
    %8652 = vmatprep.subr.mxu0 0.0
    %8653 = vmatpush1.msra.mxu0 0.0
    %8654 = vmatprep.subr.mxu0 0.0
    %8655 = vmatpush1.msra.mxu0 0.0
    %8656 = vmatprep.subr.mxu0 %v8401
    %8657 = vmatpush1.msra.mxu0 %v8400
    %8658 = vmatprep.subr.mxu0 0.0
    %8659 = vmatpush2.msra.mxu0 0.0
    %8660 = vmatprep.subr.mxu0 0.0
    %8661 = vmatpush2.msra.mxu0 0.0
    %8662 = vmatprep.subr.mxu0 0.0
    %8663 = vmatpush2.msra.mxu0 0.0
    %8664 = vmatprep.subr.mxu0 0.0
    %8665 = vmatpush2.msra.mxu0 0.0
    %8666 = vmatprep.subr.mxu0 0.0
    %8667 = vmatpush2.msra.mxu0 0.0
    %8668 = vmatprep.subr.mxu0 0.0
    %8669 = vmatpush2.msra.mxu0 0.0
    %8670 = vmatprep.subr.mxu0 0.0
    %8671 = vmatpush2.msra.mxu0 0.0
    %8672 = vmatprep.subr.mxu0 0.0
    %8673 = vmatpush2.msra.mxu0 0.0
    %8674 = vmatprep.subr.mxu0 0.0
    %8675 = vmatpush2.msra.mxu0 0.0
    %8676 = vmatprep.subr.mxu0 0.0
    %8677 = vmatpush2.msra.mxu0 0.0
    %8678 = vmatprep.subr.mxu0 0.0
    %8679 = vmatpush2.msra.mxu0 0.0
    %8680 = vmatprep.subr.mxu0 0.0
    %8681 = vmatpush2.msra.mxu0 0.0
    %8682 = vmatprep.subr.mxu0 0.0
    %8683 = vmatpush2.msra.mxu0 0.0
    %8684 = vmatprep.subr.mxu0 0.0
    %8685 = vmatpush2.msra.mxu0 0.0
    %8686 = vmatprep.subr.mxu0 0.0
    %8687 = vmatpush2.msra.mxu0 0.0
    %8688 = vmatprep.subr.mxu0 0.0
    %8689 = vmatpush2.msra.mxu0 0.0
    %8690 = vmatprep.mubr.f32.mxu0 0.0
    %8691 = vmatmul.mubr.f32.gmra.mxu0 %v8411
    %v8692 = vpop.f32.mrf.mxu0
    %v8693 = vadd.f32 0.0, %v8692
    %v8694 = vpop.f32.mrf.mxu0
    %v8695 = vadd.f32 0.0, %v8694
    %8696 = vdwg.mxu0
    %v8697 = vadd.f32 %v8367, %v8480
    %v8698 = vadd.f32 %v8368, %v8482
    %v8699 = vadd.f32 %v8369, %v8551
    %v8700 = vadd.f32 %v8370, %v8553
    %v8701 = vadd.f32 %v8371, %v8622
    %v8702 = vadd.f32 %v8372, %v8624
    %v8703 = vadd.f32 %v8373, %v8693
    %v8704 = vadd.f32 %v8374, %v8695
    %v8705 = vld [vmem:[%s5 + $0x40] sm:$0xff]
    %8706 = vrot.lane.b32.xlu0 %v7698, 107
    %v8707 = vpop.permute.xlu0 %8706
    %8708 = vrot.lane.b32.xlu0 %v7699, 107
    %v8709 = vpop.permute.xlu0 %8708
    %8710 = vrot.lane.b32.xlu0 %v7700, 107
    %v8711 = vpop.permute.xlu0 %8710
    %8712 = vrot.lane.b32.xlu0 %v7701, 107
    %v8713 = vpop.permute.xlu0 %8712
    %8714 = vrot.lane.b32.xlu0 %v7702, 107
    %v8715 = vpop.permute.xlu0 %8714
    %8716 = vrot.lane.b32.xlu0 %v7703, 107
    %v8717 = vpop.permute.xlu0 %8716
    %8718 = vrot.lane.b32.xlu0 %v7704, 107
    %v8719 = vpop.permute.xlu0 %8718
    %8720 = vrot.lane.b32.xlu0 %v7705, 107
    %v8721 = vpop.permute.xlu0 %8720
    %8722 = vrot.lane.b32.xlu0 %v7706, 107
    %v8723 = vpop.permute.xlu0 %8722
    %v8724 = vsel %vm2743, %v8707, %v8709
    %v8725 = vsel %vm2743, %v8709, %v8711
    %v8726 = vsel %vm2743, %v8711, %v8713
    %v8727 = vsel %vm2743, %v8713, %v8715
    %v8728 = vsel %vm2743, %v8715, %v8717
    %v8729 = vsel %vm2743, %v8717, %v8719
    %v8730 = vsel %vm2743, %v8719, %v8721
    %v8731 = vsel %vm2743, %v8721, %v8723
    %v8741 = vsel %vm145, %v8705, 0
    %8743 = vmatprep.subr.mxu0 0.0
    %8744 = vmatpush1.msra.mxu0 0.0
    %8745 = vmatprep.subr.mxu0 0.0
    %8746 = vmatpush1.msra.mxu0 0.0
    %8747 = vmatprep.subr.mxu0 0.0
    %8748 = vmatpush1.msra.mxu0 0.0
    %8749 = vmatprep.subr.mxu0 0.0
    %8750 = vmatpush1.msra.mxu0 0.0
    %8751 = vmatprep.subr.mxu0 0.0
    %8752 = vmatpush1.msra.mxu0 0.0
    %8753 = vmatprep.subr.mxu0 0.0
    %8754 = vmatpush1.msra.mxu0 0.0
    %8755 = vmatprep.subr.mxu0 0.0
    %8756 = vmatpush1.msra.mxu0 0.0
    %8757 = vmatprep.subr.mxu0 0.0
    %8758 = vmatpush1.msra.mxu0 0.0
    %8759 = vmatprep.subr.mxu0 0.0
    %8760 = vmatpush1.msra.mxu0 0.0
    %8761 = vmatprep.subr.mxu0 0.0
    %8762 = vmatpush1.msra.mxu0 0.0
    %8763 = vmatprep.subr.mxu0 0.0
    %8764 = vmatpush1.msra.mxu0 0.0
    %8765 = vmatprep.subr.mxu0 0.0
    %8766 = vmatpush1.msra.mxu0 0.0
    %8767 = vmatprep.subr.mxu0 0.0
    %8768 = vmatpush1.msra.mxu0 0.0
    %8769 = vmatprep.subr.mxu0 0.0
    %8770 = vmatpush1.msra.mxu0 0.0
    %8771 = vmatprep.subr.mxu0 0.0
    %8772 = vmatpush1.msra.mxu0 0.0
    %8773 = vmatprep.subr.mxu0 %v8725
    %8774 = vmatpush1.msra.mxu0 %v8724
    %8775 = vmatprep.subr.mxu0 0.0
    %8776 = vmatpush2.msra.mxu0 0.0
    %8777 = vmatprep.subr.mxu0 0.0
    %8778 = vmatpush2.msra.mxu0 0.0
    %8779 = vmatprep.subr.mxu0 0.0
    %8780 = vmatpush2.msra.mxu0 0.0
    %8781 = vmatprep.subr.mxu0 0.0
    %8782 = vmatpush2.msra.mxu0 0.0
    %8783 = vmatprep.subr.mxu0 0.0
    %8784 = vmatpush2.msra.mxu0 0.0
    %8785 = vmatprep.subr.mxu0 0.0
    %8786 = vmatpush2.msra.mxu0 0.0
    %8787 = vmatprep.subr.mxu0 0.0
    %8788 = vmatpush2.msra.mxu0 0.0
    %8789 = vmatprep.subr.mxu0 0.0
    %8790 = vmatpush2.msra.mxu0 0.0
    %8791 = vmatprep.subr.mxu0 0.0
    %8792 = vmatpush2.msra.mxu0 0.0
    %8793 = vmatprep.subr.mxu0 0.0
    %8794 = vmatpush2.msra.mxu0 0.0
    %8795 = vmatprep.subr.mxu0 0.0
    %8796 = vmatpush2.msra.mxu0 0.0
    %8797 = vmatprep.subr.mxu0 0.0
    %8798 = vmatpush2.msra.mxu0 0.0
    %8799 = vmatprep.subr.mxu0 0.0
    %8800 = vmatpush2.msra.mxu0 0.0
    %8801 = vmatprep.subr.mxu0 0.0
    %8802 = vmatpush2.msra.mxu0 0.0
    %8803 = vmatprep.subr.mxu0 0.0
    %8804 = vmatpush2.msra.mxu0 0.0
    %8805 = vmatprep.subr.mxu0 0.0
    %8806 = vmatpush2.msra.mxu0 0.0
    %8807 = vmatprep.mubr.f32.mxu0 0.0
    %8808 = vmatmul.mubr.f32.gmra.mxu0 %v8741
    %v8809 = vpop.f32.mrf.mxu0
    %v8810 = vadd.f32 0.0, %v8809
    %v8811 = vpop.f32.mrf.mxu0
    %v8812 = vadd.f32 0.0, %v8811
    %8813 = vdwg.mxu0
    %8814 = vmatprep.subr.mxu0 0.0
    %8815 = vmatpush1.msra.mxu0 0.0
    %8816 = vmatprep.subr.mxu0 0.0
    %8817 = vmatpush1.msra.mxu0 0.0
    %8818 = vmatprep.subr.mxu0 0.0
    %8819 = vmatpush1.msra.mxu0 0.0
    %8820 = vmatprep.subr.mxu0 0.0
    %8821 = vmatpush1.msra.mxu0 0.0
    %8822 = vmatprep.subr.mxu0 0.0
    %8823 = vmatpush1.msra.mxu0 0.0
    %8824 = vmatprep.subr.mxu0 0.0
    %8825 = vmatpush1.msra.mxu0 0.0
    %8826 = vmatprep.subr.mxu0 0.0
    %8827 = vmatpush1.msra.mxu0 0.0
    %8828 = vmatprep.subr.mxu0 0.0
    %8829 = vmatpush1.msra.mxu0 0.0
    %8830 = vmatprep.subr.mxu0 0.0
    %8831 = vmatpush1.msra.mxu0 0.0
    %8832 = vmatprep.subr.mxu0 0.0
    %8833 = vmatpush1.msra.mxu0 0.0
    %8834 = vmatprep.subr.mxu0 0.0
    %8835 = vmatpush1.msra.mxu0 0.0
    %8836 = vmatprep.subr.mxu0 0.0
    %8837 = vmatpush1.msra.mxu0 0.0
    %8838 = vmatprep.subr.mxu0 0.0
    %8839 = vmatpush1.msra.mxu0 0.0
    %8840 = vmatprep.subr.mxu0 0.0
    %8841 = vmatpush1.msra.mxu0 0.0
    %8842 = vmatprep.subr.mxu0 0.0
    %8843 = vmatpush1.msra.mxu0 0.0
    %8844 = vmatprep.subr.mxu0 %v8727
    %8845 = vmatpush1.msra.mxu0 %v8726
    %8846 = vmatprep.subr.mxu0 0.0
    %8847 = vmatpush2.msra.mxu0 0.0
    %8848 = vmatprep.subr.mxu0 0.0
    %8849 = vmatpush2.msra.mxu0 0.0
    %8850 = vmatprep.subr.mxu0 0.0
    %8851 = vmatpush2.msra.mxu0 0.0
    %8852 = vmatprep.subr.mxu0 0.0
    %8853 = vmatpush2.msra.mxu0 0.0
    %8854 = vmatprep.subr.mxu0 0.0
    %8855 = vmatpush2.msra.mxu0 0.0
    %8856 = vmatprep.subr.mxu0 0.0
    %8857 = vmatpush2.msra.mxu0 0.0
    %8858 = vmatprep.subr.mxu0 0.0
    %8859 = vmatpush2.msra.mxu0 0.0
    %8860 = vmatprep.subr.mxu0 0.0
    %8861 = vmatpush2.msra.mxu0 0.0
    %8862 = vmatprep.subr.mxu0 0.0
    %8863 = vmatpush2.msra.mxu0 0.0
    %8864 = vmatprep.subr.mxu0 0.0
    %8865 = vmatpush2.msra.mxu0 0.0
    %8866 = vmatprep.subr.mxu0 0.0
    %8867 = vmatpush2.msra.mxu0 0.0
    %8868 = vmatprep.subr.mxu0 0.0
    %8869 = vmatpush2.msra.mxu0 0.0
    %8870 = vmatprep.subr.mxu0 0.0
    %8871 = vmatpush2.msra.mxu0 0.0
    %8872 = vmatprep.subr.mxu0 0.0
    %8873 = vmatpush2.msra.mxu0 0.0
    %8874 = vmatprep.subr.mxu0 0.0
    %8875 = vmatpush2.msra.mxu0 0.0
    %8876 = vmatprep.subr.mxu0 0.0
    %8877 = vmatpush2.msra.mxu0 0.0
    %8878 = vmatprep.mubr.f32.mxu0 0.0
    %8879 = vmatmul.mubr.f32.gmra.mxu0 %v8741
    %v8880 = vpop.f32.mrf.mxu0
    %v8881 = vadd.f32 0.0, %v8880
    %v8882 = vpop.f32.mrf.mxu0
    %v8883 = vadd.f32 0.0, %v8882
    %8884 = vdwg.mxu0
    %8885 = vmatprep.subr.mxu0 0.0
    %8886 = vmatpush1.msra.mxu0 0.0
    %8887 = vmatprep.subr.mxu0 0.0
    %8888 = vmatpush1.msra.mxu0 0.0
    %8889 = vmatprep.subr.mxu0 0.0
    %8890 = vmatpush1.msra.mxu0 0.0
    %8891 = vmatprep.subr.mxu0 0.0
    %8892 = vmatpush1.msra.mxu0 0.0
    %8893 = vmatprep.subr.mxu0 0.0
    %8894 = vmatpush1.msra.mxu0 0.0
    %8895 = vmatprep.subr.mxu0 0.0
    %8896 = vmatpush1.msra.mxu0 0.0
    %8897 = vmatprep.subr.mxu0 0.0
    %8898 = vmatpush1.msra.mxu0 0.0
    %8899 = vmatprep.subr.mxu0 0.0
    %8900 = vmatpush1.msra.mxu0 0.0
    %8901 = vmatprep.subr.mxu0 0.0
    %8902 = vmatpush1.msra.mxu0 0.0
    %8903 = vmatprep.subr.mxu0 0.0
    %8904 = vmatpush1.msra.mxu0 0.0
    %8905 = vmatprep.subr.mxu0 0.0
    %8906 = vmatpush1.msra.mxu0 0.0
    %8907 = vmatprep.subr.mxu0 0.0
    %8908 = vmatpush1.msra.mxu0 0.0
    %8909 = vmatprep.subr.mxu0 0.0
    %8910 = vmatpush1.msra.mxu0 0.0
    %8911 = vmatprep.subr.mxu0 0.0
    %8912 = vmatpush1.msra.mxu0 0.0
    %8913 = vmatprep.subr.mxu0 0.0
    %8914 = vmatpush1.msra.mxu0 0.0
    %8915 = vmatprep.subr.mxu0 %v8729
    %8916 = vmatpush1.msra.mxu0 %v8728
    %8917 = vmatprep.subr.mxu0 0.0
    %8918 = vmatpush2.msra.mxu0 0.0
    %8919 = vmatprep.subr.mxu0 0.0
    %8920 = vmatpush2.msra.mxu0 0.0
    %8921 = vmatprep.subr.mxu0 0.0
    %8922 = vmatpush2.msra.mxu0 0.0
    %8923 = vmatprep.subr.mxu0 0.0
    %8924 = vmatpush2.msra.mxu0 0.0
    %8925 = vmatprep.subr.mxu0 0.0
    %8926 = vmatpush2.msra.mxu0 0.0
    %8927 = vmatprep.subr.mxu0 0.0
    %8928 = vmatpush2.msra.mxu0 0.0
    %8929 = vmatprep.subr.mxu0 0.0
    %8930 = vmatpush2.msra.mxu0 0.0
    %8931 = vmatprep.subr.mxu0 0.0
    %8932 = vmatpush2.msra.mxu0 0.0
    %8933 = vmatprep.subr.mxu0 0.0
    %8934 = vmatpush2.msra.mxu0 0.0
    %8935 = vmatprep.subr.mxu0 0.0
    %8936 = vmatpush2.msra.mxu0 0.0
    %8937 = vmatprep.subr.mxu0 0.0
    %8938 = vmatpush2.msra.mxu0 0.0
    %8939 = vmatprep.subr.mxu0 0.0
    %8940 = vmatpush2.msra.mxu0 0.0
    %8941 = vmatprep.subr.mxu0 0.0
    %8942 = vmatpush2.msra.mxu0 0.0
    %8943 = vmatprep.subr.mxu0 0.0
    %8944 = vmatpush2.msra.mxu0 0.0
    %8945 = vmatprep.subr.mxu0 0.0
    %8946 = vmatpush2.msra.mxu0 0.0
    %8947 = vmatprep.subr.mxu0 0.0
    %8948 = vmatpush2.msra.mxu0 0.0
    %8949 = vmatprep.mubr.f32.mxu0 0.0
    %8950 = vmatmul.mubr.f32.gmra.mxu0 %v8741
    %v8951 = vpop.f32.mrf.mxu0
    %v8952 = vadd.f32 0.0, %v8951
    %v8953 = vpop.f32.mrf.mxu0
    %v8954 = vadd.f32 0.0, %v8953
    %8955 = vdwg.mxu0
    %8956 = vmatprep.subr.mxu0 0.0
    %8957 = vmatpush1.msra.mxu0 0.0
    %8958 = vmatprep.subr.mxu0 0.0
    %8959 = vmatpush1.msra.mxu0 0.0
    %8960 = vmatprep.subr.mxu0 0.0
    %8961 = vmatpush1.msra.mxu0 0.0
    %8962 = vmatprep.subr.mxu0 0.0
    %8963 = vmatpush1.msra.mxu0 0.0
    %8964 = vmatprep.subr.mxu0 0.0
    %8965 = vmatpush1.msra.mxu0 0.0
    %8966 = vmatprep.subr.mxu0 0.0
    %8967 = vmatpush1.msra.mxu0 0.0
    %8968 = vmatprep.subr.mxu0 0.0
    %8969 = vmatpush1.msra.mxu0 0.0
    %8970 = vmatprep.subr.mxu0 0.0
    %8971 = vmatpush1.msra.mxu0 0.0
    %8972 = vmatprep.subr.mxu0 0.0
    %8973 = vmatpush1.msra.mxu0 0.0
    %8974 = vmatprep.subr.mxu0 0.0
    %8975 = vmatpush1.msra.mxu0 0.0
    %8976 = vmatprep.subr.mxu0 0.0
    %8977 = vmatpush1.msra.mxu0 0.0
    %8978 = vmatprep.subr.mxu0 0.0
    %8979 = vmatpush1.msra.mxu0 0.0
    %8980 = vmatprep.subr.mxu0 0.0
    %8981 = vmatpush1.msra.mxu0 0.0
    %8982 = vmatprep.subr.mxu0 0.0
    %8983 = vmatpush1.msra.mxu0 0.0
    %8984 = vmatprep.subr.mxu0 0.0
    %8985 = vmatpush1.msra.mxu0 0.0
    %8986 = vmatprep.subr.mxu0 %v8731
    %8987 = vmatpush1.msra.mxu0 %v8730
    %8988 = vmatprep.subr.mxu0 0.0
    %8989 = vmatpush2.msra.mxu0 0.0
    %8990 = vmatprep.subr.mxu0 0.0
    %8991 = vmatpush2.msra.mxu0 0.0
    %8992 = vmatprep.subr.mxu0 0.0
    %8993 = vmatpush2.msra.mxu0 0.0
    %8994 = vmatprep.subr.mxu0 0.0
    %8995 = vmatpush2.msra.mxu0 0.0
    %8996 = vmatprep.subr.mxu0 0.0
    %8997 = vmatpush2.msra.mxu0 0.0
    %8998 = vmatprep.subr.mxu0 0.0
    %8999 = vmatpush2.msra.mxu0 0.0
    %9000 = vmatprep.subr.mxu0 0.0
    %9001 = vmatpush2.msra.mxu0 0.0
    %9002 = vmatprep.subr.mxu0 0.0
    %9003 = vmatpush2.msra.mxu0 0.0
    %9004 = vmatprep.subr.mxu0 0.0
    %9005 = vmatpush2.msra.mxu0 0.0
    %9006 = vmatprep.subr.mxu0 0.0
    %9007 = vmatpush2.msra.mxu0 0.0
    %9008 = vmatprep.subr.mxu0 0.0
    %9009 = vmatpush2.msra.mxu0 0.0
    %9010 = vmatprep.subr.mxu0 0.0
    %9011 = vmatpush2.msra.mxu0 0.0
    %9012 = vmatprep.subr.mxu0 0.0
    %9013 = vmatpush2.msra.mxu0 0.0
    %9014 = vmatprep.subr.mxu0 0.0
    %9015 = vmatpush2.msra.mxu0 0.0
    %9016 = vmatprep.subr.mxu0 0.0
    %9017 = vmatpush2.msra.mxu0 0.0
    %9018 = vmatprep.subr.mxu0 0.0
    %9019 = vmatpush2.msra.mxu0 0.0
    %9020 = vmatprep.mubr.f32.mxu0 0.0
    %9021 = vmatmul.mubr.f32.gmra.mxu0 %v8741
    %v9022 = vpop.f32.mrf.mxu0
    %v9023 = vadd.f32 0.0, %v9022
    %v9024 = vpop.f32.mrf.mxu0
    %v9025 = vadd.f32 0.0, %v9024
    %9026 = vdwg.mxu0
    %v9027 = vadd.f32 %v8697, %v8810
    %v9028 = vadd.f32 %v8698, %v8812
    %v9029 = vadd.f32 %v8699, %v8881
    %v9030 = vadd.f32 %v8700, %v8883
    %v9031 = vadd.f32 %v8701, %v8952
    %v9032 = vadd.f32 %v8702, %v8954
    %v9033 = vadd.f32 %v8703, %v9023
    %v9034 = vadd.f32 %v8704, %v9025
    %v9035 = vld [vmem:[%s6] sm:$0xff]
    %9037 = vset.pattern.permute.xlu0 0
    %9038 = vperm.xlu0 %9037, %v9035
    %v9039 = vpop.permute.xlu0 %9038
    %v9041 = vadd.f32 %v9027, %v9039
    %v9042 = vadd.f32 %v9028, %v9039
    %v9043 = vadd.f32 %v9029, %v9039
    %v9044 = vadd.f32 %v9030, %v9039
    %v9045 = vadd.f32 %v9031, %v9039
    %v9046 = vadd.f32 %v9032, %v9039
    %v9047 = vadd.f32 %v9033, %v9039
    %v9048 = vadd.f32 %v9034, %v9039
    %v9049 = vadd.f32 %v32, %v9041
    %v9050 = vadd.f32 %v33, %v9042
    %v9051 = vadd.f32 %v34, %v9043
    %v9052 = vadd.f32 %v35, %v9044
    %v9053 = vadd.f32 %v36, %v9045
    %v9054 = vadd.f32 %v37, %v9046
    %v9055 = vadd.f32 %v38, %v9047
    %v9056 = vadd.f32 %v39, %v9048
    %9057 = vst [vmem:[#allocation3] sm:$0xff] %v9049
    %9058 = vst [vmem:[#allocation3 + $0x8] sm:$0xff] %v9050
    %9059 = vst [vmem:[#allocation3 + $0x10] sm:$0xff] %v9051
    %9060 = vst [vmem:[#allocation3 + $0x18] sm:$0xff] %v9052
    %9061 = vst [vmem:[#allocation3 + $0x20] sm:$0xff] %v9053
    %9062 = vst [vmem:[#allocation3 + $0x28] sm:$0xff] %v9054
    %9063 = vst [vmem:[#allocation3 + $0x30] sm:$0xff] %v9055
    %9064 = vst [vmem:[#allocation3 + $0x38] sm:$0xff] %v9056
    // Predicated region
    $region34: #{tpu_custom_call.1} parent=1 // pred_check
      _
    $region35: #{tpu_custom_call.1} parent=1 // pred_check_branch
      %9066 = sbr.rel (0) target = $region37
    $region36: #{tpu_custom_call.1} parent=1 // pred_region
      %s9068 = ssub.s32 1024, 1024
      %9069 = vsyncadd [#allocation4], %s9068
      %s9071 = sshll.u32 [#allocation3], 4
      %s9072 = int_to_ptr.vmem [resolvable:$true] %s9071
      %9074 = dma.vmem_to_hbm [thread:$0]  %s9072, 1024, %s8, [#allocation4]
    $region37: #{tpu_custom_call.1} parent=1 // pred_fallthru
      _
    // Predicated region
    $region38: #{tpu_custom_call.1} parent=1 // pred_check
      _
    $region39: #{tpu_custom_call.1} parent=1 // pred_check_branch
      %9076 = sbr.rel (0) target = $region41
    $region40: #{tpu_custom_call.1} parent=1 // pred_region
      %9077 = dma.done [#allocation4], 1024
    $region41: #{tpu_custom_call.1} parent=1 // pred_fallthru
      _
    %9078 = vsyncpa [#allocation4], 1

</llo_original>
